<compile_context>
chip_gen: v7x
topology: tpu7x:2x2x1
jax: 0.10.0
libtpu: 0.0.40
codegen_flags: <defaults>
</compile_context>

<pallas_src>
import jax
import jax.numpy as jnp
from jax.experimental import pallas as pl
from jax.experimental.pallas import tpu as pltpu

H = 128  # LSTM hidden size (fixed by the nn.Module)


def _maxpool2(y):
    """MaxPool1d(kernel=2, stride=2) along axis 1 using static slices only."""
    B, T, C = y.shape
    return jnp.concatenate(
        [jnp.maximum(y[:, 2 * i:2 * i + 1, :], y[:, 2 * i + 1:2 * i + 2, :])
         for i in range(T // 2)], axis=1)


# ----------------------------------------------------------------------------
# Single fused kernel: whole stage_1model forward.
# ----------------------------------------------------------------------------
def stage1_kernel(
    x_ref,                                        # (B, T, 1)
    c1w_ref, bn1s_ref, bn1h_ref,                  # (3,1,64), (1,1,64) x2
    c2w_ref, bn2s_ref, bn2h_ref,                  # (192,128) im2col, (1,1,128) x2
    l0_wih_ref, l0_whh_ref, l0_b_ref,             # (256,1024) bf16, (256,1024) bf16, (1,1024)
    l1_wih_hbm, l1_whh_hbm, l1_b_ref,             # (512,1024) bf16 HBM, (256,1024) bf16 HBM, (1,1024)
    caw1_ref, caw2_ref, saw_ref,                  # (256,16), (16,256), (2,7) SMEM
    fc1w_hbm, fc1b_ref,                           # (L,256,512) bf16 HBM, (1,512)
    fc2w_hbm, fc2b_ref,                           # (512,256) bf16 HBM, (1,256)
    fc3w_ref, fc3b_ref, fc4w_ref, fc4b_ref,       # (256,128),(1,128),(128,2),(1,2)
    o_ref,                                        # (B, 2)
    # --- scratch ---
    l1_wih_v, l1_whh_v, fc1w_v, fc2w_v,           # VMEM staging for late weights
    dma_sem,                                      # DMA semaphores (4,)
    lstm0_out, lstm1_out,                         # (B, L, 2H) f32 each
):
    f32 = jnp.float32
    bf16 = jnp.bfloat16
    x = x_ref[...]                                # (B, T, 1)
    B, T, _ = x.shape
    L1 = T // 2
    L = T // 4

    # ---- kick off late-weight DMAs: overlap with conv1/conv2/layer-0 LSTM ---
    cp_l1_wih = pltpu.make_async_copy(l1_wih_hbm, l1_wih_v, dma_sem.at[0])
    cp_l1_whh = pltpu.make_async_copy(l1_whh_hbm, l1_whh_v, dma_sem.at[1])
    cp_fc1 = pltpu.make_async_copy(fc1w_hbm, fc1w_v, dma_sem.at[2])
    cp_fc2 = pltpu.make_async_copy(fc2w_hbm, fc2w_v, dma_sem.at[3])
    cp_l1_wih.start(); cp_l1_whh.start(); cp_fc1.start(); cp_fc2.start()

    # ---------------- conv1 (1->64, k=3, pad=1) + BN + ReLU + MaxPool(2,2) ---
    zp1 = jnp.zeros((B, 1, 1), f32)
    xp = jnp.concatenate([zp1, x, zp1], axis=1)           # (B, T+2, 1)
    acc1 = jnp.zeros((B, T, 64), f32)
    for j in range(3):                                    # Cin=1 -> 3 VPU FMAs
        acc1 = acc1 + xp[:, j:j + T, :] * c1w_ref[j]      # (B,T,1)*(1,64)
    y1 = jnp.maximum(acc1 * bn1s_ref[...] + bn1h_ref[...], 0.0)
    h1 = _maxpool2(y1)                                    # (B, T//2, 64)

    # ---------------- conv2 (64->128, k=3, pad=1) + BN + ReLU + MaxPool ------
    zp2 = jnp.zeros((B, 1, 64), f32)
    h1p = jnp.concatenate([zp2, h1, zp2], axis=1)         # (B, T//2+2, 64)
    # im2col: 3 shifted windows stacked on channels -> one K=192 dot
    xcat = jnp.concatenate([h1p[:, j:j + L1, :] for j in range(3)], axis=-1)
    y2 = jnp.dot(xcat.reshape(B * L1, 192), c2w_ref[...],
                 preferred_element_type=f32).reshape(B, L1, 128)
    y2 = jnp.maximum(y2 * bn2s_ref[...] + bn2h_ref[...], 0.0)
    h2 = _maxpool2(y2)                                    # (B, T//4, 128)

    # ---------------- 2-layer bidirectional LSTM (hidden 128) ----------------
    # Fused gate-column layout: [i_f,i_b | f_f,f_b | o_f,o_b | g_f,g_b] (8H).
    # W_ih block: rows 0:D = fwd input weights, rows D:2D = bwd (zeros in the
    # cross-direction positions).  W_hh block: rows 0:H <- h_f, rows H:2H <- h_b.
    def bilstm_layer(xin, wih_ref, whh_ref, b_ref, out_ref):
        _, Lq, D = xin.shape
        # time-reversed copy of the input for the backward direction
        xin_rev = jnp.concatenate(
            [xin[:, Lq - 1 - t:Lq - t, :] for t in range(Lq)], axis=1)
        xin_cat = jnp.concatenate([xin, xin_rev], axis=-1)        # (B, L, 2D)
        # hoisted input projection for BOTH directions: one K=2D matmul
        gx = jnp.dot(xin_cat.reshape(B * Lq, 2 * D).astype(bf16), wih_ref[...],
                     preferred_element_type=f32) + b_ref[...]     # (B*L, 8H)
        gx = gx.reshape(B, Lq, 8 * H)
        whh = whh_ref[...]                                        # (2H, 8H) bf16
        hc = jnp.zeros((B, 2 * H), f32)                           # [h_f | h_b]
        cc = jnp.zeros((B, 2 * H), f32)                           # [c_f | c_b]
        for t in range(Lq):                      # static unroll (L = T//4 = 4)
            # ONE block-diagonal recurrent dot for both directions (K = 2H)
            pre = gx[:, t, :] + jnp.dot(hc.astype(bf16), whh,
                                        preferred_element_type=f32)  # (B, 8H)
            sg = jax.nn.sigmoid(pre[:, 0:6 * H])      # [i | f | o] both dirs
            g = jnp.tanh(pre[:, 6 * H:8 * H])         # [g_f | g_b]
            cc = sg[:, 2 * H:4 * H] * cc + sg[:, 0:2 * H] * g
            hc = sg[:, 4 * H:6 * H] * jnp.tanh(cc)
            # direct VMEM scratch writes (no list + concatenate)
            out_ref[:, t, 0:H] = hc[:, 0:H]                 # fwd hidden @ t
            out_ref[:, Lq - 1 - t, H:2 * H] = hc[:, H:2 * H]  # bwd hidden @ L-1-t

    bilstm_layer(h2, l0_wih_ref, l0_whh_ref, l0_b_ref, lstm0_out)
    cp_l1_wih.wait(); cp_l1_whh.wait()
    bilstm_layer(lstm0_out[...], l1_wih_v, l1_whh_v, l1_b_ref, lstm1_out)
    hl = lstm1_out[...]                                   # (B, L, 256)
    # dropout = identity (eval mode)

    # ---------------- CBAM ---------------------------------------------------
    C = 2 * H
    # channel attention: shared MLP on stacked [avg; max] rows, plain 2-D dots
    avg = jnp.mean(hl, axis=1)                            # (B, C)
    mx = jnp.max(hl, axis=1)                              # (B, C)
    v2 = jnp.concatenate([avg, mx], axis=0)               # (2B, C)
    hfc = jnp.maximum(jnp.dot(v2, caw1_ref[...], preferred_element_type=f32), 0.0)
    ofc = jnp.dot(hfc, caw2_ref[...], preferred_element_type=f32)   # (2B, C)
    ca = jax.nn.sigmoid(ofc[0:B] + ofc[B:2 * B])          # (B, C)
    xc = hl * ca[:, None, :]                              # (B, L, C)

    # spatial attention: pool over C, 7-tap conv (pad=3, no bias) over L, sigmoid
    avg_c = jnp.mean(xc, axis=2, keepdims=True)           # (B, L, 1)
    max_c = jnp.max(xc, axis=2, keepdims=True)
    zp3 = jnp.zeros((B, 3, 1), f32)
    avg_p = jnp.concatenate([zp3, avg_c, zp3], axis=1)    # (B, L+6, 1)
    max_p = jnp.concatenate([zp3, max_c, zp3], axis=1)
    sa = jnp.zeros((B, L, 1), f32)
    for j in range(7):
        sa = sa + saw_ref[0, j] * avg_p[:, j:j + L, :] \
                + saw_ref[1, j] * max_p[:, j:j + L, :]
    xs_out = xc * jax.nn.sigmoid(sa)                      # (B, L, C)

    # ---------------- permute + flatten + fc1..fc4 (dropout = identity) ------
    # PyTorch flatten after the final permute(0,2,1) is (l, c) row-major, so
    # fc1 is a sum of per-timestep (B,256)@(256,512) dots -> no relayout needed.
    cp_fc1.wait()
    hm = jnp.zeros((B, 512), f32)
    for t in range(L):
        hm = hm + jnp.dot(xs_out[:, t, :].astype(bf16), fc1w_v[t],
                          preferred_element_type=f32)
    hm = jnp.maximum(hm + fc1b_ref[...], 0.0)
    cp_fc2.wait()
    hm = jnp.maximum(jnp.dot(hm.astype(bf16), fc2w_v[...],
                             preferred_element_type=f32) + fc2b_ref[...], 0.0)
    hm = jnp.maximum(jnp.dot(hm, fc3w_ref[...],
                             preferred_element_type=f32) + fc3b_ref[...], 0.0)
    o_ref[...] = jnp.dot(hm, fc4w_ref[...],
                         preferred_element_type=f32) + fc4b_ref[...]


# ----------------------------------------------------------------------------
# Wrapper: one grid-less pallas_call for the whole forward.
# ----------------------------------------------------------------------------
def stage1_forward(p, x):
    B, T = x.shape
    # PyTorch MaxPool1d(2,2) floors odd lengths; the model's fc1 already
    # assumes T % 4 == 0, so we require it here.
    assert T % 4 == 0, "max_time_steps must be a multiple of 4"
    L = T // 4

    vmem = pl.BlockSpec(memory_space=pltpu.MemorySpace.VMEM)
    smem = pl.BlockSpec(memory_space=pltpu.MemorySpace.SMEM)
    hbm = pl.BlockSpec(memory_space=pl.ANY)       # stays in HBM, manually staged

    args_and_specs = [
        (x.reshape(B, T, 1), vmem),
        (p['conv1_w'], vmem), (p['bn1_scale'], vmem), (p['bn1_shift'], vmem),
        (p['conv2_w'], vmem), (p['bn2_scale'], vmem), (p['bn2_shift'], vmem),
        (p['lstm_l0_wih'], vmem), (p['lstm_l0_whh'], vmem), (p['lstm_l0_b'], vmem),
        (p['lstm_l1_wih'], hbm), (p['lstm_l1_whh'], hbm), (p['lstm_l1_b'], vmem),
        (p['ca_w1'], vmem), (p['ca_w2'], vmem), (p['sa_w'], smem),
        (p['fc1_w'], hbm), (p['fc1_b'], vmem),
        (p['fc2_w'], hbm), (p['fc2_b'], vmem),
        (p['fc3_w'], vmem), (p['fc3_b'], vmem),
        (p['fc4_w'], vmem), (p['fc4_b'], vmem),
    ]
    args = [a for a, _ in args_and_specs]
    in_specs = [s for _, s in args_and_specs]

    scratch_shapes = [
        pltpu.VMEM((4 * H, 8 * H), jnp.bfloat16),    # layer-1 W_ih block (512,1024)
        pltpu.VMEM((2 * H, 8 * H), jnp.bfloat16),    # layer-1 W_hh block (256,1024)
        pltpu.VMEM((L, 2 * H, 512), jnp.bfloat16),   # fc1 weight
        pltpu.VMEM((512, 2 * H), jnp.bfloat16),      # fc2 weight
        pltpu.SemaphoreType.DMA((4,)),
        pltpu.VMEM((B, L, 2 * H), jnp.float32),      # layer-0 LSTM output
        pltpu.VMEM((B, L, 2 * H), jnp.float32),      # layer-1 LSTM output
    ]

    return pl.pallas_call(
        stage1_kernel,
        out_shape=jax.ShapeDtypeStruct((B, 2), jnp.float32),
        in_specs=in_specs,
        out_specs=vmem,
        scratch_shapes=scratch_shapes,
        # explicit scoped-VMEM limit (v5e default is 16 MiB); safe on all gens
        compiler_params=pltpu.CompilerParams(vmem_limit_bytes=32 * 1024 * 1024),
    )(*args)


# ----------------------------------------------------------------------------
# Parameters (deterministic synthetic init; shapes follow the nn.Module).
# When porting trained torch weights: per direction, W_ih/W_hh rows are
# (i,f,g,o) blocks -> transpose and place into the fused column layout
# [i_f,i_b | f_f,f_b | o_f,o_b | g_f,g_b]; bias b = b_ih + b_hh.
# ----------------------------------------------------------------------------
def init_params(key, T):
    keys = iter(jax.random.split(key, 128))

    def rn(shape, s=0.1):
        return jax.random.normal(next(keys), shape, dtype=jnp.float32) * s

    p = {}
    eps = 1e-5
    L = T // 4
    bf16 = jnp.bfloat16

    # conv1d_1 (1 -> 64, k=3) + bn1 (eval-mode, folded); w[j,0,o] = torch[o,0,j]
    p['conv1_w'] = rn((3, 1, 64))
    conv1_b = rn((64,))
    g1 = 1.0 + rn((64,), 0.05); be1 = rn((64,), 0.05)
    m1 = rn((64,), 0.05); v1 = 1.0 + jnp.abs(rn((64,), 0.05))
    sc1 = g1 / jnp.sqrt(v1 + eps)
    p['bn1_scale'] = sc1.reshape(1, 1, 64)
    p['bn1_shift'] = ((conv1_b - m1) * sc1 + be1).reshape(1, 1, 64)

    # conv1d_2 (64 -> 128, k=3) + bn2; im2col rows: index j*64+c = torch[o,c,j]
    p['conv2_w'] = rn((3, 64, 128)).reshape(192, 128)
    conv2_b = rn((128,))
    g2 = 1.0 + rn((128,), 0.05); be2 = rn((128,), 0.05)
    m2 = rn((128,), 0.05); v2 = 1.0 + jnp.abs(rn((128,), 0.05))
    sc2 = g2 / jnp.sqrt(v2 + eps)
    p['bn2_scale'] = sc2.reshape(1, 1, 128)
    p['bn2_shift'] = ((conv2_b - m2) * sc2 + be2).reshape(1, 1, 128)

    # 2-layer bidirectional LSTM, hidden=128, fused block weights (bf16).
    def _lstm_blk(D):
        zi = jnp.zeros((D, H), jnp.float32)
        zh = jnp.zeros((H, H), jnp.float32)
        Wf = [rn((D, H)) for _ in range(4)]   # gate order here: i, f, o, g
        Wb = [rn((D, H)) for _ in range(4)]
        Uf = [rn((H, H)) for _ in range(4)]
        Ub = [rn((H, H)) for _ in range(4)]
        bf = [rn((1, H)) for _ in range(4)]   # = b_ih + b_hh folded
        bb = [rn((1, H)) for _ in range(4)]
        wih = jnp.concatenate([
            jnp.concatenate([Wf[0], zi, Wf[1], zi, Wf[2], zi, Wf[3], zi], axis=1),
            jnp.concatenate([zi, Wb[0], zi, Wb[1], zi, Wb[2], zi, Wb[3]], axis=1),
        ], axis=0).astype(bf16)                                   # (2D, 8H)
        whh = jnp.concatenate([
            jnp.concatenate([Uf[0], zh, Uf[1], zh, Uf[2], zh, Uf[3], zh], axis=1),
            jnp.concatenate([zh, Ub[0], zh, Ub[1], zh, Ub[2], zh, Ub[3]], axis=1),
        ], axis=0).astype(bf16)                                   # (2H, 8H)
        b = jnp.concatenate(
            [bf[0], bb[0], bf[1], bb[1], bf[2], bb[2], bf[3], bb[3]], axis=1)
        return wih, whh, b

    p['lstm_l0_wih'], p['lstm_l0_whh'], p['lstm_l0_b'] = _lstm_blk(H)
    p['lstm_l1_wih'], p['lstm_l1_whh'], p['lstm_l1_b'] = _lstm_blk(2 * H)

    # CBAM(in_planes=256): channel MLP (no bias) + 7-tap spatial conv (no bias)
    p['ca_w1'] = rn((256, 16))
    p['ca_w2'] = rn((16, 256))
    p['sa_w'] = rn((2, 7))

    # FC head; fc1 stored as (L, 256, 512): row t*256+c -> fc1_w[t, c, :]
    p['fc1_w'] = rn((L * 256, 512)).reshape(L, 256, 512).astype(bf16)
    p['fc1_b'] = rn((1, 512))
    p['fc2_w'] = rn((512, 256)).astype(bf16)
    p['fc2_b'] = rn((1, 256))
    p['fc3_w'] = rn((256, 128)); p['fc3_b'] = rn((1, 128))
    p['fc4_w'] = rn((128, 2));   p['fc4_b'] = rn((1, 2))
    return p


if __name__ == "__main__":
    B, T = 2, 16                       # max_time_steps = 16 -> fc1 in = 1024
    k_x, k_p = jax.random.split(jax.random.PRNGKey(0))
    x = jax.random.normal(k_x, (B, T), dtype=jnp.float32)
    params = init_params(k_p, T)
    out = jax.jit(stage1_forward)(params, x)
    out = jax.block_until_ready(out)
    assert out.shape == (B, 2)
    assert bool(jnp.all(jnp.isfinite(out)))
    print("KERNEL_OK")
</pallas_src>

<mosaic_0001>
module attributes {stable_mosaic.version = 11 : i64} {
  func.func @stage1_kernel(%arg0: memref<2x16x1xf32, #tpu.memory_space<vmem>>, %arg1: memref<3x1x64xf32, #tpu.memory_space<vmem>>, %arg2: memref<1x1x64xf32, #tpu.memory_space<vmem>>, %arg3: memref<1x1x64xf32, #tpu.memory_space<vmem>>, %arg4: memref<192x128xf32, #tpu.memory_space<vmem>>, %arg5: memref<1x1x128xf32, #tpu.memory_space<vmem>>, %arg6: memref<1x1x128xf32, #tpu.memory_space<vmem>>, %arg7: memref<256x1024xbf16, #tpu.memory_space<vmem>>, %arg8: memref<256x1024xbf16, #tpu.memory_space<vmem>>, %arg9: memref<1x1024xf32, #tpu.memory_space<vmem>>, %arg10: memref<512x1024xbf16, #tpu.memory_space<any>>, %arg11: memref<256x1024xbf16, #tpu.memory_space<any>>, %arg12: memref<1x1024xf32, #tpu.memory_space<vmem>>, %arg13: memref<256x16xf32, #tpu.memory_space<vmem>>, %arg14: memref<16x256xf32, #tpu.memory_space<vmem>>, %arg15: memref<2x7xf32, #tpu.memory_space<smem>>, %arg16: memref<4x256x512xbf16, #tpu.memory_space<any>>, %arg17: memref<1x512xf32, #tpu.memory_space<vmem>>, %arg18: memref<512x256xbf16, #tpu.memory_space<any>>, %arg19: memref<1x256xf32, #tpu.memory_space<vmem>>, %arg20: memref<256x128xf32, #tpu.memory_space<vmem>>, %arg21: memref<1x128xf32, #tpu.memory_space<vmem>>, %arg22: memref<128x2xf32, #tpu.memory_space<vmem>>, %arg23: memref<1x2xf32, #tpu.memory_space<vmem>>, %arg24: memref<2x2xf32, #tpu.memory_space<vmem>>, %arg25: memref<512x1024xbf16, #tpu.memory_space<vmem>>, %arg26: memref<256x1024xbf16, #tpu.memory_space<vmem>>, %arg27: memref<4x256x512xbf16, #tpu.memory_space<vmem>>, %arg28: memref<512x256xbf16, #tpu.memory_space<vmem>>, %arg29: memref<4x!tpu.dma_semaphore, #tpu.memory_space<semaphore_mem>>, %arg30: memref<2x4x256xf32, #tpu.memory_space<vmem>>, %arg31: memref<2x4x256xf32, #tpu.memory_space<vmem>>) attributes {dimension_semantics = [], scalar_prefetch = 0 : i64, scratch_operands = 7 : i64, tpu.core_type = #tpu.core_type<tc>} {
    %c0 = arith.constant 0 : index
    %c0_0 = arith.constant 0 : index
    %c0_1 = arith.constant 0 : index
    %0 = vector.load %arg0[%c0, %c0_0, %c0_1] : memref<2x16x1xf32, #tpu.memory_space<vmem>>, vector<2x16x1xf32>
    %c0_i32 = arith.constant 0 : i32
    %1 = tpu.memref_slice %arg29[%c0_i32] : memref<4x!tpu.dma_semaphore, #tpu.memory_space<semaphore_mem>> -> memref<1x!tpu.dma_semaphore, #tpu.memory_space<semaphore_mem>>
    %2 = tpu.memref_squeeze %1 : memref<1x!tpu.dma_semaphore, #tpu.memory_space<semaphore_mem>> -> memref<!tpu.dma_semaphore, #tpu.memory_space<semaphore_mem>>
    tpu.enqueue_dma source(%arg10 : memref<512x1024xbf16, #tpu.memory_space<any>>) target(%arg25 : memref<512x1024xbf16, #tpu.memory_space<vmem>>) target_semaphore(%2 : memref<!tpu.dma_semaphore, #tpu.memory_space<semaphore_mem>>)
    %c1_i32 = arith.constant 1 : i32
    %3 = tpu.memref_slice %arg29[%c1_i32] : memref<4x!tpu.dma_semaphore, #tpu.memory_space<semaphore_mem>> -> memref<1x!tpu.dma_semaphore, #tpu.memory_space<semaphore_mem>>
    %4 = tpu.memref_squeeze %3 : memref<1x!tpu.dma_semaphore, #tpu.memory_space<semaphore_mem>> -> memref<!tpu.dma_semaphore, #tpu.memory_space<semaphore_mem>>
    tpu.enqueue_dma source(%arg11 : memref<256x1024xbf16, #tpu.memory_space<any>>) target(%arg26 : memref<256x1024xbf16, #tpu.memory_space<vmem>>) target_semaphore(%4 : memref<!tpu.dma_semaphore, #tpu.memory_space<semaphore_mem>>)
    %c2_i32 = arith.constant 2 : i32
    %5 = tpu.memref_slice %arg29[%c2_i32] : memref<4x!tpu.dma_semaphore, #tpu.memory_space<semaphore_mem>> -> memref<1x!tpu.dma_semaphore, #tpu.memory_space<semaphore_mem>>
    %6 = tpu.memref_squeeze %5 : memref<1x!tpu.dma_semaphore, #tpu.memory_space<semaphore_mem>> -> memref<!tpu.dma_semaphore, #tpu.memory_space<semaphore_mem>>
    tpu.enqueue_dma source(%arg16 : memref<4x256x512xbf16, #tpu.memory_space<any>>) target(%arg27 : memref<4x256x512xbf16, #tpu.memory_space<vmem>>) target_semaphore(%6 : memref<!tpu.dma_semaphore, #tpu.memory_space<semaphore_mem>>)
    %c3_i32 = arith.constant 3 : i32
    %7 = tpu.memref_slice %arg29[%c3_i32] : memref<4x!tpu.dma_semaphore, #tpu.memory_space<semaphore_mem>> -> memref<1x!tpu.dma_semaphore, #tpu.memory_space<semaphore_mem>>
    %8 = tpu.memref_squeeze %7 : memref<1x!tpu.dma_semaphore, #tpu.memory_space<semaphore_mem>> -> memref<!tpu.dma_semaphore, #tpu.memory_space<semaphore_mem>>
    tpu.enqueue_dma source(%arg18 : memref<512x256xbf16, #tpu.memory_space<any>>) target(%arg28 : memref<512x256xbf16, #tpu.memory_space<vmem>>) target_semaphore(%8 : memref<!tpu.dma_semaphore, #tpu.memory_space<semaphore_mem>>)
    %cst = arith.constant 0.000000e+00 : f32
    %9 = vector.broadcast %cst : f32 to vector<2x1x1xf32>
    %10 = tpu.concatenate %9, %0, %9 in 1 : vector<2x1x1xf32>, vector<2x16x1xf32>, vector<2x1x1xf32> -> vector<2x18x1xf32>
    %cst_2 = arith.constant 0.000000e+00 : f32
    %11 = vector.broadcast %cst_2 : f32 to vector<2x16x64xf32>
    %12 = vector.extract_strided_slice %10 {offsets = [0, 0, 0], sizes = [2, 16, 1], strides = [1, 1, 1]} : vector<2x18x1xf32> to vector<2x16x1xf32>
    %c0_3 = arith.constant 0 : index
    %c0_4 = arith.constant 0 : index
    %c0_5 = arith.constant 0 : index
    %13 = vector.load %arg1[%c0_3, %c0_4, %c0_5] : memref<3x1x64xf32, #tpu.memory_space<vmem>>, vector<1x1x64xf32>
    %14 = vector.shape_cast %13 : vector<1x1x64xf32> to vector<1x64xf32>
    %15 = vector.shape_cast %14 : vector<1x64xf32> to vector<1x1x64xf32>
    %16 = vector.broadcast %12 : vector<2x16x1xf32> to vector<2x16x64xf32>
    %17 = vector.broadcast %15 : vector<1x1x64xf32> to vector<2x16x64xf32>
    %18 = arith.mulf %16, %17 : vector<2x16x64xf32>
    %19 = arith.addf %11, %18 : vector<2x16x64xf32>
    %20 = vector.extract_strided_slice %10 {offsets = [0, 1, 0], sizes = [2, 16, 1], strides = [1, 1, 1]} : vector<2x18x1xf32> to vector<2x16x1xf32>
    %c1 = arith.constant 1 : index
    %c0_6 = arith.constant 0 : index
    %c0_7 = arith.constant 0 : index
    %21 = vector.load %arg1[%c1, %c0_6, %c0_7] : memref<3x1x64xf32, #tpu.memory_space<vmem>>, vector<1x1x64xf32>
    %22 = vector.shape_cast %21 : vector<1x1x64xf32> to vector<1x64xf32>
    %23 = vector.shape_cast %22 : vector<1x64xf32> to vector<1x1x64xf32>
    %24 = vector.broadcast %20 : vector<2x16x1xf32> to vector<2x16x64xf32>
    %25 = vector.broadcast %23 : vector<1x1x64xf32> to vector<2x16x64xf32>
    %26 = arith.mulf %24, %25 : vector<2x16x64xf32>
    %27 = arith.addf %19, %26 : vector<2x16x64xf32>
    %28 = vector.extract_strided_slice %10 {offsets = [0, 2, 0], sizes = [2, 16, 1], strides = [1, 1, 1]} : vector<2x18x1xf32> to vector<2x16x1xf32>
    %c2 = arith.constant 2 : index
    %c0_8 = arith.constant 0 : index
    %c0_9 = arith.constant 0 : index
    %29 = vector.load %arg1[%c2, %c0_8, %c0_9] : memref<3x1x64xf32, #tpu.memory_space<vmem>>, vector<1x1x64xf32>
    %30 = vector.shape_cast %29 : vector<1x1x64xf32> to vector<1x64xf32>
    %31 = vector.shape_cast %30 : vector<1x64xf32> to vector<1x1x64xf32>
    %32 = vector.broadcast %28 : vector<2x16x1xf32> to vector<2x16x64xf32>
    %33 = vector.broadcast %31 : vector<1x1x64xf32> to vector<2x16x64xf32>
    %34 = arith.mulf %32, %33 : vector<2x16x64xf32>
    %35 = arith.addf %27, %34 : vector<2x16x64xf32>
    %c0_10 = arith.constant 0 : index
    %c0_11 = arith.constant 0 : index
    %c0_12 = arith.constant 0 : index
    %36 = vector.load %arg2[%c0_10, %c0_11, %c0_12] : memref<1x1x64xf32, #tpu.memory_space<vmem>>, vector<1x1x64xf32>
    %37 = vector.broadcast %36 : vector<1x1x64xf32> to vector<2x16x64xf32>
    %38 = arith.mulf %35, %37 : vector<2x16x64xf32>
    %c0_13 = arith.constant 0 : index
    %c0_14 = arith.constant 0 : index
    %c0_15 = arith.constant 0 : index
    %39 = vector.load %arg3[%c0_13, %c0_14, %c0_15] : memref<1x1x64xf32, #tpu.memory_space<vmem>>, vector<1x1x64xf32>
    %40 = vector.broadcast %39 : vector<1x1x64xf32> to vector<2x16x64xf32>
    %41 = arith.addf %38, %40 : vector<2x16x64xf32>
    %cst_16 = arith.constant 0.000000e+00 : f32
    %42 = vector.broadcast %cst_16 : f32 to vector<2x16x64xf32>
    %43 = arith.maximumf %41, %42 : vector<2x16x64xf32>
    %44 = vector.extract_strided_slice %43 {offsets = [0, 0, 0], sizes = [2, 1, 64], strides = [1, 1, 1]} : vector<2x16x64xf32> to vector<2x1x64xf32>
    %45 = vector.extract_strided_slice %43 {offsets = [0, 1, 0], sizes = [2, 1, 64], strides = [1, 1, 1]} : vector<2x16x64xf32> to vector<2x1x64xf32>
    %46 = arith.maximumf %44, %45 : vector<2x1x64xf32>
    %47 = vector.extract_strided_slice %43 {offsets = [0, 2, 0], sizes = [2, 1, 64], strides = [1, 1, 1]} : vector<2x16x64xf32> to vector<2x1x64xf32>
    %48 = vector.extract_strided_slice %43 {offsets = [0, 3, 0], sizes = [2, 1, 64], strides = [1, 1, 1]} : vector<2x16x64xf32> to vector<2x1x64xf32>
    %49 = arith.maximumf %47, %48 : vector<2x1x64xf32>
    %50 = vector.extract_strided_slice %43 {offsets = [0, 4, 0], sizes = [2, 1, 64], strides = [1, 1, 1]} : vector<2x16x64xf32> to vector<2x1x64xf32>
    %51 = vector.extract_strided_slice %43 {offsets = [0, 5, 0], sizes = [2, 1, 64], strides = [1, 1, 1]} : vector<2x16x64xf32> to vector<2x1x64xf32>
    %52 = arith.maximumf %50, %51 : vector<2x1x64xf32>
    %53 = vector.extract_strided_slice %43 {offsets = [0, 6, 0], sizes = [2, 1, 64], strides = [1, 1, 1]} : vector<2x16x64xf32> to vector<2x1x64xf32>
    %54 = vector.extract_strided_slice %43 {offsets = [0, 7, 0], sizes = [2, 1, 64], strides = [1, 1, 1]} : vector<2x16x64xf32> to vector<2x1x64xf32>
    %55 = arith.maximumf %53, %54 : vector<2x1x64xf32>
    %56 = vector.extract_strided_slice %43 {offsets = [0, 8, 0], sizes = [2, 1, 64], strides = [1, 1, 1]} : vector<2x16x64xf32> to vector<2x1x64xf32>
    %57 = vector.extract_strided_slice %43 {offsets = [0, 9, 0], sizes = [2, 1, 64], strides = [1, 1, 1]} : vector<2x16x64xf32> to vector<2x1x64xf32>
    %58 = arith.maximumf %56, %57 : vector<2x1x64xf32>
    %59 = vector.extract_strided_slice %43 {offsets = [0, 10, 0], sizes = [2, 1, 64], strides = [1, 1, 1]} : vector<2x16x64xf32> to vector<2x1x64xf32>
    %60 = vector.extract_strided_slice %43 {offsets = [0, 11, 0], sizes = [2, 1, 64], strides = [1, 1, 1]} : vector<2x16x64xf32> to vector<2x1x64xf32>
    %61 = arith.maximumf %59, %60 : vector<2x1x64xf32>
    %62 = vector.extract_strided_slice %43 {offsets = [0, 12, 0], sizes = [2, 1, 64], strides = [1, 1, 1]} : vector<2x16x64xf32> to vector<2x1x64xf32>
    %63 = vector.extract_strided_slice %43 {offsets = [0, 13, 0], sizes = [2, 1, 64], strides = [1, 1, 1]} : vector<2x16x64xf32> to vector<2x1x64xf32>
    %64 = arith.maximumf %62, %63 : vector<2x1x64xf32>
    %65 = vector.extract_strided_slice %43 {offsets = [0, 14, 0], sizes = [2, 1, 64], strides = [1, 1, 1]} : vector<2x16x64xf32> to vector<2x1x64xf32>
    %66 = vector.extract_strided_slice %43 {offsets = [0, 15, 0], sizes = [2, 1, 64], strides = [1, 1, 1]} : vector<2x16x64xf32> to vector<2x1x64xf32>
    %67 = arith.maximumf %65, %66 : vector<2x1x64xf32>
    %68 = tpu.concatenate %46, %49, %52, %55, %58, %61, %64, %67 in 1 : vector<2x1x64xf32>, vector<2x1x64xf32>, vector<2x1x64xf32>, vector<2x1x64xf32>, vector<2x1x64xf32>, vector<2x1x64xf32>, vector<2x1x64xf32>, vector<2x1x64xf32> -> vector<2x8x64xf32>
    %cst_17 = arith.constant 0.000000e+00 : f32
    %69 = vector.broadcast %cst_17 : f32 to vector<2x1x64xf32>
    %70 = tpu.concatenate %69, %68, %69 in 1 : vector<2x1x64xf32>, vector<2x8x64xf32>, vector<2x1x64xf32> -> vector<2x10x64xf32>
    %71 = vector.extract_strided_slice %70 {offsets = [0, 0, 0], sizes = [2, 8, 64], strides = [1, 1, 1]} : vector<2x10x64xf32> to vector<2x8x64xf32>
    %72 = vector.extract_strided_slice %70 {offsets = [0, 1, 0], sizes = [2, 8, 64], strides = [1, 1, 1]} : vector<2x10x64xf32> to vector<2x8x64xf32>
    %73 = vector.extract_strided_slice %70 {offsets = [0, 2, 0], sizes = [2, 8, 64], strides = [1, 1, 1]} : vector<2x10x64xf32> to vector<2x8x64xf32>
    %74 = tpu.concatenate %71, %72, %73 in 2 : vector<2x8x64xf32>, vector<2x8x64xf32>, vector<2x8x64xf32> -> vector<2x8x192xf32>
    %75 = vector.shape_cast %74 : vector<2x8x192xf32> to vector<16x192xf32>
    %c0_18 = arith.constant 0 : index
    %c0_19 = arith.constant 0 : index
    %76 = vector.load %arg4[%c0_18, %c0_19] : memref<192x128xf32, #tpu.memory_space<vmem>>, vector<192x128xf32>
    %cst_20 = arith.constant dense<0.000000e+00> : vector<16x128xf32>
    %77 = tpu.matmul %75, %76, %cst_20 {dimension_numbers = #tpu.dot_dimension_numbers<[1], [0], [0], [1], [0, 0, 1, 1], [], []>} : vector<16x192xf32>, vector<192x128xf32>, vector<16x128xf32> -> vector<16x128xf32>
    %78 = vector.shape_cast %77 : vector<16x128xf32> to vector<2x8x128xf32>
    %c0_21 = arith.constant 0 : index
    %c0_22 = arith.constant 0 : index
    %c0_23 = arith.constant 0 : index
    %79 = vector.load %arg5[%c0_21, %c0_22, %c0_23] : memref<1x1x128xf32, #tpu.memory_space<vmem>>, vector<1x1x128xf32>
    %80 = vector.broadcast %79 : vector<1x1x128xf32> to vector<2x8x128xf32>
    %81 = arith.mulf %78, %80 : vector<2x8x128xf32>
    %c0_24 = arith.constant 0 : index
    %c0_25 = arith.constant 0 : index
    %c0_26 = arith.constant 0 : index
    %82 = vector.load %arg6[%c0_24, %c0_25, %c0_26] : memref<1x1x128xf32, #tpu.memory_space<vmem>>, vector<1x1x128xf32>
    %83 = vector.broadcast %82 : vector<1x1x128xf32> to vector<2x8x128xf32>
    %84 = arith.addf %81, %83 : vector<2x8x128xf32>
    %cst_27 = arith.constant 0.000000e+00 : f32
    %85 = vector.broadcast %cst_27 : f32 to vector<2x8x128xf32>
    %86 = arith.maximumf %84, %85 : vector<2x8x128xf32>
    %87 = vector.extract_strided_slice %86 {offsets = [0, 0, 0], sizes = [2, 1, 128], strides = [1, 1, 1]} : vector<2x8x128xf32> to vector<2x1x128xf32>
    %88 = vector.extract_strided_slice %86 {offsets = [0, 1, 0], sizes = [2, 1, 128], strides = [1, 1, 1]} : vector<2x8x128xf32> to vector<2x1x128xf32>
    %89 = arith.maximumf %87, %88 : vector<2x1x128xf32>
    %90 = vector.extract_strided_slice %86 {offsets = [0, 2, 0], sizes = [2, 1, 128], strides = [1, 1, 1]} : vector<2x8x128xf32> to vector<2x1x128xf32>
    %91 = vector.extract_strided_slice %86 {offsets = [0, 3, 0], sizes = [2, 1, 128], strides = [1, 1, 1]} : vector<2x8x128xf32> to vector<2x1x128xf32>
    %92 = arith.maximumf %90, %91 : vector<2x1x128xf32>
    %93 = vector.extract_strided_slice %86 {offsets = [0, 4, 0], sizes = [2, 1, 128], strides = [1, 1, 1]} : vector<2x8x128xf32> to vector<2x1x128xf32>
    %94 = vector.extract_strided_slice %86 {offsets = [0, 5, 0], sizes = [2, 1, 128], strides = [1, 1, 1]} : vector<2x8x128xf32> to vector<2x1x128xf32>
    %95 = arith.maximumf %93, %94 : vector<2x1x128xf32>
    %96 = vector.extract_strided_slice %86 {offsets = [0, 6, 0], sizes = [2, 1, 128], strides = [1, 1, 1]} : vector<2x8x128xf32> to vector<2x1x128xf32>
    %97 = vector.extract_strided_slice %86 {offsets = [0, 7, 0], sizes = [2, 1, 128], strides = [1, 1, 1]} : vector<2x8x128xf32> to vector<2x1x128xf32>
    %98 = arith.maximumf %96, %97 : vector<2x1x128xf32>
    %99 = tpu.concatenate %89, %92, %95, %98 in 1 : vector<2x1x128xf32>, vector<2x1x128xf32>, vector<2x1x128xf32>, vector<2x1x128xf32> -> vector<2x4x128xf32>
    %100 = vector.extract_strided_slice %99 {offsets = [0, 3, 0], sizes = [2, 1, 128], strides = [1, 1, 1]} : vector<2x4x128xf32> to vector<2x1x128xf32>
    %101 = vector.extract_strided_slice %99 {offsets = [0, 2, 0], sizes = [2, 1, 128], strides = [1, 1, 1]} : vector<2x4x128xf32> to vector<2x1x128xf32>
    %102 = vector.extract_strided_slice %99 {offsets = [0, 1, 0], sizes = [2, 1, 128], strides = [1, 1, 1]} : vector<2x4x128xf32> to vector<2x1x128xf32>
    %103 = vector.extract_strided_slice %99 {offsets = [0, 0, 0], sizes = [2, 1, 128], strides = [1, 1, 1]} : vector<2x4x128xf32> to vector<2x1x128xf32>
    %104 = tpu.concatenate %100, %101, %102, %103 in 1 : vector<2x1x128xf32>, vector<2x1x128xf32>, vector<2x1x128xf32>, vector<2x1x128xf32> -> vector<2x4x128xf32>
    %105 = tpu.concatenate %99, %104 in 2 : vector<2x4x128xf32>, vector<2x4x128xf32> -> vector<2x4x256xf32>
    %106 = vector.shape_cast %105 : vector<2x4x256xf32> to vector<8x256xf32>
    %107 = arith.truncf %106 : vector<8x256xf32> to vector<8x256xbf16>
    %c0_28 = arith.constant 0 : index
    %c0_29 = arith.constant 0 : index
    %108 = vector.load %arg7[%c0_28, %c0_29] : memref<256x1024xbf16, #tpu.memory_space<vmem>>, vector<256x1024xbf16>
    %cst_30 = arith.constant dense<0.000000e+00> : vector<8x1024xf32>
    %109 = tpu.matmul %107, %108, %cst_30 {dimension_numbers = #tpu.dot_dimension_numbers<[1], [0], [0], [1], [0, 0, 1, 1], [], []>} : vector<8x256xbf16>, vector<256x1024xbf16>, vector<8x1024xf32> -> vector<8x1024xf32>
    %c0_31 = arith.constant 0 : index
    %c0_32 = arith.constant 0 : index
    %110 = vector.load %arg9[%c0_31, %c0_32] : memref<1x1024xf32, #tpu.memory_space<vmem>>, vector<1x1024xf32>
    %111 = vector.broadcast %110 : vector<1x1024xf32> to vector<8x1024xf32>
    %112 = arith.addf %109, %111 : vector<8x1024xf32>
    %113 = vector.shape_cast %112 : vector<8x1024xf32> to vector<2x4x1024xf32>
    %c0_33 = arith.constant 0 : index
    %c0_34 = arith.constant 0 : index
    %114 = vector.load %arg8[%c0_33, %c0_34] : memref<256x1024xbf16, #tpu.memory_space<vmem>>, vector<256x1024xbf16>
    %cst_35 = arith.constant 0.000000e+00 : f32
    %115 = vector.broadcast %cst_35 : f32 to vector<2x256xf32>
    %cst_36 = arith.constant 0.000000e+00 : f32
    %116 = vector.broadcast %cst_36 : f32 to vector<2x256xf32>
    %117 = vector.extract_strided_slice %113 {offsets = [0, 0, 0], sizes = [2, 1, 1024], strides = [1, 1, 1]} : vector<2x4x1024xf32> to vector<2x1x1024xf32>
    %118 = vector.shape_cast %117 : vector<2x1x1024xf32> to vector<2x1024xf32>
    %119 = arith.truncf %115 : vector<2x256xf32> to vector<2x256xbf16>
    %cst_37 = arith.constant dense<0.000000e+00> : vector<2x1024xf32>
    %120 = tpu.matmul %119, %114, %cst_37 {dimension_numbers = #tpu.dot_dimension_numbers<[1], [0], [0], [1], [0, 0, 1, 1], [], []>} : vector<2x256xbf16>, vector<256x1024xbf16>, vector<2x1024xf32> -> vector<2x1024xf32>
    %121 = arith.addf %118, %120 : vector<2x1024xf32>
    %122 = vector.extract_strided_slice %121 {offsets = [0, 0], sizes = [2, 768], strides = [1, 1]} : vector<2x1024xf32> to vector<2x768xf32>
    %123 = arith.negf %122 : vector<2x768xf32>
    %124 = math.exp %123 : vector<2x768xf32>
    %cst_38 = arith.constant 1.000000e+00 : f32
    %125 = vector.broadcast %cst_38 : f32 to vector<2x768xf32>
    %126 = arith.addf %125, %124 : vector<2x768xf32>
    %127 = arith.divf %125, %126 : vector<2x768xf32>
    %128 = vector.extract_strided_slice %121 {offsets = [0, 768], sizes = [2, 256], strides = [1, 1]} : vector<2x1024xf32> to vector<2x256xf32>
    %129 = math.tanh %128 : vector<2x256xf32>
    %130 = vector.extract_strided_slice %127 {offsets = [0, 256], sizes = [2, 256], strides = [1, 1]} : vector<2x768xf32> to vector<2x256xf32>
    %131 = arith.mulf %130, %116 : vector<2x256xf32>
    %132 = vector.extract_strided_slice %127 {offsets = [0, 0], sizes = [2, 256], strides = [1, 1]} : vector<2x768xf32> to vector<2x256xf32>
    %133 = arith.mulf %132, %129 : vector<2x256xf32>
    %134 = arith.addf %131, %133 : vector<2x256xf32>
    %135 = vector.extract_strided_slice %127 {offsets = [0, 512], sizes = [2, 256], strides = [1, 1]} : vector<2x768xf32> to vector<2x256xf32>
    %136 = math.tanh %134 : vector<2x256xf32>
    %137 = arith.mulf %135, %136 : vector<2x256xf32>
    %138 = vector.extract_strided_slice %137 {offsets = [0, 0], sizes = [2, 128], strides = [1, 1]} : vector<2x256xf32> to vector<2x128xf32>
    %c0_39 = arith.constant 0 : index
    %c0_40 = arith.constant 0 : index
    %c0_41 = arith.constant 0 : index
    %139 = vector.load %arg30[%c0_39, %c0_40, %c0_41] : memref<2x4x256xf32, #tpu.memory_space<vmem>>, vector<2x1x128xf32>
    %140 = vector.shape_cast %139 : vector<2x1x128xf32> to vector<2x128xf32>
    %141 = vector.shape_cast %138 : vector<2x128xf32> to vector<2x1x128xf32>
    tpu.vector_store %arg30[%c0_39, %c0_40, %c0_41], %141 {strides = array<i32>} : memref<2x4x256xf32, #tpu.memory_space<vmem>>, vector<2x1x128xf32>,
    %142 = vector.extract_strided_slice %137 {offsets = [0, 128], sizes = [2, 128], strides = [1, 1]} : vector<2x256xf32> to vector<2x128xf32>
    %c0_42 = arith.constant 0 : index
    %c3 = arith.constant 3 : index
    %c128 = arith.constant 128 : index
    %143 = vector.load %arg30[%c0_42, %c3, %c128] : memref<2x4x256xf32, #tpu.memory_space<vmem>>, vector<2x1x128xf32>
    %144 = vector.shape_cast %143 : vector<2x1x128xf32> to vector<2x128xf32>
    %145 = vector.shape_cast %142 : vector<2x128xf32> to vector<2x1x128xf32>
    tpu.vector_store %arg30[%c0_42, %c3, %c128], %145 {strides = array<i32>} : memref<2x4x256xf32, #tpu.memory_space<vmem>>, vector<2x1x128xf32>,
    %146 = vector.extract_strided_slice %113 {offsets = [0, 1, 0], sizes = [2, 1, 1024], strides = [1, 1, 1]} : vector<2x4x1024xf32> to vector<2x1x1024xf32>
    %147 = vector.shape_cast %146 : vector<2x1x1024xf32> to vector<2x1024xf32>
    %148 = arith.truncf %137 : vector<2x256xf32> to vector<2x256xbf16>
    %cst_43 = arith.constant dense<0.000000e+00> : vector<2x1024xf32>
    %149 = tpu.matmul %148, %114, %cst_43 {dimension_numbers = #tpu.dot_dimension_numbers<[1], [0], [0], [1], [0, 0, 1, 1], [], []>} : vector<2x256xbf16>, vector<256x1024xbf16>, vector<2x1024xf32> -> vector<2x1024xf32>
    %150 = arith.addf %147, %149 : vector<2x1024xf32>
    %151 = vector.extract_strided_slice %150 {offsets = [0, 0], sizes = [2, 768], strides = [1, 1]} : vector<2x1024xf32> to vector<2x768xf32>
    %152 = arith.negf %151 : vector<2x768xf32>
    %153 = math.exp %152 : vector<2x768xf32>
    %cst_44 = arith.constant 1.000000e+00 : f32
    %154 = vector.broadcast %cst_44 : f32 to vector<2x768xf32>
    %155 = arith.addf %154, %153 : vector<2x768xf32>
    %156 = arith.divf %154, %155 : vector<2x768xf32>
    %157 = vector.extract_strided_slice %150 {offsets = [0, 768], sizes = [2, 256], strides = [1, 1]} : vector<2x1024xf32> to vector<2x256xf32>
    %158 = math.tanh %157 : vector<2x256xf32>
    %159 = vector.extract_strided_slice %156 {offsets = [0, 256], sizes = [2, 256], strides = [1, 1]} : vector<2x768xf32> to vector<2x256xf32>
    %160 = arith.mulf %159, %134 : vector<2x256xf32>
    %161 = vector.extract_strided_slice %156 {offsets = [0, 0], sizes = [2, 256], strides = [1, 1]} : vector<2x768xf32> to vector<2x256xf32>
    %162 = arith.mulf %161, %158 : vector<2x256xf32>
    %163 = arith.addf %160, %162 : vector<2x256xf32>
    %164 = vector.extract_strided_slice %156 {offsets = [0, 512], sizes = [2, 256], strides = [1, 1]} : vector<2x768xf32> to vector<2x256xf32>
    %165 = math.tanh %163 : vector<2x256xf32>
    %166 = arith.mulf %164, %165 : vector<2x256xf32>
    %167 = vector.extract_strided_slice %166 {offsets = [0, 0], sizes = [2, 128], strides = [1, 1]} : vector<2x256xf32> to vector<2x128xf32>
    %c0_45 = arith.constant 0 : index
    %c1_46 = arith.constant 1 : index
    %c0_47 = arith.constant 0 : index
    %168 = vector.load %arg30[%c0_45, %c1_46, %c0_47] : memref<2x4x256xf32, #tpu.memory_space<vmem>>, vector<2x1x128xf32>
    %169 = vector.shape_cast %168 : vector<2x1x128xf32> to vector<2x128xf32>
    %170 = vector.shape_cast %167 : vector<2x128xf32> to vector<2x1x128xf32>
    tpu.vector_store %arg30[%c0_45, %c1_46, %c0_47], %170 {strides = array<i32>} : memref<2x4x256xf32, #tpu.memory_space<vmem>>, vector<2x1x128xf32>,
    %171 = vector.extract_strided_slice %166 {offsets = [0, 128], sizes = [2, 128], strides = [1, 1]} : vector<2x256xf32> to vector<2x128xf32>
    %c0_48 = arith.constant 0 : index
    %c2_49 = arith.constant 2 : index
    %c128_50 = arith.constant 128 : index
    %172 = vector.load %arg30[%c0_48, %c2_49, %c128_50] : memref<2x4x256xf32, #tpu.memory_space<vmem>>, vector<2x1x128xf32>
    %173 = vector.shape_cast %172 : vector<2x1x128xf32> to vector<2x128xf32>
    %174 = vector.shape_cast %171 : vector<2x128xf32> to vector<2x1x128xf32>
    tpu.vector_store %arg30[%c0_48, %c2_49, %c128_50], %174 {strides = array<i32>} : memref<2x4x256xf32, #tpu.memory_space<vmem>>, vector<2x1x128xf32>,
    %175 = vector.extract_strided_slice %113 {offsets = [0, 2, 0], sizes = [2, 1, 1024], strides = [1, 1, 1]} : vector<2x4x1024xf32> to vector<2x1x1024xf32>
    %176 = vector.shape_cast %175 : vector<2x1x1024xf32> to vector<2x1024xf32>
    %177 = arith.truncf %166 : vector<2x256xf32> to vector<2x256xbf16>
    %cst_51 = arith.constant dense<0.000000e+00> : vector<2x1024xf32>
    %178 = tpu.matmul %177, %114, %cst_51 {dimension_numbers = #tpu.dot_dimension_numbers<[1], [0], [0], [1], [0, 0, 1, 1], [], []>} : vector<2x256xbf16>, vector<256x1024xbf16>, vector<2x1024xf32> -> vector<2x1024xf32>
    %179 = arith.addf %176, %178 : vector<2x1024xf32>
    %180 = vector.extract_strided_slice %179 {offsets = [0, 0], sizes = [2, 768], strides = [1, 1]} : vector<2x1024xf32> to vector<2x768xf32>
    %181 = arith.negf %180 : vector<2x768xf32>
    %182 = math.exp %181 : vector<2x768xf32>
    %cst_52 = arith.constant 1.000000e+00 : f32
    %183 = vector.broadcast %cst_52 : f32 to vector<2x768xf32>
    %184 = arith.addf %183, %182 : vector<2x768xf32>
    %185 = arith.divf %183, %184 : vector<2x768xf32>
    %186 = vector.extract_strided_slice %179 {offsets = [0, 768], sizes = [2, 256], strides = [1, 1]} : vector<2x1024xf32> to vector<2x256xf32>
    %187 = math.tanh %186 : vector<2x256xf32>
    %188 = vector.extract_strided_slice %185 {offsets = [0, 256], sizes = [2, 256], strides = [1, 1]} : vector<2x768xf32> to vector<2x256xf32>
    %189 = arith.mulf %188, %163 : vector<2x256xf32>
    %190 = vector.extract_strided_slice %185 {offsets = [0, 0], sizes = [2, 256], strides = [1, 1]} : vector<2x768xf32> to vector<2x256xf32>
    %191 = arith.mulf %190, %187 : vector<2x256xf32>
    %192 = arith.addf %189, %191 : vector<2x256xf32>
    %193 = vector.extract_strided_slice %185 {offsets = [0, 512], sizes = [2, 256], strides = [1, 1]} : vector<2x768xf32> to vector<2x256xf32>
    %194 = math.tanh %192 : vector<2x256xf32>
    %195 = arith.mulf %193, %194 : vector<2x256xf32>
    %196 = vector.extract_strided_slice %195 {offsets = [0, 0], sizes = [2, 128], strides = [1, 1]} : vector<2x256xf32> to vector<2x128xf32>
    %c0_53 = arith.constant 0 : index
    %c2_54 = arith.constant 2 : index
    %c0_55 = arith.constant 0 : index
    %197 = vector.load %arg30[%c0_53, %c2_54, %c0_55] : memref<2x4x256xf32, #tpu.memory_space<vmem>>, vector<2x1x128xf32>
    %198 = vector.shape_cast %197 : vector<2x1x128xf32> to vector<2x128xf32>
    %199 = vector.shape_cast %196 : vector<2x128xf32> to vector<2x1x128xf32>
    tpu.vector_store %arg30[%c0_53, %c2_54, %c0_55], %199 {strides = array<i32>} : memref<2x4x256xf32, #tpu.memory_space<vmem>>, vector<2x1x128xf32>,
    %200 = vector.extract_strided_slice %195 {offsets = [0, 128], sizes = [2, 128], strides = [1, 1]} : vector<2x256xf32> to vector<2x128xf32>
    %c0_56 = arith.constant 0 : index
    %c1_57 = arith.constant 1 : index
    %c128_58 = arith.constant 128 : index
    %201 = vector.load %arg30[%c0_56, %c1_57, %c128_58] : memref<2x4x256xf32, #tpu.memory_space<vmem>>, vector<2x1x128xf32>
    %202 = vector.shape_cast %201 : vector<2x1x128xf32> to vector<2x128xf32>
    %203 = vector.shape_cast %200 : vector<2x128xf32> to vector<2x1x128xf32>
    tpu.vector_store %arg30[%c0_56, %c1_57, %c128_58], %203 {strides = array<i32>} : memref<2x4x256xf32, #tpu.memory_space<vmem>>, vector<2x1x128xf32>,
    %204 = vector.extract_strided_slice %113 {offsets = [0, 3, 0], sizes = [2, 1, 1024], strides = [1, 1, 1]} : vector<2x4x1024xf32> to vector<2x1x1024xf32>
    %205 = vector.shape_cast %204 : vector<2x1x1024xf32> to vector<2x1024xf32>
    %206 = arith.truncf %195 : vector<2x256xf32> to vector<2x256xbf16>
    %cst_59 = arith.constant dense<0.000000e+00> : vector<2x1024xf32>
    %207 = tpu.matmul %206, %114, %cst_59 {dimension_numbers = #tpu.dot_dimension_numbers<[1], [0], [0], [1], [0, 0, 1, 1], [], []>} : vector<2x256xbf16>, vector<256x1024xbf16>, vector<2x1024xf32> -> vector<2x1024xf32>
    %208 = arith.addf %205, %207 : vector<2x1024xf32>
    %209 = vector.extract_strided_slice %208 {offsets = [0, 0], sizes = [2, 768], strides = [1, 1]} : vector<2x1024xf32> to vector<2x768xf32>
    %210 = arith.negf %209 : vector<2x768xf32>
    %211 = math.exp %210 : vector<2x768xf32>
    %cst_60 = arith.constant 1.000000e+00 : f32
    %212 = vector.broadcast %cst_60 : f32 to vector<2x768xf32>
    %213 = arith.addf %212, %211 : vector<2x768xf32>
    %214 = arith.divf %212, %213 : vector<2x768xf32>
    %215 = vector.extract_strided_slice %208 {offsets = [0, 768], sizes = [2, 256], strides = [1, 1]} : vector<2x1024xf32> to vector<2x256xf32>
    %216 = math.tanh %215 : vector<2x256xf32>
    %217 = vector.extract_strided_slice %214 {offsets = [0, 256], sizes = [2, 256], strides = [1, 1]} : vector<2x768xf32> to vector<2x256xf32>
    %218 = arith.mulf %217, %192 : vector<2x256xf32>
    %219 = vector.extract_strided_slice %214 {offsets = [0, 0], sizes = [2, 256], strides = [1, 1]} : vector<2x768xf32> to vector<2x256xf32>
    %220 = arith.mulf %219, %216 : vector<2x256xf32>
    %221 = arith.addf %218, %220 : vector<2x256xf32>
    %222 = vector.extract_strided_slice %214 {offsets = [0, 512], sizes = [2, 256], strides = [1, 1]} : vector<2x768xf32> to vector<2x256xf32>
    %223 = math.tanh %221 : vector<2x256xf32>
    %224 = arith.mulf %222, %223 : vector<2x256xf32>
    %225 = vector.extract_strided_slice %224 {offsets = [0, 0], sizes = [2, 128], strides = [1, 1]} : vector<2x256xf32> to vector<2x128xf32>
    %c0_61 = arith.constant 0 : index
    %c3_62 = arith.constant 3 : index
    %c0_63 = arith.constant 0 : index
    %226 = vector.load %arg30[%c0_61, %c3_62, %c0_63] : memref<2x4x256xf32, #tpu.memory_space<vmem>>, vector<2x1x128xf32>
    %227 = vector.shape_cast %226 : vector<2x1x128xf32> to vector<2x128xf32>
    %228 = vector.shape_cast %225 : vector<2x128xf32> to vector<2x1x128xf32>
    tpu.vector_store %arg30[%c0_61, %c3_62, %c0_63], %228 {strides = array<i32>} : memref<2x4x256xf32, #tpu.memory_space<vmem>>, vector<2x1x128xf32>,
    %229 = vector.extract_strided_slice %224 {offsets = [0, 128], sizes = [2, 128], strides = [1, 1]} : vector<2x256xf32> to vector<2x128xf32>
    %c0_64 = arith.constant 0 : index
    %c0_65 = arith.constant 0 : index
    %c128_66 = arith.constant 128 : index
    %230 = vector.load %arg30[%c0_64, %c0_65, %c128_66] : memref<2x4x256xf32, #tpu.memory_space<vmem>>, vector<2x1x128xf32>
    %231 = vector.shape_cast %230 : vector<2x1x128xf32> to vector<2x128xf32>
    %232 = vector.shape_cast %229 : vector<2x128xf32> to vector<2x1x128xf32>
    tpu.vector_store %arg30[%c0_64, %c0_65, %c128_66], %232 {strides = array<i32>} : memref<2x4x256xf32, #tpu.memory_space<vmem>>, vector<2x1x128xf32>,
    %c0_i32_67 = arith.constant 0 : i32
    %233 = tpu.memref_slice %arg29[%c0_i32_67] : memref<4x!tpu.dma_semaphore, #tpu.memory_space<semaphore_mem>> -> memref<1x!tpu.dma_semaphore, #tpu.memory_space<semaphore_mem>>
    %234 = tpu.memref_squeeze %233 : memref<1x!tpu.dma_semaphore, #tpu.memory_space<semaphore_mem>> -> memref<!tpu.dma_semaphore, #tpu.memory_space<semaphore_mem>>
    tpu.wait_dma2 semaphore(%234 : memref<!tpu.dma_semaphore, #tpu.memory_space<semaphore_mem>>) src(%arg10 : memref<512x1024xbf16, #tpu.memory_space<any>>) dst(%arg25 : memref<512x1024xbf16, #tpu.memory_space<vmem>>)
    %c1_i32_68 = arith.constant 1 : i32
    %235 = tpu.memref_slice %arg29[%c1_i32_68] : memref<4x!tpu.dma_semaphore, #tpu.memory_space<semaphore_mem>> -> memref<1x!tpu.dma_semaphore, #tpu.memory_space<semaphore_mem>>
    %236 = tpu.memref_squeeze %235 : memref<1x!tpu.dma_semaphore, #tpu.memory_space<semaphore_mem>> -> memref<!tpu.dma_semaphore, #tpu.memory_space<semaphore_mem>>
    tpu.wait_dma2 semaphore(%236 : memref<!tpu.dma_semaphore, #tpu.memory_space<semaphore_mem>>) src(%arg11 : memref<256x1024xbf16, #tpu.memory_space<any>>) dst(%arg26 : memref<256x1024xbf16, #tpu.memory_space<vmem>>)
    %c0_69 = arith.constant 0 : index
    %c0_70 = arith.constant 0 : index
    %c0_71 = arith.constant 0 : index
    %237 = vector.load %arg30[%c0_69, %c0_70, %c0_71] : memref<2x4x256xf32, #tpu.memory_space<vmem>>, vector<2x4x256xf32>
    %238 = vector.extract_strided_slice %237 {offsets = [0, 3, 0], sizes = [2, 1, 256], strides = [1, 1, 1]} : vector<2x4x256xf32> to vector<2x1x256xf32>
    %239 = vector.extract_strided_slice %237 {offsets = [0, 2, 0], sizes = [2, 1, 256], strides = [1, 1, 1]} : vector<2x4x256xf32> to vector<2x1x256xf32>
    %240 = vector.extract_strided_slice %237 {offsets = [0, 1, 0], sizes = [2, 1, 256], strides = [1, 1, 1]} : vector<2x4x256xf32> to vector<2x1x256xf32>
    %241 = vector.extract_strided_slice %237 {offsets = [0, 0, 0], sizes = [2, 1, 256], strides = [1, 1, 1]} : vector<2x4x256xf32> to vector<2x1x256xf32>
    %242 = tpu.concatenate %238, %239, %240, %241 in 1 : vector<2x1x256xf32>, vector<2x1x256xf32>, vector<2x1x256xf32>, vector<2x1x256xf32> -> vector<2x4x256xf32>
    %243 = tpu.concatenate %237, %242 in 2 : vector<2x4x256xf32>, vector<2x4x256xf32> -> vector<2x4x512xf32>
    %244 = vector.shape_cast %243 : vector<2x4x512xf32> to vector<8x512xf32>
    %245 = arith.truncf %244 : vector<8x512xf32> to vector<8x512xbf16>
    %c0_72 = arith.constant 0 : index
    %c0_73 = arith.constant 0 : index
    %246 = vector.load %arg25[%c0_72, %c0_73] : memref<512x1024xbf16, #tpu.memory_space<vmem>>, vector<512x1024xbf16>
    %cst_74 = arith.constant dense<0.000000e+00> : vector<8x1024xf32>
    %247 = tpu.matmul %245, %246, %cst_74 {dimension_numbers = #tpu.dot_dimension_numbers<[1], [0], [0], [1], [0, 0, 1, 1], [], []>} : vector<8x512xbf16>, vector<512x1024xbf16>, vector<8x1024xf32> -> vector<8x1024xf32>
    %c0_75 = arith.constant 0 : index
    %c0_76 = arith.constant 0 : index
    %248 = vector.load %arg12[%c0_75, %c0_76] : memref<1x1024xf32, #tpu.memory_space<vmem>>, vector<1x1024xf32>
    %249 = vector.broadcast %248 : vector<1x1024xf32> to vector<8x1024xf32>
    %250 = arith.addf %247, %249 : vector<8x1024xf32>
    %251 = vector.shape_cast %250 : vector<8x1024xf32> to vector<2x4x1024xf32>
    %c0_77 = arith.constant 0 : index
    %c0_78 = arith.constant 0 : index
    %252 = vector.load %arg26[%c0_77, %c0_78] : memref<256x1024xbf16, #tpu.memory_space<vmem>>, vector<256x1024xbf16>
    %cst_79 = arith.constant 0.000000e+00 : f32
    %253 = vector.broadcast %cst_79 : f32 to vector<2x256xf32>
    %cst_80 = arith.constant 0.000000e+00 : f32
    %254 = vector.broadcast %cst_80 : f32 to vector<2x256xf32>
    %255 = vector.extract_strided_slice %251 {offsets = [0, 0, 0], sizes = [2, 1, 1024], strides = [1, 1, 1]} : vector<2x4x1024xf32> to vector<2x1x1024xf32>
    %256 = vector.shape_cast %255 : vector<2x1x1024xf32> to vector<2x1024xf32>
    %257 = arith.truncf %253 : vector<2x256xf32> to vector<2x256xbf16>
    %cst_81 = arith.constant dense<0.000000e+00> : vector<2x1024xf32>
    %258 = tpu.matmul %257, %252, %cst_81 {dimension_numbers = #tpu.dot_dimension_numbers<[1], [0], [0], [1], [0, 0, 1, 1], [], []>} : vector<2x256xbf16>, vector<256x1024xbf16>, vector<2x1024xf32> -> vector<2x1024xf32>
    %259 = arith.addf %256, %258 : vector<2x1024xf32>
    %260 = vector.extract_strided_slice %259 {offsets = [0, 0], sizes = [2, 768], strides = [1, 1]} : vector<2x1024xf32> to vector<2x768xf32>
    %261 = arith.negf %260 : vector<2x768xf32>
    %262 = math.exp %261 : vector<2x768xf32>
    %cst_82 = arith.constant 1.000000e+00 : f32
    %263 = vector.broadcast %cst_82 : f32 to vector<2x768xf32>
    %264 = arith.addf %263, %262 : vector<2x768xf32>
    %265 = arith.divf %263, %264 : vector<2x768xf32>
    %266 = vector.extract_strided_slice %259 {offsets = [0, 768], sizes = [2, 256], strides = [1, 1]} : vector<2x1024xf32> to vector<2x256xf32>
    %267 = math.tanh %266 : vector<2x256xf32>
    %268 = vector.extract_strided_slice %265 {offsets = [0, 256], sizes = [2, 256], strides = [1, 1]} : vector<2x768xf32> to vector<2x256xf32>
    %269 = arith.mulf %268, %254 : vector<2x256xf32>
    %270 = vector.extract_strided_slice %265 {offsets = [0, 0], sizes = [2, 256], strides = [1, 1]} : vector<2x768xf32> to vector<2x256xf32>
    %271 = arith.mulf %270, %267 : vector<2x256xf32>
    %272 = arith.addf %269, %271 : vector<2x256xf32>
    %273 = vector.extract_strided_slice %265 {offsets = [0, 512], sizes = [2, 256], strides = [1, 1]} : vector<2x768xf32> to vector<2x256xf32>
    %274 = math.tanh %272 : vector<2x256xf32>
    %275 = arith.mulf %273, %274 : vector<2x256xf32>
    %276 = vector.extract_strided_slice %275 {offsets = [0, 0], sizes = [2, 128], strides = [1, 1]} : vector<2x256xf32> to vector<2x128xf32>
    %c0_83 = arith.constant 0 : index
    %c0_84 = arith.constant 0 : index
    %c0_85 = arith.constant 0 : index
    %277 = vector.load %arg31[%c0_83, %c0_84, %c0_85] : memref<2x4x256xf32, #tpu.memory_space<vmem>>, vector<2x1x128xf32>
    %278 = vector.shape_cast %277 : vector<2x1x128xf32> to vector<2x128xf32>
    %279 = vector.shape_cast %276 : vector<2x128xf32> to vector<2x1x128xf32>
    tpu.vector_store %arg31[%c0_83, %c0_84, %c0_85], %279 {strides = array<i32>} : memref<2x4x256xf32, #tpu.memory_space<vmem>>, vector<2x1x128xf32>,
    %280 = vector.extract_strided_slice %275 {offsets = [0, 128], sizes = [2, 128], strides = [1, 1]} : vector<2x256xf32> to vector<2x128xf32>
    %c0_86 = arith.constant 0 : index
    %c3_87 = arith.constant 3 : index
    %c128_88 = arith.constant 128 : index
    %281 = vector.load %arg31[%c0_86, %c3_87, %c128_88] : memref<2x4x256xf32, #tpu.memory_space<vmem>>, vector<2x1x128xf32>
    %282 = vector.shape_cast %281 : vector<2x1x128xf32> to vector<2x128xf32>
    %283 = vector.shape_cast %280 : vector<2x128xf32> to vector<2x1x128xf32>
    tpu.vector_store %arg31[%c0_86, %c3_87, %c128_88], %283 {strides = array<i32>} : memref<2x4x256xf32, #tpu.memory_space<vmem>>, vector<2x1x128xf32>,
    %284 = vector.extract_strided_slice %251 {offsets = [0, 1, 0], sizes = [2, 1, 1024], strides = [1, 1, 1]} : vector<2x4x1024xf32> to vector<2x1x1024xf32>
    %285 = vector.shape_cast %284 : vector<2x1x1024xf32> to vector<2x1024xf32>
    %286 = arith.truncf %275 : vector<2x256xf32> to vector<2x256xbf16>
    %cst_89 = arith.constant dense<0.000000e+00> : vector<2x1024xf32>
    %287 = tpu.matmul %286, %252, %cst_89 {dimension_numbers = #tpu.dot_dimension_numbers<[1], [0], [0], [1], [0, 0, 1, 1], [], []>} : vector<2x256xbf16>, vector<256x1024xbf16>, vector<2x1024xf32> -> vector<2x1024xf32>
    %288 = arith.addf %285, %287 : vector<2x1024xf32>
    %289 = vector.extract_strided_slice %288 {offsets = [0, 0], sizes = [2, 768], strides = [1, 1]} : vector<2x1024xf32> to vector<2x768xf32>
    %290 = arith.negf %289 : vector<2x768xf32>
    %291 = math.exp %290 : vector<2x768xf32>
    %cst_90 = arith.constant 1.000000e+00 : f32
    %292 = vector.broadcast %cst_90 : f32 to vector<2x768xf32>
    %293 = arith.addf %292, %291 : vector<2x768xf32>
    %294 = arith.divf %292, %293 : vector<2x768xf32>
    %295 = vector.extract_strided_slice %288 {offsets = [0, 768], sizes = [2, 256], strides = [1, 1]} : vector<2x1024xf32> to vector<2x256xf32>
    %296 = math.tanh %295 : vector<2x256xf32>
    %297 = vector.extract_strided_slice %294 {offsets = [0, 256], sizes = [2, 256], strides = [1, 1]} : vector<2x768xf32> to vector<2x256xf32>
    %298 = arith.mulf %297, %272 : vector<2x256xf32>
    %299 = vector.extract_strided_slice %294 {offsets = [0, 0], sizes = [2, 256], strides = [1, 1]} : vector<2x768xf32> to vector<2x256xf32>
    %300 = arith.mulf %299, %296 : vector<2x256xf32>
    %301 = arith.addf %298, %300 : vector<2x256xf32>
    %302 = vector.extract_strided_slice %294 {offsets = [0, 512], sizes = [2, 256], strides = [1, 1]} : vector<2x768xf32> to vector<2x256xf32>
    %303 = math.tanh %301 : vector<2x256xf32>
    %304 = arith.mulf %302, %303 : vector<2x256xf32>
    %305 = vector.extract_strided_slice %304 {offsets = [0, 0], sizes = [2, 128], strides = [1, 1]} : vector<2x256xf32> to vector<2x128xf32>
    %c0_91 = arith.constant 0 : index
    %c1_92 = arith.constant 1 : index
    %c0_93 = arith.constant 0 : index
    %306 = vector.load %arg31[%c0_91, %c1_92, %c0_93] : memref<2x4x256xf32, #tpu.memory_space<vmem>>, vector<2x1x128xf32>
    %307 = vector.shape_cast %306 : vector<2x1x128xf32> to vector<2x128xf32>
    %308 = vector.shape_cast %305 : vector<2x128xf32> to vector<2x1x128xf32>
    tpu.vector_store %arg31[%c0_91, %c1_92, %c0_93], %308 {strides = array<i32>} : memref<2x4x256xf32, #tpu.memory_space<vmem>>, vector<2x1x128xf32>,
    %309 = vector.extract_strided_slice %304 {offsets = [0, 128], sizes = [2, 128], strides = [1, 1]} : vector<2x256xf32> to vector<2x128xf32>
    %c0_94 = arith.constant 0 : index
    %c2_95 = arith.constant 2 : index
    %c128_96 = arith.constant 128 : index
    %310 = vector.load %arg31[%c0_94, %c2_95, %c128_96] : memref<2x4x256xf32, #tpu.memory_space<vmem>>, vector<2x1x128xf32>
    %311 = vector.shape_cast %310 : vector<2x1x128xf32> to vector<2x128xf32>
    %312 = vector.shape_cast %309 : vector<2x128xf32> to vector<2x1x128xf32>
    tpu.vector_store %arg31[%c0_94, %c2_95, %c128_96], %312 {strides = array<i32>} : memref<2x4x256xf32, #tpu.memory_space<vmem>>, vector<2x1x128xf32>,
    %313 = vector.extract_strided_slice %251 {offsets = [0, 2, 0], sizes = [2, 1, 1024], strides = [1, 1, 1]} : vector<2x4x1024xf32> to vector<2x1x1024xf32>
    %314 = vector.shape_cast %313 : vector<2x1x1024xf32> to vector<2x1024xf32>
    %315 = arith.truncf %304 : vector<2x256xf32> to vector<2x256xbf16>
    %cst_97 = arith.constant dense<0.000000e+00> : vector<2x1024xf32>
    %316 = tpu.matmul %315, %252, %cst_97 {dimension_numbers = #tpu.dot_dimension_numbers<[1], [0], [0], [1], [0, 0, 1, 1], [], []>} : vector<2x256xbf16>, vector<256x1024xbf16>, vector<2x1024xf32> -> vector<2x1024xf32>
    %317 = arith.addf %314, %316 : vector<2x1024xf32>
    %318 = vector.extract_strided_slice %317 {offsets = [0, 0], sizes = [2, 768], strides = [1, 1]} : vector<2x1024xf32> to vector<2x768xf32>
    %319 = arith.negf %318 : vector<2x768xf32>
    %320 = math.exp %319 : vector<2x768xf32>
    %cst_98 = arith.constant 1.000000e+00 : f32
    %321 = vector.broadcast %cst_98 : f32 to vector<2x768xf32>
    %322 = arith.addf %321, %320 : vector<2x768xf32>
    %323 = arith.divf %321, %322 : vector<2x768xf32>
    %324 = vector.extract_strided_slice %317 {offsets = [0, 768], sizes = [2, 256], strides = [1, 1]} : vector<2x1024xf32> to vector<2x256xf32>
    %325 = math.tanh %324 : vector<2x256xf32>
    %326 = vector.extract_strided_slice %323 {offsets = [0, 256], sizes = [2, 256], strides = [1, 1]} : vector<2x768xf32> to vector<2x256xf32>
    %327 = arith.mulf %326, %301 : vector<2x256xf32>
    %328 = vector.extract_strided_slice %323 {offsets = [0, 0], sizes = [2, 256], strides = [1, 1]} : vector<2x768xf32> to vector<2x256xf32>
    %329 = arith.mulf %328, %325 : vector<2x256xf32>
    %330 = arith.addf %327, %329 : vector<2x256xf32>
    %331 = vector.extract_strided_slice %323 {offsets = [0, 512], sizes = [2, 256], strides = [1, 1]} : vector<2x768xf32> to vector<2x256xf32>
    %332 = math.tanh %330 : vector<2x256xf32>
    %333 = arith.mulf %331, %332 : vector<2x256xf32>
    %334 = vector.extract_strided_slice %333 {offsets = [0, 0], sizes = [2, 128], strides = [1, 1]} : vector<2x256xf32> to vector<2x128xf32>
    %c0_99 = arith.constant 0 : index
    %c2_100 = arith.constant 2 : index
    %c0_101 = arith.constant 0 : index
    %335 = vector.load %arg31[%c0_99, %c2_100, %c0_101] : memref<2x4x256xf32, #tpu.memory_space<vmem>>, vector<2x1x128xf32>
    %336 = vector.shape_cast %335 : vector<2x1x128xf32> to vector<2x128xf32>
    %337 = vector.shape_cast %334 : vector<2x128xf32> to vector<2x1x128xf32>
    tpu.vector_store %arg31[%c0_99, %c2_100, %c0_101], %337 {strides = array<i32>} : memref<2x4x256xf32, #tpu.memory_space<vmem>>, vector<2x1x128xf32>,
    %338 = vector.extract_strided_slice %333 {offsets = [0, 128], sizes = [2, 128], strides = [1, 1]} : vector<2x256xf32> to vector<2x128xf32>
    %c0_102 = arith.constant 0 : index
    %c1_103 = arith.constant 1 : index
    %c128_104 = arith.constant 128 : index
    %339 = vector.load %arg31[%c0_102, %c1_103, %c128_104] : memref<2x4x256xf32, #tpu.memory_space<vmem>>, vector<2x1x128xf32>
    %340 = vector.shape_cast %339 : vector<2x1x128xf32> to vector<2x128xf32>
    %341 = vector.shape_cast %338 : vector<2x128xf32> to vector<2x1x128xf32>
    tpu.vector_store %arg31[%c0_102, %c1_103, %c128_104], %341 {strides = array<i32>} : memref<2x4x256xf32, #tpu.memory_space<vmem>>, vector<2x1x128xf32>,
    %342 = vector.extract_strided_slice %251 {offsets = [0, 3, 0], sizes = [2, 1, 1024], strides = [1, 1, 1]} : vector<2x4x1024xf32> to vector<2x1x1024xf32>
    %343 = vector.shape_cast %342 : vector<2x1x1024xf32> to vector<2x1024xf32>
    %344 = arith.truncf %333 : vector<2x256xf32> to vector<2x256xbf16>
    %cst_105 = arith.constant dense<0.000000e+00> : vector<2x1024xf32>
    %345 = tpu.matmul %344, %252, %cst_105 {dimension_numbers = #tpu.dot_dimension_numbers<[1], [0], [0], [1], [0, 0, 1, 1], [], []>} : vector<2x256xbf16>, vector<256x1024xbf16>, vector<2x1024xf32> -> vector<2x1024xf32>
    %346 = arith.addf %343, %345 : vector<2x1024xf32>
    %347 = vector.extract_strided_slice %346 {offsets = [0, 0], sizes = [2, 768], strides = [1, 1]} : vector<2x1024xf32> to vector<2x768xf32>
    %348 = arith.negf %347 : vector<2x768xf32>
    %349 = math.exp %348 : vector<2x768xf32>
    %cst_106 = arith.constant 1.000000e+00 : f32
    %350 = vector.broadcast %cst_106 : f32 to vector<2x768xf32>
    %351 = arith.addf %350, %349 : vector<2x768xf32>
    %352 = arith.divf %350, %351 : vector<2x768xf32>
    %353 = vector.extract_strided_slice %346 {offsets = [0, 768], sizes = [2, 256], strides = [1, 1]} : vector<2x1024xf32> to vector<2x256xf32>
    %354 = math.tanh %353 : vector<2x256xf32>
    %355 = vector.extract_strided_slice %352 {offsets = [0, 256], sizes = [2, 256], strides = [1, 1]} : vector<2x768xf32> to vector<2x256xf32>
    %356 = arith.mulf %355, %330 : vector<2x256xf32>
    %357 = vector.extract_strided_slice %352 {offsets = [0, 0], sizes = [2, 256], strides = [1, 1]} : vector<2x768xf32> to vector<2x256xf32>
    %358 = arith.mulf %357, %354 : vector<2x256xf32>
    %359 = arith.addf %356, %358 : vector<2x256xf32>
    %360 = vector.extract_strided_slice %352 {offsets = [0, 512], sizes = [2, 256], strides = [1, 1]} : vector<2x768xf32> to vector<2x256xf32>
    %361 = math.tanh %359 : vector<2x256xf32>
    %362 = arith.mulf %360, %361 : vector<2x256xf32>
    %363 = vector.extract_strided_slice %362 {offsets = [0, 0], sizes = [2, 128], strides = [1, 1]} : vector<2x256xf32> to vector<2x128xf32>
    %c0_107 = arith.constant 0 : index
    %c3_108 = arith.constant 3 : index
    %c0_109 = arith.constant 0 : index
    %364 = vector.load %arg31[%c0_107, %c3_108, %c0_109] : memref<2x4x256xf32, #tpu.memory_space<vmem>>, vector<2x1x128xf32>
    %365 = vector.shape_cast %364 : vector<2x1x128xf32> to vector<2x128xf32>
    %366 = vector.shape_cast %363 : vector<2x128xf32> to vector<2x1x128xf32>
    tpu.vector_store %arg31[%c0_107, %c3_108, %c0_109], %366 {strides = array<i32>} : memref<2x4x256xf32, #tpu.memory_space<vmem>>, vector<2x1x128xf32>,
    %367 = vector.extract_strided_slice %362 {offsets = [0, 128], sizes = [2, 128], strides = [1, 1]} : vector<2x256xf32> to vector<2x128xf32>
    %c0_110 = arith.constant 0 : index
    %c0_111 = arith.constant 0 : index
    %c128_112 = arith.constant 128 : index
    %368 = vector.load %arg31[%c0_110, %c0_111, %c128_112] : memref<2x4x256xf32, #tpu.memory_space<vmem>>, vector<2x1x128xf32>
    %369 = vector.shape_cast %368 : vector<2x1x128xf32> to vector<2x128xf32>
    %370 = vector.shape_cast %367 : vector<2x128xf32> to vector<2x1x128xf32>
    tpu.vector_store %arg31[%c0_110, %c0_111, %c128_112], %370 {strides = array<i32>} : memref<2x4x256xf32, #tpu.memory_space<vmem>>, vector<2x1x128xf32>,
    %c0_113 = arith.constant 0 : index
    %c0_114 = arith.constant 0 : index
    %c0_115 = arith.constant 0 : index
    %371 = vector.load %arg31[%c0_113, %c0_114, %c0_115] : memref<2x4x256xf32, #tpu.memory_space<vmem>>, vector<2x4x256xf32>
    %cst_116 = arith.constant dense<0.000000e+00> : vector<2x256xf32>
    %372 = vector.multi_reduction <add>, %371, %cst_116 [1] : vector<2x4x256xf32> to vector<2x256xf32>
    %cst_117 = arith.constant 4.000000e+00 : f32
    %373 = vector.broadcast %cst_117 : f32 to vector<2x256xf32>
    %374 = arith.divf %372, %373 : vector<2x256xf32>
    %cst_118 = arith.constant dense<0xFF800000> : vector<2x256xf32>
    %375 = vector.multi_reduction <maximumf>, %371, %cst_118 [1] : vector<2x4x256xf32> to vector<2x256xf32>
    %376 = tpu.concatenate %374, %375 in 0 : vector<2x256xf32>, vector<2x256xf32> -> vector<4x256xf32>
    %c0_119 = arith.constant 0 : index
    %c0_120 = arith.constant 0 : index
    %377 = vector.load %arg13[%c0_119, %c0_120] : memref<256x16xf32, #tpu.memory_space<vmem>>, vector<256x16xf32>
    %cst_121 = arith.constant dense<0.000000e+00> : vector<4x16xf32>
    %378 = tpu.matmul %376, %377, %cst_121 {dimension_numbers = #tpu.dot_dimension_numbers<[1], [0], [0], [1], [0, 0, 1, 1], [], []>} : vector<4x256xf32>, vector<256x16xf32>, vector<4x16xf32> -> vector<4x16xf32>
    %cst_122 = arith.constant 0.000000e+00 : f32
    %379 = vector.broadcast %cst_122 : f32 to vector<4x16xf32>
    %380 = arith.maximumf %378, %379 : vector<4x16xf32>
    %c0_123 = arith.constant 0 : index
    %c0_124 = arith.constant 0 : index
    %381 = vector.load %arg14[%c0_123, %c0_124] : memref<16x256xf32, #tpu.memory_space<vmem>>, vector<16x256xf32>
    %cst_125 = arith.constant dense<0.000000e+00> : vector<4x256xf32>
    %382 = tpu.matmul %380, %381, %cst_125 {dimension_numbers = #tpu.dot_dimension_numbers<[1], [0], [0], [1], [0, 0, 1, 1], [], []>} : vector<4x16xf32>, vector<16x256xf32>, vector<4x256xf32> -> vector<4x256xf32>
    %383 = vector.extract_strided_slice %382 {offsets = [0, 0], sizes = [2, 256], strides = [1, 1]} : vector<4x256xf32> to vector<2x256xf32>
    %384 = vector.extract_strided_slice %382 {offsets = [2, 0], sizes = [2, 256], strides = [1, 1]} : vector<4x256xf32> to vector<2x256xf32>
    %385 = arith.addf %383, %384 : vector<2x256xf32>
    %386 = arith.negf %385 : vector<2x256xf32>
    %387 = math.exp %386 : vector<2x256xf32>
    %cst_126 = arith.constant 1.000000e+00 : f32
    %388 = vector.broadcast %cst_126 : f32 to vector<2x256xf32>
    %389 = arith.addf %388, %387 : vector<2x256xf32>
    %390 = arith.divf %388, %389 : vector<2x256xf32>
    %391 = vector.shape_cast %390 : vector<2x256xf32> to vector<2x1x256xf32>
    %392 = vector.broadcast %391 : vector<2x1x256xf32> to vector<2x4x256xf32>
    %393 = arith.mulf %371, %392 : vector<2x4x256xf32>
    %cst_127 = arith.constant dense<0.000000e+00> : vector<2x4xf32>
    %394 = vector.multi_reduction <add>, %393, %cst_127 [2] : vector<2x4x256xf32> to vector<2x4xf32>
    %395 = vector.shape_cast %394 : vector<2x4xf32> to vector<2x4x1xf32>
    %cst_128 = arith.constant 2.560000e+02 : f32
    %396 = vector.broadcast %cst_128 : f32 to vector<2x4x1xf32>
    %397 = arith.divf %395, %396 : vector<2x4x1xf32>
    %cst_129 = arith.constant dense<0xFF800000> : vector<2x4xf32>
    %398 = vector.multi_reduction <maximumf>, %393, %cst_129 [2] : vector<2x4x256xf32> to vector<2x4xf32>
    %399 = vector.shape_cast %398 : vector<2x4xf32> to vector<2x4x1xf32>
    %cst_130 = arith.constant 0.000000e+00 : f32
    %400 = vector.broadcast %cst_130 : f32 to vector<2x3x1xf32>
    %401 = tpu.concatenate %400, %397, %400 in 1 : vector<2x3x1xf32>, vector<2x4x1xf32>, vector<2x3x1xf32> -> vector<2x10x1xf32>
    %402 = tpu.concatenate %400, %399, %400 in 1 : vector<2x3x1xf32>, vector<2x4x1xf32>, vector<2x3x1xf32> -> vector<2x10x1xf32>
    %cst_131 = arith.constant 0.000000e+00 : f32
    %403 = vector.broadcast %cst_131 : f32 to vector<2x4x1xf32>
    %c0_132 = arith.constant 0 : index
    %c0_133 = arith.constant 0 : index
    %404 = memref.load %arg15[%c0_132, %c0_133] : memref<2x7xf32, #tpu.memory_space<smem>>
    %405 = vector.extract_strided_slice %401 {offsets = [0, 0, 0], sizes = [2, 4, 1], strides = [1, 1, 1]} : vector<2x10x1xf32> to vector<2x4x1xf32>
    %406 = vector.broadcast %404 : f32 to vector<2x4x1xf32>
    %407 = arith.mulf %406, %405 : vector<2x4x1xf32>
    %408 = arith.addf %403, %407 : vector<2x4x1xf32>
    %c1_134 = arith.constant 1 : index
    %c0_135 = arith.constant 0 : index
    %409 = memref.load %arg15[%c1_134, %c0_135] : memref<2x7xf32, #tpu.memory_space<smem>>
    %410 = vector.extract_strided_slice %402 {offsets = [0, 0, 0], sizes = [2, 4, 1], strides = [1, 1, 1]} : vector<2x10x1xf32> to vector<2x4x1xf32>
    %411 = vector.broadcast %409 : f32 to vector<2x4x1xf32>
    %412 = arith.mulf %411, %410 : vector<2x4x1xf32>
    %413 = arith.addf %408, %412 : vector<2x4x1xf32>
    %c0_136 = arith.constant 0 : index
    %c1_137 = arith.constant 1 : index
    %414 = memref.load %arg15[%c0_136, %c1_137] : memref<2x7xf32, #tpu.memory_space<smem>>
    %415 = vector.extract_strided_slice %401 {offsets = [0, 1, 0], sizes = [2, 4, 1], strides = [1, 1, 1]} : vector<2x10x1xf32> to vector<2x4x1xf32>
    %416 = vector.broadcast %414 : f32 to vector<2x4x1xf32>
    %417 = arith.mulf %416, %415 : vector<2x4x1xf32>
    %418 = arith.addf %413, %417 : vector<2x4x1xf32>
    %c1_138 = arith.constant 1 : index
    %c1_139 = arith.constant 1 : index
    %419 = memref.load %arg15[%c1_138, %c1_139] : memref<2x7xf32, #tpu.memory_space<smem>>
    %420 = vector.extract_strided_slice %402 {offsets = [0, 1, 0], sizes = [2, 4, 1], strides = [1, 1, 1]} : vector<2x10x1xf32> to vector<2x4x1xf32>
    %421 = vector.broadcast %419 : f32 to vector<2x4x1xf32>
    %422 = arith.mulf %421, %420 : vector<2x4x1xf32>
    %423 = arith.addf %418, %422 : vector<2x4x1xf32>
    %c0_140 = arith.constant 0 : index
    %c2_141 = arith.constant 2 : index
    %424 = memref.load %arg15[%c0_140, %c2_141] : memref<2x7xf32, #tpu.memory_space<smem>>
    %425 = vector.extract_strided_slice %401 {offsets = [0, 2, 0], sizes = [2, 4, 1], strides = [1, 1, 1]} : vector<2x10x1xf32> to vector<2x4x1xf32>
    %426 = vector.broadcast %424 : f32 to vector<2x4x1xf32>
    %427 = arith.mulf %426, %425 : vector<2x4x1xf32>
    %428 = arith.addf %423, %427 : vector<2x4x1xf32>
    %c1_142 = arith.constant 1 : index
    %c2_143 = arith.constant 2 : index
    %429 = memref.load %arg15[%c1_142, %c2_143] : memref<2x7xf32, #tpu.memory_space<smem>>
    %430 = vector.extract_strided_slice %402 {offsets = [0, 2, 0], sizes = [2, 4, 1], strides = [1, 1, 1]} : vector<2x10x1xf32> to vector<2x4x1xf32>
    %431 = vector.broadcast %429 : f32 to vector<2x4x1xf32>
    %432 = arith.mulf %431, %430 : vector<2x4x1xf32>
    %433 = arith.addf %428, %432 : vector<2x4x1xf32>
    %c0_144 = arith.constant 0 : index
    %c3_145 = arith.constant 3 : index
    %434 = memref.load %arg15[%c0_144, %c3_145] : memref<2x7xf32, #tpu.memory_space<smem>>
    %435 = vector.extract_strided_slice %401 {offsets = [0, 3, 0], sizes = [2, 4, 1], strides = [1, 1, 1]} : vector<2x10x1xf32> to vector<2x4x1xf32>
    %436 = vector.broadcast %434 : f32 to vector<2x4x1xf32>
    %437 = arith.mulf %436, %435 : vector<2x4x1xf32>
    %438 = arith.addf %433, %437 : vector<2x4x1xf32>
    %c1_146 = arith.constant 1 : index
    %c3_147 = arith.constant 3 : index
    %439 = memref.load %arg15[%c1_146, %c3_147] : memref<2x7xf32, #tpu.memory_space<smem>>
    %440 = vector.extract_strided_slice %402 {offsets = [0, 3, 0], sizes = [2, 4, 1], strides = [1, 1, 1]} : vector<2x10x1xf32> to vector<2x4x1xf32>
    %441 = vector.broadcast %439 : f32 to vector<2x4x1xf32>
    %442 = arith.mulf %441, %440 : vector<2x4x1xf32>
    %443 = arith.addf %438, %442 : vector<2x4x1xf32>
    %c0_148 = arith.constant 0 : index
    %c4 = arith.constant 4 : index
    %444 = memref.load %arg15[%c0_148, %c4] : memref<2x7xf32, #tpu.memory_space<smem>>
    %445 = vector.extract_strided_slice %401 {offsets = [0, 4, 0], sizes = [2, 4, 1], strides = [1, 1, 1]} : vector<2x10x1xf32> to vector<2x4x1xf32>
    %446 = vector.broadcast %444 : f32 to vector<2x4x1xf32>
    %447 = arith.mulf %446, %445 : vector<2x4x1xf32>
    %448 = arith.addf %443, %447 : vector<2x4x1xf32>
    %c1_149 = arith.constant 1 : index
    %c4_150 = arith.constant 4 : index
    %449 = memref.load %arg15[%c1_149, %c4_150] : memref<2x7xf32, #tpu.memory_space<smem>>
    %450 = vector.extract_strided_slice %402 {offsets = [0, 4, 0], sizes = [2, 4, 1], strides = [1, 1, 1]} : vector<2x10x1xf32> to vector<2x4x1xf32>
    %451 = vector.broadcast %449 : f32 to vector<2x4x1xf32>
    %452 = arith.mulf %451, %450 : vector<2x4x1xf32>
    %453 = arith.addf %448, %452 : vector<2x4x1xf32>
    %c0_151 = arith.constant 0 : index
    %c5 = arith.constant 5 : index
    %454 = memref.load %arg15[%c0_151, %c5] : memref<2x7xf32, #tpu.memory_space<smem>>
    %455 = vector.extract_strided_slice %401 {offsets = [0, 5, 0], sizes = [2, 4, 1], strides = [1, 1, 1]} : vector<2x10x1xf32> to vector<2x4x1xf32>
    %456 = vector.broadcast %454 : f32 to vector<2x4x1xf32>
    %457 = arith.mulf %456, %455 : vector<2x4x1xf32>
    %458 = arith.addf %453, %457 : vector<2x4x1xf32>
    %c1_152 = arith.constant 1 : index
    %c5_153 = arith.constant 5 : index
    %459 = memref.load %arg15[%c1_152, %c5_153] : memref<2x7xf32, #tpu.memory_space<smem>>
    %460 = vector.extract_strided_slice %402 {offsets = [0, 5, 0], sizes = [2, 4, 1], strides = [1, 1, 1]} : vector<2x10x1xf32> to vector<2x4x1xf32>
    %461 = vector.broadcast %459 : f32 to vector<2x4x1xf32>
    %462 = arith.mulf %461, %460 : vector<2x4x1xf32>
    %463 = arith.addf %458, %462 : vector<2x4x1xf32>
    %c0_154 = arith.constant 0 : index
    %c6 = arith.constant 6 : index
    %464 = memref.load %arg15[%c0_154, %c6] : memref<2x7xf32, #tpu.memory_space<smem>>
    %465 = vector.extract_strided_slice %401 {offsets = [0, 6, 0], sizes = [2, 4, 1], strides = [1, 1, 1]} : vector<2x10x1xf32> to vector<2x4x1xf32>
    %466 = vector.broadcast %464 : f32 to vector<2x4x1xf32>
    %467 = arith.mulf %466, %465 : vector<2x4x1xf32>
    %468 = arith.addf %463, %467 : vector<2x4x1xf32>
    %c1_155 = arith.constant 1 : index
    %c6_156 = arith.constant 6 : index
    %469 = memref.load %arg15[%c1_155, %c6_156] : memref<2x7xf32, #tpu.memory_space<smem>>
    %470 = vector.extract_strided_slice %402 {offsets = [0, 6, 0], sizes = [2, 4, 1], strides = [1, 1, 1]} : vector<2x10x1xf32> to vector<2x4x1xf32>
    %471 = vector.broadcast %469 : f32 to vector<2x4x1xf32>
    %472 = arith.mulf %471, %470 : vector<2x4x1xf32>
    %473 = arith.addf %468, %472 : vector<2x4x1xf32>
    %474 = arith.negf %473 : vector<2x4x1xf32>
    %475 = math.exp %474 : vector<2x4x1xf32>
    %cst_157 = arith.constant 1.000000e+00 : f32
    %476 = vector.broadcast %cst_157 : f32 to vector<2x4x1xf32>
    %477 = arith.addf %476, %475 : vector<2x4x1xf32>
    %478 = arith.divf %476, %477 : vector<2x4x1xf32>
    %479 = vector.broadcast %478 : vector<2x4x1xf32> to vector<2x4x256xf32>
    %480 = arith.mulf %393, %479 : vector<2x4x256xf32>
    %c2_i32_158 = arith.constant 2 : i32
    %481 = tpu.memref_slice %arg29[%c2_i32_158] : memref<4x!tpu.dma_semaphore, #tpu.memory_space<semaphore_mem>> -> memref<1x!tpu.dma_semaphore, #tpu.memory_space<semaphore_mem>>
    %482 = tpu.memref_squeeze %481 : memref<1x!tpu.dma_semaphore, #tpu.memory_space<semaphore_mem>> -> memref<!tpu.dma_semaphore, #tpu.memory_space<semaphore_mem>>
    tpu.wait_dma2 semaphore(%482 : memref<!tpu.dma_semaphore, #tpu.memory_space<semaphore_mem>>) src(%arg16 : memref<4x256x512xbf16, #tpu.memory_space<any>>) dst(%arg27 : memref<4x256x512xbf16, #tpu.memory_space<vmem>>)
    %cst_159 = arith.constant 0.000000e+00 : f32
    %483 = vector.broadcast %cst_159 : f32 to vector<2x512xf32>
    %484 = vector.extract_strided_slice %480 {offsets = [0, 0, 0], sizes = [2, 1, 256], strides = [1, 1, 1]} : vector<2x4x256xf32> to vector<2x1x256xf32>
    %485 = vector.shape_cast %484 : vector<2x1x256xf32> to vector<2x256xf32>
    %486 = arith.truncf %485 : vector<2x256xf32> to vector<2x256xbf16>
    %c0_160 = arith.constant 0 : index
    %c0_161 = arith.constant 0 : index
    %c0_162 = arith.constant 0 : index
    %487 = vector.load %arg27[%c0_160, %c0_161, %c0_162] : memref<4x256x512xbf16, #tpu.memory_space<vmem>>, vector<1x256x512xbf16>
    %488 = vector.shape_cast %487 : vector<1x256x512xbf16> to vector<256x512xbf16>
    %cst_163 = arith.constant dense<0.000000e+00> : vector<2x512xf32>
    %489 = tpu.matmul %486, %488, %cst_163 {dimension_numbers = #tpu.dot_dimension_numbers<[1], [0], [0], [1], [0, 0, 1, 1], [], []>} : vector<2x256xbf16>, vector<256x512xbf16>, vector<2x512xf32> -> vector<2x512xf32>
    %490 = arith.addf %483, %489 : vector<2x512xf32>
    %491 = vector.extract_strided_slice %480 {offsets = [0, 1, 0], sizes = [2, 1, 256], strides = [1, 1, 1]} : vector<2x4x256xf32> to vector<2x1x256xf32>
    %492 = vector.shape_cast %491 : vector<2x1x256xf32> to vector<2x256xf32>
    %493 = arith.truncf %492 : vector<2x256xf32> to vector<2x256xbf16>
    %c1_164 = arith.constant 1 : index
    %c0_165 = arith.constant 0 : index
    %c0_166 = arith.constant 0 : index
    %494 = vector.load %arg27[%c1_164, %c0_165, %c0_166] : memref<4x256x512xbf16, #tpu.memory_space<vmem>>, vector<1x256x512xbf16>
    %495 = vector.shape_cast %494 : vector<1x256x512xbf16> to vector<256x512xbf16>
    %cst_167 = arith.constant dense<0.000000e+00> : vector<2x512xf32>
    %496 = tpu.matmul %493, %495, %cst_167 {dimension_numbers = #tpu.dot_dimension_numbers<[1], [0], [0], [1], [0, 0, 1, 1], [], []>} : vector<2x256xbf16>, vector<256x512xbf16>, vector<2x512xf32> -> vector<2x512xf32>
    %497 = arith.addf %490, %496 : vector<2x512xf32>
    %498 = vector.extract_strided_slice %480 {offsets = [0, 2, 0], sizes = [2, 1, 256], strides = [1, 1, 1]} : vector<2x4x256xf32> to vector<2x1x256xf32>
    %499 = vector.shape_cast %498 : vector<2x1x256xf32> to vector<2x256xf32>
    %500 = arith.truncf %499 : vector<2x256xf32> to vector<2x256xbf16>
    %c2_168 = arith.constant 2 : index
    %c0_169 = arith.constant 0 : index
    %c0_170 = arith.constant 0 : index
    %501 = vector.load %arg27[%c2_168, %c0_169, %c0_170] : memref<4x256x512xbf16, #tpu.memory_space<vmem>>, vector<1x256x512xbf16>
    %502 = vector.shape_cast %501 : vector<1x256x512xbf16> to vector<256x512xbf16>
    %cst_171 = arith.constant dense<0.000000e+00> : vector<2x512xf32>
    %503 = tpu.matmul %500, %502, %cst_171 {dimension_numbers = #tpu.dot_dimension_numbers<[1], [0], [0], [1], [0, 0, 1, 1], [], []>} : vector<2x256xbf16>, vector<256x512xbf16>, vector<2x512xf32> -> vector<2x512xf32>
    %504 = arith.addf %497, %503 : vector<2x512xf32>
    %505 = vector.extract_strided_slice %480 {offsets = [0, 3, 0], sizes = [2, 1, 256], strides = [1, 1, 1]} : vector<2x4x256xf32> to vector<2x1x256xf32>
    %506 = vector.shape_cast %505 : vector<2x1x256xf32> to vector<2x256xf32>
    %507 = arith.truncf %506 : vector<2x256xf32> to vector<2x256xbf16>
    %c3_172 = arith.constant 3 : index
    %c0_173 = arith.constant 0 : index
    %c0_174 = arith.constant 0 : index
    %508 = vector.load %arg27[%c3_172, %c0_173, %c0_174] : memref<4x256x512xbf16, #tpu.memory_space<vmem>>, vector<1x256x512xbf16>
    %509 = vector.shape_cast %508 : vector<1x256x512xbf16> to vector<256x512xbf16>
    %cst_175 = arith.constant dense<0.000000e+00> : vector<2x512xf32>
    %510 = tpu.matmul %507, %509, %cst_175 {dimension_numbers = #tpu.dot_dimension_numbers<[1], [0], [0], [1], [0, 0, 1, 1], [], []>} : vector<2x256xbf16>, vector<256x512xbf16>, vector<2x512xf32> -> vector<2x512xf32>
    %511 = arith.addf %504, %510 : vector<2x512xf32>
    %c0_176 = arith.constant 0 : index
    %c0_177 = arith.constant 0 : index
    %512 = vector.load %arg17[%c0_176, %c0_177] : memref<1x512xf32, #tpu.memory_space<vmem>>, vector<1x512xf32>
    %513 = vector.broadcast %512 : vector<1x512xf32> to vector<2x512xf32>
    %514 = arith.addf %511, %513 : vector<2x512xf32>
    %cst_178 = arith.constant 0.000000e+00 : f32
    %515 = vector.broadcast %cst_178 : f32 to vector<2x512xf32>
    %516 = arith.maximumf %514, %515 : vector<2x512xf32>
    %c3_i32_179 = arith.constant 3 : i32
    %517 = tpu.memref_slice %arg29[%c3_i32_179] : memref<4x!tpu.dma_semaphore, #tpu.memory_space<semaphore_mem>> -> memref<1x!tpu.dma_semaphore, #tpu.memory_space<semaphore_mem>>
    %518 = tpu.memref_squeeze %517 : memref<1x!tpu.dma_semaphore, #tpu.memory_space<semaphore_mem>> -> memref<!tpu.dma_semaphore, #tpu.memory_space<semaphore_mem>>
    tpu.wait_dma2 semaphore(%518 : memref<!tpu.dma_semaphore, #tpu.memory_space<semaphore_mem>>) src(%arg18 : memref<512x256xbf16, #tpu.memory_space<any>>) dst(%arg28 : memref<512x256xbf16, #tpu.memory_space<vmem>>)
    %519 = arith.truncf %516 : vector<2x512xf32> to vector<2x512xbf16>
    %c0_180 = arith.constant 0 : index
    %c0_181 = arith.constant 0 : index
    %520 = vector.load %arg28[%c0_180, %c0_181] : memref<512x256xbf16, #tpu.memory_space<vmem>>, vector<512x256xbf16>
    %cst_182 = arith.constant dense<0.000000e+00> : vector<2x256xf32>
    %521 = tpu.matmul %519, %520, %cst_182 {dimension_numbers = #tpu.dot_dimension_numbers<[1], [0], [0], [1], [0, 0, 1, 1], [], []>} : vector<2x512xbf16>, vector<512x256xbf16>, vector<2x256xf32> -> vector<2x256xf32>
    %c0_183 = arith.constant 0 : index
    %c0_184 = arith.constant 0 : index
    %522 = vector.load %arg19[%c0_183, %c0_184] : memref<1x256xf32, #tpu.memory_space<vmem>>, vector<1x256xf32>
    %523 = vector.broadcast %522 : vector<1x256xf32> to vector<2x256xf32>
    %524 = arith.addf %521, %523 : vector<2x256xf32>
    %cst_185 = arith.constant 0.000000e+00 : f32
    %525 = vector.broadcast %cst_185 : f32 to vector<2x256xf32>
    %526 = arith.maximumf %524, %525 : vector<2x256xf32>
    %c0_186 = arith.constant 0 : index
    %c0_187 = arith.constant 0 : index
    %527 = vector.load %arg20[%c0_186, %c0_187] : memref<256x128xf32, #tpu.memory_space<vmem>>, vector<256x128xf32>
    %cst_188 = arith.constant dense<0.000000e+00> : vector<2x128xf32>
    %528 = tpu.matmul %526, %527, %cst_188 {dimension_numbers = #tpu.dot_dimension_numbers<[1], [0], [0], [1], [0, 0, 1, 1], [], []>} : vector<2x256xf32>, vector<256x128xf32>, vector<2x128xf32> -> vector<2x128xf32>
    %c0_189 = arith.constant 0 : index
    %c0_190 = arith.constant 0 : index
    %529 = vector.load %arg21[%c0_189, %c0_190] : memref<1x128xf32, #tpu.memory_space<vmem>>, vector<1x128xf32>
    %530 = vector.broadcast %529 : vector<1x128xf32> to vector<2x128xf32>
    %531 = arith.addf %528, %530 : vector<2x128xf32>
    %cst_191 = arith.constant 0.000000e+00 : f32
    %532 = vector.broadcast %cst_191 : f32 to vector<2x128xf32>
    %533 = arith.maximumf %531, %532 : vector<2x128xf32>
    %c0_192 = arith.constant 0 : index
    %c0_193 = arith.constant 0 : index
    %534 = vector.load %arg22[%c0_192, %c0_193] : memref<128x2xf32, #tpu.memory_space<vmem>>, vector<128x2xf32>
    %cst_194 = arith.constant dense<0.000000e+00> : vector<2x2xf32>
    %535 = tpu.matmul %533, %534, %cst_194 {dimension_numbers = #tpu.dot_dimension_numbers<[1], [0], [0], [1], [0, 0, 1, 1], [], []>} : vector<2x128xf32>, vector<128x2xf32>, vector<2x2xf32> -> vector<2x2xf32>
    %c0_195 = arith.constant 0 : index
    %c0_196 = arith.constant 0 : index
    %536 = vector.load %arg23[%c0_195, %c0_196] : memref<1x2xf32, #tpu.memory_space<vmem>>, vector<1x2xf32>
    %537 = vector.broadcast %536 : vector<1x2xf32> to vector<2x2xf32>
    %538 = arith.addf %535, %537 : vector<2x2xf32>
    %c0_197 = arith.constant 0 : index
    %c0_198 = arith.constant 0 : index
    %539 = vector.load %arg24[%c0_197, %c0_198] : memref<2x2xf32, #tpu.memory_space<vmem>>, vector<2x2xf32>
    tpu.vector_store %arg24[%c0_197, %c0_198], %538 {strides = array<i32>} : memref<2x2xf32, #tpu.memory_space<vmem>>, vector<2x2xf32>,
    return
  }
}

</mosaic_0001>

<llo_original>
// kernel: stage1_forward.1
$region0: #{stage1_forward.1}
  #allocation0 [shape = 'u32[]', space=smem, size = 0x4, offset = 0x4, fixed_abs, tag = 'smem constant byte address 0x4 - core index']
  #allocation1 [shape = 'u32[144,128]{1,0:T(1,128)}', space=vmem, size = 0x12000, scoped, tag = 'internal scratch']
  #allocation2 [shape = 'bf16[512,1024]{1,0:T(16,128)(2,1)}', space=vmem, size = 0x100000, scoped, tag = 'scratch operand']
  #allocation3 [shape = 'bf16[256,1024]{1,0:T(16,128)(2,1)}', space=vmem, size = 0x80000, scoped, tag = 'scratch operand']
  #allocation4 [shape = 'bf16[4,256,512]{2,1,0:T(16,128)(2,1)}', space=vmem, size = 0x100000, scoped, tag = 'scratch operand']
  #allocation5 [shape = 'bf16[512,256]{1,0:T(16,128)(2,1)}', space=vmem, size = 0x40000, scoped, tag = 'scratch operand']
  #allocation6 [shape = 's32[4]{0}', space=sflag, size = 0x10, scoped, tag = 'scratch operand']
  #allocation7 [shape = 'f32[2,4,256]{2,1,0:T(4,128)}', space=vmem, size = 0x2000, scoped, tag = 'scratch operand']
  #allocation8 [shape = 'f32[2,4,256]{2,1,0:T(4,128)}', space=vmem, size = 0x2000, scoped, tag = 'scratch operand']
  #allocation27 [shape = 's32[]', space=sflag, size = 0x4, offset = 0, fixed_abs, tag = 'sflag constant byte address 0x0 - dummy sync flag']
  #allocation29 [shape = 's32[]', space=sflag, size = 0x4, offset = 0, fixed_abs, tag = 'sflag constant byte address 0x0 - dummy sync flag']
  #allocation31 [shape = 's32[]', space=sflag, size = 0x4, offset = 0, fixed_abs, tag = 'sflag constant byte address 0x0 - dummy sync flag']
  #allocation33 [shape = 's32[]', space=sflag, size = 0x4, offset = 0, fixed_abs, tag = 'sflag constant byte address 0x0 - dummy sync flag']
  %s0 = inlined_call_operand.vmem [shape: f32[2,16,1], index: 0, kind: input, shape index: {}]
  %s1 = inlined_call_operand.vmem [shape: f32[3,1,64], index: 1, kind: input, shape index: {}]
  %s2 = inlined_call_operand.hbm [shape: f32[1,1,64], index: 2, kind: input, shape index: {}]
  %s3 = inlined_call_operand.hbm [shape: f32[1,1,64], index: 3, kind: input, shape index: {}]
  %s4 = inlined_call_operand.vmem [shape: f32[192,128], index: 4, kind: input, shape index: {}]
  %s5 = inlined_call_operand.hbm [shape: f32[1,1,128], index: 5, kind: input, shape index: {}]
  %s6 = inlined_call_operand.hbm [shape: f32[1,1,128], index: 6, kind: input, shape index: {}]
  %s7 = inlined_call_operand.hbm [shape: bf16[256,1024], index: 7, kind: input, shape index: {}]
  %s8 = inlined_call_operand.hbm [shape: bf16[256,1024], index: 8, kind: input, shape index: {}]
  %s9 = inlined_call_operand.vmem [shape: f32[1,1024], index: 9, kind: input, shape index: {}]
  %s10 = inlined_call_operand.hbm [shape: bf16[512,1024], index: 10, kind: input, shape index: {}]
  %s11 = inlined_call_operand.hbm [shape: bf16[256,1024], index: 11, kind: input, shape index: {}]
  %s12 = inlined_call_operand.vmem [shape: f32[1,1024], index: 12, kind: input, shape index: {}]
  %s13 = inlined_call_operand.vmem [shape: f32[256,16], index: 13, kind: input, shape index: {}]
  %s14 = inlined_call_operand.vmem [shape: f32[16,256], index: 14, kind: input, shape index: {}]
  %s15 = inlined_call_operand.vmem [shape: f32[2,7], index: 15, kind: input, shape index: {}]
  %s16 = inlined_call_operand.hbm [shape: bf16[4,256,512], index: 16, kind: input, shape index: {}]
  %s17 = inlined_call_operand.vmem [shape: f32[1,512], index: 17, kind: input, shape index: {}]
  %s18 = inlined_call_operand.hbm [shape: bf16[512,256], index: 18, kind: input, shape index: {}]
  %s19 = inlined_call_operand.hbm [shape: f32[1,256], index: 19, kind: input, shape index: {}]
  %s20 = inlined_call_operand.vmem [shape: f32[256,128], index: 20, kind: input, shape index: {}]
  %s21 = inlined_call_operand.hbm [shape: f32[1,128], index: 21, kind: input, shape index: {}]
  %s22 = inlined_call_operand.vmem [shape: f32[128,2], index: 22, kind: input, shape index: {}]
  %s23 = inlined_call_operand.hbm [shape: f32[1,2], index: 23, kind: input, shape index: {}]
  %s24 = inlined_call_operand.hbm [shape: f32[2,2], index: 24, kind: output, shape index: {}]
  %s25 = sld [smem:[#allocation0]]
  $region130: #{stage1_forward.1} parent=0
    _
  %s27 = ssub.s32 1, %s25
  %s28 = scalar_select 0, %s27, %s25
  $region1: #{stage1_forward.1} parent=0
    #allocation9 [shape = 'u8[512]{0}', space=vmem, size = 0x400, scoped, tag = 'input window, operand 2, single buffered']
    #allocation10 [shape = 's32[1]{0}', space=sflag, size = 0x4, scoped, tag = 'scoped memory for stage1_forward.1']
    #allocation11 [shape = 's32[1]{0}', space=sflag, size = 0x4, scoped, tag = 'scoped memory for stage1_forward.1']
    #allocation12 [shape = 's32[1]{0}', space=sflag, size = 0x4, scoped, tag = 'scoped memory for stage1_forward.1']
    #allocation13 [shape = 'u8[512]{0}', space=vmem, size = 0x400, scoped, tag = 'input window, operand 3, single buffered']
    #allocation14 [shape = 's32[1]{0}', space=sflag, size = 0x4, scoped, tag = 'scoped memory for stage1_forward.1']
    #allocation15 [shape = 'u8[512]{0}', space=vmem, size = 0x400, scoped, tag = 'input window, operand 5, single buffered']
    #allocation16 [shape = 'u8[512]{0}', space=vmem, size = 0x400, scoped, tag = 'input window, operand 6, single buffered']
    #allocation17 [shape = 's32[1]{0}', space=sflag, size = 0x4, scoped, tag = 'scoped memory for stage1_forward.1']
    #allocation18 [shape = 'u8[524288]{0}', space=vmem, size = 0x80000, scoped, tag = 'input window, operand 7, single buffered']
    #allocation19 [shape = 'u8[524288]{0}', space=vmem, size = 0x80000, scoped, tag = 'input window, operand 8, single buffered']
    #allocation20 [shape = 's32[1]{0}', space=sflag, size = 0x4, scoped, tag = 'scoped memory for stage1_forward.1']
    #allocation21 [shape = 'u8[1024]{0}', space=smem, size = 0x400, scoped, tag = 'input window, operand 15, single buffered']
    #allocation22 [shape = 'u8[1024]{0}', space=vmem, size = 0x400, scoped, tag = 'input window, operand 19, single buffered']
    #allocation23 [shape = 'u8[512]{0}', space=vmem, size = 0x400, scoped, tag = 'input window, operand 21, single buffered']
    #allocation24 [shape = 's32[1]{0}', space=sflag, size = 0x4, scoped, tag = 'scoped memory for stage1_forward.1']
    #allocation25 [shape = 'u8[512]{0}', space=vmem, size = 0x400, scoped, tag = 'input window, operand 23, single buffered']
    #allocation26 [shape = 'u8[1024]{0}', space=vmem, size = 0x400, scoped, tag = 'output window, operand 0, single buffered']
    #allocation28 [shape = 'u32[9]{0}', space=smem, size = 0x24, scoped, tag = 'DMA stride descriptor']
    #allocation30 [shape = 'u32[9]{0}', space=smem, size = 0x24, scoped, tag = 'DMA stride descriptor']
    #allocation32 [shape = 'u32[9]{0}', space=smem, size = 0x24, scoped, tag = 'DMA stride descriptor']
    #allocation34 [shape = 'u32[9]{0}', space=smem, size = 0x24, scoped, tag = 'DMA stride descriptor']
    %29 = vsyncpa [#allocation10], 0
    %30 = vsyncpa [#allocation14], 0
    %31 = vsyncpa [#allocation17], 0
    %32 = vsyncpa [#allocation20], 0
    %33 = vsyncpa [#allocation12], 0
    %34 = vsyncpa [#allocation24], 0
    %35 = vsyncpa [#allocation11], 0
    // Predicated region
    $region2: #{stage1_forward.1} parent=1 // pred_check
      _
    $region3: #{stage1_forward.1} parent=1 // pred_check_branch
      %37 = sbr.rel (0) target = $region5
    $region4: #{stage1_forward.1} parent=1 // pred_region
      _
    $region5: #{stage1_forward.1} parent=1 // pred_fallthru
      _
    // Predicated region
    $region6: #{stage1_forward.1} parent=1 // pred_check
      _
    $region7: #{stage1_forward.1} parent=1 // pred_check_branch
      %39 = sbr.rel (0) target = $region9
    $region8: #{stage1_forward.1} parent=1 // pred_region
      _
    $region9: #{stage1_forward.1} parent=1 // pred_fallthru
      _
    // Predicated region
    $region10: #{stage1_forward.1} parent=1 // pred_check
      _
    $region11: #{stage1_forward.1} parent=1 // pred_check_branch
      %41 = sbr.rel (0) target = $region13
    $region12: #{stage1_forward.1} parent=1 // pred_region
      %s43 = ssub.s32 16, 16
      %44 = vsyncadd [#allocation10], %s43
      %s46 = sshll.u32 [#allocation9], 4
      %s47 = int_to_ptr.vmem [resolvable:$true] %s46
      %49 = dma.hbm_to_vmem [thread:$0]  %s2, 16, %s47, [#allocation10]
    $region13: #{stage1_forward.1} parent=1 // pred_fallthru
      _
    // Predicated region
    $region14: #{stage1_forward.1} parent=1 // pred_check
      _
    $region15: #{stage1_forward.1} parent=1 // pred_check_branch
      %51 = sbr.rel (0) target = $region17
    $region16: #{stage1_forward.1} parent=1 // pred_region
      %s53 = ssub.s32 16, 16
      %54 = vsyncadd [#allocation14], %s53
      %s56 = sshll.u32 [#allocation13], 4
      %s57 = int_to_ptr.vmem [resolvable:$true] %s56
      %59 = dma.hbm_to_vmem [thread:$0]  %s3, 16, %s57, [#allocation14]
    $region17: #{stage1_forward.1} parent=1 // pred_fallthru
      _
    // Predicated region
    $region18: #{stage1_forward.1} parent=1 // pred_check
      _
    $region19: #{stage1_forward.1} parent=1 // pred_check_branch
      %61 = sbr.rel (0) target = $region21
    $region20: #{stage1_forward.1} parent=1 // pred_region
      _
    $region21: #{stage1_forward.1} parent=1 // pred_fallthru
      _
    // Predicated region
    $region22: #{stage1_forward.1} parent=1 // pred_check
      _
    $region23: #{stage1_forward.1} parent=1 // pred_check_branch
      %63 = sbr.rel (0) target = $region25
    $region24: #{stage1_forward.1} parent=1 // pred_region
      %s65 = ssub.s32 16, 16
      %66 = vsyncadd [#allocation14], %s65
      %s68 = sshll.u32 [#allocation15], 4
      %s69 = int_to_ptr.vmem [resolvable:$true] %s68
      %71 = dma.hbm_to_vmem [thread:$0]  %s5, 16, %s69, [#allocation14]
    $region25: #{stage1_forward.1} parent=1 // pred_fallthru
      _
    // Predicated region
    $region26: #{stage1_forward.1} parent=1 // pred_check
      _
    $region27: #{stage1_forward.1} parent=1 // pred_check_branch
      %73 = sbr.rel (0) target = $region29
    $region28: #{stage1_forward.1} parent=1 // pred_region
      %s75 = ssub.s32 16, 16
      %76 = vsyncadd [#allocation17], %s75
      %s78 = sshll.u32 [#allocation16], 4
      %s79 = int_to_ptr.vmem [resolvable:$true] %s78
      %81 = dma.hbm_to_vmem [thread:$0]  %s6, 16, %s79, [#allocation17]
    $region29: #{stage1_forward.1} parent=1 // pred_fallthru
      _
    // Predicated region
    $region30: #{stage1_forward.1} parent=1 // pred_check
      _
    $region31: #{stage1_forward.1} parent=1 // pred_check_branch
      %83 = sbr.rel (0) target = $region33
    $region32: #{stage1_forward.1} parent=1 // pred_region
      %s85 = ssub.s32 16384, 16384
      %86 = vsyncadd [#allocation17], %s85
      %s87 = sshll.u32 [#allocation18], 4
      %s88 = int_to_ptr.vmem [resolvable:$true] %s87
      %93 = dma.hbm_to_vmem [thread:$0]  %s7, 16384, %s88, [#allocation17], 512, 512, 32
    $region33: #{stage1_forward.1} parent=1 // pred_fallthru
      _
    // Predicated region
    $region34: #{stage1_forward.1} parent=1 // pred_check
      _
    $region35: #{stage1_forward.1} parent=1 // pred_check_branch
      %95 = sbr.rel (0) target = $region37
    $region36: #{stage1_forward.1} parent=1 // pred_region
      %s97 = ssub.s32 16384, 16384
      %98 = vsyncadd [#allocation20], %s97
      %s99 = sshll.u32 [#allocation19], 4
      %s100 = int_to_ptr.vmem [resolvable:$true] %s99
      %105 = dma.hbm_to_vmem [thread:$0]  %s8, 16384, %s100, [#allocation20], 512, 512, 32
    $region37: #{stage1_forward.1} parent=1 // pred_fallthru
      _
    // Predicated region
    $region38: #{stage1_forward.1} parent=1 // pred_check
      _
    $region39: #{stage1_forward.1} parent=1 // pred_check_branch
      %107 = sbr.rel (0) target = $region41
    $region40: #{stage1_forward.1} parent=1 // pred_region
      _
    $region41: #{stage1_forward.1} parent=1 // pred_fallthru
      _
    // Predicated region
    $region42: #{stage1_forward.1} parent=1 // pred_check
      _
    $region43: #{stage1_forward.1} parent=1 // pred_check_branch
      %109 = sbr.rel (0) target = $region45
    $region44: #{stage1_forward.1} parent=1 // pred_region
      _
    $region45: #{stage1_forward.1} parent=1 // pred_fallthru
      _
    // Predicated region
    $region46: #{stage1_forward.1} parent=1 // pred_check
      _
    $region47: #{stage1_forward.1} parent=1 // pred_check_branch
      %111 = sbr.rel (0) target = $region49
    $region48: #{stage1_forward.1} parent=1 // pred_region
      _
    $region49: #{stage1_forward.1} parent=1 // pred_fallthru
      _
    // Predicated region
    $region50: #{stage1_forward.1} parent=1 // pred_check
      _
    $region51: #{stage1_forward.1} parent=1 // pred_check_branch
      %113 = sbr.rel (0) target = $region53
    $region52: #{stage1_forward.1} parent=1 // pred_region
      _
    $region53: #{stage1_forward.1} parent=1 // pred_fallthru
      _
    // Predicated region
    $region54: #{stage1_forward.1} parent=1 // pred_check
      _
    $region55: #{stage1_forward.1} parent=1 // pred_check_branch
      %115 = sbr.rel (0) target = $region57
    $region56: #{stage1_forward.1} parent=1 // pred_region
      %s117 = ssub.s32 32, 32
      %118 = vsyncadd [#allocation12], %s117
      %s120 = sshll.u32 %s15, 4
      %s121 = int_to_ptr.vmem [resolvable:$true] %s120
      %123 = dma.vmem_to_smem %s121, 32, [#allocation21], [#allocation12]
    $region57: #{stage1_forward.1} parent=1 // pred_fallthru
      _
    // Predicated region
    $region58: #{stage1_forward.1} parent=1 // pred_check
      _
    $region59: #{stage1_forward.1} parent=1 // pred_check_branch
      %125 = sbr.rel (0) target = $region61
    $region60: #{stage1_forward.1} parent=1 // pred_region
      _
    $region61: #{stage1_forward.1} parent=1 // pred_fallthru
      _
    // Predicated region
    $region62: #{stage1_forward.1} parent=1 // pred_check
      _
    $region63: #{stage1_forward.1} parent=1 // pred_check_branch
      %127 = sbr.rel (0) target = $region65
    $region64: #{stage1_forward.1} parent=1 // pred_region
      %s129 = ssub.s32 32, 32
      %130 = vsyncadd [#allocation20], %s129
      %s132 = sshll.u32 [#allocation22], 4
      %s133 = int_to_ptr.vmem [resolvable:$true] %s132
      %135 = dma.hbm_to_vmem [thread:$0]  %s19, 32, %s133, [#allocation20]
    $region65: #{stage1_forward.1} parent=1 // pred_fallthru
      _
    // Predicated region
    $region66: #{stage1_forward.1} parent=1 // pred_check
      _
    $region67: #{stage1_forward.1} parent=1 // pred_check_branch
      %137 = sbr.rel (0) target = $region69
    $region68: #{stage1_forward.1} parent=1 // pred_region
      _
    $region69: #{stage1_forward.1} parent=1 // pred_fallthru
      _
    // Predicated region
    $region70: #{stage1_forward.1} parent=1 // pred_check
      _
    $region71: #{stage1_forward.1} parent=1 // pred_check_branch
      %139 = sbr.rel (0) target = $region73
    $region72: #{stage1_forward.1} parent=1 // pred_region
      %s141 = ssub.s32 16, 16
      %142 = vsyncadd [#allocation24], %s141
      %s144 = sshll.u32 [#allocation23], 4
      %s145 = int_to_ptr.vmem [resolvable:$true] %s144
      %147 = dma.hbm_to_vmem [thread:$0]  %s21, 16, %s145, [#allocation24]
    $region73: #{stage1_forward.1} parent=1 // pred_fallthru
      _
    // Predicated region
    $region74: #{stage1_forward.1} parent=1 // pred_check
      _
    $region75: #{stage1_forward.1} parent=1 // pred_check_branch
      %149 = sbr.rel (0) target = $region77
    $region76: #{stage1_forward.1} parent=1 // pred_region
      _
    $region77: #{stage1_forward.1} parent=1 // pred_fallthru
      _
    // Predicated region
    $region78: #{stage1_forward.1} parent=1 // pred_check
      _
    $region79: #{stage1_forward.1} parent=1 // pred_check_branch
      %151 = sbr.rel (0) target = $region81
    $region80: #{stage1_forward.1} parent=1 // pred_region
      %s153 = ssub.s32 16, 16
      %154 = vsyncadd [#allocation24], %s153
      %s156 = sshll.u32 [#allocation25], 4
      %s157 = int_to_ptr.vmem [resolvable:$true] %s156
      %159 = dma.hbm_to_vmem [thread:$0]  %s23, 16, %s157, [#allocation24]
    $region81: #{stage1_forward.1} parent=1 // pred_fallthru
      _
    // Predicated region
    $region82: #{stage1_forward.1} parent=1 // pred_check
      _
    $region83: #{stage1_forward.1} parent=1 // pred_check_branch
      %161 = sbr.rel (0) target = $region85
    $region84: #{stage1_forward.1} parent=1 // pred_region
      %162 = dma.done [#allocation10], 16
    $region85: #{stage1_forward.1} parent=1 // pred_fallthru
      _
    // Predicated region
    $region86: #{stage1_forward.1} parent=1 // pred_check
      _
    $region87: #{stage1_forward.1} parent=1 // pred_check_branch
      %164 = sbr.rel (0) target = $region89
    $region88: #{stage1_forward.1} parent=1 // pred_region
      %165 = dma.done [#allocation14], 16
    $region89: #{stage1_forward.1} parent=1 // pred_fallthru
      _
    // Predicated region
    $region90: #{stage1_forward.1} parent=1 // pred_check
      _
    $region91: #{stage1_forward.1} parent=1 // pred_check_branch
      %167 = sbr.rel (0) target = $region93
    $region92: #{stage1_forward.1} parent=1 // pred_region
      %168 = dma.done [#allocation14], 16
    $region93: #{stage1_forward.1} parent=1 // pred_fallthru
      _
    // Predicated region
    $region94: #{stage1_forward.1} parent=1 // pred_check
      _
    $region95: #{stage1_forward.1} parent=1 // pred_check_branch
      %170 = sbr.rel (0) target = $region97
    $region96: #{stage1_forward.1} parent=1 // pred_region
      %171 = dma.done [#allocation17], 16
    $region97: #{stage1_forward.1} parent=1 // pred_fallthru
      _
    // Predicated region
    $region98: #{stage1_forward.1} parent=1 // pred_check
      _
    $region99: #{stage1_forward.1} parent=1 // pred_check_branch
      %173 = sbr.rel (0) target = $region101
    $region100: #{stage1_forward.1} parent=1 // pred_region
      %174 = dma.done [#allocation17], 16384
    $region101: #{stage1_forward.1} parent=1 // pred_fallthru
      _
    // Predicated region
    $region102: #{stage1_forward.1} parent=1 // pred_check
      _
    $region103: #{stage1_forward.1} parent=1 // pred_check_branch
      %176 = sbr.rel (0) target = $region105
    $region104: #{stage1_forward.1} parent=1 // pred_region
      %177 = dma.done [#allocation20], 16384
    $region105: #{stage1_forward.1} parent=1 // pred_fallthru
      _
    // Predicated region
    $region106: #{stage1_forward.1} parent=1 // pred_check
      _
    $region107: #{stage1_forward.1} parent=1 // pred_check_branch
      %179 = sbr.rel (0) target = $region109
    $region108: #{stage1_forward.1} parent=1 // pred_region
      %180 = dma.done [#allocation12], 32
    $region109: #{stage1_forward.1} parent=1 // pred_fallthru
      _
    // Predicated region
    $region110: #{stage1_forward.1} parent=1 // pred_check
      _
    $region111: #{stage1_forward.1} parent=1 // pred_check_branch
      %182 = sbr.rel (0) target = $region113
    $region112: #{stage1_forward.1} parent=1 // pred_region
      %183 = dma.done [#allocation20], 32
    $region113: #{stage1_forward.1} parent=1 // pred_fallthru
      _
    // Predicated region
    $region114: #{stage1_forward.1} parent=1 // pred_check
      _
    $region115: #{stage1_forward.1} parent=1 // pred_check_branch
      %185 = sbr.rel (0) target = $region117
    $region116: #{stage1_forward.1} parent=1 // pred_region
      %186 = dma.done [#allocation24], 16
    $region117: #{stage1_forward.1} parent=1 // pred_fallthru
      _
    // Predicated region
    $region118: #{stage1_forward.1} parent=1 // pred_check
      _
    $region119: #{stage1_forward.1} parent=1 // pred_check_branch
      %188 = sbr.rel (0) target = $region121
    $region120: #{stage1_forward.1} parent=1 // pred_region
      %189 = dma.done [#allocation24], 16
    $region121: #{stage1_forward.1} parent=1 // pred_fallthru
      _
    %190 = sfence
    %v192 = vld [vmem:[%s0] sm:$0xff]
    %v193 = vld [vmem:[%s0 + $0x8] sm:$0xff]
    %v194 = vld [vmem:[%s0 + $0x10] sm:$0xff]
    %v195 = vld [vmem:[%s0 + $0x18] sm:$0xff]
    %s197 = sshll.u32 1, 14
    %s198 = sxor.u32 4294967295, %s197
    %s200 = sld [smem:[#allocation0]]
    %s201 = sadd.s32 2, %s200
    %s203 = sshll.u32 7, 26
    %s204 = sxor.u32 4294967295, %s203
    %s205 = sand.u32 0, %s204
    %s206 = sshll.u32 %s201, 26
    %s207 = sor.u32 %s205, %s206
    %s208 = sshll.u32 [#allocation2], 4
    %s209 = int_to_ptr.vmem [resolvable:$true] %s208
    %212 = sst [smem:[#allocation28]] 1024
    %s213 = scalar_lea.smem [#allocation28], 1
    %214 = sst [smem:[%s213]] 1024
    %s215 = scalar_lea.smem [#allocation28], 2
    %216 = sst [smem:[%s215]] 8
    %s217 = scalar_lea.smem [#allocation28], 3
    %218 = sst [smem:[%s217]] 64
    %s219 = scalar_lea.smem [#allocation28], 4
    %220 = sst [smem:[%s219]] 128
    %s221 = scalar_lea.smem [#allocation28], 5
    %222 = sst [smem:[%s221]] 2
    %s223 = scalar_lea.smem [#allocation28], 6
    %224 = sst [smem:[%s223]] 512
    %s225 = scalar_lea.smem [#allocation28], 7
    %226 = sst [smem:[%s225]] 64
    %s227 = scalar_lea.smem [#allocation28], 8
    %228 = sst [smem:[%s227]] 4
    %230 = dma.general %s10, 32768, %s209, [#allocation6], [#allocation27], [#allocation28], %s207, 0
    %s231 = scalar_lea.sflag [#allocation6], 1
    %s233 = sshll.u32 1, 14
    %s234 = sxor.u32 4294967295, %s233
    %s236 = sadd.s32 2, %s200
    %s238 = sshll.u32 7, 26
    %s239 = sxor.u32 4294967295, %s238
    %s240 = sand.u32 0, %s239
    %s241 = sshll.u32 %s236, 26
    %s242 = sor.u32 %s240, %s241
    %s243 = sshll.u32 [#allocation3], 4
    %s244 = int_to_ptr.vmem [resolvable:$true] %s243
    %247 = sst [smem:[#allocation30]] 1024
    %s248 = scalar_lea.smem [#allocation30], 1
    %249 = sst [smem:[%s248]] 1024
    %s250 = scalar_lea.smem [#allocation30], 2
    %251 = sst [smem:[%s250]] 8
    %s252 = scalar_lea.smem [#allocation30], 3
    %253 = sst [smem:[%s252]] 64
    %s254 = scalar_lea.smem [#allocation30], 4
    %255 = sst [smem:[%s254]] 128
    %s256 = scalar_lea.smem [#allocation30], 5
    %257 = sst [smem:[%s256]] 2
    %s258 = scalar_lea.smem [#allocation30], 6
    %259 = sst [smem:[%s258]] 512
    %s260 = scalar_lea.smem [#allocation30], 7
    %261 = sst [smem:[%s260]] 64
    %s262 = scalar_lea.smem [#allocation30], 8
    %263 = sst [smem:[%s262]] 4
    %265 = dma.general %s11, 16384, %s244, %s231, [#allocation29], [#allocation30], %s242, 0
    %s266 = scalar_lea.sflag [#allocation6], 2
    %s268 = sshll.u32 1, 14
    %s269 = sxor.u32 4294967295, %s268
    %s271 = sadd.s32 2, %s200
    %s273 = sshll.u32 7, 26
    %s274 = sxor.u32 4294967295, %s273
    %s275 = sand.u32 0, %s274
    %s276 = sshll.u32 %s271, 26
    %s277 = sor.u32 %s275, %s276
    %s278 = sshll.u32 [#allocation4], 4
    %s279 = int_to_ptr.vmem [resolvable:$true] %s278
    %282 = sst [smem:[#allocation32]] 512
    %s283 = scalar_lea.smem [#allocation32], 1
    %284 = sst [smem:[%s283]] 512
    %s285 = scalar_lea.smem [#allocation32], 2
    %286 = sst [smem:[%s285]] 4
    %s287 = scalar_lea.smem [#allocation32], 3
    %288 = sst [smem:[%s287]] 64
    %s289 = scalar_lea.smem [#allocation32], 4
    %290 = sst [smem:[%s289]] 128
    %s291 = scalar_lea.smem [#allocation32], 5
    %292 = sst [smem:[%s291]] 2
    %s293 = scalar_lea.smem [#allocation32], 6
    %294 = sst [smem:[%s293]] 256
    %s295 = scalar_lea.smem [#allocation32], 7
    %296 = sst [smem:[%s295]] 64
    %s297 = scalar_lea.smem [#allocation32], 8
    %298 = sst [smem:[%s297]] 4
    %300 = dma.general %s16, 32768, %s279, %s266, [#allocation31], [#allocation32], %s277, 0
    %s301 = scalar_lea.sflag [#allocation6], 3
    %s303 = sshll.u32 1, 14
    %s304 = sxor.u32 4294967295, %s303
    %s306 = sadd.s32 2, %s200
    %s308 = sshll.u32 7, 26
    %s309 = sxor.u32 4294967295, %s308
    %s310 = sand.u32 0, %s309
    %s311 = sshll.u32 %s306, 26
    %s312 = sor.u32 %s310, %s311
    %s313 = sshll.u32 [#allocation5], 4
    %s314 = int_to_ptr.vmem [resolvable:$true] %s313
    %317 = sst [smem:[#allocation34]] 256
    %s318 = scalar_lea.smem [#allocation34], 1
    %319 = sst [smem:[%s318]] 256
    %s320 = scalar_lea.smem [#allocation34], 2
    %321 = sst [smem:[%s320]] 2
    %s322 = scalar_lea.smem [#allocation34], 3
    %323 = sst [smem:[%s322]] 64
    %s324 = scalar_lea.smem [#allocation34], 4
    %325 = sst [smem:[%s324]] 128
    %s326 = scalar_lea.smem [#allocation34], 5
    %327 = sst [smem:[%s326]] 2
    %s328 = scalar_lea.smem [#allocation34], 6
    %329 = sst [smem:[%s328]] 128
    %s330 = scalar_lea.smem [#allocation34], 7
    %331 = sst [smem:[%s330]] 64
    %s332 = scalar_lea.smem [#allocation34], 8
    %333 = sst [smem:[%s332]] 4
    %335 = dma.general %s18, 8192, %s314, %s301, [#allocation33], [#allocation34], %s312, 0
    %vm340 = vcmask 1040384
    %v341 = vrot.slane %v192, 7
    %v342 = vrot.slane %v193, 7
    %v343 = vsel %vm340, %v341, %v342
    %v344 = vrot.slane %v194, 7
    %v345 = vrot.slane %v195, 7
    %v346 = vsel %vm340, %v344, %v345
    %v351 = vsel %vm340, 0.0, %v341
    %v352 = vsel %vm340, 0.0, %v344
    %v353 = vsel %vm340, %v342, 0.0
    %v354 = vsel %vm340, %v345, 0.0
    %v355 = vld [vmem:[%s1] sm:$0x1]
    %357 = vset.pattern.permute.xlu0 0
    %358 = vperm.xlu0 %357, %v351
    %v359 = vpop.permute.xlu0 %358
    %361 = vset.pattern.permute.xlu0 0
    %362 = vperm.xlu0 %361, %v343
    %v363 = vpop.permute.xlu0 %362
    %366 = vset.pattern.permute.xlu0 0
    %367 = vperm.xlu0 %366, %v352
    %v368 = vpop.permute.xlu0 %367
    %370 = vset.pattern.permute.xlu0 0
    %371 = vperm.xlu0 %370, %v346
    %v372 = vpop.permute.xlu0 %371
    %v375 = vlaneseq
    %v376 = vshrl.u32 %v375, 7
    %v377 = vsub.s32 0, %v376
    %v378 = vrot.slane %v355, %v377
    %v380 = vmul.f32 %v359, %v378
    %v381 = vmul.f32 %v363, %v378
    %v382 = vmul.f32 %v368, %v378
    %v383 = vmul.f32 %v372, %v378
    %v384 = vadd.f32 %v380, 0.0
    %v385 = vadd.f32 %v381, 0.0
    %v386 = vadd.f32 %v382, 0.0
    %v387 = vadd.f32 %v383, 0.0
    %s388 = scalar_lea.vmem %s1, 1
    %v389 = vld [vmem:[%s388] sm:$0x1]
    %391 = vset.pattern.permute.xlu0 0
    %392 = vperm.xlu0 %391, %v353
    %v393 = vpop.permute.xlu0 %392
    %396 = vset.pattern.permute.xlu0 0
    %397 = vperm.xlu0 %396, %v354
    %v398 = vpop.permute.xlu0 %397
    %v401 = vlaneseq
    %v402 = vshrl.u32 %v401, 7
    %v403 = vsub.s32 0, %v402
    %v404 = vrot.slane %v389, %v403
    %v406 = vmul.f32 %v359, %v404
    %v407 = vmul.f32 %v363, %v404
    %v408 = vmul.f32 %v393, %v404
    %v409 = vmul.f32 %v368, %v404
    %v410 = vmul.f32 %v372, %v404
    %v411 = vmul.f32 %v398, %v404
    %vm418 = vcmask 1046528
    %v419 = vrot.slane %v406, 1
    %v420 = vrot.slane %v407, 1
    %v421 = vsel %vm418, %v419, %v420
    %v422 = vrot.slane %v408, 1
    %v423 = vsel %vm418, %v420, %v422
    %v424 = vrot.slane %v409, 1
    %v425 = vrot.slane %v410, 1
    %v426 = vsel %vm418, %v424, %v425
    %v427 = vrot.slane %v411, 1
    %v428 = vsel %vm418, %v425, %v427
    %v433 = vadd.f32 %v384, %v421
    %v434 = vadd.f32 %v385, %v423
    %v435 = vadd.f32 %v386, %v426
    %v436 = vadd.f32 %v387, %v428
    %s437 = scalar_lea.vmem %s1, 2
    %v438 = vld [vmem:[%s437] sm:$0x1]
    %v440 = vlaneseq
    %v441 = vshrl.u32 %v440, 7
    %v442 = vsub.s32 0, %v441
    %v443 = vrot.slane %v438, %v442
    %v445 = vmul.f32 %v359, %v443
    %v446 = vmul.f32 %v363, %v443
    %v447 = vmul.f32 %v393, %v443
    %v448 = vmul.f32 %v368, %v443
    %v449 = vmul.f32 %v372, %v443
    %v450 = vmul.f32 %v398, %v443
    %vm457 = vcmask 1045504
    %v458 = vrot.slane %v445, 2
    %v459 = vrot.slane %v446, 2
    %v460 = vsel %vm457, %v458, %v459
    %v461 = vrot.slane %v447, 2
    %v462 = vsel %vm457, %v459, %v461
    %v463 = vrot.slane %v448, 2
    %v464 = vrot.slane %v449, 2
    %v465 = vsel %vm457, %v463, %v464
    %v466 = vrot.slane %v450, 2
    %v467 = vsel %vm457, %v464, %v466
    %v472 = vadd.f32 %v433, %v460
    %v473 = vadd.f32 %v434, %v462
    %v474 = vadd.f32 %v435, %v465
    %v475 = vadd.f32 %v436, %v467
    %v476 = vld [vmem:[#allocation9] sm:$0x1]
    %v478 = vlaneseq
    %v479 = vshrl.u32 %v478, 7
    %v480 = vsub.s32 0, %v479
    %v481 = vrot.slane %v476, %v480
    %v483 = vmul.f32 %v472, %v481
    %v484 = vmul.f32 %v473, %v481
    %v485 = vmul.f32 %v474, %v481
    %v486 = vmul.f32 %v475, %v481
    %v487 = vld [vmem:[#allocation13] sm:$0x1]
    %v489 = vlaneseq
    %v490 = vshrl.u32 %v489, 7
    %v491 = vsub.s32 0, %v490
    %v492 = vrot.slane %v487, %v491
    %v494 = vadd.f32 %v483, %v492
    %v495 = vadd.f32 %v484, %v492
    %v496 = vadd.f32 %v485, %v492
    %v497 = vadd.f32 %v486, %v492
    %v498 = vmax.f32 %v494, 0.0
    %v499 = vmax.f32 %v495, 0.0
    %v500 = vmax.f32 %v496, 0.0
    %v501 = vmax.f32 %v497, 0.0
    %v504 = vrot.slane %v498, 1
    %v505 = vrot.slane %v500, 1
    %v508 = vmax.f32 %v498, %v504
    %v509 = vmax.f32 %v500, %v505
    %v512 = vrot.slane %v499, 1
    %v513 = vrot.slane %v501, 1
    %v516 = vmax.f32 %v499, %v512
    %v517 = vmax.f32 %v501, %v513
    %v520 = vrot.slane %v508, 1
    %v521 = vrot.slane %v509, 1
    %v524 = vrot.slane %v508, 2
    %v525 = vrot.slane %v509, 2
    %v528 = vrot.slane %v508, 3
    %v529 = vrot.slane %v509, 3
    %v534 = vrot.slane %v516, 4
    %v535 = vrot.slane %v517, 4
    %v538 = vrot.slane %v516, 5
    %v539 = vrot.slane %v517, 5
    %v542 = vrot.slane %v516, 6
    %v543 = vrot.slane %v517, 6
    %v546 = vrot.slane %v516, 7
    %v547 = vrot.slane %v517, 7
    %v550 = vsel %vm340, %v508, %v520
    %v551 = vsel %vm340, %v509, %v521
    %vm552 = vcmask 1041408
    %v553 = vsel %vm552, %v550, %v524
    %v554 = vsel %vm552, %v551, %v525
    %vm555 = vcmask 1042432
    %v556 = vsel %vm555, %v553, %v528
    %v557 = vsel %vm555, %v554, %v529
    %vm558 = vcmask 1043456
    %v559 = vsel %vm558, %v556, %v534
    %v560 = vsel %vm558, %v557, %v535
    %vm561 = vcmask 1044480
    %v562 = vsel %vm561, %v559, %v538
    %v563 = vsel %vm561, %v560, %v539
    %v564 = vsel %vm457, %v562, %v542
    %v565 = vsel %vm457, %v563, %v543
    %v566 = vsel %vm418, %v564, %v546
    %v567 = vsel %vm418, %v565, %v547
    %v570 = vrot.slane %v566, 7
    %v571 = vrot.slane %v567, 7
    %v574 = vsel %vm340, 0.0, %v570
    %v575 = vsel %vm340, 0.0, %v571
    %v576 = vsel %vm340, %v570, 0.0
    %v577 = vsel %vm340, %v571, 0.0
    %v582 = vrot.slane %v574, 1
    %v583 = vrot.slane %v576, 1
    %v584 = vsel %vm418, %v582, %v583
    %v585 = vrot.slane %v575, 1
    %v586 = vrot.slane %v577, 1
    %v587 = vsel %vm418, %v585, %v586
    %588 = vrot.lane.b32.xlu0 %v584, 64
    %v589 = vpop.permute.xlu0 %588
    %590 = vrot.lane.b32.xlu0 %v587, 64
    %v591 = vpop.permute.xlu0 %590
    %v594 = vrot.slane %v574, 2
    %v595 = vrot.slane %v576, 2
    %v596 = vsel %vm457, %v594, %v595
    %v597 = vrot.slane %v575, 2
    %v598 = vrot.slane %v577, 2
    %v599 = vsel %vm457, %v597, %v598
    %vm600 = vcmask 523264
    %v601 = vsel %vm600, %v574, %v589
    %v602 = vsel %vm600, %v575, %v591
    %v603 = vld [vmem:[%s4] sm:$0xff]
    %v604 = vld [vmem:[%s4 + $0x8] sm:$0xff]
    %v605 = vld [vmem:[%s4 + $0x10] sm:$0xff]
    %v606 = vld [vmem:[%s4 + $0x18] sm:$0xff]
    %v607 = vld [vmem:[%s4 + $0x20] sm:$0xff]
    %v608 = vld [vmem:[%s4 + $0x28] sm:$0xff]
    %v609 = vld [vmem:[%s4 + $0x30] sm:$0xff]
    %v610 = vld [vmem:[%s4 + $0x38] sm:$0xff]
    %v611 = vld [vmem:[%s4 + $0x40] sm:$0xff]
    %v612 = vld [vmem:[%s4 + $0x48] sm:$0xff]
    %v613 = vld [vmem:[%s4 + $0x50] sm:$0xff]
    %v614 = vld [vmem:[%s4 + $0x58] sm:$0xff]
    %v615 = vld [vmem:[%s4 + $0x60] sm:$0xff]
    %v616 = vld [vmem:[%s4 + $0x68] sm:$0xff]
    %v617 = vld [vmem:[%s4 + $0x70] sm:$0xff]
    %v618 = vld [vmem:[%s4 + $0x78] sm:$0xff]
    %v619 = vld [vmem:[%s4 + $0x80] sm:$0xff]
    %v620 = vld [vmem:[%s4 + $0x88] sm:$0xff]
    %v621 = vld [vmem:[%s4 + $0x90] sm:$0xff]
    %v622 = vld [vmem:[%s4 + $0x98] sm:$0xff]
    %v623 = vld [vmem:[%s4 + $0xa0] sm:$0xff]
    %v624 = vld [vmem:[%s4 + $0xa8] sm:$0xff]
    %v625 = vld [vmem:[%s4 + $0xb0] sm:$0xff]
    %v626 = vld [vmem:[%s4 + $0xb8] sm:$0xff]
    %v627 = vsel %vm600, %v596, 0
    %v629 = vsel %vm600, %v599, 0
    %631 = vmatprep.subr.mxu0 0.0
    %632 = vmatpush1.msra.mxu0 %v603
    %633 = vmatprep.subr.mxu0 0.0
    %634 = vmatpush1.msra.mxu0 %v604
    %635 = vmatprep.subr.mxu0 0.0
    %636 = vmatpush1.msra.mxu0 %v605
    %637 = vmatprep.subr.mxu0 0.0
    %638 = vmatpush1.msra.mxu0 %v606
    %639 = vmatprep.subr.mxu0 0.0
    %640 = vmatpush1.msra.mxu0 %v607
    %641 = vmatprep.subr.mxu0 0.0
    %642 = vmatpush1.msra.mxu0 %v608
    %643 = vmatprep.subr.mxu0 0.0
    %644 = vmatpush1.msra.mxu0 %v609
    %645 = vmatprep.subr.mxu0 0.0
    %646 = vmatpush1.msra.mxu0 %v610
    %647 = vmatprep.subr.mxu0 0.0
    %648 = vmatpush1.msra.mxu0 %v611
    %649 = vmatprep.subr.mxu0 0.0
    %650 = vmatpush1.msra.mxu0 %v612
    %651 = vmatprep.subr.mxu0 0.0
    %652 = vmatpush1.msra.mxu0 %v613
    %653 = vmatprep.subr.mxu0 0.0
    %654 = vmatpush1.msra.mxu0 %v614
    %655 = vmatprep.subr.mxu0 0.0
    %656 = vmatpush1.msra.mxu0 %v615
    %657 = vmatprep.subr.mxu0 0.0
    %658 = vmatpush1.msra.mxu0 %v616
    %659 = vmatprep.subr.mxu0 0.0
    %660 = vmatpush1.msra.mxu0 %v617
    %661 = vmatprep.subr.mxu0 0.0
    %662 = vmatpush1.msra.mxu0 %v618
    %663 = vmatprep.subr.mxu0 0.0
    %664 = vmatpush1.msra.mxu0 %v619
    %665 = vmatprep.subr.mxu0 0.0
    %666 = vmatpush1.msra.mxu0 %v620
    %667 = vmatprep.subr.mxu0 0.0
    %668 = vmatpush1.msra.mxu0 %v621
    %669 = vmatprep.subr.mxu0 0.0
    %670 = vmatpush1.msra.mxu0 %v622
    %671 = vmatprep.subr.mxu0 0.0
    %672 = vmatpush1.msra.mxu0 %v623
    %673 = vmatprep.subr.mxu0 0.0
    %674 = vmatpush1.msra.mxu0 %v624
    %675 = vmatprep.subr.mxu0 0.0
    %676 = vmatpush1.msra.mxu0 %v625
    %677 = vmatprep.subr.mxu0 0.0
    %678 = vmatpush1.msra.mxu0 %v626
    %679 = vmatprep.subr.mxu0 0.0
    %680 = vmatpush1.msra.mxu0 0.0
    %681 = vmatprep.subr.mxu0 0.0
    %682 = vmatpush1.msra.mxu0 0.0
    %683 = vmatprep.subr.mxu0 0.0
    %684 = vmatpush1.msra.mxu0 0.0
    %685 = vmatprep.subr.mxu0 0.0
    %686 = vmatpush1.msra.mxu0 0.0
    %687 = vmatprep.subr.mxu0 0.0
    %688 = vmatpush1.msra.mxu0 0.0
    %689 = vmatprep.subr.mxu0 0.0
    %690 = vmatpush1.msra.mxu0 0.0
    %691 = vmatprep.subr.mxu0 0.0
    %692 = vmatpush1.msra.mxu0 0.0
    %693 = vmatprep.subr.mxu0 0.0
    %694 = vmatpush1.msra.mxu0 0.0
    %695 = vmatprep.mubr.f32.mxu0 %v627
    %696 = vmatmul.mubr.f32.gmra.mrb[0].mxu0 %v601
    %v697 = vpop.f32.mrb[0].mxu0
    %v698 = vadd.f32 0.0, %v697
    %v699 = vpop.f32.mrb[0].mxu0
    %700 = vmatprep.mubr.f32.mxu0 %v629
    %701 = vmatmul.mubr.f32.gmra.mrb[0].mxu0 %v602
    %v702 = vpop.f32.mrb[0].mxu0
    %v703 = vadd.f32 0.0, %v702
    %v704 = vpop.f32.mrb[0].mxu0
    %705 = vdwg.mxu0
    %v706 = vld [vmem:[#allocation15] sm:$0x1]
    %v708 = vlaneseq
    %v709 = vshrl.u32 %v708, 7
    %v710 = vsub.s32 0, %v709
    %v711 = vrot.slane %v706, %v710
    %v713 = vmul.f32 %v698, %v711
    %v714 = vmul.f32 %v703, %v711
    %v715 = vld [vmem:[#allocation16] sm:$0x1]
    %v717 = vlaneseq
    %v718 = vshrl.u32 %v717, 7
    %v719 = vsub.s32 0, %v718
    %v720 = vrot.slane %v715, %v719
    %v722 = vadd.f32 %v713, %v720
    %v723 = vadd.f32 %v714, %v720
    %v724 = vmax.f32 %v722, 0.0
    %v725 = vmax.f32 %v723, 0.0
    %v728 = vrot.slane %v724, 1
    %v729 = vrot.slane %v725, 1
    %v732 = vmax.f32 %v724, %v728
    %v733 = vmax.f32 %v725, %v729
    %v736 = vrot.slane %v732, 1
    %v737 = vrot.slane %v733, 1
    %v740 = vrot.slane %v732, 2
    %v741 = vrot.slane %v733, 2
    %v744 = vrot.slane %v732, 3
    %v745 = vrot.slane %v733, 3
    %v748 = vsel %vm340, %v732, %v736
    %v749 = vsel %vm340, %v733, %v737
    %v750 = vsel %vm552, %v748, %v740
    %v751 = vsel %vm552, %v749, %v741
    %v752 = vsel %vm555, %v750, %v744
    %v753 = vsel %vm555, %v751, %v745
    %v756 = vrot.slane %v752, 3
    %v757 = vrot.slane %v753, 3
    %v760 = vrot.slane %v752, 1
    %v761 = vrot.slane %v753, 1
    %v764 = vrot.slane %v752, 7
    %v765 = vrot.slane %v753, 7
    %v768 = vrot.slane %v752, 5
    %v769 = vrot.slane %v753, 5
    %v772 = vsel %vm340, %v756, %v760
    %v773 = vsel %vm340, %v757, %v761
    %v774 = vsel %vm552, %v772, %v764
    %v775 = vsel %vm552, %v773, %v765
    %v776 = vsel %vm555, %v774, %v768
    %v777 = vsel %vm555, %v775, %v769
    %v780 = vcombine.low %v752, %v776
    %v781 = vcombine.low %v753, %v777
    %v782 = vcombine.low %v780, %v781
    %v783 = vcombine.high %v780, %v781
    %v786 = vpack.c.bf16 %v782, %v782
    %v787 = vpack.c.bf16 %v783, %v783
    %v788 = vld [vmem:[#allocation18] sm:$0xff]
    %v789 = vld [vmem:[#allocation18 + $0x8] sm:$0xff]
    %v790 = vld [vmem:[#allocation18 + $0x10] sm:$0xff]
    %v791 = vld [vmem:[#allocation18 + $0x18] sm:$0xff]
    %v792 = vld [vmem:[#allocation18 + $0x20] sm:$0xff]
    %v793 = vld [vmem:[#allocation18 + $0x28] sm:$0xff]
    %v794 = vld [vmem:[#allocation18 + $0x30] sm:$0xff]
    %v795 = vld [vmem:[#allocation18 + $0x38] sm:$0xff]
    %v796 = vld [vmem:[#allocation18 + $0x40] sm:$0xff]
    %v797 = vld [vmem:[#allocation18 + $0x48] sm:$0xff]
    %v798 = vld [vmem:[#allocation18 + $0x50] sm:$0xff]
    %v799 = vld [vmem:[#allocation18 + $0x58] sm:$0xff]
    %v800 = vld [vmem:[#allocation18 + $0x60] sm:$0xff]
    %v801 = vld [vmem:[#allocation18 + $0x68] sm:$0xff]
    %v802 = vld [vmem:[#allocation18 + $0x70] sm:$0xff]
    %v803 = vld [vmem:[#allocation18 + $0x78] sm:$0xff]
    %v804 = vld [vmem:[#allocation18 + $0x80] sm:$0xff]
    %v805 = vld [vmem:[#allocation18 + $0x88] sm:$0xff]
    %v806 = vld [vmem:[#allocation18 + $0x90] sm:$0xff]
    %v807 = vld [vmem:[#allocation18 + $0x98] sm:$0xff]
    %v808 = vld [vmem:[#allocation18 + $0xa0] sm:$0xff]
    %v809 = vld [vmem:[#allocation18 + $0xa8] sm:$0xff]
    %v810 = vld [vmem:[#allocation18 + $0xb0] sm:$0xff]
    %v811 = vld [vmem:[#allocation18 + $0xb8] sm:$0xff]
    %v812 = vld [vmem:[#allocation18 + $0xc0] sm:$0xff]
    %v813 = vld [vmem:[#allocation18 + $0xc8] sm:$0xff]
    %v814 = vld [vmem:[#allocation18 + $0xd0] sm:$0xff]
    %v815 = vld [vmem:[#allocation18 + $0xd8] sm:$0xff]
    %v816 = vld [vmem:[#allocation18 + $0xe0] sm:$0xff]
    %v817 = vld [vmem:[#allocation18 + $0xe8] sm:$0xff]
    %v818 = vld [vmem:[#allocation18 + $0xf0] sm:$0xff]
    %v819 = vld [vmem:[#allocation18 + $0xf8] sm:$0xff]
    %v820 = vld [vmem:[#allocation18 + $0x100] sm:$0xff]
    %v821 = vld [vmem:[#allocation18 + $0x108] sm:$0xff]
    %v822 = vld [vmem:[#allocation18 + $0x110] sm:$0xff]
    %v823 = vld [vmem:[#allocation18 + $0x118] sm:$0xff]
    %v824 = vld [vmem:[#allocation18 + $0x120] sm:$0xff]
    %v825 = vld [vmem:[#allocation18 + $0x128] sm:$0xff]
    %v826 = vld [vmem:[#allocation18 + $0x130] sm:$0xff]
    %v827 = vld [vmem:[#allocation18 + $0x138] sm:$0xff]
    %v828 = vld [vmem:[#allocation18 + $0x140] sm:$0xff]
    %v829 = vld [vmem:[#allocation18 + $0x148] sm:$0xff]
    %v830 = vld [vmem:[#allocation18 + $0x150] sm:$0xff]
    %v831 = vld [vmem:[#allocation18 + $0x158] sm:$0xff]
    %v832 = vld [vmem:[#allocation18 + $0x160] sm:$0xff]
    %v833 = vld [vmem:[#allocation18 + $0x168] sm:$0xff]
    %v834 = vld [vmem:[#allocation18 + $0x170] sm:$0xff]
    %v835 = vld [vmem:[#allocation18 + $0x178] sm:$0xff]
    %v836 = vld [vmem:[#allocation18 + $0x180] sm:$0xff]
    %v837 = vld [vmem:[#allocation18 + $0x188] sm:$0xff]
    %v838 = vld [vmem:[#allocation18 + $0x190] sm:$0xff]
    %v839 = vld [vmem:[#allocation18 + $0x198] sm:$0xff]
    %v840 = vld [vmem:[#allocation18 + $0x1a0] sm:$0xff]
    %v841 = vld [vmem:[#allocation18 + $0x1a8] sm:$0xff]
    %v842 = vld [vmem:[#allocation18 + $0x1b0] sm:$0xff]
    %v843 = vld [vmem:[#allocation18 + $0x1b8] sm:$0xff]
    %v844 = vld [vmem:[#allocation18 + $0x1c0] sm:$0xff]
    %v845 = vld [vmem:[#allocation18 + $0x1c8] sm:$0xff]
    %v846 = vld [vmem:[#allocation18 + $0x1d0] sm:$0xff]
    %v847 = vld [vmem:[#allocation18 + $0x1d8] sm:$0xff]
    %v848 = vld [vmem:[#allocation18 + $0x1e0] sm:$0xff]
    %v849 = vld [vmem:[#allocation18 + $0x1e8] sm:$0xff]
    %v850 = vld [vmem:[#allocation18 + $0x1f0] sm:$0xff]
    %v851 = vld [vmem:[#allocation18 + $0x1f8] sm:$0xff]
    %v852 = vld [vmem:[#allocation18 + $0x200] sm:$0xff]
    %v853 = vld [vmem:[#allocation18 + $0x208] sm:$0xff]
    %v854 = vld [vmem:[#allocation18 + $0x210] sm:$0xff]
    %v855 = vld [vmem:[#allocation18 + $0x218] sm:$0xff]
    %v856 = vld [vmem:[#allocation18 + $0x220] sm:$0xff]
    %v857 = vld [vmem:[#allocation18 + $0x228] sm:$0xff]
    %v858 = vld [vmem:[#allocation18 + $0x230] sm:$0xff]
    %v859 = vld [vmem:[#allocation18 + $0x238] sm:$0xff]
    %v860 = vld [vmem:[#allocation18 + $0x240] sm:$0xff]
    %v861 = vld [vmem:[#allocation18 + $0x248] sm:$0xff]
    %v862 = vld [vmem:[#allocation18 + $0x250] sm:$0xff]
    %v863 = vld [vmem:[#allocation18 + $0x258] sm:$0xff]
    %v864 = vld [vmem:[#allocation18 + $0x260] sm:$0xff]
    %v865 = vld [vmem:[#allocation18 + $0x268] sm:$0xff]
    %v866 = vld [vmem:[#allocation18 + $0x270] sm:$0xff]
    %v867 = vld [vmem:[#allocation18 + $0x278] sm:$0xff]
    %v868 = vld [vmem:[#allocation18 + $0x280] sm:$0xff]
    %v869 = vld [vmem:[#allocation18 + $0x288] sm:$0xff]
    %v870 = vld [vmem:[#allocation18 + $0x290] sm:$0xff]
    %v871 = vld [vmem:[#allocation18 + $0x298] sm:$0xff]
    %v872 = vld [vmem:[#allocation18 + $0x2a0] sm:$0xff]
    %v873 = vld [vmem:[#allocation18 + $0x2a8] sm:$0xff]
    %v874 = vld [vmem:[#allocation18 + $0x2b0] sm:$0xff]
    %v875 = vld [vmem:[#allocation18 + $0x2b8] sm:$0xff]
    %v876 = vld [vmem:[#allocation18 + $0x2c0] sm:$0xff]
    %v877 = vld [vmem:[#allocation18 + $0x2c8] sm:$0xff]
    %v878 = vld [vmem:[#allocation18 + $0x2d0] sm:$0xff]
    %v879 = vld [vmem:[#allocation18 + $0x2d8] sm:$0xff]
    %v880 = vld [vmem:[#allocation18 + $0x2e0] sm:$0xff]
    %v881 = vld [vmem:[#allocation18 + $0x2e8] sm:$0xff]
    %v882 = vld [vmem:[#allocation18 + $0x2f0] sm:$0xff]
    %v883 = vld [vmem:[#allocation18 + $0x2f8] sm:$0xff]
    %v884 = vld [vmem:[#allocation18 + $0x300] sm:$0xff]
    %v885 = vld [vmem:[#allocation18 + $0x308] sm:$0xff]
    %v886 = vld [vmem:[#allocation18 + $0x310] sm:$0xff]
    %v887 = vld [vmem:[#allocation18 + $0x318] sm:$0xff]
    %v888 = vld [vmem:[#allocation18 + $0x320] sm:$0xff]
    %v889 = vld [vmem:[#allocation18 + $0x328] sm:$0xff]
    %v890 = vld [vmem:[#allocation18 + $0x330] sm:$0xff]
    %v891 = vld [vmem:[#allocation18 + $0x338] sm:$0xff]
    %v892 = vld [vmem:[#allocation18 + $0x340] sm:$0xff]
    %v893 = vld [vmem:[#allocation18 + $0x348] sm:$0xff]
    %v894 = vld [vmem:[#allocation18 + $0x350] sm:$0xff]
    %v895 = vld [vmem:[#allocation18 + $0x358] sm:$0xff]
    %v896 = vld [vmem:[#allocation18 + $0x360] sm:$0xff]
    %v897 = vld [vmem:[#allocation18 + $0x368] sm:$0xff]
    %v898 = vld [vmem:[#allocation18 + $0x370] sm:$0xff]
    %v899 = vld [vmem:[#allocation18 + $0x378] sm:$0xff]
    %v900 = vld [vmem:[#allocation18 + $0x380] sm:$0xff]
    %v901 = vld [vmem:[#allocation18 + $0x388] sm:$0xff]
    %v902 = vld [vmem:[#allocation18 + $0x390] sm:$0xff]
    %v903 = vld [vmem:[#allocation18 + $0x398] sm:$0xff]
    %v904 = vld [vmem:[#allocation18 + $0x3a0] sm:$0xff]
    %v905 = vld [vmem:[#allocation18 + $0x3a8] sm:$0xff]
    %v906 = vld [vmem:[#allocation18 + $0x3b0] sm:$0xff]
    %v907 = vld [vmem:[#allocation18 + $0x3b8] sm:$0xff]
    %v908 = vld [vmem:[#allocation18 + $0x3c0] sm:$0xff]
    %v909 = vld [vmem:[#allocation18 + $0x3c8] sm:$0xff]
    %v910 = vld [vmem:[#allocation18 + $0x3d0] sm:$0xff]
    %v911 = vld [vmem:[#allocation18 + $0x3d8] sm:$0xff]
    %v912 = vld [vmem:[#allocation18 + $0x3e0] sm:$0xff]
    %v913 = vld [vmem:[#allocation18 + $0x3e8] sm:$0xff]
    %v914 = vld [vmem:[#allocation18 + $0x3f0] sm:$0xff]
    %v915 = vld [vmem:[#allocation18 + $0x3f8] sm:$0xff]
    %v916 = vld [vmem:[%s9] sm:$0xff]
    %v918 = vlaneseq
    %v919 = vshrl.u32 %v918, 7
    %v920 = vsub.s32 0, %v919
    %v921 = vrot.slane %v916, %v920
    %v922 = vlaneseq
    %v923 = vshrl.u32 %v922, 7
    %v924 = vsub.s32 1, %v923
    %v925 = vrot.slane %v916, %v924
    %v926 = vlaneseq
    %v927 = vshrl.u32 %v926, 7
    %v928 = vsub.s32 2, %v927
    %v929 = vrot.slane %v916, %v928
    %v930 = vlaneseq
    %v931 = vshrl.u32 %v930, 7
    %v932 = vsub.s32 3, %v931
    %v933 = vrot.slane %v916, %v932
    %v934 = vlaneseq
    %v935 = vshrl.u32 %v934, 7
    %v936 = vsub.s32 4, %v935
    %v937 = vrot.slane %v916, %v936
    %v938 = vlaneseq
    %v939 = vshrl.u32 %v938, 7
    %v940 = vsub.s32 5, %v939
    %v941 = vrot.slane %v916, %v940
    %v942 = vlaneseq
    %v943 = vshrl.u32 %v942, 7
    %v944 = vsub.s32 6, %v943
    %v945 = vrot.slane %v916, %v944
    %v946 = vlaneseq
    %v947 = vshrl.u32 %v946, 7
    %v948 = vsub.s32 7, %v947
    %v949 = vrot.slane %v916, %v948
    %v1086 = vunpack.c.l.b16 %v788
    %v1087 = vunpack.c.h.b16 %v788
    %v1088 = vunpack.c.l.b16 %v789
    %v1089 = vunpack.c.h.b16 %v789
    %v1090 = vunpack.c.l.b16 %v790
    %v1091 = vunpack.c.h.b16 %v790
    %v1092 = vunpack.c.l.b16 %v791
    %v1093 = vunpack.c.h.b16 %v791
    %v1094 = vunpack.c.l.b16 %v792
    %v1095 = vunpack.c.h.b16 %v792
    %v1096 = vunpack.c.l.b16 %v793
    %v1097 = vunpack.c.h.b16 %v793
    %v1098 = vunpack.c.l.b16 %v794
    %v1099 = vunpack.c.h.b16 %v794
    %v1100 = vunpack.c.l.b16 %v795
    %v1101 = vunpack.c.h.b16 %v795
    %v1102 = vunpack.c.l.b16 %v796
    %v1103 = vunpack.c.h.b16 %v796
    %v1104 = vunpack.c.l.b16 %v797
    %v1105 = vunpack.c.h.b16 %v797
    %v1106 = vunpack.c.l.b16 %v798
    %v1107 = vunpack.c.h.b16 %v798
    %v1108 = vunpack.c.l.b16 %v799
    %v1109 = vunpack.c.h.b16 %v799
    %v1110 = vunpack.c.l.b16 %v800
    %v1111 = vunpack.c.h.b16 %v800
    %v1112 = vunpack.c.l.b16 %v801
    %v1113 = vunpack.c.h.b16 %v801
    %v1114 = vunpack.c.l.b16 %v802
    %v1115 = vunpack.c.h.b16 %v802
    %v1116 = vunpack.c.l.b16 %v803
    %v1117 = vunpack.c.h.b16 %v803
    %v1118 = vunpack.c.l.b16 %v804
    %v1119 = vunpack.c.h.b16 %v804
    %v1120 = vunpack.c.l.b16 %v805
    %v1121 = vunpack.c.h.b16 %v805
    %v1122 = vunpack.c.l.b16 %v806
    %v1123 = vunpack.c.h.b16 %v806
    %v1124 = vunpack.c.l.b16 %v807
    %v1125 = vunpack.c.h.b16 %v807
    %v1126 = vunpack.c.l.b16 %v808
    %v1127 = vunpack.c.h.b16 %v808
    %v1128 = vunpack.c.l.b16 %v809
    %v1129 = vunpack.c.h.b16 %v809
    %v1130 = vunpack.c.l.b16 %v810
    %v1131 = vunpack.c.h.b16 %v810
    %v1132 = vunpack.c.l.b16 %v811
    %v1133 = vunpack.c.h.b16 %v811
    %v1134 = vunpack.c.l.b16 %v812
    %v1135 = vunpack.c.h.b16 %v812
    %v1136 = vunpack.c.l.b16 %v813
    %v1137 = vunpack.c.h.b16 %v813
    %v1138 = vunpack.c.l.b16 %v814
    %v1139 = vunpack.c.h.b16 %v814
    %v1140 = vunpack.c.l.b16 %v815
    %v1141 = vunpack.c.h.b16 %v815
    %v1142 = vunpack.c.l.b16 %v816
    %v1143 = vunpack.c.h.b16 %v816
    %v1144 = vunpack.c.l.b16 %v817
    %v1145 = vunpack.c.h.b16 %v817
    %v1146 = vunpack.c.l.b16 %v818
    %v1147 = vunpack.c.h.b16 %v818
    %v1148 = vunpack.c.l.b16 %v819
    %v1149 = vunpack.c.h.b16 %v819
    %v1150 = vunpack.c.l.b16 %v820
    %v1151 = vunpack.c.h.b16 %v820
    %v1152 = vunpack.c.l.b16 %v821
    %v1153 = vunpack.c.h.b16 %v821
    %v1154 = vunpack.c.l.b16 %v822
    %v1155 = vunpack.c.h.b16 %v822
    %v1156 = vunpack.c.l.b16 %v823
    %v1157 = vunpack.c.h.b16 %v823
    %v1158 = vunpack.c.l.b16 %v824
    %v1159 = vunpack.c.h.b16 %v824
    %v1160 = vunpack.c.l.b16 %v825
    %v1161 = vunpack.c.h.b16 %v825
    %v1162 = vunpack.c.l.b16 %v826
    %v1163 = vunpack.c.h.b16 %v826
    %v1164 = vunpack.c.l.b16 %v827
    %v1165 = vunpack.c.h.b16 %v827
    %v1166 = vunpack.c.l.b16 %v828
    %v1167 = vunpack.c.h.b16 %v828
    %v1168 = vunpack.c.l.b16 %v829
    %v1169 = vunpack.c.h.b16 %v829
    %v1170 = vunpack.c.l.b16 %v830
    %v1171 = vunpack.c.h.b16 %v830
    %v1172 = vunpack.c.l.b16 %v831
    %v1173 = vunpack.c.h.b16 %v831
    %v1174 = vunpack.c.l.b16 %v832
    %v1175 = vunpack.c.h.b16 %v832
    %v1176 = vunpack.c.l.b16 %v833
    %v1177 = vunpack.c.h.b16 %v833
    %v1178 = vunpack.c.l.b16 %v834
    %v1179 = vunpack.c.h.b16 %v834
    %v1180 = vunpack.c.l.b16 %v835
    %v1181 = vunpack.c.h.b16 %v835
    %v1182 = vunpack.c.l.b16 %v836
    %v1183 = vunpack.c.h.b16 %v836
    %v1184 = vunpack.c.l.b16 %v837
    %v1185 = vunpack.c.h.b16 %v837
    %v1186 = vunpack.c.l.b16 %v838
    %v1187 = vunpack.c.h.b16 %v838
    %v1188 = vunpack.c.l.b16 %v839
    %v1189 = vunpack.c.h.b16 %v839
    %v1190 = vunpack.c.l.b16 %v840
    %v1191 = vunpack.c.h.b16 %v840
    %v1192 = vunpack.c.l.b16 %v841
    %v1193 = vunpack.c.h.b16 %v841
    %v1194 = vunpack.c.l.b16 %v842
    %v1195 = vunpack.c.h.b16 %v842
    %v1196 = vunpack.c.l.b16 %v843
    %v1197 = vunpack.c.h.b16 %v843
    %v1198 = vunpack.c.l.b16 %v844
    %v1199 = vunpack.c.h.b16 %v844
    %v1200 = vunpack.c.l.b16 %v845
    %v1201 = vunpack.c.h.b16 %v845
    %v1202 = vunpack.c.l.b16 %v846
    %v1203 = vunpack.c.h.b16 %v846
    %v1204 = vunpack.c.l.b16 %v847
    %v1205 = vunpack.c.h.b16 %v847
    %v1206 = vunpack.c.l.b16 %v848
    %v1207 = vunpack.c.h.b16 %v848
    %v1208 = vunpack.c.l.b16 %v849
    %v1209 = vunpack.c.h.b16 %v849
    %v1210 = vunpack.c.l.b16 %v850
    %v1211 = vunpack.c.h.b16 %v850
    %v1212 = vunpack.c.l.b16 %v851
    %v1213 = vunpack.c.h.b16 %v851
    %v1214 = vunpack.c.l.b16 %v852
    %v1215 = vunpack.c.h.b16 %v852
    %v1216 = vunpack.c.l.b16 %v853
    %v1217 = vunpack.c.h.b16 %v853
    %v1218 = vunpack.c.l.b16 %v854
    %v1219 = vunpack.c.h.b16 %v854
    %v1220 = vunpack.c.l.b16 %v855
    %v1221 = vunpack.c.h.b16 %v855
    %v1222 = vunpack.c.l.b16 %v856
    %v1223 = vunpack.c.h.b16 %v856
    %v1224 = vunpack.c.l.b16 %v857
    %v1225 = vunpack.c.h.b16 %v857
    %v1226 = vunpack.c.l.b16 %v858
    %v1227 = vunpack.c.h.b16 %v858
    %v1228 = vunpack.c.l.b16 %v859
    %v1229 = vunpack.c.h.b16 %v859
    %v1230 = vunpack.c.l.b16 %v860
    %v1231 = vunpack.c.h.b16 %v860
    %v1232 = vunpack.c.l.b16 %v861
    %v1233 = vunpack.c.h.b16 %v861
    %v1234 = vunpack.c.l.b16 %v862
    %v1235 = vunpack.c.h.b16 %v862
    %v1236 = vunpack.c.l.b16 %v863
    %v1237 = vunpack.c.h.b16 %v863
    %v1238 = vunpack.c.l.b16 %v864
    %v1239 = vunpack.c.h.b16 %v864
    %v1240 = vunpack.c.l.b16 %v865
    %v1241 = vunpack.c.h.b16 %v865
    %v1242 = vunpack.c.l.b16 %v866
    %v1243 = vunpack.c.h.b16 %v866
    %v1244 = vunpack.c.l.b16 %v867
    %v1245 = vunpack.c.h.b16 %v867
    %v1246 = vunpack.c.l.b16 %v868
    %v1247 = vunpack.c.h.b16 %v868
    %v1248 = vunpack.c.l.b16 %v869
    %v1249 = vunpack.c.h.b16 %v869
    %v1250 = vunpack.c.l.b16 %v870
    %v1251 = vunpack.c.h.b16 %v870
    %v1252 = vunpack.c.l.b16 %v871
    %v1253 = vunpack.c.h.b16 %v871
    %v1254 = vunpack.c.l.b16 %v872
    %v1255 = vunpack.c.h.b16 %v872
    %v1256 = vunpack.c.l.b16 %v873
    %v1257 = vunpack.c.h.b16 %v873
    %v1258 = vunpack.c.l.b16 %v874
    %v1259 = vunpack.c.h.b16 %v874
    %v1260 = vunpack.c.l.b16 %v875
    %v1261 = vunpack.c.h.b16 %v875
    %v1262 = vunpack.c.l.b16 %v876
    %v1263 = vunpack.c.h.b16 %v876
    %v1264 = vunpack.c.l.b16 %v877
    %v1265 = vunpack.c.h.b16 %v877
    %v1266 = vunpack.c.l.b16 %v878
    %v1267 = vunpack.c.h.b16 %v878
    %v1268 = vunpack.c.l.b16 %v879
    %v1269 = vunpack.c.h.b16 %v879
    %v1270 = vunpack.c.l.b16 %v880
    %v1271 = vunpack.c.h.b16 %v880
    %v1272 = vunpack.c.l.b16 %v881
    %v1273 = vunpack.c.h.b16 %v881
    %v1274 = vunpack.c.l.b16 %v882
    %v1275 = vunpack.c.h.b16 %v882
    %v1276 = vunpack.c.l.b16 %v883
    %v1277 = vunpack.c.h.b16 %v883
    %v1278 = vunpack.c.l.b16 %v884
    %v1279 = vunpack.c.h.b16 %v884
    %v1280 = vunpack.c.l.b16 %v885
    %v1281 = vunpack.c.h.b16 %v885
    %v1282 = vunpack.c.l.b16 %v886
    %v1283 = vunpack.c.h.b16 %v886
    %v1284 = vunpack.c.l.b16 %v887
    %v1285 = vunpack.c.h.b16 %v887
    %v1286 = vunpack.c.l.b16 %v888
    %v1287 = vunpack.c.h.b16 %v888
    %v1288 = vunpack.c.l.b16 %v889
    %v1289 = vunpack.c.h.b16 %v889
    %v1290 = vunpack.c.l.b16 %v890
    %v1291 = vunpack.c.h.b16 %v890
    %v1292 = vunpack.c.l.b16 %v891
    %v1293 = vunpack.c.h.b16 %v891
    %v1294 = vunpack.c.l.b16 %v892
    %v1295 = vunpack.c.h.b16 %v892
    %v1296 = vunpack.c.l.b16 %v893
    %v1297 = vunpack.c.h.b16 %v893
    %v1298 = vunpack.c.l.b16 %v894
    %v1299 = vunpack.c.h.b16 %v894
    %v1300 = vunpack.c.l.b16 %v895
    %v1301 = vunpack.c.h.b16 %v895
    %v1302 = vunpack.c.l.b16 %v896
    %v1303 = vunpack.c.h.b16 %v896
    %v1304 = vunpack.c.l.b16 %v897
    %v1305 = vunpack.c.h.b16 %v897
    %v1306 = vunpack.c.l.b16 %v898
    %v1307 = vunpack.c.h.b16 %v898
    %v1308 = vunpack.c.l.b16 %v899
    %v1309 = vunpack.c.h.b16 %v899
    %v1310 = vunpack.c.l.b16 %v900
    %v1311 = vunpack.c.h.b16 %v900
    %v1312 = vunpack.c.l.b16 %v901
    %v1313 = vunpack.c.h.b16 %v901
    %v1314 = vunpack.c.l.b16 %v902
    %v1315 = vunpack.c.h.b16 %v902
    %v1316 = vunpack.c.l.b16 %v903
    %v1317 = vunpack.c.h.b16 %v903
    %v1318 = vunpack.c.l.b16 %v904
    %v1319 = vunpack.c.h.b16 %v904
    %v1320 = vunpack.c.l.b16 %v905
    %v1321 = vunpack.c.h.b16 %v905
    %v1322 = vunpack.c.l.b16 %v906
    %v1323 = vunpack.c.h.b16 %v906
    %v1324 = vunpack.c.l.b16 %v907
    %v1325 = vunpack.c.h.b16 %v907
    %v1326 = vunpack.c.l.b16 %v908
    %v1327 = vunpack.c.h.b16 %v908
    %v1328 = vunpack.c.l.b16 %v909
    %v1329 = vunpack.c.h.b16 %v909
    %v1330 = vunpack.c.l.b16 %v910
    %v1331 = vunpack.c.h.b16 %v910
    %v1332 = vunpack.c.l.b16 %v911
    %v1333 = vunpack.c.h.b16 %v911
    %v1334 = vunpack.c.l.b16 %v912
    %v1335 = vunpack.c.h.b16 %v912
    %v1336 = vunpack.c.l.b16 %v913
    %v1337 = vunpack.c.h.b16 %v913
    %v1338 = vunpack.c.l.b16 %v914
    %v1339 = vunpack.c.h.b16 %v914
    %v1340 = vunpack.c.l.b16 %v915
    %v1341 = vunpack.c.h.b16 %v915
    %v1342 = vpack.c.b16 %v1094, %v1086
    %v1343 = vpack.c.b16 %v1095, %v1087
    %v1344 = vpack.c.b16 %v1096, %v1088
    %v1345 = vpack.c.b16 %v1097, %v1089
    %v1346 = vpack.c.b16 %v1098, %v1090
    %v1347 = vpack.c.b16 %v1099, %v1091
    %v1348 = vpack.c.b16 %v1100, %v1092
    %v1349 = vpack.c.b16 %v1101, %v1093
    %v1350 = vpack.c.b16 %v1110, %v1102
    %v1351 = vpack.c.b16 %v1111, %v1103
    %v1352 = vpack.c.b16 %v1112, %v1104
    %v1353 = vpack.c.b16 %v1113, %v1105
    %v1354 = vpack.c.b16 %v1114, %v1106
    %v1355 = vpack.c.b16 %v1115, %v1107
    %v1356 = vpack.c.b16 %v1116, %v1108
    %v1357 = vpack.c.b16 %v1117, %v1109
    %v1358 = vpack.c.b16 %v1126, %v1118
    %v1359 = vpack.c.b16 %v1127, %v1119
    %v1360 = vpack.c.b16 %v1128, %v1120
    %v1361 = vpack.c.b16 %v1129, %v1121
    %v1362 = vpack.c.b16 %v1130, %v1122
    %v1363 = vpack.c.b16 %v1131, %v1123
    %v1364 = vpack.c.b16 %v1132, %v1124
    %v1365 = vpack.c.b16 %v1133, %v1125
    %v1366 = vpack.c.b16 %v1142, %v1134
    %v1367 = vpack.c.b16 %v1143, %v1135
    %v1368 = vpack.c.b16 %v1144, %v1136
    %v1369 = vpack.c.b16 %v1145, %v1137
    %v1370 = vpack.c.b16 %v1146, %v1138
    %v1371 = vpack.c.b16 %v1147, %v1139
    %v1372 = vpack.c.b16 %v1148, %v1140
    %v1373 = vpack.c.b16 %v1149, %v1141
    %v1374 = vpack.c.b16 %v1158, %v1150
    %v1375 = vpack.c.b16 %v1159, %v1151
    %v1376 = vpack.c.b16 %v1160, %v1152
    %v1377 = vpack.c.b16 %v1161, %v1153
    %v1378 = vpack.c.b16 %v1162, %v1154
    %v1379 = vpack.c.b16 %v1163, %v1155
    %v1380 = vpack.c.b16 %v1164, %v1156
    %v1381 = vpack.c.b16 %v1165, %v1157
    %v1382 = vpack.c.b16 %v1174, %v1166
    %v1383 = vpack.c.b16 %v1175, %v1167
    %v1384 = vpack.c.b16 %v1176, %v1168
    %v1385 = vpack.c.b16 %v1177, %v1169
    %v1386 = vpack.c.b16 %v1178, %v1170
    %v1387 = vpack.c.b16 %v1179, %v1171
    %v1388 = vpack.c.b16 %v1180, %v1172
    %v1389 = vpack.c.b16 %v1181, %v1173
    %v1390 = vpack.c.b16 %v1190, %v1182
    %v1391 = vpack.c.b16 %v1191, %v1183
    %v1392 = vpack.c.b16 %v1192, %v1184
    %v1393 = vpack.c.b16 %v1193, %v1185
    %v1394 = vpack.c.b16 %v1194, %v1186
    %v1395 = vpack.c.b16 %v1195, %v1187
    %v1396 = vpack.c.b16 %v1196, %v1188
    %v1397 = vpack.c.b16 %v1197, %v1189
    %v1398 = vpack.c.b16 %v1206, %v1198
    %v1399 = vpack.c.b16 %v1207, %v1199
    %v1400 = vpack.c.b16 %v1208, %v1200
    %v1401 = vpack.c.b16 %v1209, %v1201
    %v1402 = vpack.c.b16 %v1210, %v1202
    %v1403 = vpack.c.b16 %v1211, %v1203
    %v1404 = vpack.c.b16 %v1212, %v1204
    %v1405 = vpack.c.b16 %v1213, %v1205
    %v1406 = vpack.c.b16 %v1222, %v1214
    %v1407 = vpack.c.b16 %v1223, %v1215
    %v1408 = vpack.c.b16 %v1224, %v1216
    %v1409 = vpack.c.b16 %v1225, %v1217
    %v1410 = vpack.c.b16 %v1226, %v1218
    %v1411 = vpack.c.b16 %v1227, %v1219
    %v1412 = vpack.c.b16 %v1228, %v1220
    %v1413 = vpack.c.b16 %v1229, %v1221
    %v1414 = vpack.c.b16 %v1238, %v1230
    %v1415 = vpack.c.b16 %v1239, %v1231
    %v1416 = vpack.c.b16 %v1240, %v1232
    %v1417 = vpack.c.b16 %v1241, %v1233
    %v1418 = vpack.c.b16 %v1242, %v1234
    %v1419 = vpack.c.b16 %v1243, %v1235
    %v1420 = vpack.c.b16 %v1244, %v1236
    %v1421 = vpack.c.b16 %v1245, %v1237
    %v1422 = vpack.c.b16 %v1254, %v1246
    %v1423 = vpack.c.b16 %v1255, %v1247
    %v1424 = vpack.c.b16 %v1256, %v1248
    %v1425 = vpack.c.b16 %v1257, %v1249
    %v1426 = vpack.c.b16 %v1258, %v1250
    %v1427 = vpack.c.b16 %v1259, %v1251
    %v1428 = vpack.c.b16 %v1260, %v1252
    %v1429 = vpack.c.b16 %v1261, %v1253
    %v1430 = vpack.c.b16 %v1270, %v1262
    %v1431 = vpack.c.b16 %v1271, %v1263
    %v1432 = vpack.c.b16 %v1272, %v1264
    %v1433 = vpack.c.b16 %v1273, %v1265
    %v1434 = vpack.c.b16 %v1274, %v1266
    %v1435 = vpack.c.b16 %v1275, %v1267
    %v1436 = vpack.c.b16 %v1276, %v1268
    %v1437 = vpack.c.b16 %v1277, %v1269
    %v1438 = vpack.c.b16 %v1286, %v1278
    %v1439 = vpack.c.b16 %v1287, %v1279
    %v1440 = vpack.c.b16 %v1288, %v1280
    %v1441 = vpack.c.b16 %v1289, %v1281
    %v1442 = vpack.c.b16 %v1290, %v1282
    %v1443 = vpack.c.b16 %v1291, %v1283
    %v1444 = vpack.c.b16 %v1292, %v1284
    %v1445 = vpack.c.b16 %v1293, %v1285
    %v1446 = vpack.c.b16 %v1302, %v1294
    %v1447 = vpack.c.b16 %v1303, %v1295
    %v1448 = vpack.c.b16 %v1304, %v1296
    %v1449 = vpack.c.b16 %v1305, %v1297
    %v1450 = vpack.c.b16 %v1306, %v1298
    %v1451 = vpack.c.b16 %v1307, %v1299
    %v1452 = vpack.c.b16 %v1308, %v1300
    %v1453 = vpack.c.b16 %v1309, %v1301
    %v1454 = vpack.c.b16 %v1318, %v1310
    %v1455 = vpack.c.b16 %v1319, %v1311
    %v1456 = vpack.c.b16 %v1320, %v1312
    %v1457 = vpack.c.b16 %v1321, %v1313
    %v1458 = vpack.c.b16 %v1322, %v1314
    %v1459 = vpack.c.b16 %v1323, %v1315
    %v1460 = vpack.c.b16 %v1324, %v1316
    %v1461 = vpack.c.b16 %v1325, %v1317
    %v1462 = vpack.c.b16 %v1334, %v1326
    %v1463 = vpack.c.b16 %v1335, %v1327
    %v1464 = vpack.c.b16 %v1336, %v1328
    %v1465 = vpack.c.b16 %v1337, %v1329
    %v1466 = vpack.c.b16 %v1338, %v1330
    %v1467 = vpack.c.b16 %v1339, %v1331
    %v1468 = vpack.c.b16 %v1340, %v1332
    %v1469 = vpack.c.b16 %v1341, %v1333
    %1598 = vmatprep.subr.bf16.mxu0 %v1343
    %1599 = vmatpush1.bf16.msra.mxu0 %v1342
    %1600 = vmatprep.subr.bf16.mxu0 %v1351
    %1601 = vmatpush1.bf16.msra.mxu0 %v1350
    %1602 = vmatprep.subr.bf16.mxu0 %v1359
    %1603 = vmatpush1.bf16.msra.mxu0 %v1358
    %1604 = vmatprep.subr.bf16.mxu0 %v1367
    %1605 = vmatpush1.bf16.msra.mxu0 %v1366
    %1606 = vmatprep.subr.bf16.mxu0 %v1375
    %1607 = vmatpush1.bf16.msra.mxu0 %v1374
    %1608 = vmatprep.subr.bf16.mxu0 %v1383
    %1609 = vmatpush1.bf16.msra.mxu0 %v1382
    %1610 = vmatprep.subr.bf16.mxu0 %v1391
    %1611 = vmatpush1.bf16.msra.mxu0 %v1390
    %1612 = vmatprep.subr.bf16.mxu0 %v1399
    %1613 = vmatpush1.bf16.msra.mxu0 %v1398
    %1614 = vmatprep.subr.bf16.mxu0 %v1407
    %1615 = vmatpush1.bf16.msra.mxu0 %v1406
    %1616 = vmatprep.subr.bf16.mxu0 %v1415
    %1617 = vmatpush1.bf16.msra.mxu0 %v1414
    %1618 = vmatprep.subr.bf16.mxu0 %v1423
    %1619 = vmatpush1.bf16.msra.mxu0 %v1422
    %1620 = vmatprep.subr.bf16.mxu0 %v1431
    %1621 = vmatpush1.bf16.msra.mxu0 %v1430
    %1622 = vmatprep.subr.bf16.mxu0 %v1439
    %1623 = vmatpush1.bf16.msra.mxu0 %v1438
    %1624 = vmatprep.subr.bf16.mxu0 %v1447
    %1625 = vmatpush1.bf16.msra.mxu0 %v1446
    %1626 = vmatprep.subr.bf16.mxu0 %v1455
    %1627 = vmatpush1.bf16.msra.mxu0 %v1454
    %1628 = vmatprep.subr.bf16.mxu0 %v1463
    %1629 = vmatpush1.bf16.msra.mxu0 %v1462
    %1630 = vmatprep.mubr.bf16.mxu0 %v787
    %1631 = vmatmul.mubr.bf16.gmra.mrb[0].mxu0 %v786
    %v1632 = vpop.f32.mrb[0].mxu0
    %v1633 = vadd.f32 %v921, %v1632
    %v1634 = vpop.f32.mrb[0].mxu0
    %v1635 = vadd.f32 %v925, %v1634
    %v1636 = vpop.f32.mrb[0].mxu0
    %v1637 = vpop.f32.mrb[0].mxu0
    %1638 = vdwg.mxu0
    %1639 = vmatprep.subr.bf16.mxu0 %v1345
    %1640 = vmatpush1.bf16.msra.mxu0 %v1344
    %1641 = vmatprep.subr.bf16.mxu0 %v1353
    %1642 = vmatpush1.bf16.msra.mxu0 %v1352
    %1643 = vmatprep.subr.bf16.mxu0 %v1361
    %1644 = vmatpush1.bf16.msra.mxu0 %v1360
    %1645 = vmatprep.subr.bf16.mxu0 %v1369
    %1646 = vmatpush1.bf16.msra.mxu0 %v1368
    %1647 = vmatprep.subr.bf16.mxu0 %v1377
    %1648 = vmatpush1.bf16.msra.mxu0 %v1376
    %1649 = vmatprep.subr.bf16.mxu0 %v1385
    %1650 = vmatpush1.bf16.msra.mxu0 %v1384
    %1651 = vmatprep.subr.bf16.mxu0 %v1393
    %1652 = vmatpush1.bf16.msra.mxu0 %v1392
    %1653 = vmatprep.subr.bf16.mxu0 %v1401
    %1654 = vmatpush1.bf16.msra.mxu0 %v1400
    %1655 = vmatprep.subr.bf16.mxu0 %v1409
    %1656 = vmatpush1.bf16.msra.mxu0 %v1408
    %1657 = vmatprep.subr.bf16.mxu0 %v1417
    %1658 = vmatpush1.bf16.msra.mxu0 %v1416
    %1659 = vmatprep.subr.bf16.mxu0 %v1425
    %1660 = vmatpush1.bf16.msra.mxu0 %v1424
    %1661 = vmatprep.subr.bf16.mxu0 %v1433
    %1662 = vmatpush1.bf16.msra.mxu0 %v1432
    %1663 = vmatprep.subr.bf16.mxu0 %v1441
    %1664 = vmatpush1.bf16.msra.mxu0 %v1440
    %1665 = vmatprep.subr.bf16.mxu0 %v1449
    %1666 = vmatpush1.bf16.msra.mxu0 %v1448
    %1667 = vmatprep.subr.bf16.mxu0 %v1457
    %1668 = vmatpush1.bf16.msra.mxu0 %v1456
    %1669 = vmatprep.subr.bf16.mxu0 %v1465
    %1670 = vmatpush1.bf16.msra.mxu0 %v1464
    %1671 = vmatprep.mubr.bf16.mxu0 %v787
    %1672 = vmatmul.mubr.bf16.gmra.mrb[0].mxu0 %v786
    %v1673 = vpop.f32.mrb[0].mxu0
    %v1674 = vadd.f32 %v929, %v1673
    %v1675 = vpop.f32.mrb[0].mxu0
    %v1676 = vadd.f32 %v933, %v1675
    %v1677 = vpop.f32.mrb[0].mxu0
    %v1678 = vpop.f32.mrb[0].mxu0
    %1679 = vdwg.mxu0
    %1680 = vmatprep.subr.bf16.mxu0 %v1347
    %1681 = vmatpush1.bf16.msra.mxu0 %v1346
    %1682 = vmatprep.subr.bf16.mxu0 %v1355
    %1683 = vmatpush1.bf16.msra.mxu0 %v1354
    %1684 = vmatprep.subr.bf16.mxu0 %v1363
    %1685 = vmatpush1.bf16.msra.mxu0 %v1362
    %1686 = vmatprep.subr.bf16.mxu0 %v1371
    %1687 = vmatpush1.bf16.msra.mxu0 %v1370
    %1688 = vmatprep.subr.bf16.mxu0 %v1379
    %1689 = vmatpush1.bf16.msra.mxu0 %v1378
    %1690 = vmatprep.subr.bf16.mxu0 %v1387
    %1691 = vmatpush1.bf16.msra.mxu0 %v1386
    %1692 = vmatprep.subr.bf16.mxu0 %v1395
    %1693 = vmatpush1.bf16.msra.mxu0 %v1394
    %1694 = vmatprep.subr.bf16.mxu0 %v1403
    %1695 = vmatpush1.bf16.msra.mxu0 %v1402
    %1696 = vmatprep.subr.bf16.mxu0 %v1411
    %1697 = vmatpush1.bf16.msra.mxu0 %v1410
    %1698 = vmatprep.subr.bf16.mxu0 %v1419
    %1699 = vmatpush1.bf16.msra.mxu0 %v1418
    %1700 = vmatprep.subr.bf16.mxu0 %v1427
    %1701 = vmatpush1.bf16.msra.mxu0 %v1426
    %1702 = vmatprep.subr.bf16.mxu0 %v1435
    %1703 = vmatpush1.bf16.msra.mxu0 %v1434
    %1704 = vmatprep.subr.bf16.mxu0 %v1443
    %1705 = vmatpush1.bf16.msra.mxu0 %v1442
    %1706 = vmatprep.subr.bf16.mxu0 %v1451
    %1707 = vmatpush1.bf16.msra.mxu0 %v1450
    %1708 = vmatprep.subr.bf16.mxu0 %v1459
    %1709 = vmatpush1.bf16.msra.mxu0 %v1458
    %1710 = vmatprep.subr.bf16.mxu0 %v1467
    %1711 = vmatpush1.bf16.msra.mxu0 %v1466
    %1712 = vmatprep.mubr.bf16.mxu0 %v787
    %1713 = vmatmul.mubr.bf16.gmra.mrb[0].mxu0 %v786
    %v1714 = vpop.f32.mrb[0].mxu0
    %v1715 = vadd.f32 %v937, %v1714
    %v1716 = vpop.f32.mrb[0].mxu0
    %v1717 = vadd.f32 %v941, %v1716
    %v1718 = vpop.f32.mrb[0].mxu0
    %v1719 = vpop.f32.mrb[0].mxu0
    %1720 = vdwg.mxu0
    %1721 = vmatprep.subr.bf16.mxu0 %v1349
    %1722 = vmatpush1.bf16.msra.mxu0 %v1348
    %1723 = vmatprep.subr.bf16.mxu0 %v1357
    %1724 = vmatpush1.bf16.msra.mxu0 %v1356
    %1725 = vmatprep.subr.bf16.mxu0 %v1365
    %1726 = vmatpush1.bf16.msra.mxu0 %v1364
    %1727 = vmatprep.subr.bf16.mxu0 %v1373
    %1728 = vmatpush1.bf16.msra.mxu0 %v1372
    %1729 = vmatprep.subr.bf16.mxu0 %v1381
    %1730 = vmatpush1.bf16.msra.mxu0 %v1380
    %1731 = vmatprep.subr.bf16.mxu0 %v1389
    %1732 = vmatpush1.bf16.msra.mxu0 %v1388
    %1733 = vmatprep.subr.bf16.mxu0 %v1397
    %1734 = vmatpush1.bf16.msra.mxu0 %v1396
    %1735 = vmatprep.subr.bf16.mxu0 %v1405
    %1736 = vmatpush1.bf16.msra.mxu0 %v1404
    %1737 = vmatprep.subr.bf16.mxu0 %v1413
    %1738 = vmatpush1.bf16.msra.mxu0 %v1412
    %1739 = vmatprep.subr.bf16.mxu0 %v1421
    %1740 = vmatpush1.bf16.msra.mxu0 %v1420
    %1741 = vmatprep.subr.bf16.mxu0 %v1429
    %1742 = vmatpush1.bf16.msra.mxu0 %v1428
    %1743 = vmatprep.subr.bf16.mxu0 %v1437
    %1744 = vmatpush1.bf16.msra.mxu0 %v1436
    %1745 = vmatprep.subr.bf16.mxu0 %v1445
    %1746 = vmatpush1.bf16.msra.mxu0 %v1444
    %1747 = vmatprep.subr.bf16.mxu0 %v1453
    %1748 = vmatpush1.bf16.msra.mxu0 %v1452
    %1749 = vmatprep.subr.bf16.mxu0 %v1461
    %1750 = vmatpush1.bf16.msra.mxu0 %v1460
    %1751 = vmatprep.subr.bf16.mxu0 %v1469
    %1752 = vmatpush1.bf16.msra.mxu0 %v1468
    %1753 = vmatprep.mubr.bf16.mxu0 %v787
    %1754 = vmatmul.mubr.bf16.gmra.mrb[0].mxu0 %v786
    %v1755 = vpop.f32.mrb[0].mxu0
    %v1756 = vadd.f32 %v945, %v1755
    %v1757 = vpop.f32.mrb[0].mxu0
    %v1758 = vadd.f32 %v949, %v1757
    %v1759 = vpop.f32.mrb[0].mxu0
    %v1760 = vpop.f32.mrb[0].mxu0
    %1761 = vdwg.mxu0
    %v1770 = vcombine.low %v1633, %v1635
    %v1771 = vcombine.high %v1633, %v1635
    %v1772 = vcombine.low %v1674, %v1676
    %v1773 = vcombine.high %v1674, %v1676
    %v1774 = vcombine.low %v1715, %v1717
    %v1775 = vcombine.high %v1715, %v1717
    %v1776 = vcombine.low %v1756, %v1758
    %v1777 = vcombine.high %v1756, %v1758
    %v1786 = vld [vmem:[#allocation19] sm:$0xff]
    %v1787 = vld [vmem:[#allocation19 + $0x8] sm:$0xff]
    %v1788 = vld [vmem:[#allocation19 + $0x10] sm:$0xff]
    %v1789 = vld [vmem:[#allocation19 + $0x18] sm:$0xff]
    %v1790 = vld [vmem:[#allocation19 + $0x20] sm:$0xff]
    %v1791 = vld [vmem:[#allocation19 + $0x28] sm:$0xff]
    %v1792 = vld [vmem:[#allocation19 + $0x30] sm:$0xff]
    %v1793 = vld [vmem:[#allocation19 + $0x38] sm:$0xff]
    %v1794 = vld [vmem:[#allocation19 + $0x40] sm:$0xff]
    %v1795 = vld [vmem:[#allocation19 + $0x48] sm:$0xff]
    %v1796 = vld [vmem:[#allocation19 + $0x50] sm:$0xff]
    %v1797 = vld [vmem:[#allocation19 + $0x58] sm:$0xff]
    %v1798 = vld [vmem:[#allocation19 + $0x60] sm:$0xff]
    %v1799 = vld [vmem:[#allocation19 + $0x68] sm:$0xff]
    %v1800 = vld [vmem:[#allocation19 + $0x70] sm:$0xff]
    %v1801 = vld [vmem:[#allocation19 + $0x78] sm:$0xff]
    %v1802 = vld [vmem:[#allocation19 + $0x80] sm:$0xff]
    %v1803 = vld [vmem:[#allocation19 + $0x88] sm:$0xff]
    %v1804 = vld [vmem:[#allocation19 + $0x90] sm:$0xff]
    %v1805 = vld [vmem:[#allocation19 + $0x98] sm:$0xff]
    %v1806 = vld [vmem:[#allocation19 + $0xa0] sm:$0xff]
    %v1807 = vld [vmem:[#allocation19 + $0xa8] sm:$0xff]
    %v1808 = vld [vmem:[#allocation19 + $0xb0] sm:$0xff]
    %v1809 = vld [vmem:[#allocation19 + $0xb8] sm:$0xff]
    %v1810 = vld [vmem:[#allocation19 + $0xc0] sm:$0xff]
    %v1811 = vld [vmem:[#allocation19 + $0xc8] sm:$0xff]
    %v1812 = vld [vmem:[#allocation19 + $0xd0] sm:$0xff]
    %v1813 = vld [vmem:[#allocation19 + $0xd8] sm:$0xff]
    %v1814 = vld [vmem:[#allocation19 + $0xe0] sm:$0xff]
    %v1815 = vld [vmem:[#allocation19 + $0xe8] sm:$0xff]
    %v1816 = vld [vmem:[#allocation19 + $0xf0] sm:$0xff]
    %v1817 = vld [vmem:[#allocation19 + $0xf8] sm:$0xff]
    %v1818 = vld [vmem:[#allocation19 + $0x100] sm:$0xff]
    %v1819 = vld [vmem:[#allocation19 + $0x108] sm:$0xff]
    %v1820 = vld [vmem:[#allocation19 + $0x110] sm:$0xff]
    %v1821 = vld [vmem:[#allocation19 + $0x118] sm:$0xff]
    %v1822 = vld [vmem:[#allocation19 + $0x120] sm:$0xff]
    %v1823 = vld [vmem:[#allocation19 + $0x128] sm:$0xff]
    %v1824 = vld [vmem:[#allocation19 + $0x130] sm:$0xff]
    %v1825 = vld [vmem:[#allocation19 + $0x138] sm:$0xff]
    %v1826 = vld [vmem:[#allocation19 + $0x140] sm:$0xff]
    %v1827 = vld [vmem:[#allocation19 + $0x148] sm:$0xff]
    %v1828 = vld [vmem:[#allocation19 + $0x150] sm:$0xff]
    %v1829 = vld [vmem:[#allocation19 + $0x158] sm:$0xff]
    %v1830 = vld [vmem:[#allocation19 + $0x160] sm:$0xff]
    %v1831 = vld [vmem:[#allocation19 + $0x168] sm:$0xff]
    %v1832 = vld [vmem:[#allocation19 + $0x170] sm:$0xff]
    %v1833 = vld [vmem:[#allocation19 + $0x178] sm:$0xff]
    %v1834 = vld [vmem:[#allocation19 + $0x180] sm:$0xff]
    %v1835 = vld [vmem:[#allocation19 + $0x188] sm:$0xff]
    %v1836 = vld [vmem:[#allocation19 + $0x190] sm:$0xff]
    %v1837 = vld [vmem:[#allocation19 + $0x198] sm:$0xff]
    %v1838 = vld [vmem:[#allocation19 + $0x1a0] sm:$0xff]
    %v1839 = vld [vmem:[#allocation19 + $0x1a8] sm:$0xff]
    %v1840 = vld [vmem:[#allocation19 + $0x1b0] sm:$0xff]
    %v1841 = vld [vmem:[#allocation19 + $0x1b8] sm:$0xff]
    %v1842 = vld [vmem:[#allocation19 + $0x1c0] sm:$0xff]
    %v1843 = vld [vmem:[#allocation19 + $0x1c8] sm:$0xff]
    %v1844 = vld [vmem:[#allocation19 + $0x1d0] sm:$0xff]
    %v1845 = vld [vmem:[#allocation19 + $0x1d8] sm:$0xff]
    %v1846 = vld [vmem:[#allocation19 + $0x1e0] sm:$0xff]
    %v1847 = vld [vmem:[#allocation19 + $0x1e8] sm:$0xff]
    %v1848 = vld [vmem:[#allocation19 + $0x1f0] sm:$0xff]
    %v1849 = vld [vmem:[#allocation19 + $0x1f8] sm:$0xff]
    %v1850 = vld [vmem:[#allocation19 + $0x200] sm:$0xff]
    %v1851 = vld [vmem:[#allocation19 + $0x208] sm:$0xff]
    %v1852 = vld [vmem:[#allocation19 + $0x210] sm:$0xff]
    %v1853 = vld [vmem:[#allocation19 + $0x218] sm:$0xff]
    %v1854 = vld [vmem:[#allocation19 + $0x220] sm:$0xff]
    %v1855 = vld [vmem:[#allocation19 + $0x228] sm:$0xff]
    %v1856 = vld [vmem:[#allocation19 + $0x230] sm:$0xff]
    %v1857 = vld [vmem:[#allocation19 + $0x238] sm:$0xff]
    %v1858 = vld [vmem:[#allocation19 + $0x240] sm:$0xff]
    %v1859 = vld [vmem:[#allocation19 + $0x248] sm:$0xff]
    %v1860 = vld [vmem:[#allocation19 + $0x250] sm:$0xff]
    %v1861 = vld [vmem:[#allocation19 + $0x258] sm:$0xff]
    %v1862 = vld [vmem:[#allocation19 + $0x260] sm:$0xff]
    %v1863 = vld [vmem:[#allocation19 + $0x268] sm:$0xff]
    %v1864 = vld [vmem:[#allocation19 + $0x270] sm:$0xff]
    %v1865 = vld [vmem:[#allocation19 + $0x278] sm:$0xff]
    %v1866 = vld [vmem:[#allocation19 + $0x280] sm:$0xff]
    %v1867 = vld [vmem:[#allocation19 + $0x288] sm:$0xff]
    %v1868 = vld [vmem:[#allocation19 + $0x290] sm:$0xff]
    %v1869 = vld [vmem:[#allocation19 + $0x298] sm:$0xff]
    %v1870 = vld [vmem:[#allocation19 + $0x2a0] sm:$0xff]
    %v1871 = vld [vmem:[#allocation19 + $0x2a8] sm:$0xff]
    %v1872 = vld [vmem:[#allocation19 + $0x2b0] sm:$0xff]
    %v1873 = vld [vmem:[#allocation19 + $0x2b8] sm:$0xff]
    %v1874 = vld [vmem:[#allocation19 + $0x2c0] sm:$0xff]
    %v1875 = vld [vmem:[#allocation19 + $0x2c8] sm:$0xff]
    %v1876 = vld [vmem:[#allocation19 + $0x2d0] sm:$0xff]
    %v1877 = vld [vmem:[#allocation19 + $0x2d8] sm:$0xff]
    %v1878 = vld [vmem:[#allocation19 + $0x2e0] sm:$0xff]
    %v1879 = vld [vmem:[#allocation19 + $0x2e8] sm:$0xff]
    %v1880 = vld [vmem:[#allocation19 + $0x2f0] sm:$0xff]
    %v1881 = vld [vmem:[#allocation19 + $0x2f8] sm:$0xff]
    %v1882 = vld [vmem:[#allocation19 + $0x300] sm:$0xff]
    %v1883 = vld [vmem:[#allocation19 + $0x308] sm:$0xff]
    %v1884 = vld [vmem:[#allocation19 + $0x310] sm:$0xff]
    %v1885 = vld [vmem:[#allocation19 + $0x318] sm:$0xff]
    %v1886 = vld [vmem:[#allocation19 + $0x320] sm:$0xff]
    %v1887 = vld [vmem:[#allocation19 + $0x328] sm:$0xff]
    %v1888 = vld [vmem:[#allocation19 + $0x330] sm:$0xff]
    %v1889 = vld [vmem:[#allocation19 + $0x338] sm:$0xff]
    %v1890 = vld [vmem:[#allocation19 + $0x340] sm:$0xff]
    %v1891 = vld [vmem:[#allocation19 + $0x348] sm:$0xff]
    %v1892 = vld [vmem:[#allocation19 + $0x350] sm:$0xff]
    %v1893 = vld [vmem:[#allocation19 + $0x358] sm:$0xff]
    %v1894 = vld [vmem:[#allocation19 + $0x360] sm:$0xff]
    %v1895 = vld [vmem:[#allocation19 + $0x368] sm:$0xff]
    %v1896 = vld [vmem:[#allocation19 + $0x370] sm:$0xff]
    %v1897 = vld [vmem:[#allocation19 + $0x378] sm:$0xff]
    %v1898 = vld [vmem:[#allocation19 + $0x380] sm:$0xff]
    %v1899 = vld [vmem:[#allocation19 + $0x388] sm:$0xff]
    %v1900 = vld [vmem:[#allocation19 + $0x390] sm:$0xff]
    %v1901 = vld [vmem:[#allocation19 + $0x398] sm:$0xff]
    %v1902 = vld [vmem:[#allocation19 + $0x3a0] sm:$0xff]
    %v1903 = vld [vmem:[#allocation19 + $0x3a8] sm:$0xff]
    %v1904 = vld [vmem:[#allocation19 + $0x3b0] sm:$0xff]
    %v1905 = vld [vmem:[#allocation19 + $0x3b8] sm:$0xff]
    %v1906 = vld [vmem:[#allocation19 + $0x3c0] sm:$0xff]
    %v1907 = vld [vmem:[#allocation19 + $0x3c8] sm:$0xff]
    %v1908 = vld [vmem:[#allocation19 + $0x3d0] sm:$0xff]
    %v1909 = vld [vmem:[#allocation19 + $0x3d8] sm:$0xff]
    %v1910 = vld [vmem:[#allocation19 + $0x3e0] sm:$0xff]
    %v1911 = vld [vmem:[#allocation19 + $0x3e8] sm:$0xff]
    %v1912 = vld [vmem:[#allocation19 + $0x3f0] sm:$0xff]
    %v1913 = vld [vmem:[#allocation19 + $0x3f8] sm:$0xff]
    %v2042 = vunpack.c.l.b16 %v1786
    %v2043 = vunpack.c.h.b16 %v1786
    %v2044 = vunpack.c.l.b16 %v1787
    %v2045 = vunpack.c.h.b16 %v1787
    %v2046 = vunpack.c.l.b16 %v1788
    %v2047 = vunpack.c.h.b16 %v1788
    %v2048 = vunpack.c.l.b16 %v1789
    %v2049 = vunpack.c.h.b16 %v1789
    %v2050 = vunpack.c.l.b16 %v1790
    %v2051 = vunpack.c.h.b16 %v1790
    %v2052 = vunpack.c.l.b16 %v1791
    %v2053 = vunpack.c.h.b16 %v1791
    %v2054 = vunpack.c.l.b16 %v1792
    %v2055 = vunpack.c.h.b16 %v1792
    %v2056 = vunpack.c.l.b16 %v1793
    %v2057 = vunpack.c.h.b16 %v1793
    %v2058 = vunpack.c.l.b16 %v1794
    %v2059 = vunpack.c.h.b16 %v1794
    %v2060 = vunpack.c.l.b16 %v1795
    %v2061 = vunpack.c.h.b16 %v1795
    %v2062 = vunpack.c.l.b16 %v1796
    %v2063 = vunpack.c.h.b16 %v1796
    %v2064 = vunpack.c.l.b16 %v1797
    %v2065 = vunpack.c.h.b16 %v1797
    %v2066 = vunpack.c.l.b16 %v1798
    %v2067 = vunpack.c.h.b16 %v1798
    %v2068 = vunpack.c.l.b16 %v1799
    %v2069 = vunpack.c.h.b16 %v1799
    %v2070 = vunpack.c.l.b16 %v1800
    %v2071 = vunpack.c.h.b16 %v1800
    %v2072 = vunpack.c.l.b16 %v1801
    %v2073 = vunpack.c.h.b16 %v1801
    %v2074 = vunpack.c.l.b16 %v1802
    %v2075 = vunpack.c.h.b16 %v1802
    %v2076 = vunpack.c.l.b16 %v1803
    %v2077 = vunpack.c.h.b16 %v1803
    %v2078 = vunpack.c.l.b16 %v1804
    %v2079 = vunpack.c.h.b16 %v1804
    %v2080 = vunpack.c.l.b16 %v1805
    %v2081 = vunpack.c.h.b16 %v1805
    %v2082 = vunpack.c.l.b16 %v1806
    %v2083 = vunpack.c.h.b16 %v1806
    %v2084 = vunpack.c.l.b16 %v1807
    %v2085 = vunpack.c.h.b16 %v1807
    %v2086 = vunpack.c.l.b16 %v1808
    %v2087 = vunpack.c.h.b16 %v1808
    %v2088 = vunpack.c.l.b16 %v1809
    %v2089 = vunpack.c.h.b16 %v1809
    %v2090 = vunpack.c.l.b16 %v1810
    %v2091 = vunpack.c.h.b16 %v1810
    %v2092 = vunpack.c.l.b16 %v1811
    %v2093 = vunpack.c.h.b16 %v1811
    %v2094 = vunpack.c.l.b16 %v1812
    %v2095 = vunpack.c.h.b16 %v1812
    %v2096 = vunpack.c.l.b16 %v1813
    %v2097 = vunpack.c.h.b16 %v1813
    %v2098 = vunpack.c.l.b16 %v1814
    %v2099 = vunpack.c.h.b16 %v1814
    %v2100 = vunpack.c.l.b16 %v1815
    %v2101 = vunpack.c.h.b16 %v1815
    %v2102 = vunpack.c.l.b16 %v1816
    %v2103 = vunpack.c.h.b16 %v1816
    %v2104 = vunpack.c.l.b16 %v1817
    %v2105 = vunpack.c.h.b16 %v1817
    %v2106 = vunpack.c.l.b16 %v1818
    %v2107 = vunpack.c.h.b16 %v1818
    %v2108 = vunpack.c.l.b16 %v1819
    %v2109 = vunpack.c.h.b16 %v1819
    %v2110 = vunpack.c.l.b16 %v1820
    %v2111 = vunpack.c.h.b16 %v1820
    %v2112 = vunpack.c.l.b16 %v1821
    %v2113 = vunpack.c.h.b16 %v1821
    %v2114 = vunpack.c.l.b16 %v1822
    %v2115 = vunpack.c.h.b16 %v1822
    %v2116 = vunpack.c.l.b16 %v1823
    %v2117 = vunpack.c.h.b16 %v1823
    %v2118 = vunpack.c.l.b16 %v1824
    %v2119 = vunpack.c.h.b16 %v1824
    %v2120 = vunpack.c.l.b16 %v1825
    %v2121 = vunpack.c.h.b16 %v1825
    %v2122 = vunpack.c.l.b16 %v1826
    %v2123 = vunpack.c.h.b16 %v1826
    %v2124 = vunpack.c.l.b16 %v1827
    %v2125 = vunpack.c.h.b16 %v1827
    %v2126 = vunpack.c.l.b16 %v1828
    %v2127 = vunpack.c.h.b16 %v1828
    %v2128 = vunpack.c.l.b16 %v1829
    %v2129 = vunpack.c.h.b16 %v1829
    %v2130 = vunpack.c.l.b16 %v1830
    %v2131 = vunpack.c.h.b16 %v1830
    %v2132 = vunpack.c.l.b16 %v1831
    %v2133 = vunpack.c.h.b16 %v1831
    %v2134 = vunpack.c.l.b16 %v1832
    %v2135 = vunpack.c.h.b16 %v1832
    %v2136 = vunpack.c.l.b16 %v1833
    %v2137 = vunpack.c.h.b16 %v1833
    %v2138 = vunpack.c.l.b16 %v1834
    %v2139 = vunpack.c.h.b16 %v1834
    %v2140 = vunpack.c.l.b16 %v1835
    %v2141 = vunpack.c.h.b16 %v1835
    %v2142 = vunpack.c.l.b16 %v1836
    %v2143 = vunpack.c.h.b16 %v1836
    %v2144 = vunpack.c.l.b16 %v1837
    %v2145 = vunpack.c.h.b16 %v1837
    %v2146 = vunpack.c.l.b16 %v1838
    %v2147 = vunpack.c.h.b16 %v1838
    %v2148 = vunpack.c.l.b16 %v1839
    %v2149 = vunpack.c.h.b16 %v1839
    %v2150 = vunpack.c.l.b16 %v1840
    %v2151 = vunpack.c.h.b16 %v1840
    %v2152 = vunpack.c.l.b16 %v1841
    %v2153 = vunpack.c.h.b16 %v1841
    %v2154 = vunpack.c.l.b16 %v1842
    %v2155 = vunpack.c.h.b16 %v1842
    %v2156 = vunpack.c.l.b16 %v1843
    %v2157 = vunpack.c.h.b16 %v1843
    %v2158 = vunpack.c.l.b16 %v1844
    %v2159 = vunpack.c.h.b16 %v1844
    %v2160 = vunpack.c.l.b16 %v1845
    %v2161 = vunpack.c.h.b16 %v1845
    %v2162 = vunpack.c.l.b16 %v1846
    %v2163 = vunpack.c.h.b16 %v1846
    %v2164 = vunpack.c.l.b16 %v1847
    %v2165 = vunpack.c.h.b16 %v1847
    %v2166 = vunpack.c.l.b16 %v1848
    %v2167 = vunpack.c.h.b16 %v1848
    %v2168 = vunpack.c.l.b16 %v1849
    %v2169 = vunpack.c.h.b16 %v1849
    %v2170 = vunpack.c.l.b16 %v1850
    %v2171 = vunpack.c.h.b16 %v1850
    %v2172 = vunpack.c.l.b16 %v1851
    %v2173 = vunpack.c.h.b16 %v1851
    %v2174 = vunpack.c.l.b16 %v1852
    %v2175 = vunpack.c.h.b16 %v1852
    %v2176 = vunpack.c.l.b16 %v1853
    %v2177 = vunpack.c.h.b16 %v1853
    %v2178 = vunpack.c.l.b16 %v1854
    %v2179 = vunpack.c.h.b16 %v1854
    %v2180 = vunpack.c.l.b16 %v1855
    %v2181 = vunpack.c.h.b16 %v1855
    %v2182 = vunpack.c.l.b16 %v1856
    %v2183 = vunpack.c.h.b16 %v1856
    %v2184 = vunpack.c.l.b16 %v1857
    %v2185 = vunpack.c.h.b16 %v1857
    %v2186 = vunpack.c.l.b16 %v1858
    %v2187 = vunpack.c.h.b16 %v1858
    %v2188 = vunpack.c.l.b16 %v1859
    %v2189 = vunpack.c.h.b16 %v1859
    %v2190 = vunpack.c.l.b16 %v1860
    %v2191 = vunpack.c.h.b16 %v1860
    %v2192 = vunpack.c.l.b16 %v1861
    %v2193 = vunpack.c.h.b16 %v1861
    %v2194 = vunpack.c.l.b16 %v1862
    %v2195 = vunpack.c.h.b16 %v1862
    %v2196 = vunpack.c.l.b16 %v1863
    %v2197 = vunpack.c.h.b16 %v1863
    %v2198 = vunpack.c.l.b16 %v1864
    %v2199 = vunpack.c.h.b16 %v1864
    %v2200 = vunpack.c.l.b16 %v1865
    %v2201 = vunpack.c.h.b16 %v1865
    %v2202 = vunpack.c.l.b16 %v1866
    %v2203 = vunpack.c.h.b16 %v1866
    %v2204 = vunpack.c.l.b16 %v1867
    %v2205 = vunpack.c.h.b16 %v1867
    %v2206 = vunpack.c.l.b16 %v1868
    %v2207 = vunpack.c.h.b16 %v1868
    %v2208 = vunpack.c.l.b16 %v1869
    %v2209 = vunpack.c.h.b16 %v1869
    %v2210 = vunpack.c.l.b16 %v1870
    %v2211 = vunpack.c.h.b16 %v1870
    %v2212 = vunpack.c.l.b16 %v1871
    %v2213 = vunpack.c.h.b16 %v1871
    %v2214 = vunpack.c.l.b16 %v1872
    %v2215 = vunpack.c.h.b16 %v1872
    %v2216 = vunpack.c.l.b16 %v1873
    %v2217 = vunpack.c.h.b16 %v1873
    %v2218 = vunpack.c.l.b16 %v1874
    %v2219 = vunpack.c.h.b16 %v1874
    %v2220 = vunpack.c.l.b16 %v1875
    %v2221 = vunpack.c.h.b16 %v1875
    %v2222 = vunpack.c.l.b16 %v1876
    %v2223 = vunpack.c.h.b16 %v1876
    %v2224 = vunpack.c.l.b16 %v1877
    %v2225 = vunpack.c.h.b16 %v1877
    %v2226 = vunpack.c.l.b16 %v1878
    %v2227 = vunpack.c.h.b16 %v1878
    %v2228 = vunpack.c.l.b16 %v1879
    %v2229 = vunpack.c.h.b16 %v1879
    %v2230 = vunpack.c.l.b16 %v1880
    %v2231 = vunpack.c.h.b16 %v1880
    %v2232 = vunpack.c.l.b16 %v1881
    %v2233 = vunpack.c.h.b16 %v1881
    %v2234 = vunpack.c.l.b16 %v1882
    %v2235 = vunpack.c.h.b16 %v1882
    %v2236 = vunpack.c.l.b16 %v1883
    %v2237 = vunpack.c.h.b16 %v1883
    %v2238 = vunpack.c.l.b16 %v1884
    %v2239 = vunpack.c.h.b16 %v1884
    %v2240 = vunpack.c.l.b16 %v1885
    %v2241 = vunpack.c.h.b16 %v1885
    %v2242 = vunpack.c.l.b16 %v1886
    %v2243 = vunpack.c.h.b16 %v1886
    %v2244 = vunpack.c.l.b16 %v1887
    %v2245 = vunpack.c.h.b16 %v1887
    %v2246 = vunpack.c.l.b16 %v1888
    %v2247 = vunpack.c.h.b16 %v1888
    %v2248 = vunpack.c.l.b16 %v1889
    %v2249 = vunpack.c.h.b16 %v1889
    %v2250 = vunpack.c.l.b16 %v1890
    %v2251 = vunpack.c.h.b16 %v1890
    %v2252 = vunpack.c.l.b16 %v1891
    %v2253 = vunpack.c.h.b16 %v1891
    %v2254 = vunpack.c.l.b16 %v1892
    %v2255 = vunpack.c.h.b16 %v1892
    %v2256 = vunpack.c.l.b16 %v1893
    %v2257 = vunpack.c.h.b16 %v1893
    %v2258 = vunpack.c.l.b16 %v1894
    %v2259 = vunpack.c.h.b16 %v1894
    %v2260 = vunpack.c.l.b16 %v1895
    %v2261 = vunpack.c.h.b16 %v1895
    %v2262 = vunpack.c.l.b16 %v1896
    %v2263 = vunpack.c.h.b16 %v1896
    %v2264 = vunpack.c.l.b16 %v1897
    %v2265 = vunpack.c.h.b16 %v1897
    %v2266 = vunpack.c.l.b16 %v1898
    %v2267 = vunpack.c.h.b16 %v1898
    %v2268 = vunpack.c.l.b16 %v1899
    %v2269 = vunpack.c.h.b16 %v1899
    %v2270 = vunpack.c.l.b16 %v1900
    %v2271 = vunpack.c.h.b16 %v1900
    %v2272 = vunpack.c.l.b16 %v1901
    %v2273 = vunpack.c.h.b16 %v1901
    %v2274 = vunpack.c.l.b16 %v1902
    %v2275 = vunpack.c.h.b16 %v1902
    %v2276 = vunpack.c.l.b16 %v1903
    %v2277 = vunpack.c.h.b16 %v1903
    %v2278 = vunpack.c.l.b16 %v1904
    %v2279 = vunpack.c.h.b16 %v1904
    %v2280 = vunpack.c.l.b16 %v1905
    %v2281 = vunpack.c.h.b16 %v1905
    %v2282 = vunpack.c.l.b16 %v1906
    %v2283 = vunpack.c.h.b16 %v1906
    %v2284 = vunpack.c.l.b16 %v1907
    %v2285 = vunpack.c.h.b16 %v1907
    %v2286 = vunpack.c.l.b16 %v1908
    %v2287 = vunpack.c.h.b16 %v1908
    %v2288 = vunpack.c.l.b16 %v1909
    %v2289 = vunpack.c.h.b16 %v1909
    %v2290 = vunpack.c.l.b16 %v1910
    %v2291 = vunpack.c.h.b16 %v1910
    %v2292 = vunpack.c.l.b16 %v1911
    %v2293 = vunpack.c.h.b16 %v1911
    %v2294 = vunpack.c.l.b16 %v1912
    %v2295 = vunpack.c.h.b16 %v1912
    %v2296 = vunpack.c.l.b16 %v1913
    %v2297 = vunpack.c.h.b16 %v1913
    %v2298 = vpack.c.b16 %v2050, %v2042
    %v2299 = vpack.c.b16 %v2051, %v2043
    %v2300 = vpack.c.b16 %v2052, %v2044
    %v2301 = vpack.c.b16 %v2053, %v2045
    %v2302 = vpack.c.b16 %v2054, %v2046
    %v2303 = vpack.c.b16 %v2055, %v2047
    %v2304 = vpack.c.b16 %v2056, %v2048
    %v2305 = vpack.c.b16 %v2057, %v2049
    %v2306 = vpack.c.b16 %v2066, %v2058
    %v2307 = vpack.c.b16 %v2067, %v2059
    %v2308 = vpack.c.b16 %v2068, %v2060
    %v2309 = vpack.c.b16 %v2069, %v2061
    %v2310 = vpack.c.b16 %v2070, %v2062
    %v2311 = vpack.c.b16 %v2071, %v2063
    %v2312 = vpack.c.b16 %v2072, %v2064
    %v2313 = vpack.c.b16 %v2073, %v2065
    %v2314 = vpack.c.b16 %v2082, %v2074
    %v2315 = vpack.c.b16 %v2083, %v2075
    %v2316 = vpack.c.b16 %v2084, %v2076
    %v2317 = vpack.c.b16 %v2085, %v2077
    %v2318 = vpack.c.b16 %v2086, %v2078
    %v2319 = vpack.c.b16 %v2087, %v2079
    %v2320 = vpack.c.b16 %v2088, %v2080
    %v2321 = vpack.c.b16 %v2089, %v2081
    %v2322 = vpack.c.b16 %v2098, %v2090
    %v2323 = vpack.c.b16 %v2099, %v2091
    %v2324 = vpack.c.b16 %v2100, %v2092
    %v2325 = vpack.c.b16 %v2101, %v2093
    %v2326 = vpack.c.b16 %v2102, %v2094
    %v2327 = vpack.c.b16 %v2103, %v2095
    %v2328 = vpack.c.b16 %v2104, %v2096
    %v2329 = vpack.c.b16 %v2105, %v2097
    %v2330 = vpack.c.b16 %v2114, %v2106
    %v2331 = vpack.c.b16 %v2115, %v2107
    %v2332 = vpack.c.b16 %v2116, %v2108
    %v2333 = vpack.c.b16 %v2117, %v2109
    %v2334 = vpack.c.b16 %v2118, %v2110
    %v2335 = vpack.c.b16 %v2119, %v2111
    %v2336 = vpack.c.b16 %v2120, %v2112
    %v2337 = vpack.c.b16 %v2121, %v2113
    %v2338 = vpack.c.b16 %v2130, %v2122
    %v2339 = vpack.c.b16 %v2131, %v2123
    %v2340 = vpack.c.b16 %v2132, %v2124
    %v2341 = vpack.c.b16 %v2133, %v2125
    %v2342 = vpack.c.b16 %v2134, %v2126
    %v2343 = vpack.c.b16 %v2135, %v2127
    %v2344 = vpack.c.b16 %v2136, %v2128
    %v2345 = vpack.c.b16 %v2137, %v2129
    %v2346 = vpack.c.b16 %v2146, %v2138
    %v2347 = vpack.c.b16 %v2147, %v2139
    %v2348 = vpack.c.b16 %v2148, %v2140
    %v2349 = vpack.c.b16 %v2149, %v2141
    %v2350 = vpack.c.b16 %v2150, %v2142
    %v2351 = vpack.c.b16 %v2151, %v2143
    %v2352 = vpack.c.b16 %v2152, %v2144
    %v2353 = vpack.c.b16 %v2153, %v2145
    %v2354 = vpack.c.b16 %v2162, %v2154
    %v2355 = vpack.c.b16 %v2163, %v2155
    %v2356 = vpack.c.b16 %v2164, %v2156
    %v2357 = vpack.c.b16 %v2165, %v2157
    %v2358 = vpack.c.b16 %v2166, %v2158
    %v2359 = vpack.c.b16 %v2167, %v2159
    %v2360 = vpack.c.b16 %v2168, %v2160
    %v2361 = vpack.c.b16 %v2169, %v2161
    %v2362 = vpack.c.b16 %v2178, %v2170
    %v2363 = vpack.c.b16 %v2179, %v2171
    %v2364 = vpack.c.b16 %v2180, %v2172
    %v2365 = vpack.c.b16 %v2181, %v2173
    %v2366 = vpack.c.b16 %v2182, %v2174
    %v2367 = vpack.c.b16 %v2183, %v2175
    %v2368 = vpack.c.b16 %v2184, %v2176
    %v2369 = vpack.c.b16 %v2185, %v2177
    %v2370 = vpack.c.b16 %v2194, %v2186
    %v2371 = vpack.c.b16 %v2195, %v2187
    %v2372 = vpack.c.b16 %v2196, %v2188
    %v2373 = vpack.c.b16 %v2197, %v2189
    %v2374 = vpack.c.b16 %v2198, %v2190
    %v2375 = vpack.c.b16 %v2199, %v2191
    %v2376 = vpack.c.b16 %v2200, %v2192
    %v2377 = vpack.c.b16 %v2201, %v2193
    %v2378 = vpack.c.b16 %v2210, %v2202
    %v2379 = vpack.c.b16 %v2211, %v2203
    %v2380 = vpack.c.b16 %v2212, %v2204
    %v2381 = vpack.c.b16 %v2213, %v2205
    %v2382 = vpack.c.b16 %v2214, %v2206
    %v2383 = vpack.c.b16 %v2215, %v2207
    %v2384 = vpack.c.b16 %v2216, %v2208
    %v2385 = vpack.c.b16 %v2217, %v2209
    %v2386 = vpack.c.b16 %v2226, %v2218
    %v2387 = vpack.c.b16 %v2227, %v2219
    %v2388 = vpack.c.b16 %v2228, %v2220
    %v2389 = vpack.c.b16 %v2229, %v2221
    %v2390 = vpack.c.b16 %v2230, %v2222
    %v2391 = vpack.c.b16 %v2231, %v2223
    %v2392 = vpack.c.b16 %v2232, %v2224
    %v2393 = vpack.c.b16 %v2233, %v2225
    %v2394 = vpack.c.b16 %v2242, %v2234
    %v2395 = vpack.c.b16 %v2243, %v2235
    %v2396 = vpack.c.b16 %v2244, %v2236
    %v2397 = vpack.c.b16 %v2245, %v2237
    %v2398 = vpack.c.b16 %v2246, %v2238
    %v2399 = vpack.c.b16 %v2247, %v2239
    %v2400 = vpack.c.b16 %v2248, %v2240
    %v2401 = vpack.c.b16 %v2249, %v2241
    %v2402 = vpack.c.b16 %v2258, %v2250
    %v2403 = vpack.c.b16 %v2259, %v2251
    %v2404 = vpack.c.b16 %v2260, %v2252
    %v2405 = vpack.c.b16 %v2261, %v2253
    %v2406 = vpack.c.b16 %v2262, %v2254
    %v2407 = vpack.c.b16 %v2263, %v2255
    %v2408 = vpack.c.b16 %v2264, %v2256
    %v2409 = vpack.c.b16 %v2265, %v2257
    %v2410 = vpack.c.b16 %v2274, %v2266
    %v2411 = vpack.c.b16 %v2275, %v2267
    %v2412 = vpack.c.b16 %v2276, %v2268
    %v2413 = vpack.c.b16 %v2277, %v2269
    %v2414 = vpack.c.b16 %v2278, %v2270
    %v2415 = vpack.c.b16 %v2279, %v2271
    %v2416 = vpack.c.b16 %v2280, %v2272
    %v2417 = vpack.c.b16 %v2281, %v2273
    %v2418 = vpack.c.b16 %v2290, %v2282
    %v2419 = vpack.c.b16 %v2291, %v2283
    %v2420 = vpack.c.b16 %v2292, %v2284
    %v2421 = vpack.c.b16 %v2293, %v2285
    %v2422 = vpack.c.b16 %v2294, %v2286
    %v2423 = vpack.c.b16 %v2295, %v2287
    %v2424 = vpack.c.b16 %v2296, %v2288
    %v2425 = vpack.c.b16 %v2297, %v2289
    %2554 = vmatprep.subr.bf16.mxu0 %v2299
    %2555 = vmatpush1.bf16.msra.mxu0 %v2298
    %2556 = vmatprep.subr.bf16.mxu0 %v2307
    %2557 = vmatpush1.bf16.msra.mxu0 %v2306
    %2558 = vmatprep.subr.bf16.mxu0 %v2315
    %2559 = vmatpush1.bf16.msra.mxu0 %v2314
    %2560 = vmatprep.subr.bf16.mxu0 %v2323
    %2561 = vmatpush1.bf16.msra.mxu0 %v2322
    %2562 = vmatprep.subr.bf16.mxu0 %v2331
    %2563 = vmatpush1.bf16.msra.mxu0 %v2330
    %2564 = vmatprep.subr.bf16.mxu0 %v2339
    %2565 = vmatpush1.bf16.msra.mxu0 %v2338
    %2566 = vmatprep.subr.bf16.mxu0 %v2347
    %2567 = vmatpush1.bf16.msra.mxu0 %v2346
    %2568 = vmatprep.subr.bf16.mxu0 %v2355
    %2569 = vmatpush1.bf16.msra.mxu0 %v2354
    %2570 = vmatprep.subr.bf16.mxu0 %v2363
    %2571 = vmatpush1.bf16.msra.mxu0 %v2362
    %2572 = vmatprep.subr.bf16.mxu0 %v2371
    %2573 = vmatpush1.bf16.msra.mxu0 %v2370
    %2574 = vmatprep.subr.bf16.mxu0 %v2379
    %2575 = vmatpush1.bf16.msra.mxu0 %v2378
    %2576 = vmatprep.subr.bf16.mxu0 %v2387
    %2577 = vmatpush1.bf16.msra.mxu0 %v2386
    %2578 = vmatprep.subr.bf16.mxu0 %v2395
    %2579 = vmatpush1.bf16.msra.mxu0 %v2394
    %2580 = vmatprep.subr.bf16.mxu0 %v2403
    %2581 = vmatpush1.bf16.msra.mxu0 %v2402
    %2582 = vmatprep.subr.bf16.mxu0 %v2411
    %2583 = vmatpush1.bf16.msra.mxu0 %v2410
    %2584 = vmatprep.subr.bf16.mxu0 %v2419
    %2585 = vmatpush1.bf16.msra.mxu0 %v2418
    %2586 = vmatprep.mubr.bf16.mxu0 0
    %2587 = vmatmul.mubr.bf16.gmra.mrb[0].mxu0 0
    %v2588 = vpop.f32.mrb[0].mxu0
    %v2589 = vadd.f32 0.0, %v2588
    %v2590 = vpop.f32.mrb[0].mxu0
    %v2591 = vadd.f32 0.0, %v2590
    %v2592 = vpop.f32.mrb[0].mxu0
    %v2593 = vpop.f32.mrb[0].mxu0
    %2594 = vdwg.mxu0
    %2595 = vmatprep.subr.bf16.mxu0 %v2301
    %2596 = vmatpush1.bf16.msra.mxu0 %v2300
    %2597 = vmatprep.subr.bf16.mxu0 %v2309
    %2598 = vmatpush1.bf16.msra.mxu0 %v2308
    %2599 = vmatprep.subr.bf16.mxu0 %v2317
    %2600 = vmatpush1.bf16.msra.mxu0 %v2316
    %2601 = vmatprep.subr.bf16.mxu0 %v2325
    %2602 = vmatpush1.bf16.msra.mxu0 %v2324
    %2603 = vmatprep.subr.bf16.mxu0 %v2333
    %2604 = vmatpush1.bf16.msra.mxu0 %v2332
    %2605 = vmatprep.subr.bf16.mxu0 %v2341
    %2606 = vmatpush1.bf16.msra.mxu0 %v2340
    %2607 = vmatprep.subr.bf16.mxu0 %v2349
    %2608 = vmatpush1.bf16.msra.mxu0 %v2348
    %2609 = vmatprep.subr.bf16.mxu0 %v2357
    %2610 = vmatpush1.bf16.msra.mxu0 %v2356
    %2611 = vmatprep.subr.bf16.mxu0 %v2365
    %2612 = vmatpush1.bf16.msra.mxu0 %v2364
    %2613 = vmatprep.subr.bf16.mxu0 %v2373
    %2614 = vmatpush1.bf16.msra.mxu0 %v2372
    %2615 = vmatprep.subr.bf16.mxu0 %v2381
    %2616 = vmatpush1.bf16.msra.mxu0 %v2380
    %2617 = vmatprep.subr.bf16.mxu0 %v2389
    %2618 = vmatpush1.bf16.msra.mxu0 %v2388
    %2619 = vmatprep.subr.bf16.mxu0 %v2397
    %2620 = vmatpush1.bf16.msra.mxu0 %v2396
    %2621 = vmatprep.subr.bf16.mxu0 %v2405
    %2622 = vmatpush1.bf16.msra.mxu0 %v2404
    %2623 = vmatprep.subr.bf16.mxu0 %v2413
    %2624 = vmatpush1.bf16.msra.mxu0 %v2412
    %2625 = vmatprep.subr.bf16.mxu0 %v2421
    %2626 = vmatpush1.bf16.msra.mxu0 %v2420
    %2627 = vmatprep.mubr.bf16.mxu0 0
    %2628 = vmatmul.mubr.bf16.gmra.mrb[0].mxu0 0
    %v2629 = vpop.f32.mrb[0].mxu0
    %v2630 = vadd.f32 0.0, %v2629
    %v2631 = vpop.f32.mrb[0].mxu0
    %v2632 = vadd.f32 0.0, %v2631
    %v2633 = vpop.f32.mrb[0].mxu0
    %v2634 = vpop.f32.mrb[0].mxu0
    %2635 = vdwg.mxu0
    %2636 = vmatprep.subr.bf16.mxu0 %v2303
    %2637 = vmatpush1.bf16.msra.mxu0 %v2302
    %2638 = vmatprep.subr.bf16.mxu0 %v2311
    %2639 = vmatpush1.bf16.msra.mxu0 %v2310
    %2640 = vmatprep.subr.bf16.mxu0 %v2319
    %2641 = vmatpush1.bf16.msra.mxu0 %v2318
    %2642 = vmatprep.subr.bf16.mxu0 %v2327
    %2643 = vmatpush1.bf16.msra.mxu0 %v2326
    %2644 = vmatprep.subr.bf16.mxu0 %v2335
    %2645 = vmatpush1.bf16.msra.mxu0 %v2334
    %2646 = vmatprep.subr.bf16.mxu0 %v2343
    %2647 = vmatpush1.bf16.msra.mxu0 %v2342
    %2648 = vmatprep.subr.bf16.mxu0 %v2351
    %2649 = vmatpush1.bf16.msra.mxu0 %v2350
    %2650 = vmatprep.subr.bf16.mxu0 %v2359
    %2651 = vmatpush1.bf16.msra.mxu0 %v2358
    %2652 = vmatprep.subr.bf16.mxu0 %v2367
    %2653 = vmatpush1.bf16.msra.mxu0 %v2366
    %2654 = vmatprep.subr.bf16.mxu0 %v2375
    %2655 = vmatpush1.bf16.msra.mxu0 %v2374
    %2656 = vmatprep.subr.bf16.mxu0 %v2383
    %2657 = vmatpush1.bf16.msra.mxu0 %v2382
    %2658 = vmatprep.subr.bf16.mxu0 %v2391
    %2659 = vmatpush1.bf16.msra.mxu0 %v2390
    %2660 = vmatprep.subr.bf16.mxu0 %v2399
    %2661 = vmatpush1.bf16.msra.mxu0 %v2398
    %2662 = vmatprep.subr.bf16.mxu0 %v2407
    %2663 = vmatpush1.bf16.msra.mxu0 %v2406
    %2664 = vmatprep.subr.bf16.mxu0 %v2415
    %2665 = vmatpush1.bf16.msra.mxu0 %v2414
    %2666 = vmatprep.subr.bf16.mxu0 %v2423
    %2667 = vmatpush1.bf16.msra.mxu0 %v2422
    %2668 = vmatprep.mubr.bf16.mxu0 0
    %2669 = vmatmul.mubr.bf16.gmra.mrb[0].mxu0 0
    %v2670 = vpop.f32.mrb[0].mxu0
    %v2671 = vadd.f32 0.0, %v2670
    %v2672 = vpop.f32.mrb[0].mxu0
    %v2673 = vadd.f32 0.0, %v2672
    %v2674 = vpop.f32.mrb[0].mxu0
    %v2675 = vpop.f32.mrb[0].mxu0
    %2676 = vdwg.mxu0
    %2677 = vmatprep.subr.bf16.mxu0 %v2305
    %2678 = vmatpush1.bf16.msra.mxu0 %v2304
    %2679 = vmatprep.subr.bf16.mxu0 %v2313
    %2680 = vmatpush1.bf16.msra.mxu0 %v2312
    %2681 = vmatprep.subr.bf16.mxu0 %v2321
    %2682 = vmatpush1.bf16.msra.mxu0 %v2320
    %2683 = vmatprep.subr.bf16.mxu0 %v2329
    %2684 = vmatpush1.bf16.msra.mxu0 %v2328
    %2685 = vmatprep.subr.bf16.mxu0 %v2337
    %2686 = vmatpush1.bf16.msra.mxu0 %v2336
    %2687 = vmatprep.subr.bf16.mxu0 %v2345
    %2688 = vmatpush1.bf16.msra.mxu0 %v2344
    %2689 = vmatprep.subr.bf16.mxu0 %v2353
    %2690 = vmatpush1.bf16.msra.mxu0 %v2352
    %2691 = vmatprep.subr.bf16.mxu0 %v2361
    %2692 = vmatpush1.bf16.msra.mxu0 %v2360
    %2693 = vmatprep.subr.bf16.mxu0 %v2369
    %2694 = vmatpush1.bf16.msra.mxu0 %v2368
    %2695 = vmatprep.subr.bf16.mxu0 %v2377
    %2696 = vmatpush1.bf16.msra.mxu0 %v2376
    %2697 = vmatprep.subr.bf16.mxu0 %v2385
    %2698 = vmatpush1.bf16.msra.mxu0 %v2384
    %2699 = vmatprep.subr.bf16.mxu0 %v2393
    %2700 = vmatpush1.bf16.msra.mxu0 %v2392
    %2701 = vmatprep.subr.bf16.mxu0 %v2401
    %2702 = vmatpush1.bf16.msra.mxu0 %v2400
    %2703 = vmatprep.subr.bf16.mxu0 %v2409
    %2704 = vmatpush1.bf16.msra.mxu0 %v2408
    %2705 = vmatprep.subr.bf16.mxu0 %v2417
    %2706 = vmatpush1.bf16.msra.mxu0 %v2416
    %2707 = vmatprep.subr.bf16.mxu0 %v2425
    %2708 = vmatpush1.bf16.msra.mxu0 %v2424
    %2709 = vmatprep.mubr.bf16.mxu0 0
    %2710 = vmatmul.mubr.bf16.gmra.mrb[0].mxu0 0
    %v2711 = vpop.f32.mrb[0].mxu0
    %v2712 = vadd.f32 0.0, %v2711
    %v2713 = vpop.f32.mrb[0].mxu0
    %v2714 = vadd.f32 0.0, %v2713
    %v2715 = vpop.f32.mrb[0].mxu0
    %v2716 = vpop.f32.mrb[0].mxu0
    %2717 = vdwg.mxu0
    %v2726 = vcombine.low %v2589, %v2591
    %v2727 = vcombine.low %v2630, %v2632
    %v2728 = vcombine.low %v2671, %v2673
    %v2729 = vcombine.low %v2712, %v2714
    %v2730 = vrot.slane %v2726, 1
    %v2731 = vrot.slane %v2727, 1
    %v2732 = vrot.slane %v2728, 1
    %v2733 = vrot.slane %v2729, 1
    %v2742 = vadd.f32 %v1770, %v2726
    %v2743 = vadd.f32 %v1772, %v2727
    %v2744 = vadd.f32 %v1774, %v2728
    %v2745 = vadd.f32 %v1776, %v2729
    %v2746 = vadd.f32 %v1771, %v2730
    %v2747 = vadd.f32 %v1773, %v2731
    %v2748 = vadd.f32 %v1775, %v2732
    %v2749 = vadd.f32 %v1777, %v2733
    %v2750 = vxor.u32 %v2742, 2147483648
    %v2751 = vxor.u32 %v2743, 2147483648
    %v2752 = vxor.u32 %v2744, 2147483648
    %v2753 = vxor.u32 %v2746, 2147483648
    %v2754 = vxor.u32 %v2747, 2147483648
    %v2755 = vxor.u32 %v2748, 2147483648
    %v2756 = vmul.f32 %v2750, 1.442695
    %v2757 = vpow.pop %v2756
    %v2758 = vmul.f32 %v2751, 1.442695
    %v2759 = vpow.pop %v2758
    %v2760 = vmul.f32 %v2752, 1.442695
    %v2761 = vpow.pop %v2760
    %v2762 = vmul.f32 %v2753, 1.442695
    %v2763 = vpow.pop %v2762
    %v2764 = vmul.f32 %v2754, 1.442695
    %v2765 = vpow.pop %v2764
    %v2766 = vmul.f32 %v2755, 1.442695
    %v2767 = vpow.pop %v2766
    %v2768 = vadd.f32 %v2757, 1.0
    %v2769 = vadd.f32 %v2759, 1.0
    %v2770 = vadd.f32 %v2761, 1.0
    %v2771 = vadd.f32 %v2763, 1.0
    %v2772 = vadd.f32 %v2765, 1.0
    %v2773 = vadd.f32 %v2767, 1.0
    %v2774 = vrcp.pop %v2768
    %v2775 = vmul.f32 1.0, %v2774
    %v2776 = vrcp.pop %v2769
    %v2777 = vmul.f32 1.0, %v2776
    %v2778 = vrcp.pop %v2770
    %v2779 = vmul.f32 1.0, %v2778
    %v2780 = vrcp.pop %v2771
    %v2781 = vmul.f32 1.0, %v2780
    %v2782 = vrcp.pop %v2772
    %v2783 = vmul.f32 1.0, %v2782
    %v2784 = vrcp.pop %v2773
    %v2785 = vmul.f32 1.0, %v2784
    %v2786 = vtanh.pop %v2745
    %v2787 = vtanh.pop %v2749
    %v2788 = vmul.f32 %v2777, 0.0
    %v2789 = vmul.f32 %v2783, 0.0
    %v2790 = vmul.f32 %v2775, %v2786
    %v2791 = vmul.f32 %v2781, %v2787
    %v2792 = vadd.f32 %v2788, %v2790
    %v2793 = vadd.f32 %v2789, %v2791
    %v2794 = vtanh.pop %v2792
    %v2795 = vtanh.pop %v2793
    %v2796 = vmul.f32 %v2779, %v2794
    %v2797 = vmul.f32 %v2785, %v2795
    %2798 = vst [vmem:[#allocation7] sm:$0x1] %v2796
    %2799 = vst [vmem:[#allocation7 + $0x8] sm:$0x1] %v2797
    %v2802 = vrot.slane %v2796, 4
    %v2803 = vrot.slane %v2797, 4
    %2806 = vst [vmem:[#allocation7 + $0x7] sm:$0x1] %v2802
    %2807 = vst [vmem:[#allocation7 + $0xf] sm:$0x1] %v2803
    %v2808 = vlaneseq
    %v2809 = vshrl.u32 %v2808, 7
    %v2810 = vsub.s32 0, %v2809
    %v2811 = vrot.slane %v2796, %v2810
    %v2812 = vlaneseq
    %v2813 = vshrl.u32 %v2812, 7
    %v2814 = vsub.s32 4, %v2813
    %v2815 = vrot.slane %v2796, %v2814
    %v2816 = vlaneseq
    %v2817 = vshrl.u32 %v2816, 7
    %v2818 = vsub.s32 0, %v2817
    %v2819 = vrot.slane %v2797, %v2818
    %v2820 = vlaneseq
    %v2821 = vshrl.u32 %v2820, 7
    %v2822 = vsub.s32 4, %v2821
    %v2823 = vrot.slane %v2797, %v2822
    %v2828 = vpack.c.bf16 %v2811, %v2811
    %v2829 = vpack.c.bf16 %v2815, %v2815
    %v2830 = vpack.c.bf16 %v2819, %v2819
    %v2831 = vpack.c.bf16 %v2823, %v2823
    %v2836 = vunpack.c.l.b16 %v2828
    %v2837 = vunpack.c.l.b16 %v2829
    %v2838 = vunpack.c.l.b16 %v2830
    %v2839 = vunpack.c.l.b16 %v2831
    %v2840 = vrot.slane %v2838, 7
    %vm2841 = vcmask 1041409
    %v2842 = vsel %vm2841, %v2840, %v2836
    %v2843 = vrot.slane %v2839, 7
    %v2844 = vsel %vm2841, %v2843, %v2837
    %v2845 = vpack.c.b16 %v2842, %v2842
    %v2846 = vpack.c.b16 %v2844, %v2844
    %2849 = vmatprep.subr.bf16.mxu0 %v2299
    %2850 = vmatpush1.bf16.msra.mxu0 %v2298
    %2851 = vmatprep.subr.bf16.mxu0 %v2307
    %2852 = vmatpush1.bf16.msra.mxu0 %v2306
    %2853 = vmatprep.subr.bf16.mxu0 %v2315
    %2854 = vmatpush1.bf16.msra.mxu0 %v2314
    %2855 = vmatprep.subr.bf16.mxu0 %v2323
    %2856 = vmatpush1.bf16.msra.mxu0 %v2322
    %2857 = vmatprep.subr.bf16.mxu0 %v2331
    %2858 = vmatpush1.bf16.msra.mxu0 %v2330
    %2859 = vmatprep.subr.bf16.mxu0 %v2339
    %2860 = vmatpush1.bf16.msra.mxu0 %v2338
    %2861 = vmatprep.subr.bf16.mxu0 %v2347
    %2862 = vmatpush1.bf16.msra.mxu0 %v2346
    %2863 = vmatprep.subr.bf16.mxu0 %v2355
    %2864 = vmatpush1.bf16.msra.mxu0 %v2354
    %2865 = vmatprep.subr.bf16.mxu0 %v2363
    %2866 = vmatpush1.bf16.msra.mxu0 %v2362
    %2867 = vmatprep.subr.bf16.mxu0 %v2371
    %2868 = vmatpush1.bf16.msra.mxu0 %v2370
    %2869 = vmatprep.subr.bf16.mxu0 %v2379
    %2870 = vmatpush1.bf16.msra.mxu0 %v2378
    %2871 = vmatprep.subr.bf16.mxu0 %v2387
    %2872 = vmatpush1.bf16.msra.mxu0 %v2386
    %2873 = vmatprep.subr.bf16.mxu0 %v2395
    %2874 = vmatpush1.bf16.msra.mxu0 %v2394
    %2875 = vmatprep.subr.bf16.mxu0 %v2403
    %2876 = vmatpush1.bf16.msra.mxu0 %v2402
    %2877 = vmatprep.subr.bf16.mxu0 %v2411
    %2878 = vmatpush1.bf16.msra.mxu0 %v2410
    %2879 = vmatprep.subr.bf16.mxu0 %v2419
    %2880 = vmatpush1.bf16.msra.mxu0 %v2418
    %2881 = vmatprep.mubr.bf16.mxu0 %v2846
    %2882 = vmatmul.mubr.bf16.gmra.mrb[0].mxu0 %v2845
    %v2883 = vpop.f32.mrb[0].mxu0
    %v2884 = vadd.f32 0.0, %v2883
    %v2885 = vpop.f32.mrb[0].mxu0
    %v2886 = vadd.f32 0.0, %v2885
    %v2887 = vpop.f32.mrb[0].mxu0
    %v2888 = vpop.f32.mrb[0].mxu0
    %2889 = vdwg.mxu0
    %2890 = vmatprep.subr.bf16.mxu0 %v2301
    %2891 = vmatpush1.bf16.msra.mxu0 %v2300
    %2892 = vmatprep.subr.bf16.mxu0 %v2309
    %2893 = vmatpush1.bf16.msra.mxu0 %v2308
    %2894 = vmatprep.subr.bf16.mxu0 %v2317
    %2895 = vmatpush1.bf16.msra.mxu0 %v2316
    %2896 = vmatprep.subr.bf16.mxu0 %v2325
    %2897 = vmatpush1.bf16.msra.mxu0 %v2324
    %2898 = vmatprep.subr.bf16.mxu0 %v2333
    %2899 = vmatpush1.bf16.msra.mxu0 %v2332
    %2900 = vmatprep.subr.bf16.mxu0 %v2341
    %2901 = vmatpush1.bf16.msra.mxu0 %v2340
    %2902 = vmatprep.subr.bf16.mxu0 %v2349
    %2903 = vmatpush1.bf16.msra.mxu0 %v2348
    %2904 = vmatprep.subr.bf16.mxu0 %v2357
    %2905 = vmatpush1.bf16.msra.mxu0 %v2356
    %2906 = vmatprep.subr.bf16.mxu0 %v2365
    %2907 = vmatpush1.bf16.msra.mxu0 %v2364
    %2908 = vmatprep.subr.bf16.mxu0 %v2373
    %2909 = vmatpush1.bf16.msra.mxu0 %v2372
    %2910 = vmatprep.subr.bf16.mxu0 %v2381
    %2911 = vmatpush1.bf16.msra.mxu0 %v2380
    %2912 = vmatprep.subr.bf16.mxu0 %v2389
    %2913 = vmatpush1.bf16.msra.mxu0 %v2388
    %2914 = vmatprep.subr.bf16.mxu0 %v2397
    %2915 = vmatpush1.bf16.msra.mxu0 %v2396
    %2916 = vmatprep.subr.bf16.mxu0 %v2405
    %2917 = vmatpush1.bf16.msra.mxu0 %v2404
    %2918 = vmatprep.subr.bf16.mxu0 %v2413
    %2919 = vmatpush1.bf16.msra.mxu0 %v2412
    %2920 = vmatprep.subr.bf16.mxu0 %v2421
    %2921 = vmatpush1.bf16.msra.mxu0 %v2420
    %2922 = vmatprep.mubr.bf16.mxu0 %v2846
    %2923 = vmatmul.mubr.bf16.gmra.mrb[0].mxu0 %v2845
    %v2924 = vpop.f32.mrb[0].mxu0
    %v2925 = vadd.f32 0.0, %v2924
    %v2926 = vpop.f32.mrb[0].mxu0
    %v2927 = vadd.f32 0.0, %v2926
    %v2928 = vpop.f32.mrb[0].mxu0
    %v2929 = vpop.f32.mrb[0].mxu0
    %2930 = vdwg.mxu0
    %2931 = vmatprep.subr.bf16.mxu0 %v2303
    %2932 = vmatpush1.bf16.msra.mxu0 %v2302
    %2933 = vmatprep.subr.bf16.mxu0 %v2311
    %2934 = vmatpush1.bf16.msra.mxu0 %v2310
    %2935 = vmatprep.subr.bf16.mxu0 %v2319
    %2936 = vmatpush1.bf16.msra.mxu0 %v2318
    %2937 = vmatprep.subr.bf16.mxu0 %v2327
    %2938 = vmatpush1.bf16.msra.mxu0 %v2326
    %2939 = vmatprep.subr.bf16.mxu0 %v2335
    %2940 = vmatpush1.bf16.msra.mxu0 %v2334
    %2941 = vmatprep.subr.bf16.mxu0 %v2343
    %2942 = vmatpush1.bf16.msra.mxu0 %v2342
    %2943 = vmatprep.subr.bf16.mxu0 %v2351
    %2944 = vmatpush1.bf16.msra.mxu0 %v2350
    %2945 = vmatprep.subr.bf16.mxu0 %v2359
    %2946 = vmatpush1.bf16.msra.mxu0 %v2358
    %2947 = vmatprep.subr.bf16.mxu0 %v2367
    %2948 = vmatpush1.bf16.msra.mxu0 %v2366
    %2949 = vmatprep.subr.bf16.mxu0 %v2375
    %2950 = vmatpush1.bf16.msra.mxu0 %v2374
    %2951 = vmatprep.subr.bf16.mxu0 %v2383
    %2952 = vmatpush1.bf16.msra.mxu0 %v2382
    %2953 = vmatprep.subr.bf16.mxu0 %v2391
    %2954 = vmatpush1.bf16.msra.mxu0 %v2390
    %2955 = vmatprep.subr.bf16.mxu0 %v2399
    %2956 = vmatpush1.bf16.msra.mxu0 %v2398
    %2957 = vmatprep.subr.bf16.mxu0 %v2407
    %2958 = vmatpush1.bf16.msra.mxu0 %v2406
    %2959 = vmatprep.subr.bf16.mxu0 %v2415
    %2960 = vmatpush1.bf16.msra.mxu0 %v2414
    %2961 = vmatprep.subr.bf16.mxu0 %v2423
    %2962 = vmatpush1.bf16.msra.mxu0 %v2422
    %2963 = vmatprep.mubr.bf16.mxu0 %v2846
    %2964 = vmatmul.mubr.bf16.gmra.mrb[0].mxu0 %v2845
    %v2965 = vpop.f32.mrb[0].mxu0
    %v2966 = vadd.f32 0.0, %v2965
    %v2967 = vpop.f32.mrb[0].mxu0
    %v2968 = vadd.f32 0.0, %v2967
    %v2969 = vpop.f32.mrb[0].mxu0
    %v2970 = vpop.f32.mrb[0].mxu0
    %2971 = vdwg.mxu0
    %2972 = vmatprep.subr.bf16.mxu0 %v2305
    %2973 = vmatpush1.bf16.msra.mxu0 %v2304
    %2974 = vmatprep.subr.bf16.mxu0 %v2313
    %2975 = vmatpush1.bf16.msra.mxu0 %v2312
    %2976 = vmatprep.subr.bf16.mxu0 %v2321
    %2977 = vmatpush1.bf16.msra.mxu0 %v2320
    %2978 = vmatprep.subr.bf16.mxu0 %v2329
    %2979 = vmatpush1.bf16.msra.mxu0 %v2328
    %2980 = vmatprep.subr.bf16.mxu0 %v2337
    %2981 = vmatpush1.bf16.msra.mxu0 %v2336
    %2982 = vmatprep.subr.bf16.mxu0 %v2345
    %2983 = vmatpush1.bf16.msra.mxu0 %v2344
    %2984 = vmatprep.subr.bf16.mxu0 %v2353
    %2985 = vmatpush1.bf16.msra.mxu0 %v2352
    %2986 = vmatprep.subr.bf16.mxu0 %v2361
    %2987 = vmatpush1.bf16.msra.mxu0 %v2360
    %2988 = vmatprep.subr.bf16.mxu0 %v2369
    %2989 = vmatpush1.bf16.msra.mxu0 %v2368
    %2990 = vmatprep.subr.bf16.mxu0 %v2377
    %2991 = vmatpush1.bf16.msra.mxu0 %v2376
    %2992 = vmatprep.subr.bf16.mxu0 %v2385
    %2993 = vmatpush1.bf16.msra.mxu0 %v2384
    %2994 = vmatprep.subr.bf16.mxu0 %v2393
    %2995 = vmatpush1.bf16.msra.mxu0 %v2392
    %2996 = vmatprep.subr.bf16.mxu0 %v2401
    %2997 = vmatpush1.bf16.msra.mxu0 %v2400
    %2998 = vmatprep.subr.bf16.mxu0 %v2409
    %2999 = vmatpush1.bf16.msra.mxu0 %v2408
    %3000 = vmatprep.subr.bf16.mxu0 %v2417
    %3001 = vmatpush1.bf16.msra.mxu0 %v2416
    %3002 = vmatprep.subr.bf16.mxu0 %v2425
    %3003 = vmatpush1.bf16.msra.mxu0 %v2424
    %3004 = vmatprep.mubr.bf16.mxu0 %v2846
    %3005 = vmatmul.mubr.bf16.gmra.mrb[0].mxu0 %v2845
    %v3006 = vpop.f32.mrb[0].mxu0
    %v3007 = vadd.f32 0.0, %v3006
    %v3008 = vpop.f32.mrb[0].mxu0
    %v3009 = vadd.f32 0.0, %v3008
    %v3010 = vpop.f32.mrb[0].mxu0
    %v3011 = vpop.f32.mrb[0].mxu0
    %3012 = vdwg.mxu0
    %v3021 = vcombine.low %v2884, %v2886
    %v3022 = vcombine.low %v2925, %v2927
    %v3023 = vcombine.low %v2966, %v2968
    %v3024 = vcombine.low %v3007, %v3009
    %v3025 = vrot.slane %v3021, 7
    %v3026 = vrot.slane %v3022, 7
    %v3027 = vrot.slane %v3023, 7
    %v3028 = vrot.slane %v3024, 7
    %v3037 = vadd.f32 %v1770, %v3025
    %v3038 = vadd.f32 %v1772, %v3026
    %v3039 = vadd.f32 %v1774, %v3027
    %v3040 = vadd.f32 %v1776, %v3028
    %v3041 = vadd.f32 %v1771, %v3021
    %v3042 = vadd.f32 %v1773, %v3022
    %v3043 = vadd.f32 %v1775, %v3023
    %v3044 = vadd.f32 %v1777, %v3024
    %v3045 = vxor.u32 %v3037, 2147483648
    %v3046 = vxor.u32 %v3038, 2147483648
    %v3047 = vxor.u32 %v3039, 2147483648
    %v3048 = vxor.u32 %v3041, 2147483648
    %v3049 = vxor.u32 %v3042, 2147483648
    %v3050 = vxor.u32 %v3043, 2147483648
    %v3051 = vmul.f32 %v3045, 1.442695
    %v3052 = vpow.pop %v3051
    %v3053 = vmul.f32 %v3046, 1.442695
    %v3054 = vpow.pop %v3053
    %v3055 = vmul.f32 %v3047, 1.442695
    %v3056 = vpow.pop %v3055
    %v3057 = vmul.f32 %v3048, 1.442695
    %v3058 = vpow.pop %v3057
    %v3059 = vmul.f32 %v3049, 1.442695
    %v3060 = vpow.pop %v3059
    %v3061 = vmul.f32 %v3050, 1.442695
    %v3062 = vpow.pop %v3061
    %v3063 = vadd.f32 %v3052, 1.0
    %v3064 = vadd.f32 %v3054, 1.0
    %v3065 = vadd.f32 %v3056, 1.0
    %v3066 = vadd.f32 %v3058, 1.0
    %v3067 = vadd.f32 %v3060, 1.0
    %v3068 = vadd.f32 %v3062, 1.0
    %v3069 = vrcp.pop %v3063
    %v3070 = vmul.f32 1.0, %v3069
    %v3071 = vrcp.pop %v3064
    %v3072 = vmul.f32 1.0, %v3071
    %v3073 = vrcp.pop %v3065
    %v3074 = vmul.f32 1.0, %v3073
    %v3075 = vrcp.pop %v3066
    %v3076 = vmul.f32 1.0, %v3075
    %v3077 = vrcp.pop %v3067
    %v3078 = vmul.f32 1.0, %v3077
    %v3079 = vrcp.pop %v3068
    %v3080 = vmul.f32 1.0, %v3079
    %v3081 = vtanh.pop %v3040
    %v3082 = vtanh.pop %v3044
    %v3085 = vrot.slane %v2792, 7
    %v3086 = vrot.slane %v2793, 7
    %v3089 = vmul.f32 %v3072, %v3085
    %v3090 = vmul.f32 %v3078, %v3086
    %v3091 = vmul.f32 %v3070, %v3081
    %v3092 = vmul.f32 %v3076, %v3082
    %v3093 = vadd.f32 %v3089, %v3091
    %v3094 = vadd.f32 %v3090, %v3092
    %v3095 = vtanh.pop %v3093
    %v3096 = vtanh.pop %v3094
    %v3097 = vmul.f32 %v3074, %v3095
    %v3098 = vmul.f32 %v3080, %v3096
    %v3101 = vrot.slane %v3097, 5
    %v3102 = vrot.slane %v3101, 4
    %v3103 = vrot.slane %v3098, 5
    %v3104 = vrot.slane %v3103, 4
    %3107 = vst [vmem:[#allocation7 + $0x1] sm:$0x1] %v3102
    %3108 = vst [vmem:[#allocation7 + $0x9] sm:$0x1] %v3104
    %v3109 = vrot.slane %v3097, 4
    %v3110 = vrot.slane %v3098, 4
    %v3111 = vrot.slane %v3109, 5
    %v3112 = vrot.slane %v3111, 4
    %v3113 = vrot.slane %v3110, 5
    %v3114 = vrot.slane %v3113, 4
    %3117 = vst [vmem:[#allocation7 + $0x6] sm:$0x1] %v3112
    %3118 = vst [vmem:[#allocation7 + $0xe] sm:$0x1] %v3114
    %v3119 = vlaneseq
    %v3120 = vshrl.u32 %v3119, 7
    %v3121 = vsub.s32 1, %v3120
    %v3122 = vrot.slane %v3097, %v3121
    %v3123 = vlaneseq
    %v3124 = vshrl.u32 %v3123, 7
    %v3125 = vsub.s32 5, %v3124
    %v3126 = vrot.slane %v3097, %v3125
    %v3127 = vlaneseq
    %v3128 = vshrl.u32 %v3127, 7
    %v3129 = vsub.s32 1, %v3128
    %v3130 = vrot.slane %v3098, %v3129
    %v3131 = vlaneseq
    %v3132 = vshrl.u32 %v3131, 7
    %v3133 = vsub.s32 5, %v3132
    %v3134 = vrot.slane %v3098, %v3133
    %v3139 = vpack.c.bf16 %v3122, %v3122
    %v3140 = vpack.c.bf16 %v3126, %v3126
    %v3141 = vpack.c.bf16 %v3130, %v3130
    %v3142 = vpack.c.bf16 %v3134, %v3134
    %v3147 = vunpack.c.l.b16 %v3139
    %v3148 = vunpack.c.l.b16 %v3140
    %v3149 = vunpack.c.l.b16 %v3141
    %v3150 = vunpack.c.l.b16 %v3142
    %v3151 = vrot.slane %v3147, 1
    %v3152 = vsel %vm2841, %v3149, %v3151
    %v3153 = vrot.slane %v3148, 1
    %v3154 = vsel %vm2841, %v3150, %v3153
    %v3155 = vpack.c.b16 %v3152, %v3152
    %v3156 = vpack.c.b16 %v3154, %v3154
    %3159 = vmatprep.subr.bf16.mxu0 %v2299
    %3160 = vmatpush1.bf16.msra.mxu0 %v2298
    %3161 = vmatprep.subr.bf16.mxu0 %v2307
    %3162 = vmatpush1.bf16.msra.mxu0 %v2306
    %3163 = vmatprep.subr.bf16.mxu0 %v2315
    %3164 = vmatpush1.bf16.msra.mxu0 %v2314
    %3165 = vmatprep.subr.bf16.mxu0 %v2323
    %3166 = vmatpush1.bf16.msra.mxu0 %v2322
    %3167 = vmatprep.subr.bf16.mxu0 %v2331
    %3168 = vmatpush1.bf16.msra.mxu0 %v2330
    %3169 = vmatprep.subr.bf16.mxu0 %v2339
    %3170 = vmatpush1.bf16.msra.mxu0 %v2338
    %3171 = vmatprep.subr.bf16.mxu0 %v2347
    %3172 = vmatpush1.bf16.msra.mxu0 %v2346
    %3173 = vmatprep.subr.bf16.mxu0 %v2355
    %3174 = vmatpush1.bf16.msra.mxu0 %v2354
    %3175 = vmatprep.subr.bf16.mxu0 %v2363
    %3176 = vmatpush1.bf16.msra.mxu0 %v2362
    %3177 = vmatprep.subr.bf16.mxu0 %v2371
    %3178 = vmatpush1.bf16.msra.mxu0 %v2370
    %3179 = vmatprep.subr.bf16.mxu0 %v2379
    %3180 = vmatpush1.bf16.msra.mxu0 %v2378
    %3181 = vmatprep.subr.bf16.mxu0 %v2387
    %3182 = vmatpush1.bf16.msra.mxu0 %v2386
    %3183 = vmatprep.subr.bf16.mxu0 %v2395
    %3184 = vmatpush1.bf16.msra.mxu0 %v2394
    %3185 = vmatprep.subr.bf16.mxu0 %v2403
    %3186 = vmatpush1.bf16.msra.mxu0 %v2402
    %3187 = vmatprep.subr.bf16.mxu0 %v2411
    %3188 = vmatpush1.bf16.msra.mxu0 %v2410
    %3189 = vmatprep.subr.bf16.mxu0 %v2419
    %3190 = vmatpush1.bf16.msra.mxu0 %v2418
    %3191 = vmatprep.mubr.bf16.mxu0 %v3156
    %3192 = vmatmul.mubr.bf16.gmra.mrb[0].mxu0 %v3155
    %v3193 = vpop.f32.mrb[0].mxu0
    %v3194 = vadd.f32 0.0, %v3193
    %v3195 = vpop.f32.mrb[0].mxu0
    %v3196 = vadd.f32 0.0, %v3195
    %v3197 = vpop.f32.mrb[0].mxu0
    %v3198 = vpop.f32.mrb[0].mxu0
    %3199 = vdwg.mxu0
    %3200 = vmatprep.subr.bf16.mxu0 %v2301
    %3201 = vmatpush1.bf16.msra.mxu0 %v2300
    %3202 = vmatprep.subr.bf16.mxu0 %v2309
    %3203 = vmatpush1.bf16.msra.mxu0 %v2308
    %3204 = vmatprep.subr.bf16.mxu0 %v2317
    %3205 = vmatpush1.bf16.msra.mxu0 %v2316
    %3206 = vmatprep.subr.bf16.mxu0 %v2325
    %3207 = vmatpush1.bf16.msra.mxu0 %v2324
    %3208 = vmatprep.subr.bf16.mxu0 %v2333
    %3209 = vmatpush1.bf16.msra.mxu0 %v2332
    %3210 = vmatprep.subr.bf16.mxu0 %v2341
    %3211 = vmatpush1.bf16.msra.mxu0 %v2340
    %3212 = vmatprep.subr.bf16.mxu0 %v2349
    %3213 = vmatpush1.bf16.msra.mxu0 %v2348
    %3214 = vmatprep.subr.bf16.mxu0 %v2357
    %3215 = vmatpush1.bf16.msra.mxu0 %v2356
    %3216 = vmatprep.subr.bf16.mxu0 %v2365
    %3217 = vmatpush1.bf16.msra.mxu0 %v2364
    %3218 = vmatprep.subr.bf16.mxu0 %v2373
    %3219 = vmatpush1.bf16.msra.mxu0 %v2372
    %3220 = vmatprep.subr.bf16.mxu0 %v2381
    %3221 = vmatpush1.bf16.msra.mxu0 %v2380
    %3222 = vmatprep.subr.bf16.mxu0 %v2389
    %3223 = vmatpush1.bf16.msra.mxu0 %v2388
    %3224 = vmatprep.subr.bf16.mxu0 %v2397
    %3225 = vmatpush1.bf16.msra.mxu0 %v2396
    %3226 = vmatprep.subr.bf16.mxu0 %v2405
    %3227 = vmatpush1.bf16.msra.mxu0 %v2404
    %3228 = vmatprep.subr.bf16.mxu0 %v2413
    %3229 = vmatpush1.bf16.msra.mxu0 %v2412
    %3230 = vmatprep.subr.bf16.mxu0 %v2421
    %3231 = vmatpush1.bf16.msra.mxu0 %v2420
    %3232 = vmatprep.mubr.bf16.mxu0 %v3156
    %3233 = vmatmul.mubr.bf16.gmra.mrb[0].mxu0 %v3155
    %v3234 = vpop.f32.mrb[0].mxu0
    %v3235 = vadd.f32 0.0, %v3234
    %v3236 = vpop.f32.mrb[0].mxu0
    %v3237 = vadd.f32 0.0, %v3236
    %v3238 = vpop.f32.mrb[0].mxu0
    %v3239 = vpop.f32.mrb[0].mxu0
    %3240 = vdwg.mxu0
    %3241 = vmatprep.subr.bf16.mxu0 %v2303
    %3242 = vmatpush1.bf16.msra.mxu0 %v2302
    %3243 = vmatprep.subr.bf16.mxu0 %v2311
    %3244 = vmatpush1.bf16.msra.mxu0 %v2310
    %3245 = vmatprep.subr.bf16.mxu0 %v2319
    %3246 = vmatpush1.bf16.msra.mxu0 %v2318
    %3247 = vmatprep.subr.bf16.mxu0 %v2327
    %3248 = vmatpush1.bf16.msra.mxu0 %v2326
    %3249 = vmatprep.subr.bf16.mxu0 %v2335
    %3250 = vmatpush1.bf16.msra.mxu0 %v2334
    %3251 = vmatprep.subr.bf16.mxu0 %v2343
    %3252 = vmatpush1.bf16.msra.mxu0 %v2342
    %3253 = vmatprep.subr.bf16.mxu0 %v2351
    %3254 = vmatpush1.bf16.msra.mxu0 %v2350
    %3255 = vmatprep.subr.bf16.mxu0 %v2359
    %3256 = vmatpush1.bf16.msra.mxu0 %v2358
    %3257 = vmatprep.subr.bf16.mxu0 %v2367
    %3258 = vmatpush1.bf16.msra.mxu0 %v2366
    %3259 = vmatprep.subr.bf16.mxu0 %v2375
    %3260 = vmatpush1.bf16.msra.mxu0 %v2374
    %3261 = vmatprep.subr.bf16.mxu0 %v2383
    %3262 = vmatpush1.bf16.msra.mxu0 %v2382
    %3263 = vmatprep.subr.bf16.mxu0 %v2391
    %3264 = vmatpush1.bf16.msra.mxu0 %v2390
    %3265 = vmatprep.subr.bf16.mxu0 %v2399
    %3266 = vmatpush1.bf16.msra.mxu0 %v2398
    %3267 = vmatprep.subr.bf16.mxu0 %v2407
    %3268 = vmatpush1.bf16.msra.mxu0 %v2406
    %3269 = vmatprep.subr.bf16.mxu0 %v2415
    %3270 = vmatpush1.bf16.msra.mxu0 %v2414
    %3271 = vmatprep.subr.bf16.mxu0 %v2423
    %3272 = vmatpush1.bf16.msra.mxu0 %v2422
    %3273 = vmatprep.mubr.bf16.mxu0 %v3156
    %3274 = vmatmul.mubr.bf16.gmra.mrb[0].mxu0 %v3155
    %v3275 = vpop.f32.mrb[0].mxu0
    %v3276 = vadd.f32 0.0, %v3275
    %v3277 = vpop.f32.mrb[0].mxu0
    %v3278 = vadd.f32 0.0, %v3277
    %v3279 = vpop.f32.mrb[0].mxu0
    %v3280 = vpop.f32.mrb[0].mxu0
    %3281 = vdwg.mxu0
    %3282 = vmatprep.subr.bf16.mxu0 %v2305
    %3283 = vmatpush1.bf16.msra.mxu0 %v2304
    %3284 = vmatprep.subr.bf16.mxu0 %v2313
    %3285 = vmatpush1.bf16.msra.mxu0 %v2312
    %3286 = vmatprep.subr.bf16.mxu0 %v2321
    %3287 = vmatpush1.bf16.msra.mxu0 %v2320
    %3288 = vmatprep.subr.bf16.mxu0 %v2329
    %3289 = vmatpush1.bf16.msra.mxu0 %v2328
    %3290 = vmatprep.subr.bf16.mxu0 %v2337
    %3291 = vmatpush1.bf16.msra.mxu0 %v2336
    %3292 = vmatprep.subr.bf16.mxu0 %v2345
    %3293 = vmatpush1.bf16.msra.mxu0 %v2344
    %3294 = vmatprep.subr.bf16.mxu0 %v2353
    %3295 = vmatpush1.bf16.msra.mxu0 %v2352
    %3296 = vmatprep.subr.bf16.mxu0 %v2361
    %3297 = vmatpush1.bf16.msra.mxu0 %v2360
    %3298 = vmatprep.subr.bf16.mxu0 %v2369
    %3299 = vmatpush1.bf16.msra.mxu0 %v2368
    %3300 = vmatprep.subr.bf16.mxu0 %v2377
    %3301 = vmatpush1.bf16.msra.mxu0 %v2376
    %3302 = vmatprep.subr.bf16.mxu0 %v2385
    %3303 = vmatpush1.bf16.msra.mxu0 %v2384
    %3304 = vmatprep.subr.bf16.mxu0 %v2393
    %3305 = vmatpush1.bf16.msra.mxu0 %v2392
    %3306 = vmatprep.subr.bf16.mxu0 %v2401
    %3307 = vmatpush1.bf16.msra.mxu0 %v2400
    %3308 = vmatprep.subr.bf16.mxu0 %v2409
    %3309 = vmatpush1.bf16.msra.mxu0 %v2408
    %3310 = vmatprep.subr.bf16.mxu0 %v2417
    %3311 = vmatpush1.bf16.msra.mxu0 %v2416
    %3312 = vmatprep.subr.bf16.mxu0 %v2425
    %3313 = vmatpush1.bf16.msra.mxu0 %v2424
    %3314 = vmatprep.mubr.bf16.mxu0 %v3156
    %3315 = vmatmul.mubr.bf16.gmra.mrb[0].mxu0 %v3155
    %v3316 = vpop.f32.mrb[0].mxu0
    %v3317 = vadd.f32 0.0, %v3316
    %v3318 = vpop.f32.mrb[0].mxu0
    %v3319 = vadd.f32 0.0, %v3318
    %v3320 = vpop.f32.mrb[0].mxu0
    %v3321 = vpop.f32.mrb[0].mxu0
    %3322 = vdwg.mxu0
    %v3331 = vcombine.low %v3194, %v3196
    %v3332 = vcombine.low %v3235, %v3237
    %v3333 = vcombine.low %v3276, %v3278
    %v3334 = vcombine.low %v3317, %v3319
    %v3335 = vrot.slane %v3331, 6
    %v3336 = vrot.slane %v3332, 6
    %v3337 = vrot.slane %v3333, 6
    %v3338 = vrot.slane %v3334, 6
    %v3339 = vrot.slane %v3331, 7
    %v3340 = vrot.slane %v3332, 7
    %v3341 = vrot.slane %v3333, 7
    %v3342 = vrot.slane %v3334, 7
    %v3351 = vadd.f32 %v1770, %v3335
    %v3352 = vadd.f32 %v1772, %v3336
    %v3353 = vadd.f32 %v1774, %v3337
    %v3354 = vadd.f32 %v1776, %v3338
    %v3355 = vadd.f32 %v1771, %v3339
    %v3356 = vadd.f32 %v1773, %v3340
    %v3357 = vadd.f32 %v1775, %v3341
    %v3358 = vadd.f32 %v1777, %v3342
    %v3359 = vxor.u32 %v3351, 2147483648
    %v3360 = vxor.u32 %v3352, 2147483648
    %v3361 = vxor.u32 %v3353, 2147483648
    %v3362 = vxor.u32 %v3355, 2147483648
    %v3363 = vxor.u32 %v3356, 2147483648
    %v3364 = vxor.u32 %v3357, 2147483648
    %v3365 = vmul.f32 %v3359, 1.442695
    %v3366 = vpow.pop %v3365
    %v3367 = vmul.f32 %v3360, 1.442695
    %v3368 = vpow.pop %v3367
    %v3369 = vmul.f32 %v3361, 1.442695
    %v3370 = vpow.pop %v3369
    %v3371 = vmul.f32 %v3362, 1.442695
    %v3372 = vpow.pop %v3371
    %v3373 = vmul.f32 %v3363, 1.442695
    %v3374 = vpow.pop %v3373
    %v3375 = vmul.f32 %v3364, 1.442695
    %v3376 = vpow.pop %v3375
    %v3377 = vadd.f32 %v3366, 1.0
    %v3378 = vadd.f32 %v3368, 1.0
    %v3379 = vadd.f32 %v3370, 1.0
    %v3380 = vadd.f32 %v3372, 1.0
    %v3381 = vadd.f32 %v3374, 1.0
    %v3382 = vadd.f32 %v3376, 1.0
    %v3383 = vrcp.pop %v3377
    %v3384 = vmul.f32 1.0, %v3383
    %v3385 = vrcp.pop %v3378
    %v3386 = vmul.f32 1.0, %v3385
    %v3387 = vrcp.pop %v3379
    %v3388 = vmul.f32 1.0, %v3387
    %v3389 = vrcp.pop %v3380
    %v3390 = vmul.f32 1.0, %v3389
    %v3391 = vrcp.pop %v3381
    %v3392 = vmul.f32 1.0, %v3391
    %v3393 = vrcp.pop %v3382
    %v3394 = vmul.f32 1.0, %v3393
    %v3395 = vtanh.pop %v3354
    %v3396 = vtanh.pop %v3358
    %v3399 = vrot.slane %v3093, 7
    %v3400 = vrot.slane %v3094, 7
    %v3403 = vmul.f32 %v3386, %v3399
    %v3404 = vmul.f32 %v3392, %v3400
    %v3405 = vmul.f32 %v3384, %v3395
    %v3406 = vmul.f32 %v3390, %v3396
    %v3407 = vadd.f32 %v3403, %v3405
    %v3408 = vadd.f32 %v3404, %v3406
    %v3409 = vtanh.pop %v3407
    %v3410 = vtanh.pop %v3408
    %v3411 = vmul.f32 %v3388, %v3409
    %v3412 = vmul.f32 %v3394, %v3410
    %v3415 = vrot.slane %v3411, 6
    %v3416 = vrot.slane %v3415, 4
    %v3417 = vrot.slane %v3412, 6
    %v3418 = vrot.slane %v3417, 4
    %3421 = vst [vmem:[#allocation7 + $0x2] sm:$0x1] %v3416
    %3422 = vst [vmem:[#allocation7 + $0xa] sm:$0x1] %v3418
    %v3423 = vrot.slane %v3411, 4
    %v3424 = vrot.slane %v3412, 4
    %v3425 = vrot.slane %v3423, 6
    %v3426 = vrot.slane %v3425, 4
    %v3427 = vrot.slane %v3424, 6
    %v3428 = vrot.slane %v3427, 4
    %3431 = vst [vmem:[#allocation7 + $0x5] sm:$0x1] %v3426
    %3432 = vst [vmem:[#allocation7 + $0xd] sm:$0x1] %v3428
    %v3433 = vlaneseq
    %v3434 = vshrl.u32 %v3433, 7
    %v3435 = vsub.s32 2, %v3434
    %v3436 = vrot.slane %v3411, %v3435
    %v3437 = vlaneseq
    %v3438 = vshrl.u32 %v3437, 7
    %v3439 = vsub.s32 6, %v3438
    %v3440 = vrot.slane %v3411, %v3439
    %v3441 = vlaneseq
    %v3442 = vshrl.u32 %v3441, 7
    %v3443 = vsub.s32 2, %v3442
    %v3444 = vrot.slane %v3412, %v3443
    %v3445 = vlaneseq
    %v3446 = vshrl.u32 %v3445, 7
    %v3447 = vsub.s32 6, %v3446
    %v3448 = vrot.slane %v3412, %v3447
    %v3453 = vpack.c.bf16 %v3436, %v3436
    %v3454 = vpack.c.bf16 %v3440, %v3440
    %v3455 = vpack.c.bf16 %v3444, %v3444
    %v3456 = vpack.c.bf16 %v3448, %v3448
    %v3461 = vunpack.c.l.b16 %v3453
    %v3462 = vunpack.c.l.b16 %v3454
    %v3463 = vunpack.c.l.b16 %v3455
    %v3464 = vunpack.c.l.b16 %v3456
    %v3465 = vrot.slane %v3461, 2
    %v3466 = vrot.slane %v3463, 1
    %v3467 = vsel %vm2841, %v3466, %v3465
    %v3468 = vrot.slane %v3462, 2
    %v3469 = vrot.slane %v3464, 1
    %v3470 = vsel %vm2841, %v3469, %v3468
    %v3471 = vpack.c.b16 %v3467, %v3467
    %v3472 = vpack.c.b16 %v3470, %v3470
    %3475 = vmatprep.subr.bf16.mxu0 %v2299
    %3476 = vmatpush1.bf16.msra.mxu0 %v2298
    %3477 = vmatprep.subr.bf16.mxu0 %v2307
    %3478 = vmatpush1.bf16.msra.mxu0 %v2306
    %3479 = vmatprep.subr.bf16.mxu0 %v2315
    %3480 = vmatpush1.bf16.msra.mxu0 %v2314
    %3481 = vmatprep.subr.bf16.mxu0 %v2323
    %3482 = vmatpush1.bf16.msra.mxu0 %v2322
    %3483 = vmatprep.subr.bf16.mxu0 %v2331
    %3484 = vmatpush1.bf16.msra.mxu0 %v2330
    %3485 = vmatprep.subr.bf16.mxu0 %v2339
    %3486 = vmatpush1.bf16.msra.mxu0 %v2338
    %3487 = vmatprep.subr.bf16.mxu0 %v2347
    %3488 = vmatpush1.bf16.msra.mxu0 %v2346
    %3489 = vmatprep.subr.bf16.mxu0 %v2355
    %3490 = vmatpush1.bf16.msra.mxu0 %v2354
    %3491 = vmatprep.subr.bf16.mxu0 %v2363
    %3492 = vmatpush1.bf16.msra.mxu0 %v2362
    %3493 = vmatprep.subr.bf16.mxu0 %v2371
    %3494 = vmatpush1.bf16.msra.mxu0 %v2370
    %3495 = vmatprep.subr.bf16.mxu0 %v2379
    %3496 = vmatpush1.bf16.msra.mxu0 %v2378
    %3497 = vmatprep.subr.bf16.mxu0 %v2387
    %3498 = vmatpush1.bf16.msra.mxu0 %v2386
    %3499 = vmatprep.subr.bf16.mxu0 %v2395
    %3500 = vmatpush1.bf16.msra.mxu0 %v2394
    %3501 = vmatprep.subr.bf16.mxu0 %v2403
    %3502 = vmatpush1.bf16.msra.mxu0 %v2402
    %3503 = vmatprep.subr.bf16.mxu0 %v2411
    %3504 = vmatpush1.bf16.msra.mxu0 %v2410
    %3505 = vmatprep.subr.bf16.mxu0 %v2419
    %3506 = vmatpush1.bf16.msra.mxu0 %v2418
    %3507 = vmatprep.mubr.bf16.mxu0 %v3472
    %3508 = vmatmul.mubr.bf16.gmra.mrb[0].mxu0 %v3471
    %v3509 = vpop.f32.mrb[0].mxu0
    %v3510 = vadd.f32 0.0, %v3509
    %v3511 = vpop.f32.mrb[0].mxu0
    %v3512 = vadd.f32 0.0, %v3511
    %v3513 = vpop.f32.mrb[0].mxu0
    %v3514 = vpop.f32.mrb[0].mxu0
    %3515 = vdwg.mxu0
    %3516 = vmatprep.subr.bf16.mxu0 %v2301
    %3517 = vmatpush1.bf16.msra.mxu0 %v2300
    %3518 = vmatprep.subr.bf16.mxu0 %v2309
    %3519 = vmatpush1.bf16.msra.mxu0 %v2308
    %3520 = vmatprep.subr.bf16.mxu0 %v2317
    %3521 = vmatpush1.bf16.msra.mxu0 %v2316
    %3522 = vmatprep.subr.bf16.mxu0 %v2325
    %3523 = vmatpush1.bf16.msra.mxu0 %v2324
    %3524 = vmatprep.subr.bf16.mxu0 %v2333
    %3525 = vmatpush1.bf16.msra.mxu0 %v2332
    %3526 = vmatprep.subr.bf16.mxu0 %v2341
    %3527 = vmatpush1.bf16.msra.mxu0 %v2340
    %3528 = vmatprep.subr.bf16.mxu0 %v2349
    %3529 = vmatpush1.bf16.msra.mxu0 %v2348
    %3530 = vmatprep.subr.bf16.mxu0 %v2357
    %3531 = vmatpush1.bf16.msra.mxu0 %v2356
    %3532 = vmatprep.subr.bf16.mxu0 %v2365
    %3533 = vmatpush1.bf16.msra.mxu0 %v2364
    %3534 = vmatprep.subr.bf16.mxu0 %v2373
    %3535 = vmatpush1.bf16.msra.mxu0 %v2372
    %3536 = vmatprep.subr.bf16.mxu0 %v2381
    %3537 = vmatpush1.bf16.msra.mxu0 %v2380
    %3538 = vmatprep.subr.bf16.mxu0 %v2389
    %3539 = vmatpush1.bf16.msra.mxu0 %v2388
    %3540 = vmatprep.subr.bf16.mxu0 %v2397
    %3541 = vmatpush1.bf16.msra.mxu0 %v2396
    %3542 = vmatprep.subr.bf16.mxu0 %v2405
    %3543 = vmatpush1.bf16.msra.mxu0 %v2404
    %3544 = vmatprep.subr.bf16.mxu0 %v2413
    %3545 = vmatpush1.bf16.msra.mxu0 %v2412
    %3546 = vmatprep.subr.bf16.mxu0 %v2421
    %3547 = vmatpush1.bf16.msra.mxu0 %v2420
    %3548 = vmatprep.mubr.bf16.mxu0 %v3472
    %3549 = vmatmul.mubr.bf16.gmra.mrb[0].mxu0 %v3471
    %v3550 = vpop.f32.mrb[0].mxu0
    %v3551 = vadd.f32 0.0, %v3550
    %v3552 = vpop.f32.mrb[0].mxu0
    %v3553 = vadd.f32 0.0, %v3552
    %v3554 = vpop.f32.mrb[0].mxu0
    %v3555 = vpop.f32.mrb[0].mxu0
    %3556 = vdwg.mxu0
    %3557 = vmatprep.subr.bf16.mxu0 %v2303
    %3558 = vmatpush1.bf16.msra.mxu0 %v2302
    %3559 = vmatprep.subr.bf16.mxu0 %v2311
    %3560 = vmatpush1.bf16.msra.mxu0 %v2310
    %3561 = vmatprep.subr.bf16.mxu0 %v2319
    %3562 = vmatpush1.bf16.msra.mxu0 %v2318
    %3563 = vmatprep.subr.bf16.mxu0 %v2327
    %3564 = vmatpush1.bf16.msra.mxu0 %v2326
    %3565 = vmatprep.subr.bf16.mxu0 %v2335
    %3566 = vmatpush1.bf16.msra.mxu0 %v2334
    %3567 = vmatprep.subr.bf16.mxu0 %v2343
    %3568 = vmatpush1.bf16.msra.mxu0 %v2342
    %3569 = vmatprep.subr.bf16.mxu0 %v2351
    %3570 = vmatpush1.bf16.msra.mxu0 %v2350
    %3571 = vmatprep.subr.bf16.mxu0 %v2359
    %3572 = vmatpush1.bf16.msra.mxu0 %v2358
    %3573 = vmatprep.subr.bf16.mxu0 %v2367
    %3574 = vmatpush1.bf16.msra.mxu0 %v2366
    %3575 = vmatprep.subr.bf16.mxu0 %v2375
    %3576 = vmatpush1.bf16.msra.mxu0 %v2374
    %3577 = vmatprep.subr.bf16.mxu0 %v2383
    %3578 = vmatpush1.bf16.msra.mxu0 %v2382
    %3579 = vmatprep.subr.bf16.mxu0 %v2391
    %3580 = vmatpush1.bf16.msra.mxu0 %v2390
    %3581 = vmatprep.subr.bf16.mxu0 %v2399
    %3582 = vmatpush1.bf16.msra.mxu0 %v2398
    %3583 = vmatprep.subr.bf16.mxu0 %v2407
    %3584 = vmatpush1.bf16.msra.mxu0 %v2406
    %3585 = vmatprep.subr.bf16.mxu0 %v2415
    %3586 = vmatpush1.bf16.msra.mxu0 %v2414
    %3587 = vmatprep.subr.bf16.mxu0 %v2423
    %3588 = vmatpush1.bf16.msra.mxu0 %v2422
    %3589 = vmatprep.mubr.bf16.mxu0 %v3472
    %3590 = vmatmul.mubr.bf16.gmra.mrb[0].mxu0 %v3471
    %v3591 = vpop.f32.mrb[0].mxu0
    %v3592 = vadd.f32 0.0, %v3591
    %v3593 = vpop.f32.mrb[0].mxu0
    %v3594 = vadd.f32 0.0, %v3593
    %v3595 = vpop.f32.mrb[0].mxu0
    %v3596 = vpop.f32.mrb[0].mxu0
    %3597 = vdwg.mxu0
    %3598 = vmatprep.subr.bf16.mxu0 %v2305
    %3599 = vmatpush1.bf16.msra.mxu0 %v2304
    %3600 = vmatprep.subr.bf16.mxu0 %v2313
    %3601 = vmatpush1.bf16.msra.mxu0 %v2312
    %3602 = vmatprep.subr.bf16.mxu0 %v2321
    %3603 = vmatpush1.bf16.msra.mxu0 %v2320
    %3604 = vmatprep.subr.bf16.mxu0 %v2329
    %3605 = vmatpush1.bf16.msra.mxu0 %v2328
    %3606 = vmatprep.subr.bf16.mxu0 %v2337
    %3607 = vmatpush1.bf16.msra.mxu0 %v2336
    %3608 = vmatprep.subr.bf16.mxu0 %v2345
    %3609 = vmatpush1.bf16.msra.mxu0 %v2344
    %3610 = vmatprep.subr.bf16.mxu0 %v2353
    %3611 = vmatpush1.bf16.msra.mxu0 %v2352
    %3612 = vmatprep.subr.bf16.mxu0 %v2361
    %3613 = vmatpush1.bf16.msra.mxu0 %v2360
    %3614 = vmatprep.subr.bf16.mxu0 %v2369
    %3615 = vmatpush1.bf16.msra.mxu0 %v2368
    %3616 = vmatprep.subr.bf16.mxu0 %v2377
    %3617 = vmatpush1.bf16.msra.mxu0 %v2376
    %3618 = vmatprep.subr.bf16.mxu0 %v2385
    %3619 = vmatpush1.bf16.msra.mxu0 %v2384
    %3620 = vmatprep.subr.bf16.mxu0 %v2393
    %3621 = vmatpush1.bf16.msra.mxu0 %v2392
    %3622 = vmatprep.subr.bf16.mxu0 %v2401
    %3623 = vmatpush1.bf16.msra.mxu0 %v2400
    %3624 = vmatprep.subr.bf16.mxu0 %v2409
    %3625 = vmatpush1.bf16.msra.mxu0 %v2408
    %3626 = vmatprep.subr.bf16.mxu0 %v2417
    %3627 = vmatpush1.bf16.msra.mxu0 %v2416
    %3628 = vmatprep.subr.bf16.mxu0 %v2425
    %3629 = vmatpush1.bf16.msra.mxu0 %v2424
    %3630 = vmatprep.mubr.bf16.mxu0 %v3472
    %3631 = vmatmul.mubr.bf16.gmra.mrb[0].mxu0 %v3471
    %v3632 = vpop.f32.mrb[0].mxu0
    %v3633 = vadd.f32 0.0, %v3632
    %v3634 = vpop.f32.mrb[0].mxu0
    %v3635 = vadd.f32 0.0, %v3634
    %v3636 = vpop.f32.mrb[0].mxu0
    %v3637 = vpop.f32.mrb[0].mxu0
    %3638 = vdwg.mxu0
    %v3647 = vcombine.low %v3510, %v3512
    %v3648 = vcombine.low %v3551, %v3553
    %v3649 = vcombine.low %v3592, %v3594
    %v3650 = vcombine.low %v3633, %v3635
    %v3651 = vrot.slane %v3647, 5
    %v3652 = vrot.slane %v3648, 5
    %v3653 = vrot.slane %v3649, 5
    %v3654 = vrot.slane %v3650, 5
    %v3655 = vrot.slane %v3647, 6
    %v3656 = vrot.slane %v3648, 6
    %v3657 = vrot.slane %v3649, 6
    %v3658 = vrot.slane %v3650, 6
    %v3667 = vadd.f32 %v1770, %v3651
    %v3668 = vadd.f32 %v1772, %v3652
    %v3669 = vadd.f32 %v1774, %v3653
    %v3670 = vadd.f32 %v1776, %v3654
    %v3671 = vadd.f32 %v1771, %v3655
    %v3672 = vadd.f32 %v1773, %v3656
    %v3673 = vadd.f32 %v1775, %v3657
    %v3674 = vadd.f32 %v1777, %v3658
    %v3675 = vxor.u32 %v3667, 2147483648
    %v3676 = vxor.u32 %v3668, 2147483648
    %v3677 = vxor.u32 %v3669, 2147483648
    %v3678 = vxor.u32 %v3671, 2147483648
    %v3679 = vxor.u32 %v3672, 2147483648
    %v3680 = vxor.u32 %v3673, 2147483648
    %v3681 = vmul.f32 %v3675, 1.442695
    %v3682 = vpow.pop %v3681
    %v3683 = vmul.f32 %v3676, 1.442695
    %v3684 = vpow.pop %v3683
    %v3685 = vmul.f32 %v3677, 1.442695
    %v3686 = vpow.pop %v3685
    %v3687 = vmul.f32 %v3678, 1.442695
    %v3688 = vpow.pop %v3687
    %v3689 = vmul.f32 %v3679, 1.442695
    %v3690 = vpow.pop %v3689
    %v3691 = vmul.f32 %v3680, 1.442695
    %v3692 = vpow.pop %v3691
    %v3693 = vadd.f32 %v3682, 1.0
    %v3694 = vadd.f32 %v3684, 1.0
    %v3695 = vadd.f32 %v3686, 1.0
    %v3696 = vadd.f32 %v3688, 1.0
    %v3697 = vadd.f32 %v3690, 1.0
    %v3698 = vadd.f32 %v3692, 1.0
    %v3699 = vrcp.pop %v3693
    %v3700 = vmul.f32 1.0, %v3699
    %v3701 = vrcp.pop %v3694
    %v3702 = vmul.f32 1.0, %v3701
    %v3703 = vrcp.pop %v3695
    %v3704 = vmul.f32 1.0, %v3703
    %v3705 = vrcp.pop %v3696
    %v3706 = vmul.f32 1.0, %v3705
    %v3707 = vrcp.pop %v3697
    %v3708 = vmul.f32 1.0, %v3707
    %v3709 = vrcp.pop %v3698
    %v3710 = vmul.f32 1.0, %v3709
    %v3711 = vtanh.pop %v3670
    %v3712 = vtanh.pop %v3674
    %v3715 = vrot.slane %v3407, 7
    %v3716 = vrot.slane %v3408, 7
    %v3719 = vmul.f32 %v3702, %v3715
    %v3720 = vmul.f32 %v3708, %v3716
    %v3721 = vmul.f32 %v3700, %v3711
    %v3722 = vmul.f32 %v3706, %v3712
    %v3723 = vadd.f32 %v3719, %v3721
    %v3724 = vadd.f32 %v3720, %v3722
    %v3725 = vtanh.pop %v3723
    %v3726 = vtanh.pop %v3724
    %v3727 = vmul.f32 %v3704, %v3725
    %v3728 = vmul.f32 %v3710, %v3726
    %v3731 = vrot.slane %v3727, 7
    %v3732 = vrot.slane %v3731, 4
    %v3733 = vrot.slane %v3728, 7
    %v3734 = vrot.slane %v3733, 4
    %3737 = vst [vmem:[#allocation7 + $0x3] sm:$0x1] %v3732
    %3738 = vst [vmem:[#allocation7 + $0xb] sm:$0x1] %v3734
    %v3739 = vrot.slane %v3727, 4
    %v3740 = vrot.slane %v3728, 4
    %v3741 = vrot.slane %v3739, 7
    %v3742 = vrot.slane %v3741, 4
    %v3743 = vrot.slane %v3740, 7
    %v3744 = vrot.slane %v3743, 4
    %3747 = vst [vmem:[#allocation7 + $0x4] sm:$0x1] %v3742
    %3748 = vst [vmem:[#allocation7 + $0xc] sm:$0x1] %v3744
    %s3749 = smul.u32 4, 64
    %s3750 = smul.u32 %s3749, 8
    %s3751 = sshll.u32 %s3750, 4
    %3752 = dma.done [#allocation6], %s3751
    %s3753 = smul.u32 4, 32
    %s3754 = smul.u32 %s3753, 8
    %s3755 = sshll.u32 %s3754, 4
    %3756 = dma.done %s231, %s3755
    %v3757 = vld [vmem:[#allocation7] sm:$0xff]
    %v3758 = vld [vmem:[#allocation7 + $0x8] sm:$0xff]
    %v3761 = vlaneseq
    %v3762 = vshrl.u32 %v3761, 7
    %v3763 = vsub.s32 3, %v3762
    %v3764 = vrot.slane %v3757, %v3763
    %v3765 = vlaneseq
    %v3766 = vshrl.u32 %v3765, 7
    %v3767 = vsub.s32 7, %v3766
    %v3768 = vrot.slane %v3757, %v3767
    %v3769 = vlaneseq
    %v3770 = vshrl.u32 %v3769, 7
    %v3771 = vsub.s32 3, %v3770
    %v3772 = vrot.slane %v3758, %v3771
    %v3773 = vlaneseq
    %v3774 = vshrl.u32 %v3773, 7
    %v3775 = vsub.s32 7, %v3774
    %v3776 = vrot.slane %v3758, %v3775
    %v3781 = vlaneseq
    %v3782 = vshrl.u32 %v3781, 7
    %v3783 = vsub.s32 2, %v3782
    %v3784 = vrot.slane %v3757, %v3783
    %v3785 = vlaneseq
    %v3786 = vshrl.u32 %v3785, 7
    %v3787 = vsub.s32 6, %v3786
    %v3788 = vrot.slane %v3757, %v3787
    %v3789 = vlaneseq
    %v3790 = vshrl.u32 %v3789, 7
    %v3791 = vsub.s32 2, %v3790
    %v3792 = vrot.slane %v3758, %v3791
    %v3793 = vlaneseq
    %v3794 = vshrl.u32 %v3793, 7
    %v3795 = vsub.s32 6, %v3794
    %v3796 = vrot.slane %v3758, %v3795
    %v3801 = vlaneseq
    %v3802 = vshrl.u32 %v3801, 7
    %v3803 = vsub.s32 1, %v3802
    %v3804 = vrot.slane %v3757, %v3803
    %v3805 = vlaneseq
    %v3806 = vshrl.u32 %v3805, 7
    %v3807 = vsub.s32 5, %v3806
    %v3808 = vrot.slane %v3757, %v3807
    %v3809 = vlaneseq
    %v3810 = vshrl.u32 %v3809, 7
    %v3811 = vsub.s32 1, %v3810
    %v3812 = vrot.slane %v3758, %v3811
    %v3813 = vlaneseq
    %v3814 = vshrl.u32 %v3813, 7
    %v3815 = vsub.s32 5, %v3814
    %v3816 = vrot.slane %v3758, %v3815
    %v3821 = vlaneseq
    %v3822 = vshrl.u32 %v3821, 7
    %v3823 = vsub.s32 0, %v3822
    %v3824 = vrot.slane %v3757, %v3823
    %v3825 = vlaneseq
    %v3826 = vshrl.u32 %v3825, 7
    %v3827 = vsub.s32 4, %v3826
    %v3828 = vrot.slane %v3757, %v3827
    %v3829 = vlaneseq
    %v3830 = vshrl.u32 %v3829, 7
    %v3831 = vsub.s32 0, %v3830
    %v3832 = vrot.slane %v3758, %v3831
    %v3833 = vlaneseq
    %v3834 = vshrl.u32 %v3833, 7
    %v3835 = vsub.s32 4, %v3834
    %v3836 = vrot.slane %v3758, %v3835
    %v3841 = vsel %vm340, %v3764, %v3784
    %v3842 = vsel %vm340, %v3768, %v3788
    %v3843 = vsel %vm340, %v3772, %v3792
    %v3844 = vsel %vm340, %v3776, %v3796
    %v3845 = vsel %vm552, %v3841, %v3804
    %v3846 = vsel %vm552, %v3842, %v3808
    %v3847 = vsel %vm552, %v3843, %v3812
    %v3848 = vsel %vm552, %v3844, %v3816
    %v3849 = vsel %vm555, %v3845, %v3824
    %v3850 = vsel %vm555, %v3846, %v3828
    %v3851 = vsel %vm555, %v3847, %v3832
    %v3852 = vsel %vm555, %v3848, %v3836
    %v3853 = vcombine.high %v3757, %v3757
    %v3854 = vcombine.high %v3758, %v3758
    %v3859 = vcombine.low %v3757, %v3853
    %v3860 = vcombine.low %v3849, %v3850
    %v3861 = vcombine.low %v3758, %v3854
    %v3862 = vcombine.low %v3851, %v3852
    %v3863 = vcombine.low %v3859, %v3861
    %v3864 = vcombine.high %v3859, %v3861
    %v3865 = vcombine.low %v3860, %v3862
    %v3866 = vcombine.high %v3860, %v3862
    %v3871 = vpack.c.bf16 %v3863, %v3863
    %v3872 = vpack.c.bf16 %v3864, %v3864
    %v3873 = vpack.c.bf16 %v3865, %v3865
    %v3874 = vpack.c.bf16 %v3866, %v3866
    %v3875 = vld [vmem:[#allocation2] sm:$0xff]
    %v3876 = vld [vmem:[#allocation2 + $0x8] sm:$0xff]
    %v3877 = vld [vmem:[#allocation2 + $0x10] sm:$0xff]
    %v3878 = vld [vmem:[#allocation2 + $0x18] sm:$0xff]
    %v3879 = vld [vmem:[#allocation2 + $0x20] sm:$0xff]
    %v3880 = vld [vmem:[#allocation2 + $0x28] sm:$0xff]
    %v3881 = vld [vmem:[#allocation2 + $0x30] sm:$0xff]
    %v3882 = vld [vmem:[#allocation2 + $0x38] sm:$0xff]
    %v3883 = vld [vmem:[#allocation2 + $0x40] sm:$0xff]
    %v3884 = vld [vmem:[#allocation2 + $0x48] sm:$0xff]
    %v3885 = vld [vmem:[#allocation2 + $0x50] sm:$0xff]
    %v3886 = vld [vmem:[#allocation2 + $0x58] sm:$0xff]
    %v3887 = vld [vmem:[#allocation2 + $0x60] sm:$0xff]
    %v3888 = vld [vmem:[#allocation2 + $0x68] sm:$0xff]
    %v3889 = vld [vmem:[#allocation2 + $0x70] sm:$0xff]
    %v3890 = vld [vmem:[#allocation2 + $0x78] sm:$0xff]
    %v3891 = vld [vmem:[#allocation2 + $0x80] sm:$0xff]
    %v3892 = vld [vmem:[#allocation2 + $0x88] sm:$0xff]
    %v3893 = vld [vmem:[#allocation2 + $0x90] sm:$0xff]
    %v3894 = vld [vmem:[#allocation2 + $0x98] sm:$0xff]
    %v3895 = vld [vmem:[#allocation2 + $0xa0] sm:$0xff]
    %v3896 = vld [vmem:[#allocation2 + $0xa8] sm:$0xff]
    %v3897 = vld [vmem:[#allocation2 + $0xb0] sm:$0xff]
    %v3898 = vld [vmem:[#allocation2 + $0xb8] sm:$0xff]
    %v3899 = vld [vmem:[#allocation2 + $0xc0] sm:$0xff]
    %v3900 = vld [vmem:[#allocation2 + $0xc8] sm:$0xff]
    %v3901 = vld [vmem:[#allocation2 + $0xd0] sm:$0xff]
    %v3902 = vld [vmem:[#allocation2 + $0xd8] sm:$0xff]
    %v3903 = vld [vmem:[#allocation2 + $0xe0] sm:$0xff]
    %v3904 = vld [vmem:[#allocation2 + $0xe8] sm:$0xff]
    %v3905 = vld [vmem:[#allocation2 + $0xf0] sm:$0xff]
    %v3906 = vld [vmem:[#allocation2 + $0xf8] sm:$0xff]
    %v3907 = vld [vmem:[#allocation2 + $0x100] sm:$0xff]
    %v3908 = vld [vmem:[#allocation2 + $0x108] sm:$0xff]
    %v3909 = vld [vmem:[#allocation2 + $0x110] sm:$0xff]
    %v3910 = vld [vmem:[#allocation2 + $0x118] sm:$0xff]
    %v3911 = vld [vmem:[#allocation2 + $0x120] sm:$0xff]
    %v3912 = vld [vmem:[#allocation2 + $0x128] sm:$0xff]
    %v3913 = vld [vmem:[#allocation2 + $0x130] sm:$0xff]
    %v3914 = vld [vmem:[#allocation2 + $0x138] sm:$0xff]
    %v3915 = vld [vmem:[#allocation2 + $0x140] sm:$0xff]
    %v3916 = vld [vmem:[#allocation2 + $0x148] sm:$0xff]
    %v3917 = vld [vmem:[#allocation2 + $0x150] sm:$0xff]
    %v3918 = vld [vmem:[#allocation2 + $0x158] sm:$0xff]
    %v3919 = vld [vmem:[#allocation2 + $0x160] sm:$0xff]
    %v3920 = vld [vmem:[#allocation2 + $0x168] sm:$0xff]
    %v3921 = vld [vmem:[#allocation2 + $0x170] sm:$0xff]
    %v3922 = vld [vmem:[#allocation2 + $0x178] sm:$0xff]
    %v3923 = vld [vmem:[#allocation2 + $0x180] sm:$0xff]
    %v3924 = vld [vmem:[#allocation2 + $0x188] sm:$0xff]
    %v3925 = vld [vmem:[#allocation2 + $0x190] sm:$0xff]
    %v3926 = vld [vmem:[#allocation2 + $0x198] sm:$0xff]
    %v3927 = vld [vmem:[#allocation2 + $0x1a0] sm:$0xff]
    %v3928 = vld [vmem:[#allocation2 + $0x1a8] sm:$0xff]
    %v3929 = vld [vmem:[#allocation2 + $0x1b0] sm:$0xff]
    %v3930 = vld [vmem:[#allocation2 + $0x1b8] sm:$0xff]
    %v3931 = vld [vmem:[#allocation2 + $0x1c0] sm:$0xff]
    %v3932 = vld [vmem:[#allocation2 + $0x1c8] sm:$0xff]
    %v3933 = vld [vmem:[#allocation2 + $0x1d0] sm:$0xff]
    %v3934 = vld [vmem:[#allocation2 + $0x1d8] sm:$0xff]
    %v3935 = vld [vmem:[#allocation2 + $0x1e0] sm:$0xff]
    %v3936 = vld [vmem:[#allocation2 + $0x1e8] sm:$0xff]
    %v3937 = vld [vmem:[#allocation2 + $0x1f0] sm:$0xff]
    %v3938 = vld [vmem:[#allocation2 + $0x1f8] sm:$0xff]
    %v3939 = vld [vmem:[#allocation2 + $0x200] sm:$0xff]
    %v3940 = vld [vmem:[#allocation2 + $0x208] sm:$0xff]
    %v3941 = vld [vmem:[#allocation2 + $0x210] sm:$0xff]
    %v3942 = vld [vmem:[#allocation2 + $0x218] sm:$0xff]
    %v3943 = vld [vmem:[#allocation2 + $0x220] sm:$0xff]
    %v3944 = vld [vmem:[#allocation2 + $0x228] sm:$0xff]
    %v3945 = vld [vmem:[#allocation2 + $0x230] sm:$0xff]
    %v3946 = vld [vmem:[#allocation2 + $0x238] sm:$0xff]
    %v3947 = vld [vmem:[#allocation2 + $0x240] sm:$0xff]
    %v3948 = vld [vmem:[#allocation2 + $0x248] sm:$0xff]
    %v3949 = vld [vmem:[#allocation2 + $0x250] sm:$0xff]
    %v3950 = vld [vmem:[#allocation2 + $0x258] sm:$0xff]
    %v3951 = vld [vmem:[#allocation2 + $0x260] sm:$0xff]
    %v3952 = vld [vmem:[#allocation2 + $0x268] sm:$0xff]
    %v3953 = vld [vmem:[#allocation2 + $0x270] sm:$0xff]
    %v3954 = vld [vmem:[#allocation2 + $0x278] sm:$0xff]
    %v3955 = vld [vmem:[#allocation2 + $0x280] sm:$0xff]
    %v3956 = vld [vmem:[#allocation2 + $0x288] sm:$0xff]
    %v3957 = vld [vmem:[#allocation2 + $0x290] sm:$0xff]
    %v3958 = vld [vmem:[#allocation2 + $0x298] sm:$0xff]
    %v3959 = vld [vmem:[#allocation2 + $0x2a0] sm:$0xff]
    %v3960 = vld [vmem:[#allocation2 + $0x2a8] sm:$0xff]
    %v3961 = vld [vmem:[#allocation2 + $0x2b0] sm:$0xff]
    %v3962 = vld [vmem:[#allocation2 + $0x2b8] sm:$0xff]
    %v3963 = vld [vmem:[#allocation2 + $0x2c0] sm:$0xff]
    %v3964 = vld [vmem:[#allocation2 + $0x2c8] sm:$0xff]
    %v3965 = vld [vmem:[#allocation2 + $0x2d0] sm:$0xff]
    %v3966 = vld [vmem:[#allocation2 + $0x2d8] sm:$0xff]
    %v3967 = vld [vmem:[#allocation2 + $0x2e0] sm:$0xff]
    %v3968 = vld [vmem:[#allocation2 + $0x2e8] sm:$0xff]
    %v3969 = vld [vmem:[#allocation2 + $0x2f0] sm:$0xff]
    %v3970 = vld [vmem:[#allocation2 + $0x2f8] sm:$0xff]
    %v3971 = vld [vmem:[#allocation2 + $0x300] sm:$0xff]
    %v3972 = vld [vmem:[#allocation2 + $0x308] sm:$0xff]
    %v3973 = vld [vmem:[#allocation2 + $0x310] sm:$0xff]
    %v3974 = vld [vmem:[#allocation2 + $0x318] sm:$0xff]
    %v3975 = vld [vmem:[#allocation2 + $0x320] sm:$0xff]
    %v3976 = vld [vmem:[#allocation2 + $0x328] sm:$0xff]
    %v3977 = vld [vmem:[#allocation2 + $0x330] sm:$0xff]
    %v3978 = vld [vmem:[#allocation2 + $0x338] sm:$0xff]
    %v3979 = vld [vmem:[#allocation2 + $0x340] sm:$0xff]
    %v3980 = vld [vmem:[#allocation2 + $0x348] sm:$0xff]
    %v3981 = vld [vmem:[#allocation2 + $0x350] sm:$0xff]
    %v3982 = vld [vmem:[#allocation2 + $0x358] sm:$0xff]
    %v3983 = vld [vmem:[#allocation2 + $0x360] sm:$0xff]
    %v3984 = vld [vmem:[#allocation2 + $0x368] sm:$0xff]
    %v3985 = vld [vmem:[#allocation2 + $0x370] sm:$0xff]
    %v3986 = vld [vmem:[#allocation2 + $0x378] sm:$0xff]
    %v3987 = vld [vmem:[#allocation2 + $0x380] sm:$0xff]
    %v3988 = vld [vmem:[#allocation2 + $0x388] sm:$0xff]
    %v3989 = vld [vmem:[#allocation2 + $0x390] sm:$0xff]
    %v3990 = vld [vmem:[#allocation2 + $0x398] sm:$0xff]
    %v3991 = vld [vmem:[#allocation2 + $0x3a0] sm:$0xff]
    %v3992 = vld [vmem:[#allocation2 + $0x3a8] sm:$0xff]
    %v3993 = vld [vmem:[#allocation2 + $0x3b0] sm:$0xff]
    %v3994 = vld [vmem:[#allocation2 + $0x3b8] sm:$0xff]
    %v3995 = vld [vmem:[#allocation2 + $0x3c0] sm:$0xff]
    %v3996 = vld [vmem:[#allocation2 + $0x3c8] sm:$0xff]
    %v3997 = vld [vmem:[#allocation2 + $0x3d0] sm:$0xff]
    %v3998 = vld [vmem:[#allocation2 + $0x3d8] sm:$0xff]
    %v3999 = vld [vmem:[#allocation2 + $0x3e0] sm:$0xff]
    %v4000 = vld [vmem:[#allocation2 + $0x3e8] sm:$0xff]
    %v4001 = vld [vmem:[#allocation2 + $0x3f0] sm:$0xff]
    %v4002 = vld [vmem:[#allocation2 + $0x3f8] sm:$0xff]
    %v4003 = vld [vmem:[#allocation2 + $0x400] sm:$0xff]
    %v4004 = vld [vmem:[#allocation2 + $0x408] sm:$0xff]
    %v4005 = vld [vmem:[#allocation2 + $0x410] sm:$0xff]
    %v4006 = vld [vmem:[#allocation2 + $0x418] sm:$0xff]
    %v4007 = vld [vmem:[#allocation2 + $0x420] sm:$0xff]
    %v4008 = vld [vmem:[#allocation2 + $0x428] sm:$0xff]
    %v4009 = vld [vmem:[#allocation2 + $0x430] sm:$0xff]
    %v4010 = vld [vmem:[#allocation2 + $0x438] sm:$0xff]
    %v4011 = vld [vmem:[#allocation2 + $0x440] sm:$0xff]
    %v4012 = vld [vmem:[#allocation2 + $0x448] sm:$0xff]
    %v4013 = vld [vmem:[#allocation2 + $0x450] sm:$0xff]
    %v4014 = vld [vmem:[#allocation2 + $0x458] sm:$0xff]
    %v4015 = vld [vmem:[#allocation2 + $0x460] sm:$0xff]
    %v4016 = vld [vmem:[#allocation2 + $0x468] sm:$0xff]
    %v4017 = vld [vmem:[#allocation2 + $0x470] sm:$0xff]
    %v4018 = vld [vmem:[#allocation2 + $0x478] sm:$0xff]
    %v4019 = vld [vmem:[#allocation2 + $0x480] sm:$0xff]
    %v4020 = vld [vmem:[#allocation2 + $0x488] sm:$0xff]
    %v4021 = vld [vmem:[#allocation2 + $0x490] sm:$0xff]
    %v4022 = vld [vmem:[#allocation2 + $0x498] sm:$0xff]
    %v4023 = vld [vmem:[#allocation2 + $0x4a0] sm:$0xff]
    %v4024 = vld [vmem:[#allocation2 + $0x4a8] sm:$0xff]
    %v4025 = vld [vmem:[#allocation2 + $0x4b0] sm:$0xff]
    %v4026 = vld [vmem:[#allocation2 + $0x4b8] sm:$0xff]
    %v4027 = vld [vmem:[#allocation2 + $0x4c0] sm:$0xff]
    %v4028 = vld [vmem:[#allocation2 + $0x4c8] sm:$0xff]
    %v4029 = vld [vmem:[#allocation2 + $0x4d0] sm:$0xff]
    %v4030 = vld [vmem:[#allocation2 + $0x4d8] sm:$0xff]
    %v4031 = vld [vmem:[#allocation2 + $0x4e0] sm:$0xff]
    %v4032 = vld [vmem:[#allocation2 + $0x4e8] sm:$0xff]
    %v4033 = vld [vmem:[#allocation2 + $0x4f0] sm:$0xff]
    %v4034 = vld [vmem:[#allocation2 + $0x4f8] sm:$0xff]
    %v4035 = vld [vmem:[#allocation2 + $0x500] sm:$0xff]
    %v4036 = vld [vmem:[#allocation2 + $0x508] sm:$0xff]
    %v4037 = vld [vmem:[#allocation2 + $0x510] sm:$0xff]
    %v4038 = vld [vmem:[#allocation2 + $0x518] sm:$0xff]
    %v4039 = vld [vmem:[#allocation2 + $0x520] sm:$0xff]
    %v4040 = vld [vmem:[#allocation2 + $0x528] sm:$0xff]
    %v4041 = vld [vmem:[#allocation2 + $0x530] sm:$0xff]
    %v4042 = vld [vmem:[#allocation2 + $0x538] sm:$0xff]
    %v4043 = vld [vmem:[#allocation2 + $0x540] sm:$0xff]
    %v4044 = vld [vmem:[#allocation2 + $0x548] sm:$0xff]
    %v4045 = vld [vmem:[#allocation2 + $0x550] sm:$0xff]
    %v4046 = vld [vmem:[#allocation2 + $0x558] sm:$0xff]
    %v4047 = vld [vmem:[#allocation2 + $0x560] sm:$0xff]
    %v4048 = vld [vmem:[#allocation2 + $0x568] sm:$0xff]
    %v4049 = vld [vmem:[#allocation2 + $0x570] sm:$0xff]
    %v4050 = vld [vmem:[#allocation2 + $0x578] sm:$0xff]
    %v4051 = vld [vmem:[#allocation2 + $0x580] sm:$0xff]
    %v4052 = vld [vmem:[#allocation2 + $0x588] sm:$0xff]
    %v4053 = vld [vmem:[#allocation2 + $0x590] sm:$0xff]
    %v4054 = vld [vmem:[#allocation2 + $0x598] sm:$0xff]
    %v4055 = vld [vmem:[#allocation2 + $0x5a0] sm:$0xff]
    %v4056 = vld [vmem:[#allocation2 + $0x5a8] sm:$0xff]
    %v4057 = vld [vmem:[#allocation2 + $0x5b0] sm:$0xff]
    %v4058 = vld [vmem:[#allocation2 + $0x5b8] sm:$0xff]
    %v4059 = vld [vmem:[#allocation2 + $0x5c0] sm:$0xff]
    %v4060 = vld [vmem:[#allocation2 + $0x5c8] sm:$0xff]
    %v4061 = vld [vmem:[#allocation2 + $0x5d0] sm:$0xff]
    %v4062 = vld [vmem:[#allocation2 + $0x5d8] sm:$0xff]
    %v4063 = vld [vmem:[#allocation2 + $0x5e0] sm:$0xff]
    %v4064 = vld [vmem:[#allocation2 + $0x5e8] sm:$0xff]
    %v4065 = vld [vmem:[#allocation2 + $0x5f0] sm:$0xff]
    %v4066 = vld [vmem:[#allocation2 + $0x5f8] sm:$0xff]
    %v4067 = vld [vmem:[#allocation2 + $0x600] sm:$0xff]
    %v4068 = vld [vmem:[#allocation2 + $0x608] sm:$0xff]
    %v4069 = vld [vmem:[#allocation2 + $0x610] sm:$0xff]
    %v4070 = vld [vmem:[#allocation2 + $0x618] sm:$0xff]
    %v4071 = vld [vmem:[#allocation2 + $0x620] sm:$0xff]
    %v4072 = vld [vmem:[#allocation2 + $0x628] sm:$0xff]
    %v4073 = vld [vmem:[#allocation2 + $0x630] sm:$0xff]
    %v4074 = vld [vmem:[#allocation2 + $0x638] sm:$0xff]
    %v4075 = vld [vmem:[#allocation2 + $0x640] sm:$0xff]
    %v4076 = vld [vmem:[#allocation2 + $0x648] sm:$0xff]
    %v4077 = vld [vmem:[#allocation2 + $0x650] sm:$0xff]
    %v4078 = vld [vmem:[#allocation2 + $0x658] sm:$0xff]
    %v4079 = vld [vmem:[#allocation2 + $0x660] sm:$0xff]
    %v4080 = vld [vmem:[#allocation2 + $0x668] sm:$0xff]
    %v4081 = vld [vmem:[#allocation2 + $0x670] sm:$0xff]
    %v4082 = vld [vmem:[#allocation2 + $0x678] sm:$0xff]
    %v4083 = vld [vmem:[#allocation2 + $0x680] sm:$0xff]
    %v4084 = vld [vmem:[#allocation2 + $0x688] sm:$0xff]
    %v4085 = vld [vmem:[#allocation2 + $0x690] sm:$0xff]
    %v4086 = vld [vmem:[#allocation2 + $0x698] sm:$0xff]
    %v4087 = vld [vmem:[#allocation2 + $0x6a0] sm:$0xff]
    %v4088 = vld [vmem:[#allocation2 + $0x6a8] sm:$0xff]
    %v4089 = vld [vmem:[#allocation2 + $0x6b0] sm:$0xff]
    %v4090 = vld [vmem:[#allocation2 + $0x6b8] sm:$0xff]
    %v4091 = vld [vmem:[#allocation2 + $0x6c0] sm:$0xff]
    %v4092 = vld [vmem:[#allocation2 + $0x6c8] sm:$0xff]
    %v4093 = vld [vmem:[#allocation2 + $0x6d0] sm:$0xff]
    %v4094 = vld [vmem:[#allocation2 + $0x6d8] sm:$0xff]
    %v4095 = vld [vmem:[#allocation2 + $0x6e0] sm:$0xff]
    %v4096 = vld [vmem:[#allocation2 + $0x6e8] sm:$0xff]
    %v4097 = vld [vmem:[#allocation2 + $0x6f0] sm:$0xff]
    %v4098 = vld [vmem:[#allocation2 + $0x6f8] sm:$0xff]
    %v4099 = vld [vmem:[#allocation2 + $0x700] sm:$0xff]
    %v4100 = vld [vmem:[#allocation2 + $0x708] sm:$0xff]
    %v4101 = vld [vmem:[#allocation2 + $0x710] sm:$0xff]
    %v4102 = vld [vmem:[#allocation2 + $0x718] sm:$0xff]
    %v4103 = vld [vmem:[#allocation2 + $0x720] sm:$0xff]
    %v4104 = vld [vmem:[#allocation2 + $0x728] sm:$0xff]
    %v4105 = vld [vmem:[#allocation2 + $0x730] sm:$0xff]
    %v4106 = vld [vmem:[#allocation2 + $0x738] sm:$0xff]
    %v4107 = vld [vmem:[#allocation2 + $0x740] sm:$0xff]
    %v4108 = vld [vmem:[#allocation2 + $0x748] sm:$0xff]
    %v4109 = vld [vmem:[#allocation2 + $0x750] sm:$0xff]
    %v4110 = vld [vmem:[#allocation2 + $0x758] sm:$0xff]
    %v4111 = vld [vmem:[#allocation2 + $0x760] sm:$0xff]
    %v4112 = vld [vmem:[#allocation2 + $0x768] sm:$0xff]
    %v4113 = vld [vmem:[#allocation2 + $0x770] sm:$0xff]
    %v4114 = vld [vmem:[#allocation2 + $0x778] sm:$0xff]
    %v4115 = vld [vmem:[#allocation2 + $0x780] sm:$0xff]
    %v4116 = vld [vmem:[#allocation2 + $0x788] sm:$0xff]
    %v4117 = vld [vmem:[#allocation2 + $0x790] sm:$0xff]
    %v4118 = vld [vmem:[#allocation2 + $0x798] sm:$0xff]
    %v4119 = vld [vmem:[#allocation2 + $0x7a0] sm:$0xff]
    %v4120 = vld [vmem:[#allocation2 + $0x7a8] sm:$0xff]
    %v4121 = vld [vmem:[#allocation2 + $0x7b0] sm:$0xff]
    %v4122 = vld [vmem:[#allocation2 + $0x7b8] sm:$0xff]
    %v4123 = vld [vmem:[#allocation2 + $0x7c0] sm:$0xff]
    %v4124 = vld [vmem:[#allocation2 + $0x7c8] sm:$0xff]
    %v4125 = vld [vmem:[#allocation2 + $0x7d0] sm:$0xff]
    %v4126 = vld [vmem:[#allocation2 + $0x7d8] sm:$0xff]
    %v4127 = vld [vmem:[#allocation2 + $0x7e0] sm:$0xff]
    %v4128 = vld [vmem:[#allocation2 + $0x7e8] sm:$0xff]
    %v4129 = vld [vmem:[#allocation2 + $0x7f0] sm:$0xff]
    %v4130 = vld [vmem:[#allocation2 + $0x7f8] sm:$0xff]
    %v4131 = vld [vmem:[%s12] sm:$0xff]
    %v4133 = vlaneseq
    %v4134 = vshrl.u32 %v4133, 7
    %v4135 = vsub.s32 0, %v4134
    %v4136 = vrot.slane %v4131, %v4135
    %v4137 = vlaneseq
    %v4138 = vshrl.u32 %v4137, 7
    %v4139 = vsub.s32 1, %v4138
    %v4140 = vrot.slane %v4131, %v4139
    %v4141 = vlaneseq
    %v4142 = vshrl.u32 %v4141, 7
    %v4143 = vsub.s32 2, %v4142
    %v4144 = vrot.slane %v4131, %v4143
    %v4145 = vlaneseq
    %v4146 = vshrl.u32 %v4145, 7
    %v4147 = vsub.s32 3, %v4146
    %v4148 = vrot.slane %v4131, %v4147
    %v4149 = vlaneseq
    %v4150 = vshrl.u32 %v4149, 7
    %v4151 = vsub.s32 4, %v4150
    %v4152 = vrot.slane %v4131, %v4151
    %v4153 = vlaneseq
    %v4154 = vshrl.u32 %v4153, 7
    %v4155 = vsub.s32 5, %v4154
    %v4156 = vrot.slane %v4131, %v4155
    %v4157 = vlaneseq
    %v4158 = vshrl.u32 %v4157, 7
    %v4159 = vsub.s32 6, %v4158
    %v4160 = vrot.slane %v4131, %v4159
    %v4161 = vlaneseq
    %v4162 = vshrl.u32 %v4161, 7
    %v4163 = vsub.s32 7, %v4162
    %v4164 = vrot.slane %v4131, %v4163
    %4173 = vmatprep.subr.bf16.mxu0 %v3876
    %4174 = vmatpush1.bf16.msra.mxu0 %v3875
    %4175 = vmatprep.subr.bf16.mxu0 %v3884
    %4176 = vmatpush1.bf16.msra.mxu0 %v3883
    %4177 = vmatprep.subr.bf16.mxu0 %v3892
    %4178 = vmatpush1.bf16.msra.mxu0 %v3891
    %4179 = vmatprep.subr.bf16.mxu0 %v3900
    %4180 = vmatpush1.bf16.msra.mxu0 %v3899
    %4181 = vmatprep.subr.bf16.mxu0 %v3908
    %4182 = vmatpush1.bf16.msra.mxu0 %v3907
    %4183 = vmatprep.subr.bf16.mxu0 %v3916
    %4184 = vmatpush1.bf16.msra.mxu0 %v3915
    %4185 = vmatprep.subr.bf16.mxu0 %v3924
    %4186 = vmatpush1.bf16.msra.mxu0 %v3923
    %4187 = vmatprep.subr.bf16.mxu0 %v3932
    %4188 = vmatpush1.bf16.msra.mxu0 %v3931
    %4189 = vmatprep.subr.bf16.mxu0 %v3940
    %4190 = vmatpush1.bf16.msra.mxu0 %v3939
    %4191 = vmatprep.subr.bf16.mxu0 %v3948
    %4192 = vmatpush1.bf16.msra.mxu0 %v3947
    %4193 = vmatprep.subr.bf16.mxu0 %v3956
    %4194 = vmatpush1.bf16.msra.mxu0 %v3955
    %4195 = vmatprep.subr.bf16.mxu0 %v3964
    %4196 = vmatpush1.bf16.msra.mxu0 %v3963
    %4197 = vmatprep.subr.bf16.mxu0 %v3972
    %4198 = vmatpush1.bf16.msra.mxu0 %v3971
    %4199 = vmatprep.subr.bf16.mxu0 %v3980
    %4200 = vmatpush1.bf16.msra.mxu0 %v3979
    %4201 = vmatprep.subr.bf16.mxu0 %v3988
    %4202 = vmatpush1.bf16.msra.mxu0 %v3987
    %4203 = vmatprep.subr.bf16.mxu0 %v3996
    %4204 = vmatpush1.bf16.msra.mxu0 %v3995
    %4205 = vmatprep.mubr.bf16.mxu0 %v3872
    %4206 = vmatmul.mubr.bf16.gmra.mrb[0].mxu0 %v3871
    %v4207 = vpop.f32.mrb[0].mxu0
    %v4208 = vadd.f32 %v4136, %v4207
    %v4209 = vpop.f32.mrb[0].mxu0
    %v4210 = vadd.f32 %v4140, %v4209
    %v4211 = vpop.f32.mrb[0].mxu0
    %v4212 = vpop.f32.mrb[0].mxu0
    %4213 = vdwg.mxu0
    %4214 = vmatprep.subr.bf16.mxu0 %v4004
    %4215 = vmatpush1.bf16.msra.mxu0 %v4003
    %4216 = vmatprep.subr.bf16.mxu0 %v4012
    %4217 = vmatpush1.bf16.msra.mxu0 %v4011
    %4218 = vmatprep.subr.bf16.mxu0 %v4020
    %4219 = vmatpush1.bf16.msra.mxu0 %v4019
    %4220 = vmatprep.subr.bf16.mxu0 %v4028
    %4221 = vmatpush1.bf16.msra.mxu0 %v4027
    %4222 = vmatprep.subr.bf16.mxu0 %v4036
    %4223 = vmatpush1.bf16.msra.mxu0 %v4035
    %4224 = vmatprep.subr.bf16.mxu0 %v4044
    %4225 = vmatpush1.bf16.msra.mxu0 %v4043
    %4226 = vmatprep.subr.bf16.mxu0 %v4052
    %4227 = vmatpush1.bf16.msra.mxu0 %v4051
    %4228 = vmatprep.subr.bf16.mxu0 %v4060
    %4229 = vmatpush1.bf16.msra.mxu0 %v4059
    %4230 = vmatprep.subr.bf16.mxu0 %v4068
    %4231 = vmatpush1.bf16.msra.mxu0 %v4067
    %4232 = vmatprep.subr.bf16.mxu0 %v4076
    %4233 = vmatpush1.bf16.msra.mxu0 %v4075
    %4234 = vmatprep.subr.bf16.mxu0 %v4084
    %4235 = vmatpush1.bf16.msra.mxu0 %v4083
    %4236 = vmatprep.subr.bf16.mxu0 %v4092
    %4237 = vmatpush1.bf16.msra.mxu0 %v4091
    %4238 = vmatprep.subr.bf16.mxu0 %v4100
    %4239 = vmatpush1.bf16.msra.mxu0 %v4099
    %4240 = vmatprep.subr.bf16.mxu0 %v4108
    %4241 = vmatpush1.bf16.msra.mxu0 %v4107
    %4242 = vmatprep.subr.bf16.mxu0 %v4116
    %4243 = vmatpush1.bf16.msra.mxu0 %v4115
    %4244 = vmatprep.subr.bf16.mxu0 %v4124
    %4245 = vmatpush1.bf16.msra.mxu0 %v4123
    %4246 = vmatprep.mubr.bf16.mxu0 %v3874
    %4247 = vmatmul.mubr.bf16.gmra.mrb[0].mxu0 %v3873
    %v4248 = vpop.f32.mrb[0].mxu0
    %v4249 = vadd.f32 %v4208, %v4248
    %v4250 = vpop.f32.mrb[0].mxu0
    %v4251 = vadd.f32 %v4210, %v4250
    %v4252 = vpop.f32.mrb[0].mxu0
    %v4253 = vpop.f32.mrb[0].mxu0
    %4254 = vdwg.mxu0
    %4255 = vmatprep.subr.bf16.mxu0 %v3878
    %4256 = vmatpush1.bf16.msra.mxu0 %v3877
    %4257 = vmatprep.subr.bf16.mxu0 %v3886
    %4258 = vmatpush1.bf16.msra.mxu0 %v3885
    %4259 = vmatprep.subr.bf16.mxu0 %v3894
    %4260 = vmatpush1.bf16.msra.mxu0 %v3893
    %4261 = vmatprep.subr.bf16.mxu0 %v3902
    %4262 = vmatpush1.bf16.msra.mxu0 %v3901
    %4263 = vmatprep.subr.bf16.mxu0 %v3910
    %4264 = vmatpush1.bf16.msra.mxu0 %v3909
    %4265 = vmatprep.subr.bf16.mxu0 %v3918
    %4266 = vmatpush1.bf16.msra.mxu0 %v3917
    %4267 = vmatprep.subr.bf16.mxu0 %v3926
    %4268 = vmatpush1.bf16.msra.mxu0 %v3925
    %4269 = vmatprep.subr.bf16.mxu0 %v3934
    %4270 = vmatpush1.bf16.msra.mxu0 %v3933
    %4271 = vmatprep.subr.bf16.mxu0 %v3942
    %4272 = vmatpush1.bf16.msra.mxu0 %v3941
    %4273 = vmatprep.subr.bf16.mxu0 %v3950
    %4274 = vmatpush1.bf16.msra.mxu0 %v3949
    %4275 = vmatprep.subr.bf16.mxu0 %v3958
    %4276 = vmatpush1.bf16.msra.mxu0 %v3957
    %4277 = vmatprep.subr.bf16.mxu0 %v3966
    %4278 = vmatpush1.bf16.msra.mxu0 %v3965
    %4279 = vmatprep.subr.bf16.mxu0 %v3974
    %4280 = vmatpush1.bf16.msra.mxu0 %v3973
    %4281 = vmatprep.subr.bf16.mxu0 %v3982
    %4282 = vmatpush1.bf16.msra.mxu0 %v3981
    %4283 = vmatprep.subr.bf16.mxu0 %v3990
    %4284 = vmatpush1.bf16.msra.mxu0 %v3989
    %4285 = vmatprep.subr.bf16.mxu0 %v3998
    %4286 = vmatpush1.bf16.msra.mxu0 %v3997
    %4287 = vmatprep.mubr.bf16.mxu0 %v3872
    %4288 = vmatmul.mubr.bf16.gmra.mrb[0].mxu0 %v3871
    %v4289 = vpop.f32.mrb[0].mxu0
    %v4290 = vadd.f32 %v4144, %v4289
    %v4291 = vpop.f32.mrb[0].mxu0
    %v4292 = vadd.f32 %v4148, %v4291
    %v4293 = vpop.f32.mrb[0].mxu0
    %v4294 = vpop.f32.mrb[0].mxu0
    %4295 = vdwg.mxu0
    %4296 = vmatprep.subr.bf16.mxu0 %v4006
    %4297 = vmatpush1.bf16.msra.mxu0 %v4005
    %4298 = vmatprep.subr.bf16.mxu0 %v4014
    %4299 = vmatpush1.bf16.msra.mxu0 %v4013
    %4300 = vmatprep.subr.bf16.mxu0 %v4022
    %4301 = vmatpush1.bf16.msra.mxu0 %v4021
    %4302 = vmatprep.subr.bf16.mxu0 %v4030
    %4303 = vmatpush1.bf16.msra.mxu0 %v4029
    %4304 = vmatprep.subr.bf16.mxu0 %v4038
    %4305 = vmatpush1.bf16.msra.mxu0 %v4037
    %4306 = vmatprep.subr.bf16.mxu0 %v4046
    %4307 = vmatpush1.bf16.msra.mxu0 %v4045
    %4308 = vmatprep.subr.bf16.mxu0 %v4054
    %4309 = vmatpush1.bf16.msra.mxu0 %v4053
    %4310 = vmatprep.subr.bf16.mxu0 %v4062
    %4311 = vmatpush1.bf16.msra.mxu0 %v4061
    %4312 = vmatprep.subr.bf16.mxu0 %v4070
    %4313 = vmatpush1.bf16.msra.mxu0 %v4069
    %4314 = vmatprep.subr.bf16.mxu0 %v4078
    %4315 = vmatpush1.bf16.msra.mxu0 %v4077
    %4316 = vmatprep.subr.bf16.mxu0 %v4086
    %4317 = vmatpush1.bf16.msra.mxu0 %v4085
    %4318 = vmatprep.subr.bf16.mxu0 %v4094
    %4319 = vmatpush1.bf16.msra.mxu0 %v4093
    %4320 = vmatprep.subr.bf16.mxu0 %v4102
    %4321 = vmatpush1.bf16.msra.mxu0 %v4101
    %4322 = vmatprep.subr.bf16.mxu0 %v4110
    %4323 = vmatpush1.bf16.msra.mxu0 %v4109
    %4324 = vmatprep.subr.bf16.mxu0 %v4118
    %4325 = vmatpush1.bf16.msra.mxu0 %v4117
    %4326 = vmatprep.subr.bf16.mxu0 %v4126
    %4327 = vmatpush1.bf16.msra.mxu0 %v4125
    %4328 = vmatprep.mubr.bf16.mxu0 %v3874
    %4329 = vmatmul.mubr.bf16.gmra.mrb[0].mxu0 %v3873
    %v4330 = vpop.f32.mrb[0].mxu0
    %v4331 = vadd.f32 %v4290, %v4330
    %v4332 = vpop.f32.mrb[0].mxu0
    %v4333 = vadd.f32 %v4292, %v4332
    %v4334 = vpop.f32.mrb[0].mxu0
    %v4335 = vpop.f32.mrb[0].mxu0
    %4336 = vdwg.mxu0
    %4337 = vmatprep.subr.bf16.mxu0 %v3880
    %4338 = vmatpush1.bf16.msra.mxu0 %v3879
    %4339 = vmatprep.subr.bf16.mxu0 %v3888
    %4340 = vmatpush1.bf16.msra.mxu0 %v3887
    %4341 = vmatprep.subr.bf16.mxu0 %v3896
    %4342 = vmatpush1.bf16.msra.mxu0 %v3895
    %4343 = vmatprep.subr.bf16.mxu0 %v3904
    %4344 = vmatpush1.bf16.msra.mxu0 %v3903
    %4345 = vmatprep.subr.bf16.mxu0 %v3912
    %4346 = vmatpush1.bf16.msra.mxu0 %v3911
    %4347 = vmatprep.subr.bf16.mxu0 %v3920
    %4348 = vmatpush1.bf16.msra.mxu0 %v3919
    %4349 = vmatprep.subr.bf16.mxu0 %v3928
    %4350 = vmatpush1.bf16.msra.mxu0 %v3927
    %4351 = vmatprep.subr.bf16.mxu0 %v3936
    %4352 = vmatpush1.bf16.msra.mxu0 %v3935
    %4353 = vmatprep.subr.bf16.mxu0 %v3944
    %4354 = vmatpush1.bf16.msra.mxu0 %v3943
    %4355 = vmatprep.subr.bf16.mxu0 %v3952
    %4356 = vmatpush1.bf16.msra.mxu0 %v3951
    %4357 = vmatprep.subr.bf16.mxu0 %v3960
    %4358 = vmatpush1.bf16.msra.mxu0 %v3959
    %4359 = vmatprep.subr.bf16.mxu0 %v3968
    %4360 = vmatpush1.bf16.msra.mxu0 %v3967
    %4361 = vmatprep.subr.bf16.mxu0 %v3976
    %4362 = vmatpush1.bf16.msra.mxu0 %v3975
    %4363 = vmatprep.subr.bf16.mxu0 %v3984
    %4364 = vmatpush1.bf16.msra.mxu0 %v3983
    %4365 = vmatprep.subr.bf16.mxu0 %v3992
    %4366 = vmatpush1.bf16.msra.mxu0 %v3991
    %4367 = vmatprep.subr.bf16.mxu0 %v4000
    %4368 = vmatpush1.bf16.msra.mxu0 %v3999
    %4369 = vmatprep.mubr.bf16.mxu0 %v3872
    %4370 = vmatmul.mubr.bf16.gmra.mrb[0].mxu0 %v3871
    %v4371 = vpop.f32.mrb[0].mxu0
    %v4372 = vadd.f32 %v4152, %v4371
    %v4373 = vpop.f32.mrb[0].mxu0
    %v4374 = vadd.f32 %v4156, %v4373
    %v4375 = vpop.f32.mrb[0].mxu0
    %v4376 = vpop.f32.mrb[0].mxu0
    %4377 = vdwg.mxu0
    %4378 = vmatprep.subr.bf16.mxu0 %v4008
    %4379 = vmatpush1.bf16.msra.mxu0 %v4007
    %4380 = vmatprep.subr.bf16.mxu0 %v4016
    %4381 = vmatpush1.bf16.msra.mxu0 %v4015
    %4382 = vmatprep.subr.bf16.mxu0 %v4024
    %4383 = vmatpush1.bf16.msra.mxu0 %v4023
    %4384 = vmatprep.subr.bf16.mxu0 %v4032
    %4385 = vmatpush1.bf16.msra.mxu0 %v4031
    %4386 = vmatprep.subr.bf16.mxu0 %v4040
    %4387 = vmatpush1.bf16.msra.mxu0 %v4039
    %4388 = vmatprep.subr.bf16.mxu0 %v4048
    %4389 = vmatpush1.bf16.msra.mxu0 %v4047
    %4390 = vmatprep.subr.bf16.mxu0 %v4056
    %4391 = vmatpush1.bf16.msra.mxu0 %v4055
    %4392 = vmatprep.subr.bf16.mxu0 %v4064
    %4393 = vmatpush1.bf16.msra.mxu0 %v4063
    %4394 = vmatprep.subr.bf16.mxu0 %v4072
    %4395 = vmatpush1.bf16.msra.mxu0 %v4071
    %4396 = vmatprep.subr.bf16.mxu0 %v4080
    %4397 = vmatpush1.bf16.msra.mxu0 %v4079
    %4398 = vmatprep.subr.bf16.mxu0 %v4088
    %4399 = vmatpush1.bf16.msra.mxu0 %v4087
    %4400 = vmatprep.subr.bf16.mxu0 %v4096
    %4401 = vmatpush1.bf16.msra.mxu0 %v4095
    %4402 = vmatprep.subr.bf16.mxu0 %v4104
    %4403 = vmatpush1.bf16.msra.mxu0 %v4103
    %4404 = vmatprep.subr.bf16.mxu0 %v4112
    %4405 = vmatpush1.bf16.msra.mxu0 %v4111
    %4406 = vmatprep.subr.bf16.mxu0 %v4120
    %4407 = vmatpush1.bf16.msra.mxu0 %v4119
    %4408 = vmatprep.subr.bf16.mxu0 %v4128
    %4409 = vmatpush1.bf16.msra.mxu0 %v4127
    %4410 = vmatprep.mubr.bf16.mxu0 %v3874
    %4411 = vmatmul.mubr.bf16.gmra.mrb[0].mxu0 %v3873
    %v4412 = vpop.f32.mrb[0].mxu0
    %v4413 = vadd.f32 %v4372, %v4412
    %v4414 = vpop.f32.mrb[0].mxu0
    %v4415 = vadd.f32 %v4374, %v4414
    %v4416 = vpop.f32.mrb[0].mxu0
    %v4417 = vpop.f32.mrb[0].mxu0
    %4418 = vdwg.mxu0
    %4419 = vmatprep.subr.bf16.mxu0 %v3882
    %4420 = vmatpush1.bf16.msra.mxu0 %v3881
    %4421 = vmatprep.subr.bf16.mxu0 %v3890
    %4422 = vmatpush1.bf16.msra.mxu0 %v3889
    %4423 = vmatprep.subr.bf16.mxu0 %v3898
    %4424 = vmatpush1.bf16.msra.mxu0 %v3897
    %4425 = vmatprep.subr.bf16.mxu0 %v3906
    %4426 = vmatpush1.bf16.msra.mxu0 %v3905
    %4427 = vmatprep.subr.bf16.mxu0 %v3914
    %4428 = vmatpush1.bf16.msra.mxu0 %v3913
    %4429 = vmatprep.subr.bf16.mxu0 %v3922
    %4430 = vmatpush1.bf16.msra.mxu0 %v3921
    %4431 = vmatprep.subr.bf16.mxu0 %v3930
    %4432 = vmatpush1.bf16.msra.mxu0 %v3929
    %4433 = vmatprep.subr.bf16.mxu0 %v3938
    %4434 = vmatpush1.bf16.msra.mxu0 %v3937
    %4435 = vmatprep.subr.bf16.mxu0 %v3946
    %4436 = vmatpush1.bf16.msra.mxu0 %v3945
    %4437 = vmatprep.subr.bf16.mxu0 %v3954
    %4438 = vmatpush1.bf16.msra.mxu0 %v3953
    %4439 = vmatprep.subr.bf16.mxu0 %v3962
    %4440 = vmatpush1.bf16.msra.mxu0 %v3961
    %4441 = vmatprep.subr.bf16.mxu0 %v3970
    %4442 = vmatpush1.bf16.msra.mxu0 %v3969
    %4443 = vmatprep.subr.bf16.mxu0 %v3978
    %4444 = vmatpush1.bf16.msra.mxu0 %v3977
    %4445 = vmatprep.subr.bf16.mxu0 %v3986
    %4446 = vmatpush1.bf16.msra.mxu0 %v3985
    %4447 = vmatprep.subr.bf16.mxu0 %v3994
    %4448 = vmatpush1.bf16.msra.mxu0 %v3993
    %4449 = vmatprep.subr.bf16.mxu0 %v4002
    %4450 = vmatpush1.bf16.msra.mxu0 %v4001
    %4451 = vmatprep.mubr.bf16.mxu0 %v3872
    %4452 = vmatmul.mubr.bf16.gmra.mrb[0].mxu0 %v3871
    %v4453 = vpop.f32.mrb[0].mxu0
    %v4454 = vadd.f32 %v4160, %v4453
    %v4455 = vpop.f32.mrb[0].mxu0
    %v4456 = vadd.f32 %v4164, %v4455
    %v4457 = vpop.f32.mrb[0].mxu0
    %v4458 = vpop.f32.mrb[0].mxu0
    %4459 = vdwg.mxu0
    %4460 = vmatprep.subr.bf16.mxu0 %v4010
    %4461 = vmatpush1.bf16.msra.mxu0 %v4009
    %4462 = vmatprep.subr.bf16.mxu0 %v4018
    %4463 = vmatpush1.bf16.msra.mxu0 %v4017
    %4464 = vmatprep.subr.bf16.mxu0 %v4026
    %4465 = vmatpush1.bf16.msra.mxu0 %v4025
    %4466 = vmatprep.subr.bf16.mxu0 %v4034
    %4467 = vmatpush1.bf16.msra.mxu0 %v4033
    %4468 = vmatprep.subr.bf16.mxu0 %v4042
    %4469 = vmatpush1.bf16.msra.mxu0 %v4041
    %4470 = vmatprep.subr.bf16.mxu0 %v4050
    %4471 = vmatpush1.bf16.msra.mxu0 %v4049
    %4472 = vmatprep.subr.bf16.mxu0 %v4058
    %4473 = vmatpush1.bf16.msra.mxu0 %v4057
    %4474 = vmatprep.subr.bf16.mxu0 %v4066
    %4475 = vmatpush1.bf16.msra.mxu0 %v4065
    %4476 = vmatprep.subr.bf16.mxu0 %v4074
    %4477 = vmatpush1.bf16.msra.mxu0 %v4073
    %4478 = vmatprep.subr.bf16.mxu0 %v4082
    %4479 = vmatpush1.bf16.msra.mxu0 %v4081
    %4480 = vmatprep.subr.bf16.mxu0 %v4090
    %4481 = vmatpush1.bf16.msra.mxu0 %v4089
    %4482 = vmatprep.subr.bf16.mxu0 %v4098
    %4483 = vmatpush1.bf16.msra.mxu0 %v4097
    %4484 = vmatprep.subr.bf16.mxu0 %v4106
    %4485 = vmatpush1.bf16.msra.mxu0 %v4105
    %4486 = vmatprep.subr.bf16.mxu0 %v4114
    %4487 = vmatpush1.bf16.msra.mxu0 %v4113
    %4488 = vmatprep.subr.bf16.mxu0 %v4122
    %4489 = vmatpush1.bf16.msra.mxu0 %v4121
    %4490 = vmatprep.subr.bf16.mxu0 %v4130
    %4491 = vmatpush1.bf16.msra.mxu0 %v4129
    %4492 = vmatprep.mubr.bf16.mxu0 %v3874
    %4493 = vmatmul.mubr.bf16.gmra.mrb[0].mxu0 %v3873
    %v4494 = vpop.f32.mrb[0].mxu0
    %v4495 = vadd.f32 %v4454, %v4494
    %v4496 = vpop.f32.mrb[0].mxu0
    %v4497 = vadd.f32 %v4456, %v4496
    %v4498 = vpop.f32.mrb[0].mxu0
    %v4499 = vpop.f32.mrb[0].mxu0
    %4500 = vdwg.mxu0
    %v4509 = vcombine.low %v4249, %v4251
    %v4510 = vcombine.high %v4249, %v4251
    %v4511 = vcombine.low %v4331, %v4333
    %v4512 = vcombine.high %v4331, %v4333
    %v4513 = vcombine.low %v4413, %v4415
    %v4514 = vcombine.high %v4413, %v4415
    %v4515 = vcombine.low %v4495, %v4497
    %v4516 = vcombine.high %v4495, %v4497
    %v4525 = vld [vmem:[#allocation3] sm:$0xff]
    %v4526 = vld [vmem:[#allocation3 + $0x8] sm:$0xff]
    %v4527 = vld [vmem:[#allocation3 + $0x10] sm:$0xff]
    %v4528 = vld [vmem:[#allocation3 + $0x18] sm:$0xff]
    %v4529 = vld [vmem:[#allocation3 + $0x20] sm:$0xff]
    %v4530 = vld [vmem:[#allocation3 + $0x28] sm:$0xff]
    %v4531 = vld [vmem:[#allocation3 + $0x30] sm:$0xff]
    %v4532 = vld [vmem:[#allocation3 + $0x38] sm:$0xff]
    %v4533 = vld [vmem:[#allocation3 + $0x40] sm:$0xff]
    %v4534 = vld [vmem:[#allocation3 + $0x48] sm:$0xff]
    %v4535 = vld [vmem:[#allocation3 + $0x50] sm:$0xff]
    %v4536 = vld [vmem:[#allocation3 + $0x58] sm:$0xff]
    %v4537 = vld [vmem:[#allocation3 + $0x60] sm:$0xff]
    %v4538 = vld [vmem:[#allocation3 + $0x68] sm:$0xff]
    %v4539 = vld [vmem:[#allocation3 + $0x70] sm:$0xff]
    %v4540 = vld [vmem:[#allocation3 + $0x78] sm:$0xff]
    %v4541 = vld [vmem:[#allocation3 + $0x80] sm:$0xff]
    %v4542 = vld [vmem:[#allocation3 + $0x88] sm:$0xff]
    %v4543 = vld [vmem:[#allocation3 + $0x90] sm:$0xff]
    %v4544 = vld [vmem:[#allocation3 + $0x98] sm:$0xff]
    %v4545 = vld [vmem:[#allocation3 + $0xa0] sm:$0xff]
    %v4546 = vld [vmem:[#allocation3 + $0xa8] sm:$0xff]
    %v4547 = vld [vmem:[#allocation3 + $0xb0] sm:$0xff]
    %v4548 = vld [vmem:[#allocation3 + $0xb8] sm:$0xff]
    %v4549 = vld [vmem:[#allocation3 + $0xc0] sm:$0xff]
    %v4550 = vld [vmem:[#allocation3 + $0xc8] sm:$0xff]
    %v4551 = vld [vmem:[#allocation3 + $0xd0] sm:$0xff]
    %v4552 = vld [vmem:[#allocation3 + $0xd8] sm:$0xff]
    %v4553 = vld [vmem:[#allocation3 + $0xe0] sm:$0xff]
    %v4554 = vld [vmem:[#allocation3 + $0xe8] sm:$0xff]
    %v4555 = vld [vmem:[#allocation3 + $0xf0] sm:$0xff]
    %v4556 = vld [vmem:[#allocation3 + $0xf8] sm:$0xff]
    %v4557 = vld [vmem:[#allocation3 + $0x100] sm:$0xff]
    %v4558 = vld [vmem:[#allocation3 + $0x108] sm:$0xff]
    %v4559 = vld [vmem:[#allocation3 + $0x110] sm:$0xff]
    %v4560 = vld [vmem:[#allocation3 + $0x118] sm:$0xff]
    %v4561 = vld [vmem:[#allocation3 + $0x120] sm:$0xff]
    %v4562 = vld [vmem:[#allocation3 + $0x128] sm:$0xff]
    %v4563 = vld [vmem:[#allocation3 + $0x130] sm:$0xff]
    %v4564 = vld [vmem:[#allocation3 + $0x138] sm:$0xff]
    %v4565 = vld [vmem:[#allocation3 + $0x140] sm:$0xff]
    %v4566 = vld [vmem:[#allocation3 + $0x148] sm:$0xff]
    %v4567 = vld [vmem:[#allocation3 + $0x150] sm:$0xff]
    %v4568 = vld [vmem:[#allocation3 + $0x158] sm:$0xff]
    %v4569 = vld [vmem:[#allocation3 + $0x160] sm:$0xff]
    %v4570 = vld [vmem:[#allocation3 + $0x168] sm:$0xff]
    %v4571 = vld [vmem:[#allocation3 + $0x170] sm:$0xff]
    %v4572 = vld [vmem:[#allocation3 + $0x178] sm:$0xff]
    %v4573 = vld [vmem:[#allocation3 + $0x180] sm:$0xff]
    %v4574 = vld [vmem:[#allocation3 + $0x188] sm:$0xff]
    %v4575 = vld [vmem:[#allocation3 + $0x190] sm:$0xff]
    %v4576 = vld [vmem:[#allocation3 + $0x198] sm:$0xff]
    %v4577 = vld [vmem:[#allocation3 + $0x1a0] sm:$0xff]
    %v4578 = vld [vmem:[#allocation3 + $0x1a8] sm:$0xff]
    %v4579 = vld [vmem:[#allocation3 + $0x1b0] sm:$0xff]
    %v4580 = vld [vmem:[#allocation3 + $0x1b8] sm:$0xff]
    %v4581 = vld [vmem:[#allocation3 + $0x1c0] sm:$0xff]
    %v4582 = vld [vmem:[#allocation3 + $0x1c8] sm:$0xff]
    %v4583 = vld [vmem:[#allocation3 + $0x1d0] sm:$0xff]
    %v4584 = vld [vmem:[#allocation3 + $0x1d8] sm:$0xff]
    %v4585 = vld [vmem:[#allocation3 + $0x1e0] sm:$0xff]
    %v4586 = vld [vmem:[#allocation3 + $0x1e8] sm:$0xff]
    %v4587 = vld [vmem:[#allocation3 + $0x1f0] sm:$0xff]
    %v4588 = vld [vmem:[#allocation3 + $0x1f8] sm:$0xff]
    %v4589 = vld [vmem:[#allocation3 + $0x200] sm:$0xff]
    %v4590 = vld [vmem:[#allocation3 + $0x208] sm:$0xff]
    %v4591 = vld [vmem:[#allocation3 + $0x210] sm:$0xff]
    %v4592 = vld [vmem:[#allocation3 + $0x218] sm:$0xff]
    %v4593 = vld [vmem:[#allocation3 + $0x220] sm:$0xff]
    %v4594 = vld [vmem:[#allocation3 + $0x228] sm:$0xff]
    %v4595 = vld [vmem:[#allocation3 + $0x230] sm:$0xff]
    %v4596 = vld [vmem:[#allocation3 + $0x238] sm:$0xff]
    %v4597 = vld [vmem:[#allocation3 + $0x240] sm:$0xff]
    %v4598 = vld [vmem:[#allocation3 + $0x248] sm:$0xff]
    %v4599 = vld [vmem:[#allocation3 + $0x250] sm:$0xff]
    %v4600 = vld [vmem:[#allocation3 + $0x258] sm:$0xff]
    %v4601 = vld [vmem:[#allocation3 + $0x260] sm:$0xff]
    %v4602 = vld [vmem:[#allocation3 + $0x268] sm:$0xff]
    %v4603 = vld [vmem:[#allocation3 + $0x270] sm:$0xff]
    %v4604 = vld [vmem:[#allocation3 + $0x278] sm:$0xff]
    %v4605 = vld [vmem:[#allocation3 + $0x280] sm:$0xff]
    %v4606 = vld [vmem:[#allocation3 + $0x288] sm:$0xff]
    %v4607 = vld [vmem:[#allocation3 + $0x290] sm:$0xff]
    %v4608 = vld [vmem:[#allocation3 + $0x298] sm:$0xff]
    %v4609 = vld [vmem:[#allocation3 + $0x2a0] sm:$0xff]
    %v4610 = vld [vmem:[#allocation3 + $0x2a8] sm:$0xff]
    %v4611 = vld [vmem:[#allocation3 + $0x2b0] sm:$0xff]
    %v4612 = vld [vmem:[#allocation3 + $0x2b8] sm:$0xff]
    %v4613 = vld [vmem:[#allocation3 + $0x2c0] sm:$0xff]
    %v4614 = vld [vmem:[#allocation3 + $0x2c8] sm:$0xff]
    %v4615 = vld [vmem:[#allocation3 + $0x2d0] sm:$0xff]
    %v4616 = vld [vmem:[#allocation3 + $0x2d8] sm:$0xff]
    %v4617 = vld [vmem:[#allocation3 + $0x2e0] sm:$0xff]
    %v4618 = vld [vmem:[#allocation3 + $0x2e8] sm:$0xff]
    %v4619 = vld [vmem:[#allocation3 + $0x2f0] sm:$0xff]
    %v4620 = vld [vmem:[#allocation3 + $0x2f8] sm:$0xff]
    %v4621 = vld [vmem:[#allocation3 + $0x300] sm:$0xff]
    %v4622 = vld [vmem:[#allocation3 + $0x308] sm:$0xff]
    %v4623 = vld [vmem:[#allocation3 + $0x310] sm:$0xff]
    %v4624 = vld [vmem:[#allocation3 + $0x318] sm:$0xff]
    %v4625 = vld [vmem:[#allocation3 + $0x320] sm:$0xff]
    %v4626 = vld [vmem:[#allocation3 + $0x328] sm:$0xff]
    %v4627 = vld [vmem:[#allocation3 + $0x330] sm:$0xff]
    %v4628 = vld [vmem:[#allocation3 + $0x338] sm:$0xff]
    %v4629 = vld [vmem:[#allocation3 + $0x340] sm:$0xff]
    %v4630 = vld [vmem:[#allocation3 + $0x348] sm:$0xff]
    %v4631 = vld [vmem:[#allocation3 + $0x350] sm:$0xff]
    %v4632 = vld [vmem:[#allocation3 + $0x358] sm:$0xff]
    %v4633 = vld [vmem:[#allocation3 + $0x360] sm:$0xff]
    %v4634 = vld [vmem:[#allocation3 + $0x368] sm:$0xff]
    %v4635 = vld [vmem:[#allocation3 + $0x370] sm:$0xff]
    %v4636 = vld [vmem:[#allocation3 + $0x378] sm:$0xff]
    %v4637 = vld [vmem:[#allocation3 + $0x380] sm:$0xff]
    %v4638 = vld [vmem:[#allocation3 + $0x388] sm:$0xff]
    %v4639 = vld [vmem:[#allocation3 + $0x390] sm:$0xff]
    %v4640 = vld [vmem:[#allocation3 + $0x398] sm:$0xff]
    %v4641 = vld [vmem:[#allocation3 + $0x3a0] sm:$0xff]
    %v4642 = vld [vmem:[#allocation3 + $0x3a8] sm:$0xff]
    %v4643 = vld [vmem:[#allocation3 + $0x3b0] sm:$0xff]
    %v4644 = vld [vmem:[#allocation3 + $0x3b8] sm:$0xff]
    %v4645 = vld [vmem:[#allocation3 + $0x3c0] sm:$0xff]
    %v4646 = vld [vmem:[#allocation3 + $0x3c8] sm:$0xff]
    %v4647 = vld [vmem:[#allocation3 + $0x3d0] sm:$0xff]
    %v4648 = vld [vmem:[#allocation3 + $0x3d8] sm:$0xff]
    %v4649 = vld [vmem:[#allocation3 + $0x3e0] sm:$0xff]
    %v4650 = vld [vmem:[#allocation3 + $0x3e8] sm:$0xff]
    %v4651 = vld [vmem:[#allocation3 + $0x3f0] sm:$0xff]
    %v4652 = vld [vmem:[#allocation3 + $0x3f8] sm:$0xff]
    %4653 = vmatprep.subr.bf16.mxu0 %v4526
    %4654 = vmatpush1.bf16.msra.mxu0 %v4525
    %4655 = vmatprep.subr.bf16.mxu0 %v4534
    %4656 = vmatpush1.bf16.msra.mxu0 %v4533
    %4657 = vmatprep.subr.bf16.mxu0 %v4542
    %4658 = vmatpush1.bf16.msra.mxu0 %v4541
    %4659 = vmatprep.subr.bf16.mxu0 %v4550
    %4660 = vmatpush1.bf16.msra.mxu0 %v4549
    %4661 = vmatprep.subr.bf16.mxu0 %v4558
    %4662 = vmatpush1.bf16.msra.mxu0 %v4557
    %4663 = vmatprep.subr.bf16.mxu0 %v4566
    %4664 = vmatpush1.bf16.msra.mxu0 %v4565
    %4665 = vmatprep.subr.bf16.mxu0 %v4574
    %4666 = vmatpush1.bf16.msra.mxu0 %v4573
    %4667 = vmatprep.subr.bf16.mxu0 %v4582
    %4668 = vmatpush1.bf16.msra.mxu0 %v4581
    %4669 = vmatprep.subr.bf16.mxu0 %v4590
    %4670 = vmatpush1.bf16.msra.mxu0 %v4589
    %4671 = vmatprep.subr.bf16.mxu0 %v4598
    %4672 = vmatpush1.bf16.msra.mxu0 %v4597
    %4673 = vmatprep.subr.bf16.mxu0 %v4606
    %4674 = vmatpush1.bf16.msra.mxu0 %v4605
    %4675 = vmatprep.subr.bf16.mxu0 %v4614
    %4676 = vmatpush1.bf16.msra.mxu0 %v4613
    %4677 = vmatprep.subr.bf16.mxu0 %v4622
    %4678 = vmatpush1.bf16.msra.mxu0 %v4621
    %4679 = vmatprep.subr.bf16.mxu0 %v4630
    %4680 = vmatpush1.bf16.msra.mxu0 %v4629
    %4681 = vmatprep.subr.bf16.mxu0 %v4638
    %4682 = vmatpush1.bf16.msra.mxu0 %v4637
    %4683 = vmatprep.subr.bf16.mxu0 %v4646
    %4684 = vmatpush1.bf16.msra.mxu0 %v4645
    %4685 = vmatprep.mubr.bf16.mxu0 0
    %4686 = vmatmul.mubr.bf16.gmra.mrb[0].mxu0 0
    %v4687 = vpop.f32.mrb[0].mxu0
    %v4688 = vadd.f32 0.0, %v4687
    %v4689 = vpop.f32.mrb[0].mxu0
    %v4690 = vadd.f32 0.0, %v4689
    %v4691 = vpop.f32.mrb[0].mxu0
    %v4692 = vpop.f32.mrb[0].mxu0
    %4693 = vdwg.mxu0
    %4694 = vmatprep.subr.bf16.mxu0 %v4528
    %4695 = vmatpush1.bf16.msra.mxu0 %v4527
    %4696 = vmatprep.subr.bf16.mxu0 %v4536
    %4697 = vmatpush1.bf16.msra.mxu0 %v4535
    %4698 = vmatprep.subr.bf16.mxu0 %v4544
    %4699 = vmatpush1.bf16.msra.mxu0 %v4543
    %4700 = vmatprep.subr.bf16.mxu0 %v4552
    %4701 = vmatpush1.bf16.msra.mxu0 %v4551
    %4702 = vmatprep.subr.bf16.mxu0 %v4560
    %4703 = vmatpush1.bf16.msra.mxu0 %v4559
    %4704 = vmatprep.subr.bf16.mxu0 %v4568
    %4705 = vmatpush1.bf16.msra.mxu0 %v4567
    %4706 = vmatprep.subr.bf16.mxu0 %v4576
    %4707 = vmatpush1.bf16.msra.mxu0 %v4575
    %4708 = vmatprep.subr.bf16.mxu0 %v4584
    %4709 = vmatpush1.bf16.msra.mxu0 %v4583
    %4710 = vmatprep.subr.bf16.mxu0 %v4592
    %4711 = vmatpush1.bf16.msra.mxu0 %v4591
    %4712 = vmatprep.subr.bf16.mxu0 %v4600
    %4713 = vmatpush1.bf16.msra.mxu0 %v4599
    %4714 = vmatprep.subr.bf16.mxu0 %v4608
    %4715 = vmatpush1.bf16.msra.mxu0 %v4607
    %4716 = vmatprep.subr.bf16.mxu0 %v4616
    %4717 = vmatpush1.bf16.msra.mxu0 %v4615
    %4718 = vmatprep.subr.bf16.mxu0 %v4624
    %4719 = vmatpush1.bf16.msra.mxu0 %v4623
    %4720 = vmatprep.subr.bf16.mxu0 %v4632
    %4721 = vmatpush1.bf16.msra.mxu0 %v4631
    %4722 = vmatprep.subr.bf16.mxu0 %v4640
    %4723 = vmatpush1.bf16.msra.mxu0 %v4639
    %4724 = vmatprep.subr.bf16.mxu0 %v4648
    %4725 = vmatpush1.bf16.msra.mxu0 %v4647
    %4726 = vmatprep.mubr.bf16.mxu0 0
    %4727 = vmatmul.mubr.bf16.gmra.mrb[0].mxu0 0
    %v4728 = vpop.f32.mrb[0].mxu0
    %v4729 = vadd.f32 0.0, %v4728
    %v4730 = vpop.f32.mrb[0].mxu0
    %v4731 = vadd.f32 0.0, %v4730
    %v4732 = vpop.f32.mrb[0].mxu0
    %v4733 = vpop.f32.mrb[0].mxu0
    %4734 = vdwg.mxu0
    %4735 = vmatprep.subr.bf16.mxu0 %v4530
    %4736 = vmatpush1.bf16.msra.mxu0 %v4529
    %4737 = vmatprep.subr.bf16.mxu0 %v4538
    %4738 = vmatpush1.bf16.msra.mxu0 %v4537
    %4739 = vmatprep.subr.bf16.mxu0 %v4546
    %4740 = vmatpush1.bf16.msra.mxu0 %v4545
    %4741 = vmatprep.subr.bf16.mxu0 %v4554
    %4742 = vmatpush1.bf16.msra.mxu0 %v4553
    %4743 = vmatprep.subr.bf16.mxu0 %v4562
    %4744 = vmatpush1.bf16.msra.mxu0 %v4561
    %4745 = vmatprep.subr.bf16.mxu0 %v4570
    %4746 = vmatpush1.bf16.msra.mxu0 %v4569
    %4747 = vmatprep.subr.bf16.mxu0 %v4578
    %4748 = vmatpush1.bf16.msra.mxu0 %v4577
    %4749 = vmatprep.subr.bf16.mxu0 %v4586
    %4750 = vmatpush1.bf16.msra.mxu0 %v4585
    %4751 = vmatprep.subr.bf16.mxu0 %v4594
    %4752 = vmatpush1.bf16.msra.mxu0 %v4593
    %4753 = vmatprep.subr.bf16.mxu0 %v4602
    %4754 = vmatpush1.bf16.msra.mxu0 %v4601
    %4755 = vmatprep.subr.bf16.mxu0 %v4610
    %4756 = vmatpush1.bf16.msra.mxu0 %v4609
    %4757 = vmatprep.subr.bf16.mxu0 %v4618
    %4758 = vmatpush1.bf16.msra.mxu0 %v4617
    %4759 = vmatprep.subr.bf16.mxu0 %v4626
    %4760 = vmatpush1.bf16.msra.mxu0 %v4625
    %4761 = vmatprep.subr.bf16.mxu0 %v4634
    %4762 = vmatpush1.bf16.msra.mxu0 %v4633
    %4763 = vmatprep.subr.bf16.mxu0 %v4642
    %4764 = vmatpush1.bf16.msra.mxu0 %v4641
    %4765 = vmatprep.subr.bf16.mxu0 %v4650
    %4766 = vmatpush1.bf16.msra.mxu0 %v4649
    %4767 = vmatprep.mubr.bf16.mxu0 0
    %4768 = vmatmul.mubr.bf16.gmra.mrb[0].mxu0 0
    %v4769 = vpop.f32.mrb[0].mxu0
    %v4770 = vadd.f32 0.0, %v4769
    %v4771 = vpop.f32.mrb[0].mxu0
    %v4772 = vadd.f32 0.0, %v4771
    %v4773 = vpop.f32.mrb[0].mxu0
    %v4774 = vpop.f32.mrb[0].mxu0
    %4775 = vdwg.mxu0
    %4776 = vmatprep.subr.bf16.mxu0 %v4532
    %4777 = vmatpush1.bf16.msra.mxu0 %v4531
    %4778 = vmatprep.subr.bf16.mxu0 %v4540
    %4779 = vmatpush1.bf16.msra.mxu0 %v4539
    %4780 = vmatprep.subr.bf16.mxu0 %v4548
    %4781 = vmatpush1.bf16.msra.mxu0 %v4547
    %4782 = vmatprep.subr.bf16.mxu0 %v4556
    %4783 = vmatpush1.bf16.msra.mxu0 %v4555
    %4784 = vmatprep.subr.bf16.mxu0 %v4564
    %4785 = vmatpush1.bf16.msra.mxu0 %v4563
    %4786 = vmatprep.subr.bf16.mxu0 %v4572
    %4787 = vmatpush1.bf16.msra.mxu0 %v4571
    %4788 = vmatprep.subr.bf16.mxu0 %v4580
    %4789 = vmatpush1.bf16.msra.mxu0 %v4579
    %4790 = vmatprep.subr.bf16.mxu0 %v4588
    %4791 = vmatpush1.bf16.msra.mxu0 %v4587
    %4792 = vmatprep.subr.bf16.mxu0 %v4596
    %4793 = vmatpush1.bf16.msra.mxu0 %v4595
    %4794 = vmatprep.subr.bf16.mxu0 %v4604
    %4795 = vmatpush1.bf16.msra.mxu0 %v4603
    %4796 = vmatprep.subr.bf16.mxu0 %v4612
    %4797 = vmatpush1.bf16.msra.mxu0 %v4611
    %4798 = vmatprep.subr.bf16.mxu0 %v4620
    %4799 = vmatpush1.bf16.msra.mxu0 %v4619
    %4800 = vmatprep.subr.bf16.mxu0 %v4628
    %4801 = vmatpush1.bf16.msra.mxu0 %v4627
    %4802 = vmatprep.subr.bf16.mxu0 %v4636
    %4803 = vmatpush1.bf16.msra.mxu0 %v4635
    %4804 = vmatprep.subr.bf16.mxu0 %v4644
    %4805 = vmatpush1.bf16.msra.mxu0 %v4643
    %4806 = vmatprep.subr.bf16.mxu0 %v4652
    %4807 = vmatpush1.bf16.msra.mxu0 %v4651
    %4808 = vmatprep.mubr.bf16.mxu0 0
    %4809 = vmatmul.mubr.bf16.gmra.mrb[0].mxu0 0
    %v4810 = vpop.f32.mrb[0].mxu0
    %v4811 = vadd.f32 0.0, %v4810
    %v4812 = vpop.f32.mrb[0].mxu0
    %v4813 = vadd.f32 0.0, %v4812
    %v4814 = vpop.f32.mrb[0].mxu0
    %v4815 = vpop.f32.mrb[0].mxu0
    %4816 = vdwg.mxu0
    %v4825 = vcombine.low %v4688, %v4690
    %v4826 = vcombine.low %v4729, %v4731
    %v4827 = vcombine.low %v4770, %v4772
    %v4828 = vcombine.low %v4811, %v4813
    %v4829 = vrot.slane %v4825, 1
    %v4830 = vrot.slane %v4826, 1
    %v4831 = vrot.slane %v4827, 1
    %v4832 = vrot.slane %v4828, 1
    %v4841 = vadd.f32 %v4509, %v4825
    %v4842 = vadd.f32 %v4511, %v4826
    %v4843 = vadd.f32 %v4513, %v4827
    %v4844 = vadd.f32 %v4515, %v4828
    %v4845 = vadd.f32 %v4510, %v4829
    %v4846 = vadd.f32 %v4512, %v4830
    %v4847 = vadd.f32 %v4514, %v4831
    %v4848 = vadd.f32 %v4516, %v4832
    %v4849 = vxor.u32 %v4841, 2147483648
    %v4850 = vxor.u32 %v4842, 2147483648
    %v4851 = vxor.u32 %v4843, 2147483648
    %v4852 = vxor.u32 %v4845, 2147483648
    %v4853 = vxor.u32 %v4846, 2147483648
    %v4854 = vxor.u32 %v4847, 2147483648
    %v4855 = vmul.f32 %v4849, 1.442695
    %v4856 = vpow.pop %v4855
    %v4857 = vmul.f32 %v4850, 1.442695
    %v4858 = vpow.pop %v4857
    %v4859 = vmul.f32 %v4851, 1.442695
    %v4860 = vpow.pop %v4859
    %v4861 = vmul.f32 %v4852, 1.442695
    %v4862 = vpow.pop %v4861
    %v4863 = vmul.f32 %v4853, 1.442695
    %v4864 = vpow.pop %v4863
    %v4865 = vmul.f32 %v4854, 1.442695
    %v4866 = vpow.pop %v4865
    %v4867 = vadd.f32 %v4856, 1.0
    %v4868 = vadd.f32 %v4858, 1.0
    %v4869 = vadd.f32 %v4860, 1.0
    %v4870 = vadd.f32 %v4862, 1.0
    %v4871 = vadd.f32 %v4864, 1.0
    %v4872 = vadd.f32 %v4866, 1.0
    %v4873 = vrcp.pop %v4867
    %v4874 = vmul.f32 1.0, %v4873
    %v4875 = vrcp.pop %v4868
    %v4876 = vmul.f32 1.0, %v4875
    %v4877 = vrcp.pop %v4869
    %v4878 = vmul.f32 1.0, %v4877
    %v4879 = vrcp.pop %v4870
    %v4880 = vmul.f32 1.0, %v4879
    %v4881 = vrcp.pop %v4871
    %v4882 = vmul.f32 1.0, %v4881
    %v4883 = vrcp.pop %v4872
    %v4884 = vmul.f32 1.0, %v4883
    %v4885 = vtanh.pop %v4844
    %v4886 = vtanh.pop %v4848
    %v4887 = vmul.f32 %v4876, 0.0
    %v4888 = vmul.f32 %v4882, 0.0
    %v4889 = vmul.f32 %v4874, %v4885
    %v4890 = vmul.f32 %v4880, %v4886
    %v4891 = vadd.f32 %v4887, %v4889
    %v4892 = vadd.f32 %v4888, %v4890
    %v4893 = vtanh.pop %v4891
    %v4894 = vtanh.pop %v4892
    %v4895 = vmul.f32 %v4878, %v4893
    %v4896 = vmul.f32 %v4884, %v4894
    %4897 = vst [vmem:[#allocation8] sm:$0x1] %v4895
    %4898 = vst [vmem:[#allocation8 + $0x8] sm:$0x1] %v4896
    %v4901 = vrot.slane %v4895, 4
    %v4902 = vrot.slane %v4896, 4
    %4905 = vst [vmem:[#allocation8 + $0x7] sm:$0x1] %v4901
    %4906 = vst [vmem:[#allocation8 + $0xf] sm:$0x1] %v4902
    %v4907 = vlaneseq
    %v4908 = vshrl.u32 %v4907, 7
    %v4909 = vsub.s32 0, %v4908
    %v4910 = vrot.slane %v4895, %v4909
    %v4911 = vlaneseq
    %v4912 = vshrl.u32 %v4911, 7
    %v4913 = vsub.s32 4, %v4912
    %v4914 = vrot.slane %v4895, %v4913
    %v4915 = vlaneseq
    %v4916 = vshrl.u32 %v4915, 7
    %v4917 = vsub.s32 0, %v4916
    %v4918 = vrot.slane %v4896, %v4917
    %v4919 = vlaneseq
    %v4920 = vshrl.u32 %v4919, 7
    %v4921 = vsub.s32 4, %v4920
    %v4922 = vrot.slane %v4896, %v4921
    %v4927 = vpack.c.bf16 %v4910, %v4910
    %v4928 = vpack.c.bf16 %v4914, %v4914
    %v4929 = vpack.c.bf16 %v4918, %v4918
    %v4930 = vpack.c.bf16 %v4922, %v4922
    %v4935 = vunpack.c.l.b16 %v4927
    %v4936 = vunpack.c.l.b16 %v4928
    %v4937 = vunpack.c.l.b16 %v4929
    %v4938 = vunpack.c.l.b16 %v4930
    %v4939 = vrot.slane %v4937, 7
    %v4940 = vsel %vm2841, %v4939, %v4935
    %v4941 = vrot.slane %v4938, 7
    %v4942 = vsel %vm2841, %v4941, %v4936
    %v4943 = vpack.c.b16 %v4940, %v4940
    %v4944 = vpack.c.b16 %v4942, %v4942
    %4947 = vmatprep.subr.bf16.mxu0 %v4526
    %4948 = vmatpush1.bf16.msra.mxu0 %v4525
    %4949 = vmatprep.subr.bf16.mxu0 %v4534
    %4950 = vmatpush1.bf16.msra.mxu0 %v4533
    %4951 = vmatprep.subr.bf16.mxu0 %v4542
    %4952 = vmatpush1.bf16.msra.mxu0 %v4541
    %4953 = vmatprep.subr.bf16.mxu0 %v4550
    %4954 = vmatpush1.bf16.msra.mxu0 %v4549
    %4955 = vmatprep.subr.bf16.mxu0 %v4558
    %4956 = vmatpush1.bf16.msra.mxu0 %v4557
    %4957 = vmatprep.subr.bf16.mxu0 %v4566
    %4958 = vmatpush1.bf16.msra.mxu0 %v4565
    %4959 = vmatprep.subr.bf16.mxu0 %v4574
    %4960 = vmatpush1.bf16.msra.mxu0 %v4573
    %4961 = vmatprep.subr.bf16.mxu0 %v4582
    %4962 = vmatpush1.bf16.msra.mxu0 %v4581
    %4963 = vmatprep.subr.bf16.mxu0 %v4590
    %4964 = vmatpush1.bf16.msra.mxu0 %v4589
    %4965 = vmatprep.subr.bf16.mxu0 %v4598
    %4966 = vmatpush1.bf16.msra.mxu0 %v4597
    %4967 = vmatprep.subr.bf16.mxu0 %v4606
    %4968 = vmatpush1.bf16.msra.mxu0 %v4605
    %4969 = vmatprep.subr.bf16.mxu0 %v4614
    %4970 = vmatpush1.bf16.msra.mxu0 %v4613
    %4971 = vmatprep.subr.bf16.mxu0 %v4622
    %4972 = vmatpush1.bf16.msra.mxu0 %v4621
    %4973 = vmatprep.subr.bf16.mxu0 %v4630
    %4974 = vmatpush1.bf16.msra.mxu0 %v4629
    %4975 = vmatprep.subr.bf16.mxu0 %v4638
    %4976 = vmatpush1.bf16.msra.mxu0 %v4637
    %4977 = vmatprep.subr.bf16.mxu0 %v4646
    %4978 = vmatpush1.bf16.msra.mxu0 %v4645
    %4979 = vmatprep.mubr.bf16.mxu0 %v4944
    %4980 = vmatmul.mubr.bf16.gmra.mrb[0].mxu0 %v4943
    %v4981 = vpop.f32.mrb[0].mxu0
    %v4982 = vadd.f32 0.0, %v4981
    %v4983 = vpop.f32.mrb[0].mxu0
    %v4984 = vadd.f32 0.0, %v4983
    %v4985 = vpop.f32.mrb[0].mxu0
    %v4986 = vpop.f32.mrb[0].mxu0
    %4987 = vdwg.mxu0
    %4988 = vmatprep.subr.bf16.mxu0 %v4528
    %4989 = vmatpush1.bf16.msra.mxu0 %v4527
    %4990 = vmatprep.subr.bf16.mxu0 %v4536
    %4991 = vmatpush1.bf16.msra.mxu0 %v4535
    %4992 = vmatprep.subr.bf16.mxu0 %v4544
    %4993 = vmatpush1.bf16.msra.mxu0 %v4543
    %4994 = vmatprep.subr.bf16.mxu0 %v4552
    %4995 = vmatpush1.bf16.msra.mxu0 %v4551
    %4996 = vmatprep.subr.bf16.mxu0 %v4560
    %4997 = vmatpush1.bf16.msra.mxu0 %v4559
    %4998 = vmatprep.subr.bf16.mxu0 %v4568
    %4999 = vmatpush1.bf16.msra.mxu0 %v4567
    %5000 = vmatprep.subr.bf16.mxu0 %v4576
    %5001 = vmatpush1.bf16.msra.mxu0 %v4575
    %5002 = vmatprep.subr.bf16.mxu0 %v4584
    %5003 = vmatpush1.bf16.msra.mxu0 %v4583
    %5004 = vmatprep.subr.bf16.mxu0 %v4592
    %5005 = vmatpush1.bf16.msra.mxu0 %v4591
    %5006 = vmatprep.subr.bf16.mxu0 %v4600
    %5007 = vmatpush1.bf16.msra.mxu0 %v4599
    %5008 = vmatprep.subr.bf16.mxu0 %v4608
    %5009 = vmatpush1.bf16.msra.mxu0 %v4607
    %5010 = vmatprep.subr.bf16.mxu0 %v4616
    %5011 = vmatpush1.bf16.msra.mxu0 %v4615
    %5012 = vmatprep.subr.bf16.mxu0 %v4624
    %5013 = vmatpush1.bf16.msra.mxu0 %v4623
    %5014 = vmatprep.subr.bf16.mxu0 %v4632
    %5015 = vmatpush1.bf16.msra.mxu0 %v4631
    %5016 = vmatprep.subr.bf16.mxu0 %v4640
    %5017 = vmatpush1.bf16.msra.mxu0 %v4639
    %5018 = vmatprep.subr.bf16.mxu0 %v4648
    %5019 = vmatpush1.bf16.msra.mxu0 %v4647
    %5020 = vmatprep.mubr.bf16.mxu0 %v4944
    %5021 = vmatmul.mubr.bf16.gmra.mrb[0].mxu0 %v4943
    %v5022 = vpop.f32.mrb[0].mxu0
    %v5023 = vadd.f32 0.0, %v5022
    %v5024 = vpop.f32.mrb[0].mxu0
    %v5025 = vadd.f32 0.0, %v5024
    %v5026 = vpop.f32.mrb[0].mxu0
    %v5027 = vpop.f32.mrb[0].mxu0
    %5028 = vdwg.mxu0
    %5029 = vmatprep.subr.bf16.mxu0 %v4530
    %5030 = vmatpush1.bf16.msra.mxu0 %v4529
    %5031 = vmatprep.subr.bf16.mxu0 %v4538
    %5032 = vmatpush1.bf16.msra.mxu0 %v4537
    %5033 = vmatprep.subr.bf16.mxu0 %v4546
    %5034 = vmatpush1.bf16.msra.mxu0 %v4545
    %5035 = vmatprep.subr.bf16.mxu0 %v4554
    %5036 = vmatpush1.bf16.msra.mxu0 %v4553
    %5037 = vmatprep.subr.bf16.mxu0 %v4562
    %5038 = vmatpush1.bf16.msra.mxu0 %v4561
    %5039 = vmatprep.subr.bf16.mxu0 %v4570
    %5040 = vmatpush1.bf16.msra.mxu0 %v4569
    %5041 = vmatprep.subr.bf16.mxu0 %v4578
    %5042 = vmatpush1.bf16.msra.mxu0 %v4577
    %5043 = vmatprep.subr.bf16.mxu0 %v4586
    %5044 = vmatpush1.bf16.msra.mxu0 %v4585
    %5045 = vmatprep.subr.bf16.mxu0 %v4594
    %5046 = vmatpush1.bf16.msra.mxu0 %v4593
    %5047 = vmatprep.subr.bf16.mxu0 %v4602
    %5048 = vmatpush1.bf16.msra.mxu0 %v4601
    %5049 = vmatprep.subr.bf16.mxu0 %v4610
    %5050 = vmatpush1.bf16.msra.mxu0 %v4609
    %5051 = vmatprep.subr.bf16.mxu0 %v4618
    %5052 = vmatpush1.bf16.msra.mxu0 %v4617
    %5053 = vmatprep.subr.bf16.mxu0 %v4626
    %5054 = vmatpush1.bf16.msra.mxu0 %v4625
    %5055 = vmatprep.subr.bf16.mxu0 %v4634
    %5056 = vmatpush1.bf16.msra.mxu0 %v4633
    %5057 = vmatprep.subr.bf16.mxu0 %v4642
    %5058 = vmatpush1.bf16.msra.mxu0 %v4641
    %5059 = vmatprep.subr.bf16.mxu0 %v4650
    %5060 = vmatpush1.bf16.msra.mxu0 %v4649
    %5061 = vmatprep.mubr.bf16.mxu0 %v4944
    %5062 = vmatmul.mubr.bf16.gmra.mrb[0].mxu0 %v4943
    %v5063 = vpop.f32.mrb[0].mxu0
    %v5064 = vadd.f32 0.0, %v5063
    %v5065 = vpop.f32.mrb[0].mxu0
    %v5066 = vadd.f32 0.0, %v5065
    %v5067 = vpop.f32.mrb[0].mxu0
    %v5068 = vpop.f32.mrb[0].mxu0
    %5069 = vdwg.mxu0
    %5070 = vmatprep.subr.bf16.mxu0 %v4532
    %5071 = vmatpush1.bf16.msra.mxu0 %v4531
    %5072 = vmatprep.subr.bf16.mxu0 %v4540
    %5073 = vmatpush1.bf16.msra.mxu0 %v4539
    %5074 = vmatprep.subr.bf16.mxu0 %v4548
    %5075 = vmatpush1.bf16.msra.mxu0 %v4547
    %5076 = vmatprep.subr.bf16.mxu0 %v4556
    %5077 = vmatpush1.bf16.msra.mxu0 %v4555
    %5078 = vmatprep.subr.bf16.mxu0 %v4564
    %5079 = vmatpush1.bf16.msra.mxu0 %v4563
    %5080 = vmatprep.subr.bf16.mxu0 %v4572
    %5081 = vmatpush1.bf16.msra.mxu0 %v4571
    %5082 = vmatprep.subr.bf16.mxu0 %v4580
    %5083 = vmatpush1.bf16.msra.mxu0 %v4579
    %5084 = vmatprep.subr.bf16.mxu0 %v4588
    %5085 = vmatpush1.bf16.msra.mxu0 %v4587
    %5086 = vmatprep.subr.bf16.mxu0 %v4596
    %5087 = vmatpush1.bf16.msra.mxu0 %v4595
    %5088 = vmatprep.subr.bf16.mxu0 %v4604
    %5089 = vmatpush1.bf16.msra.mxu0 %v4603
    %5090 = vmatprep.subr.bf16.mxu0 %v4612
    %5091 = vmatpush1.bf16.msra.mxu0 %v4611
    %5092 = vmatprep.subr.bf16.mxu0 %v4620
    %5093 = vmatpush1.bf16.msra.mxu0 %v4619
    %5094 = vmatprep.subr.bf16.mxu0 %v4628
    %5095 = vmatpush1.bf16.msra.mxu0 %v4627
    %5096 = vmatprep.subr.bf16.mxu0 %v4636
    %5097 = vmatpush1.bf16.msra.mxu0 %v4635
    %5098 = vmatprep.subr.bf16.mxu0 %v4644
    %5099 = vmatpush1.bf16.msra.mxu0 %v4643
    %5100 = vmatprep.subr.bf16.mxu0 %v4652
    %5101 = vmatpush1.bf16.msra.mxu0 %v4651
    %5102 = vmatprep.mubr.bf16.mxu0 %v4944
    %5103 = vmatmul.mubr.bf16.gmra.mrb[0].mxu0 %v4943
    %v5104 = vpop.f32.mrb[0].mxu0
    %v5105 = vadd.f32 0.0, %v5104
    %v5106 = vpop.f32.mrb[0].mxu0
    %v5107 = vadd.f32 0.0, %v5106
    %v5108 = vpop.f32.mrb[0].mxu0
    %v5109 = vpop.f32.mrb[0].mxu0
    %5110 = vdwg.mxu0
    %v5119 = vcombine.low %v4982, %v4984
    %v5120 = vcombine.low %v5023, %v5025
    %v5121 = vcombine.low %v5064, %v5066
    %v5122 = vcombine.low %v5105, %v5107
    %v5123 = vrot.slane %v5119, 7
    %v5124 = vrot.slane %v5120, 7
    %v5125 = vrot.slane %v5121, 7
    %v5126 = vrot.slane %v5122, 7
    %v5135 = vadd.f32 %v4509, %v5123
    %v5136 = vadd.f32 %v4511, %v5124
    %v5137 = vadd.f32 %v4513, %v5125
    %v5138 = vadd.f32 %v4515, %v5126
    %v5139 = vadd.f32 %v4510, %v5119
    %v5140 = vadd.f32 %v4512, %v5120
    %v5141 = vadd.f32 %v4514, %v5121
    %v5142 = vadd.f32 %v4516, %v5122
    %v5143 = vxor.u32 %v5135, 2147483648
    %v5144 = vxor.u32 %v5136, 2147483648
    %v5145 = vxor.u32 %v5137, 2147483648
    %v5146 = vxor.u32 %v5139, 2147483648
    %v5147 = vxor.u32 %v5140, 2147483648
    %v5148 = vxor.u32 %v5141, 2147483648
    %v5149 = vmul.f32 %v5143, 1.442695
    %v5150 = vpow.pop %v5149
    %v5151 = vmul.f32 %v5144, 1.442695
    %v5152 = vpow.pop %v5151
    %v5153 = vmul.f32 %v5145, 1.442695
    %v5154 = vpow.pop %v5153
    %v5155 = vmul.f32 %v5146, 1.442695
    %v5156 = vpow.pop %v5155
    %v5157 = vmul.f32 %v5147, 1.442695
    %v5158 = vpow.pop %v5157
    %v5159 = vmul.f32 %v5148, 1.442695
    %v5160 = vpow.pop %v5159
    %v5161 = vadd.f32 %v5150, 1.0
    %v5162 = vadd.f32 %v5152, 1.0
    %v5163 = vadd.f32 %v5154, 1.0
    %v5164 = vadd.f32 %v5156, 1.0
    %v5165 = vadd.f32 %v5158, 1.0
    %v5166 = vadd.f32 %v5160, 1.0
    %v5167 = vrcp.pop %v5161
    %v5168 = vmul.f32 1.0, %v5167
    %v5169 = vrcp.pop %v5162
    %v5170 = vmul.f32 1.0, %v5169
    %v5171 = vrcp.pop %v5163
    %v5172 = vmul.f32 1.0, %v5171
    %v5173 = vrcp.pop %v5164
    %v5174 = vmul.f32 1.0, %v5173
    %v5175 = vrcp.pop %v5165
    %v5176 = vmul.f32 1.0, %v5175
    %v5177 = vrcp.pop %v5166
    %v5178 = vmul.f32 1.0, %v5177
    %v5179 = vtanh.pop %v5138
    %v5180 = vtanh.pop %v5142
    %v5183 = vrot.slane %v4891, 7
    %v5184 = vrot.slane %v4892, 7
    %v5187 = vmul.f32 %v5170, %v5183
    %v5188 = vmul.f32 %v5176, %v5184
    %v5189 = vmul.f32 %v5168, %v5179
    %v5190 = vmul.f32 %v5174, %v5180
    %v5191 = vadd.f32 %v5187, %v5189
    %v5192 = vadd.f32 %v5188, %v5190
    %v5193 = vtanh.pop %v5191
    %v5194 = vtanh.pop %v5192
    %v5195 = vmul.f32 %v5172, %v5193
    %v5196 = vmul.f32 %v5178, %v5194
    %v5199 = vrot.slane %v5195, 5
    %v5200 = vrot.slane %v5199, 4
    %v5201 = vrot.slane %v5196, 5
    %v5202 = vrot.slane %v5201, 4
    %5205 = vst [vmem:[#allocation8 + $0x1] sm:$0x1] %v5200
    %5206 = vst [vmem:[#allocation8 + $0x9] sm:$0x1] %v5202
    %v5207 = vrot.slane %v5195, 4
    %v5208 = vrot.slane %v5196, 4
    %v5209 = vrot.slane %v5207, 5
    %v5210 = vrot.slane %v5209, 4
    %v5211 = vrot.slane %v5208, 5
    %v5212 = vrot.slane %v5211, 4
    %5215 = vst [vmem:[#allocation8 + $0x6] sm:$0x1] %v5210
    %5216 = vst [vmem:[#allocation8 + $0xe] sm:$0x1] %v5212
    %v5217 = vlaneseq
    %v5218 = vshrl.u32 %v5217, 7
    %v5219 = vsub.s32 1, %v5218
    %v5220 = vrot.slane %v5195, %v5219
    %v5221 = vlaneseq
    %v5222 = vshrl.u32 %v5221, 7
    %v5223 = vsub.s32 5, %v5222
    %v5224 = vrot.slane %v5195, %v5223
    %v5225 = vlaneseq
    %v5226 = vshrl.u32 %v5225, 7
    %v5227 = vsub.s32 1, %v5226
    %v5228 = vrot.slane %v5196, %v5227
    %v5229 = vlaneseq
    %v5230 = vshrl.u32 %v5229, 7
    %v5231 = vsub.s32 5, %v5230
    %v5232 = vrot.slane %v5196, %v5231
    %v5237 = vpack.c.bf16 %v5220, %v5220
    %v5238 = vpack.c.bf16 %v5224, %v5224
    %v5239 = vpack.c.bf16 %v5228, %v5228
    %v5240 = vpack.c.bf16 %v5232, %v5232
    %v5245 = vunpack.c.l.b16 %v5237
    %v5246 = vunpack.c.l.b16 %v5238
    %v5247 = vunpack.c.l.b16 %v5239
    %v5248 = vunpack.c.l.b16 %v5240
    %v5249 = vrot.slane %v5245, 1
    %v5250 = vsel %vm2841, %v5247, %v5249
    %v5251 = vrot.slane %v5246, 1
    %v5252 = vsel %vm2841, %v5248, %v5251
    %v5253 = vpack.c.b16 %v5250, %v5250
    %v5254 = vpack.c.b16 %v5252, %v5252
    %5257 = vmatprep.subr.bf16.mxu0 %v4526
    %5258 = vmatpush1.bf16.msra.mxu0 %v4525
    %5259 = vmatprep.subr.bf16.mxu0 %v4534
    %5260 = vmatpush1.bf16.msra.mxu0 %v4533
    %5261 = vmatprep.subr.bf16.mxu0 %v4542
    %5262 = vmatpush1.bf16.msra.mxu0 %v4541
    %5263 = vmatprep.subr.bf16.mxu0 %v4550
    %5264 = vmatpush1.bf16.msra.mxu0 %v4549
    %5265 = vmatprep.subr.bf16.mxu0 %v4558
    %5266 = vmatpush1.bf16.msra.mxu0 %v4557
    %5267 = vmatprep.subr.bf16.mxu0 %v4566
    %5268 = vmatpush1.bf16.msra.mxu0 %v4565
    %5269 = vmatprep.subr.bf16.mxu0 %v4574
    %5270 = vmatpush1.bf16.msra.mxu0 %v4573
    %5271 = vmatprep.subr.bf16.mxu0 %v4582
    %5272 = vmatpush1.bf16.msra.mxu0 %v4581
    %5273 = vmatprep.subr.bf16.mxu0 %v4590
    %5274 = vmatpush1.bf16.msra.mxu0 %v4589
    %5275 = vmatprep.subr.bf16.mxu0 %v4598
    %5276 = vmatpush1.bf16.msra.mxu0 %v4597
    %5277 = vmatprep.subr.bf16.mxu0 %v4606
    %5278 = vmatpush1.bf16.msra.mxu0 %v4605
    %5279 = vmatprep.subr.bf16.mxu0 %v4614
    %5280 = vmatpush1.bf16.msra.mxu0 %v4613
    %5281 = vmatprep.subr.bf16.mxu0 %v4622
    %5282 = vmatpush1.bf16.msra.mxu0 %v4621
    %5283 = vmatprep.subr.bf16.mxu0 %v4630
    %5284 = vmatpush1.bf16.msra.mxu0 %v4629
    %5285 = vmatprep.subr.bf16.mxu0 %v4638
    %5286 = vmatpush1.bf16.msra.mxu0 %v4637
    %5287 = vmatprep.subr.bf16.mxu0 %v4646
    %5288 = vmatpush1.bf16.msra.mxu0 %v4645
    %5289 = vmatprep.mubr.bf16.mxu0 %v5254
    %5290 = vmatmul.mubr.bf16.gmra.mrb[0].mxu0 %v5253
    %v5291 = vpop.f32.mrb[0].mxu0
    %v5292 = vadd.f32 0.0, %v5291
    %v5293 = vpop.f32.mrb[0].mxu0
    %v5294 = vadd.f32 0.0, %v5293
    %v5295 = vpop.f32.mrb[0].mxu0
    %v5296 = vpop.f32.mrb[0].mxu0
    %5297 = vdwg.mxu0
    %5298 = vmatprep.subr.bf16.mxu0 %v4528
    %5299 = vmatpush1.bf16.msra.mxu0 %v4527
    %5300 = vmatprep.subr.bf16.mxu0 %v4536
    %5301 = vmatpush1.bf16.msra.mxu0 %v4535
    %5302 = vmatprep.subr.bf16.mxu0 %v4544
    %5303 = vmatpush1.bf16.msra.mxu0 %v4543
    %5304 = vmatprep.subr.bf16.mxu0 %v4552
    %5305 = vmatpush1.bf16.msra.mxu0 %v4551
    %5306 = vmatprep.subr.bf16.mxu0 %v4560
    %5307 = vmatpush1.bf16.msra.mxu0 %v4559
    %5308 = vmatprep.subr.bf16.mxu0 %v4568
    %5309 = vmatpush1.bf16.msra.mxu0 %v4567
    %5310 = vmatprep.subr.bf16.mxu0 %v4576
    %5311 = vmatpush1.bf16.msra.mxu0 %v4575
    %5312 = vmatprep.subr.bf16.mxu0 %v4584
    %5313 = vmatpush1.bf16.msra.mxu0 %v4583
    %5314 = vmatprep.subr.bf16.mxu0 %v4592
    %5315 = vmatpush1.bf16.msra.mxu0 %v4591
    %5316 = vmatprep.subr.bf16.mxu0 %v4600
    %5317 = vmatpush1.bf16.msra.mxu0 %v4599
    %5318 = vmatprep.subr.bf16.mxu0 %v4608
    %5319 = vmatpush1.bf16.msra.mxu0 %v4607
    %5320 = vmatprep.subr.bf16.mxu0 %v4616
    %5321 = vmatpush1.bf16.msra.mxu0 %v4615
    %5322 = vmatprep.subr.bf16.mxu0 %v4624
    %5323 = vmatpush1.bf16.msra.mxu0 %v4623
    %5324 = vmatprep.subr.bf16.mxu0 %v4632
    %5325 = vmatpush1.bf16.msra.mxu0 %v4631
    %5326 = vmatprep.subr.bf16.mxu0 %v4640
    %5327 = vmatpush1.bf16.msra.mxu0 %v4639
    %5328 = vmatprep.subr.bf16.mxu0 %v4648
    %5329 = vmatpush1.bf16.msra.mxu0 %v4647
    %5330 = vmatprep.mubr.bf16.mxu0 %v5254
    %5331 = vmatmul.mubr.bf16.gmra.mrb[0].mxu0 %v5253
    %v5332 = vpop.f32.mrb[0].mxu0
    %v5333 = vadd.f32 0.0, %v5332
    %v5334 = vpop.f32.mrb[0].mxu0
    %v5335 = vadd.f32 0.0, %v5334
    %v5336 = vpop.f32.mrb[0].mxu0
    %v5337 = vpop.f32.mrb[0].mxu0
    %5338 = vdwg.mxu0
    %5339 = vmatprep.subr.bf16.mxu0 %v4530
    %5340 = vmatpush1.bf16.msra.mxu0 %v4529
    %5341 = vmatprep.subr.bf16.mxu0 %v4538
    %5342 = vmatpush1.bf16.msra.mxu0 %v4537
    %5343 = vmatprep.subr.bf16.mxu0 %v4546
    %5344 = vmatpush1.bf16.msra.mxu0 %v4545
    %5345 = vmatprep.subr.bf16.mxu0 %v4554
    %5346 = vmatpush1.bf16.msra.mxu0 %v4553
    %5347 = vmatprep.subr.bf16.mxu0 %v4562
    %5348 = vmatpush1.bf16.msra.mxu0 %v4561
    %5349 = vmatprep.subr.bf16.mxu0 %v4570
    %5350 = vmatpush1.bf16.msra.mxu0 %v4569
    %5351 = vmatprep.subr.bf16.mxu0 %v4578
    %5352 = vmatpush1.bf16.msra.mxu0 %v4577
    %5353 = vmatprep.subr.bf16.mxu0 %v4586
    %5354 = vmatpush1.bf16.msra.mxu0 %v4585
    %5355 = vmatprep.subr.bf16.mxu0 %v4594
    %5356 = vmatpush1.bf16.msra.mxu0 %v4593
    %5357 = vmatprep.subr.bf16.mxu0 %v4602
    %5358 = vmatpush1.bf16.msra.mxu0 %v4601
    %5359 = vmatprep.subr.bf16.mxu0 %v4610
    %5360 = vmatpush1.bf16.msra.mxu0 %v4609
    %5361 = vmatprep.subr.bf16.mxu0 %v4618
    %5362 = vmatpush1.bf16.msra.mxu0 %v4617
    %5363 = vmatprep.subr.bf16.mxu0 %v4626
    %5364 = vmatpush1.bf16.msra.mxu0 %v4625
    %5365 = vmatprep.subr.bf16.mxu0 %v4634
    %5366 = vmatpush1.bf16.msra.mxu0 %v4633
    %5367 = vmatprep.subr.bf16.mxu0 %v4642
    %5368 = vmatpush1.bf16.msra.mxu0 %v4641
    %5369 = vmatprep.subr.bf16.mxu0 %v4650
    %5370 = vmatpush1.bf16.msra.mxu0 %v4649
    %5371 = vmatprep.mubr.bf16.mxu0 %v5254
    %5372 = vmatmul.mubr.bf16.gmra.mrb[0].mxu0 %v5253
    %v5373 = vpop.f32.mrb[0].mxu0
    %v5374 = vadd.f32 0.0, %v5373
    %v5375 = vpop.f32.mrb[0].mxu0
    %v5376 = vadd.f32 0.0, %v5375
    %v5377 = vpop.f32.mrb[0].mxu0
    %v5378 = vpop.f32.mrb[0].mxu0
    %5379 = vdwg.mxu0
    %5380 = vmatprep.subr.bf16.mxu0 %v4532
    %5381 = vmatpush1.bf16.msra.mxu0 %v4531
    %5382 = vmatprep.subr.bf16.mxu0 %v4540
    %5383 = vmatpush1.bf16.msra.mxu0 %v4539
    %5384 = vmatprep.subr.bf16.mxu0 %v4548
    %5385 = vmatpush1.bf16.msra.mxu0 %v4547
    %5386 = vmatprep.subr.bf16.mxu0 %v4556
    %5387 = vmatpush1.bf16.msra.mxu0 %v4555
    %5388 = vmatprep.subr.bf16.mxu0 %v4564
    %5389 = vmatpush1.bf16.msra.mxu0 %v4563
    %5390 = vmatprep.subr.bf16.mxu0 %v4572
    %5391 = vmatpush1.bf16.msra.mxu0 %v4571
    %5392 = vmatprep.subr.bf16.mxu0 %v4580
    %5393 = vmatpush1.bf16.msra.mxu0 %v4579
    %5394 = vmatprep.subr.bf16.mxu0 %v4588
    %5395 = vmatpush1.bf16.msra.mxu0 %v4587
    %5396 = vmatprep.subr.bf16.mxu0 %v4596
    %5397 = vmatpush1.bf16.msra.mxu0 %v4595
    %5398 = vmatprep.subr.bf16.mxu0 %v4604
    %5399 = vmatpush1.bf16.msra.mxu0 %v4603
    %5400 = vmatprep.subr.bf16.mxu0 %v4612
    %5401 = vmatpush1.bf16.msra.mxu0 %v4611
    %5402 = vmatprep.subr.bf16.mxu0 %v4620
    %5403 = vmatpush1.bf16.msra.mxu0 %v4619
    %5404 = vmatprep.subr.bf16.mxu0 %v4628
    %5405 = vmatpush1.bf16.msra.mxu0 %v4627
    %5406 = vmatprep.subr.bf16.mxu0 %v4636
    %5407 = vmatpush1.bf16.msra.mxu0 %v4635
    %5408 = vmatprep.subr.bf16.mxu0 %v4644
    %5409 = vmatpush1.bf16.msra.mxu0 %v4643
    %5410 = vmatprep.subr.bf16.mxu0 %v4652
    %5411 = vmatpush1.bf16.msra.mxu0 %v4651
    %5412 = vmatprep.mubr.bf16.mxu0 %v5254
    %5413 = vmatmul.mubr.bf16.gmra.mrb[0].mxu0 %v5253
    %v5414 = vpop.f32.mrb[0].mxu0
    %v5415 = vadd.f32 0.0, %v5414
    %v5416 = vpop.f32.mrb[0].mxu0
    %v5417 = vadd.f32 0.0, %v5416
    %v5418 = vpop.f32.mrb[0].mxu0
    %v5419 = vpop.f32.mrb[0].mxu0
    %5420 = vdwg.mxu0
    %v5429 = vcombine.low %v5292, %v5294
    %v5430 = vcombine.low %v5333, %v5335
    %v5431 = vcombine.low %v5374, %v5376
    %v5432 = vcombine.low %v5415, %v5417
    %v5433 = vrot.slane %v5429, 6
    %v5434 = vrot.slane %v5430, 6
    %v5435 = vrot.slane %v5431, 6
    %v5436 = vrot.slane %v5432, 6
    %v5437 = vrot.slane %v5429, 7
    %v5438 = vrot.slane %v5430, 7
    %v5439 = vrot.slane %v5431, 7
    %v5440 = vrot.slane %v5432, 7
    %v5449 = vadd.f32 %v4509, %v5433
    %v5450 = vadd.f32 %v4511, %v5434
    %v5451 = vadd.f32 %v4513, %v5435
    %v5452 = vadd.f32 %v4515, %v5436
    %v5453 = vadd.f32 %v4510, %v5437
    %v5454 = vadd.f32 %v4512, %v5438
    %v5455 = vadd.f32 %v4514, %v5439
    %v5456 = vadd.f32 %v4516, %v5440
    %v5457 = vxor.u32 %v5449, 2147483648
    %v5458 = vxor.u32 %v5450, 2147483648
    %v5459 = vxor.u32 %v5451, 2147483648
    %v5460 = vxor.u32 %v5453, 2147483648
    %v5461 = vxor.u32 %v5454, 2147483648
    %v5462 = vxor.u32 %v5455, 2147483648
    %v5463 = vmul.f32 %v5457, 1.442695
    %v5464 = vpow.pop %v5463
    %v5465 = vmul.f32 %v5458, 1.442695
    %v5466 = vpow.pop %v5465
    %v5467 = vmul.f32 %v5459, 1.442695
    %v5468 = vpow.pop %v5467
    %v5469 = vmul.f32 %v5460, 1.442695
    %v5470 = vpow.pop %v5469
    %v5471 = vmul.f32 %v5461, 1.442695
    %v5472 = vpow.pop %v5471
    %v5473 = vmul.f32 %v5462, 1.442695
    %v5474 = vpow.pop %v5473
    %v5475 = vadd.f32 %v5464, 1.0
    %v5476 = vadd.f32 %v5466, 1.0
    %v5477 = vadd.f32 %v5468, 1.0
    %v5478 = vadd.f32 %v5470, 1.0
    %v5479 = vadd.f32 %v5472, 1.0
    %v5480 = vadd.f32 %v5474, 1.0
    %v5481 = vrcp.pop %v5475
    %v5482 = vmul.f32 1.0, %v5481
    %v5483 = vrcp.pop %v5476
    %v5484 = vmul.f32 1.0, %v5483
    %v5485 = vrcp.pop %v5477
    %v5486 = vmul.f32 1.0, %v5485
    %v5487 = vrcp.pop %v5478
    %v5488 = vmul.f32 1.0, %v5487
    %v5489 = vrcp.pop %v5479
    %v5490 = vmul.f32 1.0, %v5489
    %v5491 = vrcp.pop %v5480
    %v5492 = vmul.f32 1.0, %v5491
    %v5493 = vtanh.pop %v5452
    %v5494 = vtanh.pop %v5456
    %v5497 = vrot.slane %v5191, 7
    %v5498 = vrot.slane %v5192, 7
    %v5501 = vmul.f32 %v5484, %v5497
    %v5502 = vmul.f32 %v5490, %v5498
    %v5503 = vmul.f32 %v5482, %v5493
    %v5504 = vmul.f32 %v5488, %v5494
    %v5505 = vadd.f32 %v5501, %v5503
    %v5506 = vadd.f32 %v5502, %v5504
    %v5507 = vtanh.pop %v5505
    %v5508 = vtanh.pop %v5506
    %v5509 = vmul.f32 %v5486, %v5507
    %v5510 = vmul.f32 %v5492, %v5508
    %v5513 = vrot.slane %v5509, 6
    %v5514 = vrot.slane %v5513, 4
    %v5515 = vrot.slane %v5510, 6
    %v5516 = vrot.slane %v5515, 4
    %5519 = vst [vmem:[#allocation8 + $0x2] sm:$0x1] %v5514
    %5520 = vst [vmem:[#allocation8 + $0xa] sm:$0x1] %v5516
    %v5521 = vrot.slane %v5509, 4
    %v5522 = vrot.slane %v5510, 4
    %v5523 = vrot.slane %v5521, 6
    %v5524 = vrot.slane %v5523, 4
    %v5525 = vrot.slane %v5522, 6
    %v5526 = vrot.slane %v5525, 4
    %5529 = vst [vmem:[#allocation8 + $0x5] sm:$0x1] %v5524
    %5530 = vst [vmem:[#allocation8 + $0xd] sm:$0x1] %v5526
    %v5531 = vlaneseq
    %v5532 = vshrl.u32 %v5531, 7
    %v5533 = vsub.s32 2, %v5532
    %v5534 = vrot.slane %v5509, %v5533
    %v5535 = vlaneseq
    %v5536 = vshrl.u32 %v5535, 7
    %v5537 = vsub.s32 6, %v5536
    %v5538 = vrot.slane %v5509, %v5537
    %v5539 = vlaneseq
    %v5540 = vshrl.u32 %v5539, 7
    %v5541 = vsub.s32 2, %v5540
    %v5542 = vrot.slane %v5510, %v5541
    %v5543 = vlaneseq
    %v5544 = vshrl.u32 %v5543, 7
    %v5545 = vsub.s32 6, %v5544
    %v5546 = vrot.slane %v5510, %v5545
    %v5551 = vpack.c.bf16 %v5534, %v5534
    %v5552 = vpack.c.bf16 %v5538, %v5538
    %v5553 = vpack.c.bf16 %v5542, %v5542
    %v5554 = vpack.c.bf16 %v5546, %v5546
    %v5559 = vunpack.c.l.b16 %v5551
    %v5560 = vunpack.c.l.b16 %v5552
    %v5561 = vunpack.c.l.b16 %v5553
    %v5562 = vunpack.c.l.b16 %v5554
    %v5563 = vrot.slane %v5559, 2
    %v5564 = vrot.slane %v5561, 1
    %v5565 = vsel %vm2841, %v5564, %v5563
    %v5566 = vrot.slane %v5560, 2
    %v5567 = vrot.slane %v5562, 1
    %v5568 = vsel %vm2841, %v5567, %v5566
    %v5569 = vpack.c.b16 %v5565, %v5565
    %v5570 = vpack.c.b16 %v5568, %v5568
    %5573 = vmatprep.subr.bf16.mxu0 %v4526
    %5574 = vmatpush1.bf16.msra.mxu0 %v4525
    %5575 = vmatprep.subr.bf16.mxu0 %v4534
    %5576 = vmatpush1.bf16.msra.mxu0 %v4533
    %5577 = vmatprep.subr.bf16.mxu0 %v4542
    %5578 = vmatpush1.bf16.msra.mxu0 %v4541
    %5579 = vmatprep.subr.bf16.mxu0 %v4550
    %5580 = vmatpush1.bf16.msra.mxu0 %v4549
    %5581 = vmatprep.subr.bf16.mxu0 %v4558
    %5582 = vmatpush1.bf16.msra.mxu0 %v4557
    %5583 = vmatprep.subr.bf16.mxu0 %v4566
    %5584 = vmatpush1.bf16.msra.mxu0 %v4565
    %5585 = vmatprep.subr.bf16.mxu0 %v4574
    %5586 = vmatpush1.bf16.msra.mxu0 %v4573
    %5587 = vmatprep.subr.bf16.mxu0 %v4582
    %5588 = vmatpush1.bf16.msra.mxu0 %v4581
    %5589 = vmatprep.subr.bf16.mxu0 %v4590
    %5590 = vmatpush1.bf16.msra.mxu0 %v4589
    %5591 = vmatprep.subr.bf16.mxu0 %v4598
    %5592 = vmatpush1.bf16.msra.mxu0 %v4597
    %5593 = vmatprep.subr.bf16.mxu0 %v4606
    %5594 = vmatpush1.bf16.msra.mxu0 %v4605
    %5595 = vmatprep.subr.bf16.mxu0 %v4614
    %5596 = vmatpush1.bf16.msra.mxu0 %v4613
    %5597 = vmatprep.subr.bf16.mxu0 %v4622
    %5598 = vmatpush1.bf16.msra.mxu0 %v4621
    %5599 = vmatprep.subr.bf16.mxu0 %v4630
    %5600 = vmatpush1.bf16.msra.mxu0 %v4629
    %5601 = vmatprep.subr.bf16.mxu0 %v4638
    %5602 = vmatpush1.bf16.msra.mxu0 %v4637
    %5603 = vmatprep.subr.bf16.mxu0 %v4646
    %5604 = vmatpush1.bf16.msra.mxu0 %v4645
    %5605 = vmatprep.mubr.bf16.mxu0 %v5570
    %5606 = vmatmul.mubr.bf16.gmra.mrb[0].mxu0 %v5569
    %v5607 = vpop.f32.mrb[0].mxu0
    %v5608 = vadd.f32 0.0, %v5607
    %v5609 = vpop.f32.mrb[0].mxu0
    %v5610 = vadd.f32 0.0, %v5609
    %v5611 = vpop.f32.mrb[0].mxu0
    %v5612 = vpop.f32.mrb[0].mxu0
    %5613 = vdwg.mxu0
    %5614 = vmatprep.subr.bf16.mxu0 %v4528
    %5615 = vmatpush1.bf16.msra.mxu0 %v4527
    %5616 = vmatprep.subr.bf16.mxu0 %v4536
    %5617 = vmatpush1.bf16.msra.mxu0 %v4535
    %5618 = vmatprep.subr.bf16.mxu0 %v4544
    %5619 = vmatpush1.bf16.msra.mxu0 %v4543
    %5620 = vmatprep.subr.bf16.mxu0 %v4552
    %5621 = vmatpush1.bf16.msra.mxu0 %v4551
    %5622 = vmatprep.subr.bf16.mxu0 %v4560
    %5623 = vmatpush1.bf16.msra.mxu0 %v4559
    %5624 = vmatprep.subr.bf16.mxu0 %v4568
    %5625 = vmatpush1.bf16.msra.mxu0 %v4567
    %5626 = vmatprep.subr.bf16.mxu0 %v4576
    %5627 = vmatpush1.bf16.msra.mxu0 %v4575
    %5628 = vmatprep.subr.bf16.mxu0 %v4584
    %5629 = vmatpush1.bf16.msra.mxu0 %v4583
    %5630 = vmatprep.subr.bf16.mxu0 %v4592
    %5631 = vmatpush1.bf16.msra.mxu0 %v4591
    %5632 = vmatprep.subr.bf16.mxu0 %v4600
    %5633 = vmatpush1.bf16.msra.mxu0 %v4599
    %5634 = vmatprep.subr.bf16.mxu0 %v4608
    %5635 = vmatpush1.bf16.msra.mxu0 %v4607
    %5636 = vmatprep.subr.bf16.mxu0 %v4616
    %5637 = vmatpush1.bf16.msra.mxu0 %v4615
    %5638 = vmatprep.subr.bf16.mxu0 %v4624
    %5639 = vmatpush1.bf16.msra.mxu0 %v4623
    %5640 = vmatprep.subr.bf16.mxu0 %v4632
    %5641 = vmatpush1.bf16.msra.mxu0 %v4631
    %5642 = vmatprep.subr.bf16.mxu0 %v4640
    %5643 = vmatpush1.bf16.msra.mxu0 %v4639
    %5644 = vmatprep.subr.bf16.mxu0 %v4648
    %5645 = vmatpush1.bf16.msra.mxu0 %v4647
    %5646 = vmatprep.mubr.bf16.mxu0 %v5570
    %5647 = vmatmul.mubr.bf16.gmra.mrb[0].mxu0 %v5569
    %v5648 = vpop.f32.mrb[0].mxu0
    %v5649 = vadd.f32 0.0, %v5648
    %v5650 = vpop.f32.mrb[0].mxu0
    %v5651 = vadd.f32 0.0, %v5650
    %v5652 = vpop.f32.mrb[0].mxu0
    %v5653 = vpop.f32.mrb[0].mxu0
    %5654 = vdwg.mxu0
    %5655 = vmatprep.subr.bf16.mxu0 %v4530
    %5656 = vmatpush1.bf16.msra.mxu0 %v4529
    %5657 = vmatprep.subr.bf16.mxu0 %v4538
    %5658 = vmatpush1.bf16.msra.mxu0 %v4537
    %5659 = vmatprep.subr.bf16.mxu0 %v4546
    %5660 = vmatpush1.bf16.msra.mxu0 %v4545
    %5661 = vmatprep.subr.bf16.mxu0 %v4554
    %5662 = vmatpush1.bf16.msra.mxu0 %v4553
    %5663 = vmatprep.subr.bf16.mxu0 %v4562
    %5664 = vmatpush1.bf16.msra.mxu0 %v4561
    %5665 = vmatprep.subr.bf16.mxu0 %v4570
    %5666 = vmatpush1.bf16.msra.mxu0 %v4569
    %5667 = vmatprep.subr.bf16.mxu0 %v4578
    %5668 = vmatpush1.bf16.msra.mxu0 %v4577
    %5669 = vmatprep.subr.bf16.mxu0 %v4586
    %5670 = vmatpush1.bf16.msra.mxu0 %v4585
    %5671 = vmatprep.subr.bf16.mxu0 %v4594
    %5672 = vmatpush1.bf16.msra.mxu0 %v4593
    %5673 = vmatprep.subr.bf16.mxu0 %v4602
    %5674 = vmatpush1.bf16.msra.mxu0 %v4601
    %5675 = vmatprep.subr.bf16.mxu0 %v4610
    %5676 = vmatpush1.bf16.msra.mxu0 %v4609
    %5677 = vmatprep.subr.bf16.mxu0 %v4618
    %5678 = vmatpush1.bf16.msra.mxu0 %v4617
    %5679 = vmatprep.subr.bf16.mxu0 %v4626
    %5680 = vmatpush1.bf16.msra.mxu0 %v4625
    %5681 = vmatprep.subr.bf16.mxu0 %v4634
    %5682 = vmatpush1.bf16.msra.mxu0 %v4633
    %5683 = vmatprep.subr.bf16.mxu0 %v4642
    %5684 = vmatpush1.bf16.msra.mxu0 %v4641
    %5685 = vmatprep.subr.bf16.mxu0 %v4650
    %5686 = vmatpush1.bf16.msra.mxu0 %v4649
    %5687 = vmatprep.mubr.bf16.mxu0 %v5570
    %5688 = vmatmul.mubr.bf16.gmra.mrb[0].mxu0 %v5569
    %v5689 = vpop.f32.mrb[0].mxu0
    %v5690 = vadd.f32 0.0, %v5689
    %v5691 = vpop.f32.mrb[0].mxu0
    %v5692 = vadd.f32 0.0, %v5691
    %v5693 = vpop.f32.mrb[0].mxu0
    %v5694 = vpop.f32.mrb[0].mxu0
    %5695 = vdwg.mxu0
    %5696 = vmatprep.subr.bf16.mxu0 %v4532
    %5697 = vmatpush1.bf16.msra.mxu0 %v4531
    %5698 = vmatprep.subr.bf16.mxu0 %v4540
    %5699 = vmatpush1.bf16.msra.mxu0 %v4539
    %5700 = vmatprep.subr.bf16.mxu0 %v4548
    %5701 = vmatpush1.bf16.msra.mxu0 %v4547
    %5702 = vmatprep.subr.bf16.mxu0 %v4556
    %5703 = vmatpush1.bf16.msra.mxu0 %v4555
    %5704 = vmatprep.subr.bf16.mxu0 %v4564
    %5705 = vmatpush1.bf16.msra.mxu0 %v4563
    %5706 = vmatprep.subr.bf16.mxu0 %v4572
    %5707 = vmatpush1.bf16.msra.mxu0 %v4571
    %5708 = vmatprep.subr.bf16.mxu0 %v4580
    %5709 = vmatpush1.bf16.msra.mxu0 %v4579
    %5710 = vmatprep.subr.bf16.mxu0 %v4588
    %5711 = vmatpush1.bf16.msra.mxu0 %v4587
    %5712 = vmatprep.subr.bf16.mxu0 %v4596
    %5713 = vmatpush1.bf16.msra.mxu0 %v4595
    %5714 = vmatprep.subr.bf16.mxu0 %v4604
    %5715 = vmatpush1.bf16.msra.mxu0 %v4603
    %5716 = vmatprep.subr.bf16.mxu0 %v4612
    %5717 = vmatpush1.bf16.msra.mxu0 %v4611
    %5718 = vmatprep.subr.bf16.mxu0 %v4620
    %5719 = vmatpush1.bf16.msra.mxu0 %v4619
    %5720 = vmatprep.subr.bf16.mxu0 %v4628
    %5721 = vmatpush1.bf16.msra.mxu0 %v4627
    %5722 = vmatprep.subr.bf16.mxu0 %v4636
    %5723 = vmatpush1.bf16.msra.mxu0 %v4635
    %5724 = vmatprep.subr.bf16.mxu0 %v4644
    %5725 = vmatpush1.bf16.msra.mxu0 %v4643
    %5726 = vmatprep.subr.bf16.mxu0 %v4652
    %5727 = vmatpush1.bf16.msra.mxu0 %v4651
    %5728 = vmatprep.mubr.bf16.mxu0 %v5570
    %5729 = vmatmul.mubr.bf16.gmra.mrb[0].mxu0 %v5569
    %v5730 = vpop.f32.mrb[0].mxu0
    %v5731 = vadd.f32 0.0, %v5730
    %v5732 = vpop.f32.mrb[0].mxu0
    %v5733 = vadd.f32 0.0, %v5732
    %v5734 = vpop.f32.mrb[0].mxu0
    %v5735 = vpop.f32.mrb[0].mxu0
    %5736 = vdwg.mxu0
    %v5745 = vcombine.low %v5608, %v5610
    %v5746 = vcombine.low %v5649, %v5651
    %v5747 = vcombine.low %v5690, %v5692
    %v5748 = vcombine.low %v5731, %v5733
    %v5749 = vrot.slane %v5745, 5
    %v5750 = vrot.slane %v5746, 5
    %v5751 = vrot.slane %v5747, 5
    %v5752 = vrot.slane %v5748, 5
    %v5753 = vrot.slane %v5745, 6
    %v5754 = vrot.slane %v5746, 6
    %v5755 = vrot.slane %v5747, 6
    %v5756 = vrot.slane %v5748, 6
    %v5765 = vadd.f32 %v4509, %v5749
    %v5766 = vadd.f32 %v4511, %v5750
    %v5767 = vadd.f32 %v4513, %v5751
    %v5768 = vadd.f32 %v4515, %v5752
    %v5769 = vadd.f32 %v4510, %v5753
    %v5770 = vadd.f32 %v4512, %v5754
    %v5771 = vadd.f32 %v4514, %v5755
    %v5772 = vadd.f32 %v4516, %v5756
    %v5773 = vxor.u32 %v5765, 2147483648
    %v5774 = vxor.u32 %v5766, 2147483648
    %v5775 = vxor.u32 %v5767, 2147483648
    %v5776 = vxor.u32 %v5769, 2147483648
    %v5777 = vxor.u32 %v5770, 2147483648
    %v5778 = vxor.u32 %v5771, 2147483648
    %v5779 = vmul.f32 %v5773, 1.442695
    %v5780 = vpow.pop %v5779
    %v5781 = vmul.f32 %v5774, 1.442695
    %v5782 = vpow.pop %v5781
    %v5783 = vmul.f32 %v5775, 1.442695
    %v5784 = vpow.pop %v5783
    %v5785 = vmul.f32 %v5776, 1.442695
    %v5786 = vpow.pop %v5785
    %v5787 = vmul.f32 %v5777, 1.442695
    %v5788 = vpow.pop %v5787
    %v5789 = vmul.f32 %v5778, 1.442695
    %v5790 = vpow.pop %v5789
    %v5791 = vadd.f32 %v5780, 1.0
    %v5792 = vadd.f32 %v5782, 1.0
    %v5793 = vadd.f32 %v5784, 1.0
    %v5794 = vadd.f32 %v5786, 1.0
    %v5795 = vadd.f32 %v5788, 1.0
    %v5796 = vadd.f32 %v5790, 1.0
    %v5797 = vrcp.pop %v5791
    %v5798 = vmul.f32 1.0, %v5797
    %v5799 = vrcp.pop %v5792
    %v5800 = vmul.f32 1.0, %v5799
    %v5801 = vrcp.pop %v5793
    %v5802 = vmul.f32 1.0, %v5801
    %v5803 = vrcp.pop %v5794
    %v5804 = vmul.f32 1.0, %v5803
    %v5805 = vrcp.pop %v5795
    %v5806 = vmul.f32 1.0, %v5805
    %v5807 = vrcp.pop %v5796
    %v5808 = vmul.f32 1.0, %v5807
    %v5809 = vtanh.pop %v5768
    %v5810 = vtanh.pop %v5772
    %v5813 = vrot.slane %v5505, 7
    %v5814 = vrot.slane %v5506, 7
    %v5817 = vmul.f32 %v5800, %v5813
    %v5818 = vmul.f32 %v5806, %v5814
    %v5819 = vmul.f32 %v5798, %v5809
    %v5820 = vmul.f32 %v5804, %v5810
    %v5821 = vadd.f32 %v5817, %v5819
    %v5822 = vadd.f32 %v5818, %v5820
    %v5823 = vtanh.pop %v5821
    %v5824 = vtanh.pop %v5822
    %v5825 = vmul.f32 %v5802, %v5823
    %v5826 = vmul.f32 %v5808, %v5824
    %v5829 = vrot.slane %v5825, 7
    %v5830 = vrot.slane %v5829, 4
    %v5831 = vrot.slane %v5826, 7
    %v5832 = vrot.slane %v5831, 4
    %5835 = vst [vmem:[#allocation8 + $0x3] sm:$0x1] %v5830
    %5836 = vst [vmem:[#allocation8 + $0xb] sm:$0x1] %v5832
    %v5837 = vrot.slane %v5825, 4
    %v5838 = vrot.slane %v5826, 4
    %v5839 = vrot.slane %v5837, 7
    %v5840 = vrot.slane %v5839, 4
    %v5841 = vrot.slane %v5838, 7
    %v5842 = vrot.slane %v5841, 4
    %5845 = vst [vmem:[#allocation8 + $0x4] sm:$0x1] %v5840
    %5846 = vst [vmem:[#allocation8 + $0xc] sm:$0x1] %v5842
    %v5847 = vld [vmem:[#allocation8] sm:$0xff]
    %v5848 = vld [vmem:[#allocation8 + $0x8] sm:$0xff]
    %v5851 = vcombine.high %v5847, %v5847
    %v5852 = vcombine.high %v5848, %v5848
    %v5855 = vsel %vm558, %v5847, 0.0
    %v5856 = vrot.slane %v5855, 4
    %v5857 = vadd.f32 %v5855, %v5856
    %v5858 = vrot.slane %v5857, 2
    %v5859 = vadd.f32 %v5857, %v5858
    %v5860 = vrot.slane %v5859, 1
    %v5861 = vadd.f32 %v5859, %v5860
    %v5862 = vsel %vm558, %v5851, 0.0
    %v5863 = vrot.slane %v5862, 4
    %v5864 = vadd.f32 %v5862, %v5863
    %v5865 = vrot.slane %v5864, 2
    %v5866 = vadd.f32 %v5864, %v5865
    %v5867 = vrot.slane %v5866, 1
    %v5868 = vadd.f32 %v5866, %v5867
    %v5869 = vsel %vm558, %v5848, 0.0
    %v5870 = vrot.slane %v5869, 4
    %v5871 = vadd.f32 %v5869, %v5870
    %v5872 = vrot.slane %v5871, 2
    %v5873 = vadd.f32 %v5871, %v5872
    %v5874 = vrot.slane %v5873, 1
    %v5875 = vadd.f32 %v5873, %v5874
    %v5876 = vsel %vm558, %v5852, 0.0
    %v5877 = vrot.slane %v5876, 4
    %v5878 = vadd.f32 %v5876, %v5877
    %v5879 = vrot.slane %v5878, 2
    %v5880 = vadd.f32 %v5878, %v5879
    %v5881 = vrot.slane %v5880, 1
    %v5882 = vadd.f32 %v5880, %v5881
    %v5883 = vrcp.pop 4.0
    %v5884 = vmul.f32 %v5861, %v5883
    %v5885 = vmul.f32 %v5868, %v5883
    %v5886 = vmul.f32 %v5875, %v5883
    %v5887 = vmul.f32 %v5882, %v5883
    %v5888 = vsel %vm558, %v5847, -inf
    %v5889 = vrot.slane %v5888, 4
    %v5890 = vmax.f32 %v5888, %v5889
    %v5891 = vrot.slane %v5890, 2
    %v5892 = vmax.f32 %v5890, %v5891
    %v5893 = vrot.slane %v5892, 1
    %v5894 = vmax.f32 %v5892, %v5893
    %v5895 = vsel %vm558, %v5851, -inf
    %v5896 = vrot.slane %v5895, 4
    %v5897 = vmax.f32 %v5895, %v5896
    %v5898 = vrot.slane %v5897, 2
    %v5899 = vmax.f32 %v5897, %v5898
    %v5900 = vrot.slane %v5899, 1
    %v5901 = vmax.f32 %v5899, %v5900
    %v5902 = vsel %vm558, %v5848, -inf
    %v5903 = vrot.slane %v5902, 4
    %v5904 = vmax.f32 %v5902, %v5903
    %v5905 = vrot.slane %v5904, 2
    %v5906 = vmax.f32 %v5904, %v5905
    %v5907 = vrot.slane %v5906, 1
    %v5908 = vmax.f32 %v5906, %v5907
    %v5909 = vsel %vm558, %v5852, -inf
    %v5910 = vrot.slane %v5909, 4
    %v5911 = vmax.f32 %v5909, %v5910
    %v5912 = vrot.slane %v5911, 2
    %v5913 = vmax.f32 %v5911, %v5912
    %v5914 = vrot.slane %v5913, 1
    %v5915 = vmax.f32 %v5913, %v5914
    %v5920 = vsel %vm2841, %v5886, %v5884
    %v5921 = vsel %vm2841, %v5887, %v5885
    %vm5928 = vcmask 1043459
    %v5929 = vsel %vm5928, %v5908, %v5894
    %v5930 = vsel %vm5928, %v5915, %v5901
    %v5933 = vsel %vm552, %v5920, %v5929
    %v5934 = vsel %vm552, %v5921, %v5930
    %v5935 = vld [vmem:[%s13] sm:$0xff]
    %v5936 = vld [vmem:[%s13 + $0x8] sm:$0xff]
    %v5937 = vld [vmem:[%s13 + $0x10] sm:$0xff]
    %v5938 = vld [vmem:[%s13 + $0x18] sm:$0xff]
    %v5939 = vld [vmem:[%s13 + $0x20] sm:$0xff]
    %v5940 = vld [vmem:[%s13 + $0x28] sm:$0xff]
    %v5941 = vld [vmem:[%s13 + $0x30] sm:$0xff]
    %v5942 = vld [vmem:[%s13 + $0x38] sm:$0xff]
    %v5943 = vld [vmem:[%s13 + $0x40] sm:$0xff]
    %v5944 = vld [vmem:[%s13 + $0x48] sm:$0xff]
    %v5945 = vld [vmem:[%s13 + $0x50] sm:$0xff]
    %v5946 = vld [vmem:[%s13 + $0x58] sm:$0xff]
    %v5947 = vld [vmem:[%s13 + $0x60] sm:$0xff]
    %v5948 = vld [vmem:[%s13 + $0x68] sm:$0xff]
    %v5949 = vld [vmem:[%s13 + $0x70] sm:$0xff]
    %v5950 = vld [vmem:[%s13 + $0x78] sm:$0xff]
    %v5951 = vld [vmem:[%s13 + $0x80] sm:$0xff]
    %v5952 = vld [vmem:[%s13 + $0x88] sm:$0xff]
    %v5953 = vld [vmem:[%s13 + $0x90] sm:$0xff]
    %v5954 = vld [vmem:[%s13 + $0x98] sm:$0xff]
    %v5955 = vld [vmem:[%s13 + $0xa0] sm:$0xff]
    %v5956 = vld [vmem:[%s13 + $0xa8] sm:$0xff]
    %v5957 = vld [vmem:[%s13 + $0xb0] sm:$0xff]
    %v5958 = vld [vmem:[%s13 + $0xb8] sm:$0xff]
    %v5959 = vld [vmem:[%s13 + $0xc0] sm:$0xff]
    %v5960 = vld [vmem:[%s13 + $0xc8] sm:$0xff]
    %v5961 = vld [vmem:[%s13 + $0xd0] sm:$0xff]
    %v5962 = vld [vmem:[%s13 + $0xd8] sm:$0xff]
    %v5963 = vld [vmem:[%s13 + $0xe0] sm:$0xff]
    %v5964 = vld [vmem:[%s13 + $0xe8] sm:$0xff]
    %v5965 = vld [vmem:[%s13 + $0xf0] sm:$0xff]
    %v5966 = vld [vmem:[%s13 + $0xf8] sm:$0xff]
    %5967 = vmatprep.subr.mxu0 0.0
    %5968 = vmatpush1.msra.mxu0 %v5935
    %5969 = vmatprep.subr.mxu0 0.0
    %5970 = vmatpush1.msra.mxu0 %v5936
    %5971 = vmatprep.subr.mxu0 0.0
    %5972 = vmatpush1.msra.mxu0 %v5937
    %5973 = vmatprep.subr.mxu0 0.0
    %5974 = vmatpush1.msra.mxu0 %v5938
    %5975 = vmatprep.subr.mxu0 0.0
    %5976 = vmatpush1.msra.mxu0 %v5939
    %5977 = vmatprep.subr.mxu0 0.0
    %5978 = vmatpush1.msra.mxu0 %v5940
    %5979 = vmatprep.subr.mxu0 0.0
    %5980 = vmatpush1.msra.mxu0 %v5941
    %5981 = vmatprep.subr.mxu0 0.0
    %5982 = vmatpush1.msra.mxu0 %v5942
    %5983 = vmatprep.subr.mxu0 0.0
    %5984 = vmatpush1.msra.mxu0 %v5943
    %5985 = vmatprep.subr.mxu0 0.0
    %5986 = vmatpush1.msra.mxu0 %v5944
    %5987 = vmatprep.subr.mxu0 0.0
    %5988 = vmatpush1.msra.mxu0 %v5945
    %5989 = vmatprep.subr.mxu0 0.0
    %5990 = vmatpush1.msra.mxu0 %v5946
    %5991 = vmatprep.subr.mxu0 0.0
    %5992 = vmatpush1.msra.mxu0 %v5947
    %5993 = vmatprep.subr.mxu0 0.0
    %5994 = vmatpush1.msra.mxu0 %v5948
    %5995 = vmatprep.subr.mxu0 0.0
    %5996 = vmatpush1.msra.mxu0 %v5949
    %5997 = vmatprep.subr.mxu0 0.0
    %5998 = vmatpush1.msra.mxu0 %v5950
    %5999 = vmatprep.subr.mxu0 0.0
    %6000 = vmatpush1.msra.mxu0 %v5951
    %6001 = vmatprep.subr.mxu0 0.0
    %6002 = vmatpush1.msra.mxu0 %v5952
    %6003 = vmatprep.subr.mxu0 0.0
    %6004 = vmatpush1.msra.mxu0 %v5953
    %6005 = vmatprep.subr.mxu0 0.0
    %6006 = vmatpush1.msra.mxu0 %v5954
    %6007 = vmatprep.subr.mxu0 0.0
    %6008 = vmatpush1.msra.mxu0 %v5955
    %6009 = vmatprep.subr.mxu0 0.0
    %6010 = vmatpush1.msra.mxu0 %v5956
    %6011 = vmatprep.subr.mxu0 0.0
    %6012 = vmatpush1.msra.mxu0 %v5957
    %6013 = vmatprep.subr.mxu0 0.0
    %6014 = vmatpush1.msra.mxu0 %v5958
    %6015 = vmatprep.subr.mxu0 0.0
    %6016 = vmatpush1.msra.mxu0 %v5959
    %6017 = vmatprep.subr.mxu0 0.0
    %6018 = vmatpush1.msra.mxu0 %v5960
    %6019 = vmatprep.subr.mxu0 0.0
    %6020 = vmatpush1.msra.mxu0 %v5961
    %6021 = vmatprep.subr.mxu0 0.0
    %6022 = vmatpush1.msra.mxu0 %v5962
    %6023 = vmatprep.subr.mxu0 0.0
    %6024 = vmatpush1.msra.mxu0 %v5963
    %6025 = vmatprep.subr.mxu0 0.0
    %6026 = vmatpush1.msra.mxu0 %v5964
    %6027 = vmatprep.subr.mxu0 0.0
    %6028 = vmatpush1.msra.mxu0 %v5965
    %6029 = vmatprep.subr.mxu0 0.0
    %6030 = vmatpush1.msra.mxu0 %v5966
    %6031 = vmatprep.mubr.f32.mxu0 %v5934
    %6032 = vmatmul.mubr.f32.gmra.mrb[0].mxu0 %v5933
    %v6033 = vpop.f32.mrb[0].mxu0
    %v6034 = vadd.f32 0.0, %v6033
    %v6035 = vpop.f32.mrb[0].mxu0
    %6036 = vdwg.mxu0
    %v6037 = vmax.f32 %v6034, 0.0
    %v6038 = vld [vmem:[%s14] sm:$0xff]
    %v6039 = vld [vmem:[%s14 + $0x8] sm:$0xff]
    %v6040 = vld [vmem:[%s14 + $0x10] sm:$0xff]
    %v6041 = vld [vmem:[%s14 + $0x18] sm:$0xff]
    %vm6042 = vcmask 130048
    %v6044 = vsel %vm6042, %v6037, 0
    %6046 = vmatprep.subr.mxu0 %v6039
    %6047 = vmatpush1.msra.mxu0 %v6038
    %6048 = vmatprep.subr.mxu0 %v6041
    %6049 = vmatpush1.msra.mxu0 %v6040
    %6050 = vmatprep.subr.mxu0 0.0
    %6051 = vmatpush1.msra.mxu0 0.0
    %6052 = vmatprep.subr.mxu0 0.0
    %6053 = vmatpush1.msra.mxu0 0.0
    %6054 = vmatprep.subr.mxu0 0.0
    %6055 = vmatpush1.msra.mxu0 0.0
    %6056 = vmatprep.subr.mxu0 0.0
    %6057 = vmatpush1.msra.mxu0 0.0
    %6058 = vmatprep.subr.mxu0 0.0
    %6059 = vmatpush1.msra.mxu0 0.0
    %6060 = vmatprep.subr.mxu0 0.0
    %6061 = vmatpush1.msra.mxu0 0.0
    %6062 = vmatprep.subr.mxu0 0.0
    %6063 = vmatpush1.msra.mxu0 0.0
    %6064 = vmatprep.subr.mxu0 0.0
    %6065 = vmatpush1.msra.mxu0 0.0
    %6066 = vmatprep.subr.mxu0 0.0
    %6067 = vmatpush1.msra.mxu0 0.0
    %6068 = vmatprep.subr.mxu0 0.0
    %6069 = vmatpush1.msra.mxu0 0.0
    %6070 = vmatprep.subr.mxu0 0.0
    %6071 = vmatpush1.msra.mxu0 0.0
    %6072 = vmatprep.subr.mxu0 0.0
    %6073 = vmatpush1.msra.mxu0 0.0
    %6074 = vmatprep.subr.mxu0 0.0
    %6075 = vmatpush1.msra.mxu0 0.0
    %6076 = vmatprep.subr.mxu0 0.0
    %6077 = vmatpush1.msra.mxu0 0.0
    %6078 = vmatprep.subr.mxu0 0.0
    %6079 = vmatpush1.msra.mxu0 0.0
    %6080 = vmatprep.subr.mxu0 0.0
    %6081 = vmatpush1.msra.mxu0 0.0
    %6082 = vmatprep.subr.mxu0 0.0
    %6083 = vmatpush1.msra.mxu0 0.0
    %6084 = vmatprep.subr.mxu0 0.0
    %6085 = vmatpush1.msra.mxu0 0.0
    %6086 = vmatprep.subr.mxu0 0.0
    %6087 = vmatpush1.msra.mxu0 0.0
    %6088 = vmatprep.subr.mxu0 0.0
    %6089 = vmatpush1.msra.mxu0 0.0
    %6090 = vmatprep.subr.mxu0 0.0
    %6091 = vmatpush1.msra.mxu0 0.0
    %6092 = vmatprep.subr.mxu0 0.0
    %6093 = vmatpush1.msra.mxu0 0.0
    %6094 = vmatprep.subr.mxu0 0.0
    %6095 = vmatpush1.msra.mxu0 0.0
    %6096 = vmatprep.subr.mxu0 0.0
    %6097 = vmatpush1.msra.mxu0 0.0
    %6098 = vmatprep.subr.mxu0 0.0
    %6099 = vmatpush1.msra.mxu0 0.0
    %6100 = vmatprep.subr.mxu0 0.0
    %6101 = vmatpush1.msra.mxu0 0.0
    %6102 = vmatprep.subr.mxu0 0.0
    %6103 = vmatpush1.msra.mxu0 0.0
    %6104 = vmatprep.subr.mxu0 0.0
    %6105 = vmatpush1.msra.mxu0 0.0
    %6106 = vmatprep.subr.mxu0 0.0
    %6107 = vmatpush1.msra.mxu0 0.0
    %6108 = vmatprep.subr.mxu0 0.0
    %6109 = vmatpush1.msra.mxu0 0.0
    %6110 = vmatprep.mubr.f32.mxu0 0.0
    %6111 = vmatmul.mubr.f32.gmra.mrb[0].mxu0 %v6044
    %v6112 = vpop.f32.mrb[0].mxu0
    %v6113 = vadd.f32 0.0, %v6112
    %v6114 = vpop.f32.mrb[0].mxu0
    %v6115 = vadd.f32 0.0, %v6114
    %6116 = vdwg.mxu0
    %v6119 = vrot.slane %v6113, 2
    %v6120 = vrot.slane %v6115, 2
    %v6123 = vadd.f32 %v6113, %v6119
    %v6124 = vadd.f32 %v6115, %v6120
    %v6125 = vxor.u32 %v6123, 2147483648
    %v6126 = vxor.u32 %v6124, 2147483648
    %v6127 = vmul.f32 %v6125, 1.442695
    %v6128 = vpow.pop %v6127
    %v6129 = vmul.f32 %v6126, 1.442695
    %v6130 = vpow.pop %v6129
    %v6131 = vadd.f32 %v6128, 1.0
    %v6132 = vadd.f32 %v6130, 1.0
    %v6133 = vrcp.pop %v6131
    %v6134 = vmul.f32 1.0, %v6133
    %v6135 = vrcp.pop %v6132
    %v6136 = vmul.f32 1.0, %v6135
    %v6139 = vcombine.low %v6134, %v6136
    %v6141 = vunpack.c.l.s4 1966171168
    %v6142 = vunpack.c.0.s8 %v6141
    %v6143 = vlaneseq
    %v6144 = vshrl.u32 %v6143, 7
    %v6145 = vsub.s32 %v6142, %v6144
    %v6146 = vrot.slane %v6139, %v6145
    %v6147 = vcombine.high %v6146, %v6146
    %v6149 = vunpack.c.l.s4 1966171168
    %v6150 = vunpack.c.0.s8 %v6149
    %v6151 = vlaneseq
    %v6152 = vshrl.u32 %v6151, 7
    %v6153 = vsub.s32 %v6150, %v6152
    %v6154 = vrot.slane %v6146, %v6153
    %v6156 = vunpack.c.l.s4 1966171168
    %v6157 = vunpack.c.0.s8 %v6156
    %v6158 = vlaneseq
    %v6159 = vshrl.u32 %v6158, 7
    %v6160 = vsub.s32 %v6157, %v6159
    %v6161 = vrot.slane %v6147, %v6160
    %v6162 = vlaneseq
    %v6163 = vshrl.u32 %v6162, 7
    %v6164 = vsub.s32 0, %v6163
    %v6165 = vrot.slane %v6154, %v6164
    %v6166 = vlaneseq
    %v6167 = vshrl.u32 %v6166, 7
    %v6168 = vsub.s32 1, %v6167
    %v6169 = vrot.slane %v6154, %v6168
    %v6170 = vlaneseq
    %v6171 = vshrl.u32 %v6170, 7
    %v6172 = vsub.s32 0, %v6171
    %v6173 = vrot.slane %v6161, %v6172
    %v6174 = vlaneseq
    %v6175 = vshrl.u32 %v6174, 7
    %v6176 = vsub.s32 1, %v6175
    %v6177 = vrot.slane %v6161, %v6176
    %v6178 = vcombine.low %v6165, %v6169
    %v6179 = vcombine.low %v6173, %v6177
    %v6182 = vmul.f32 %v5847, %v6178
    %v6183 = vmul.f32 %v5848, %v6179
    %v6186 = vcombine.high %v6182, %v6182
    %v6187 = vcombine.high %v6183, %v6183
    %v6190 = vsel %vm558, %v6182, 0.0
    %v6191 = vsel %vm558, %v6186, 0.0
    %v6192 = vadd.f32 %v6190, %v6191
    %6193 = vadd.xlane.f32.xlu0 %v6192
    %v6194 = vpop.xlane.xlu0 %6193
    %v6195 = vsel %vm558, %v6183, 0.0
    %v6196 = vsel %vm558, %v6187, 0.0
    %v6197 = vadd.f32 %v6195, %v6196
    %6198 = vadd.xlane.f32.xlu0 %v6197
    %v6199 = vpop.xlane.xlu0 %6198
    %v6200 = vrcp.pop 256.0
    %v6201 = vmul.f32 %v6194, %v6200
    %v6202 = vmul.f32 %v6199, %v6200
    %v6203 = vsel %vm558, %v6182, -inf
    %v6204 = vsel %vm558, %v6186, -inf
    %v6205 = vmax.f32 %v6203, %v6204
    %6206 = vmax.xlane.f32.xlu0 %v6205
    %v6207 = vpop.xlane.xlu0 %6206
    %v6208 = vsel %vm558, %v6183, -inf
    %v6209 = vsel %vm558, %v6187, -inf
    %v6210 = vmax.f32 %v6208, %v6209
    %6211 = vmax.xlane.f32.xlu0 %v6210
    %v6212 = vpop.xlane.xlu0 %6211
    %v6215 = vrot.slane %v6201, 5
    %v6216 = vrot.slane %v6202, 5
    %v6219 = vsel %vm555, 0.0, %v6215
    %v6220 = vsel %vm555, 0.0, %v6216
    %v6221 = vsel %vm418, %v6219, 0.0
    %v6222 = vsel %vm418, %v6220, 0.0
    %v6225 = vrot.slane %v6207, 5
    %v6226 = vrot.slane %v6212, 5
    %v6229 = vsel %vm555, 0.0, %v6225
    %v6230 = vsel %vm555, 0.0, %v6226
    %v6231 = vsel %vm418, %v6229, 0.0
    %v6232 = vsel %vm418, %v6230, 0.0
    %s6233 = sld [smem:[#allocation21]]
    %v6234 = vstv %s6233
    %v6235 = vmul.f32 %v6234, %v6221
    %v6236 = vmul.f32 %v6234, %v6222
    %v6237 = vadd.f32 %v6235, 0.0
    %v6238 = vadd.f32 %v6236, 0.0
    %s6239 = sld [smem:[#allocation21 + $0x80]]
    %v6240 = vstv %s6239
    %v6241 = vmul.f32 %v6240, %v6231
    %v6242 = vmul.f32 %v6240, %v6232
    %v6243 = vadd.f32 %v6237, %v6241
    %v6244 = vadd.f32 %v6238, %v6242
    %s6245 = sld [smem:[#allocation21 + $0x1]]
    %v6246 = vstv %s6245
    %v6247 = vmul.f32 %v6246, %v6221
    %v6248 = vmul.f32 %v6246, %v6222
    %v6251 = vrot.slane %v6247, 1
    %v6252 = vrot.slane %v6248, 1
    %v6255 = vadd.f32 %v6243, %v6251
    %v6256 = vadd.f32 %v6244, %v6252
    %s6257 = sld [smem:[#allocation21 + $0x81]]
    %v6258 = vstv %s6257
    %v6259 = vmul.f32 %v6258, %v6231
    %v6260 = vmul.f32 %v6258, %v6232
    %v6263 = vrot.slane %v6259, 1
    %v6264 = vrot.slane %v6260, 1
    %v6267 = vadd.f32 %v6255, %v6263
    %v6268 = vadd.f32 %v6256, %v6264
    %s6269 = sld [smem:[#allocation21 + $0x2]]
    %v6270 = vstv %s6269
    %v6271 = vmul.f32 %v6270, %v6221
    %v6272 = vmul.f32 %v6270, %v6222
    %v6275 = vrot.slane %v6271, 2
    %v6276 = vrot.slane %v6272, 2
    %v6279 = vadd.f32 %v6267, %v6275
    %v6280 = vadd.f32 %v6268, %v6276
    %s6281 = sld [smem:[#allocation21 + $0x82]]
    %v6282 = vstv %s6281
    %v6283 = vmul.f32 %v6282, %v6231
    %v6284 = vmul.f32 %v6282, %v6232
    %v6287 = vrot.slane %v6283, 2
    %v6288 = vrot.slane %v6284, 2
    %v6291 = vadd.f32 %v6279, %v6287
    %v6292 = vadd.f32 %v6280, %v6288
    %s6293 = sld [smem:[#allocation21 + $0x3]]
    %v6294 = vstv %s6293
    %v6295 = vmul.f32 %v6294, %v6221
    %v6296 = vmul.f32 %v6294, %v6222
    %v6299 = vrot.slane %v6295, 3
    %v6300 = vrot.slane %v6296, 3
    %v6303 = vadd.f32 %v6291, %v6299
    %v6304 = vadd.f32 %v6292, %v6300
    %s6305 = sld [smem:[#allocation21 + $0x83]]
    %v6306 = vstv %s6305
    %v6307 = vmul.f32 %v6306, %v6231
    %v6308 = vmul.f32 %v6306, %v6232
    %v6311 = vrot.slane %v6307, 3
    %v6312 = vrot.slane %v6308, 3
    %v6315 = vadd.f32 %v6303, %v6311
    %v6316 = vadd.f32 %v6304, %v6312
    %s6317 = sld [smem:[#allocation21 + $0x4]]
    %v6318 = vstv %s6317
    %v6319 = vmul.f32 %v6318, %v6221
    %v6320 = vmul.f32 %v6318, %v6222
    %v6323 = vrot.slane %v6319, 4
    %v6324 = vrot.slane %v6320, 4
    %v6327 = vadd.f32 %v6315, %v6323
    %v6328 = vadd.f32 %v6316, %v6324
    %s6329 = sld [smem:[#allocation21 + $0x84]]
    %v6330 = vstv %s6329
    %v6331 = vmul.f32 %v6330, %v6231
    %v6332 = vmul.f32 %v6330, %v6232
    %v6335 = vrot.slane %v6331, 4
    %v6336 = vrot.slane %v6332, 4
    %v6339 = vadd.f32 %v6327, %v6335
    %v6340 = vadd.f32 %v6328, %v6336
    %s6341 = sld [smem:[#allocation21 + $0x5]]
    %v6342 = vstv %s6341
    %v6343 = vmul.f32 %v6342, %v6221
    %v6344 = vmul.f32 %v6342, 0.0
    %v6345 = vmul.f32 %v6342, %v6222
    %v6349 = vrot.slane %v6343, 5
    %v6350 = vrot.slane %v6344, 5
    %v6351 = vsel %vm555, %v6349, %v6350
    %v6352 = vrot.slane %v6345, 5
    %v6353 = vsel %vm555, %v6352, %v6350
    %v6356 = vadd.f32 %v6339, %v6351
    %v6357 = vadd.f32 %v6340, %v6353
    %s6358 = sld [smem:[#allocation21 + $0x85]]
    %v6359 = vstv %s6358
    %v6360 = vmul.f32 %v6359, %v6231
    %v6361 = vmul.f32 %v6359, 0.0
    %v6362 = vmul.f32 %v6359, %v6232
    %v6366 = vrot.slane %v6360, 5
    %v6367 = vrot.slane %v6361, 5
    %v6368 = vsel %vm555, %v6366, %v6367
    %v6369 = vrot.slane %v6362, 5
    %v6370 = vsel %vm555, %v6369, %v6367
    %v6373 = vadd.f32 %v6356, %v6368
    %v6374 = vadd.f32 %v6357, %v6370
    %s6375 = sld [smem:[#allocation21 + $0x6]]
    %v6376 = vstv %s6375
    %v6377 = vmul.f32 %v6376, %v6221
    %v6378 = vmul.f32 %v6376, 0.0
    %v6379 = vmul.f32 %v6376, %v6222
    %v6383 = vrot.slane %v6377, 6
    %v6384 = vrot.slane %v6378, 6
    %v6385 = vsel %vm552, %v6383, %v6384
    %v6386 = vrot.slane %v6379, 6
    %v6387 = vsel %vm552, %v6386, %v6384
    %v6390 = vadd.f32 %v6373, %v6385
    %v6391 = vadd.f32 %v6374, %v6387
    %s6392 = sld [smem:[#allocation21 + $0x86]]
    %v6393 = vstv %s6392
    %v6394 = vmul.f32 %v6393, %v6231
    %v6395 = vmul.f32 %v6393, 0.0
    %v6396 = vmul.f32 %v6393, %v6232
    %v6400 = vrot.slane %v6394, 6
    %v6401 = vrot.slane %v6395, 6
    %v6402 = vsel %vm552, %v6400, %v6401
    %v6403 = vrot.slane %v6396, 6
    %v6404 = vsel %vm552, %v6403, %v6401
    %v6407 = vadd.f32 %v6390, %v6402
    %v6408 = vadd.f32 %v6391, %v6404
    %v6409 = vxor.u32 %v6407, 2147483648
    %v6410 = vxor.u32 %v6408, 2147483648
    %v6411 = vmul.f32 %v6409, 1.442695
    %v6412 = vpow.pop %v6411
    %v6413 = vmul.f32 %v6410, 1.442695
    %v6414 = vpow.pop %v6413
    %v6415 = vadd.f32 %v6412, 1.0
    %v6416 = vadd.f32 %v6414, 1.0
    %v6417 = vrcp.pop %v6415
    %v6418 = vmul.f32 1.0, %v6417
    %v6419 = vrcp.pop %v6416
    %v6420 = vmul.f32 1.0, %v6419
    %6422 = vset.pattern.permute.xlu0 0
    %6423 = vperm.xlu0 %6422, %v6418
    %v6424 = vpop.permute.xlu0 %6423
    %6426 = vset.pattern.permute.xlu0 0
    %6427 = vperm.xlu0 %6426, %v6420
    %v6428 = vpop.permute.xlu0 %6427
    %v6430 = vunpack.c.l.s4 839922192
    %v6431 = vunpack.c.0.s8 %v6430
    %v6432 = vlaneseq
    %v6433 = vshrl.u32 %v6432, 7
    %v6434 = vsub.s32 %v6431, %v6433
    %v6435 = vrot.slane %v6424, %v6434
    %v6437 = vunpack.c.l.s4 839922192
    %v6438 = vunpack.c.0.s8 %v6437
    %v6439 = vlaneseq
    %v6440 = vshrl.u32 %v6439, 7
    %v6441 = vsub.s32 %v6438, %v6440
    %v6442 = vrot.slane %v6428, %v6441
    %v6445 = vmul.f32 %v6182, %v6435
    %v6446 = vmul.f32 %v6183, %v6442
    %s6447 = smul.u32 4, 4
    %s6448 = smul.u32 %s6447, 32
    %s6449 = smul.u32 %s6448, 4
    %s6450 = sshll.u32 %s6449, 4
    %6451 = dma.done %s266, %s6450
    %v6454 = vlaneseq
    %v6455 = vshrl.u32 %v6454, 7
    %v6456 = vsub.s32 0, %v6455
    %v6457 = vrot.slane %v6445, %v6456
    %v6458 = vlaneseq
    %v6459 = vshrl.u32 %v6458, 7
    %v6460 = vsub.s32 4, %v6459
    %v6461 = vrot.slane %v6445, %v6460
    %v6462 = vlaneseq
    %v6463 = vshrl.u32 %v6462, 7
    %v6464 = vsub.s32 0, %v6463
    %v6465 = vrot.slane %v6446, %v6464
    %v6466 = vlaneseq
    %v6467 = vshrl.u32 %v6466, 7
    %v6468 = vsub.s32 4, %v6467
    %v6469 = vrot.slane %v6446, %v6468
    %v6474 = vpack.c.bf16 %v6457, %v6457
    %v6475 = vpack.c.bf16 %v6461, %v6461
    %v6476 = vpack.c.bf16 %v6465, %v6465
    %v6477 = vpack.c.bf16 %v6469, %v6469
    %v6478 = vld [vmem:[#allocation4] sm:$0xff]
    %v6479 = vld [vmem:[#allocation4 + $0x8] sm:$0xff]
    %v6480 = vld [vmem:[#allocation4 + $0x10] sm:$0xff]
    %v6481 = vld [vmem:[#allocation4 + $0x18] sm:$0xff]
    %v6482 = vld [vmem:[#allocation4 + $0x20] sm:$0xff]
    %v6483 = vld [vmem:[#allocation4 + $0x28] sm:$0xff]
    %v6484 = vld [vmem:[#allocation4 + $0x30] sm:$0xff]
    %v6485 = vld [vmem:[#allocation4 + $0x38] sm:$0xff]
    %v6486 = vld [vmem:[#allocation4 + $0x40] sm:$0xff]
    %v6487 = vld [vmem:[#allocation4 + $0x48] sm:$0xff]
    %v6488 = vld [vmem:[#allocation4 + $0x50] sm:$0xff]
    %v6489 = vld [vmem:[#allocation4 + $0x58] sm:$0xff]
    %v6490 = vld [vmem:[#allocation4 + $0x60] sm:$0xff]
    %v6491 = vld [vmem:[#allocation4 + $0x68] sm:$0xff]
    %v6492 = vld [vmem:[#allocation4 + $0x70] sm:$0xff]
    %v6493 = vld [vmem:[#allocation4 + $0x78] sm:$0xff]
    %v6494 = vld [vmem:[#allocation4 + $0x80] sm:$0xff]
    %v6495 = vld [vmem:[#allocation4 + $0x88] sm:$0xff]
    %v6496 = vld [vmem:[#allocation4 + $0x90] sm:$0xff]
    %v6497 = vld [vmem:[#allocation4 + $0x98] sm:$0xff]
    %v6498 = vld [vmem:[#allocation4 + $0xa0] sm:$0xff]
    %v6499 = vld [vmem:[#allocation4 + $0xa8] sm:$0xff]
    %v6500 = vld [vmem:[#allocation4 + $0xb0] sm:$0xff]
    %v6501 = vld [vmem:[#allocation4 + $0xb8] sm:$0xff]
    %v6502 = vld [vmem:[#allocation4 + $0xc0] sm:$0xff]
    %v6503 = vld [vmem:[#allocation4 + $0xc8] sm:$0xff]
    %v6504 = vld [vmem:[#allocation4 + $0xd0] sm:$0xff]
    %v6505 = vld [vmem:[#allocation4 + $0xd8] sm:$0xff]
    %v6506 = vld [vmem:[#allocation4 + $0xe0] sm:$0xff]
    %v6507 = vld [vmem:[#allocation4 + $0xe8] sm:$0xff]
    %v6508 = vld [vmem:[#allocation4 + $0xf0] sm:$0xff]
    %v6509 = vld [vmem:[#allocation4 + $0xf8] sm:$0xff]
    %v6510 = vld [vmem:[#allocation4 + $0x100] sm:$0xff]
    %v6511 = vld [vmem:[#allocation4 + $0x108] sm:$0xff]
    %v6512 = vld [vmem:[#allocation4 + $0x110] sm:$0xff]
    %v6513 = vld [vmem:[#allocation4 + $0x118] sm:$0xff]
    %v6514 = vld [vmem:[#allocation4 + $0x120] sm:$0xff]
    %v6515 = vld [vmem:[#allocation4 + $0x128] sm:$0xff]
    %v6516 = vld [vmem:[#allocation4 + $0x130] sm:$0xff]
    %v6517 = vld [vmem:[#allocation4 + $0x138] sm:$0xff]
    %v6518 = vld [vmem:[#allocation4 + $0x140] sm:$0xff]
    %v6519 = vld [vmem:[#allocation4 + $0x148] sm:$0xff]
    %v6520 = vld [vmem:[#allocation4 + $0x150] sm:$0xff]
    %v6521 = vld [vmem:[#allocation4 + $0x158] sm:$0xff]
    %v6522 = vld [vmem:[#allocation4 + $0x160] sm:$0xff]
    %v6523 = vld [vmem:[#allocation4 + $0x168] sm:$0xff]
    %v6524 = vld [vmem:[#allocation4 + $0x170] sm:$0xff]
    %v6525 = vld [vmem:[#allocation4 + $0x178] sm:$0xff]
    %v6526 = vld [vmem:[#allocation4 + $0x180] sm:$0xff]
    %v6527 = vld [vmem:[#allocation4 + $0x188] sm:$0xff]
    %v6528 = vld [vmem:[#allocation4 + $0x190] sm:$0xff]
    %v6529 = vld [vmem:[#allocation4 + $0x198] sm:$0xff]
    %v6530 = vld [vmem:[#allocation4 + $0x1a0] sm:$0xff]
    %v6531 = vld [vmem:[#allocation4 + $0x1a8] sm:$0xff]
    %v6532 = vld [vmem:[#allocation4 + $0x1b0] sm:$0xff]
    %v6533 = vld [vmem:[#allocation4 + $0x1b8] sm:$0xff]
    %v6534 = vld [vmem:[#allocation4 + $0x1c0] sm:$0xff]
    %v6535 = vld [vmem:[#allocation4 + $0x1c8] sm:$0xff]
    %v6536 = vld [vmem:[#allocation4 + $0x1d0] sm:$0xff]
    %v6537 = vld [vmem:[#allocation4 + $0x1d8] sm:$0xff]
    %v6538 = vld [vmem:[#allocation4 + $0x1e0] sm:$0xff]
    %v6539 = vld [vmem:[#allocation4 + $0x1e8] sm:$0xff]
    %v6540 = vld [vmem:[#allocation4 + $0x1f0] sm:$0xff]
    %v6541 = vld [vmem:[#allocation4 + $0x1f8] sm:$0xff]
    %v6542 = vlaneseq
    %v6543 = vshrl.u32 %v6542, 7
    %v6544 = vsub.s32 1, %v6543
    %v6545 = vrot.slane %v6445, %v6544
    %v6546 = vlaneseq
    %v6547 = vshrl.u32 %v6546, 7
    %v6548 = vsub.s32 5, %v6547
    %v6549 = vrot.slane %v6445, %v6548
    %v6550 = vlaneseq
    %v6551 = vshrl.u32 %v6550, 7
    %v6552 = vsub.s32 1, %v6551
    %v6553 = vrot.slane %v6446, %v6552
    %v6554 = vlaneseq
    %v6555 = vshrl.u32 %v6554, 7
    %v6556 = vsub.s32 5, %v6555
    %v6557 = vrot.slane %v6446, %v6556
    %v6562 = vpack.c.bf16 %v6545, %v6545
    %v6563 = vpack.c.bf16 %v6549, %v6549
    %v6564 = vpack.c.bf16 %v6553, %v6553
    %v6565 = vpack.c.bf16 %v6557, %v6557
    %s6566 = scalar_lea.vmem [#allocation4], 512
    %v6567 = vld [vmem:[%s6566] sm:$0xff]
    %v6568 = vld [vmem:[%s6566 + $0x8] sm:$0xff]
    %v6569 = vld [vmem:[%s6566 + $0x10] sm:$0xff]
    %v6570 = vld [vmem:[%s6566 + $0x18] sm:$0xff]
    %v6571 = vld [vmem:[%s6566 + $0x20] sm:$0xff]
    %v6572 = vld [vmem:[%s6566 + $0x28] sm:$0xff]
    %v6573 = vld [vmem:[%s6566 + $0x30] sm:$0xff]
    %v6574 = vld [vmem:[%s6566 + $0x38] sm:$0xff]
    %v6575 = vld [vmem:[%s6566 + $0x40] sm:$0xff]
    %v6576 = vld [vmem:[%s6566 + $0x48] sm:$0xff]
    %v6577 = vld [vmem:[%s6566 + $0x50] sm:$0xff]
    %v6578 = vld [vmem:[%s6566 + $0x58] sm:$0xff]
    %v6579 = vld [vmem:[%s6566 + $0x60] sm:$0xff]
    %v6580 = vld [vmem:[%s6566 + $0x68] sm:$0xff]
    %v6581 = vld [vmem:[%s6566 + $0x70] sm:$0xff]
    %v6582 = vld [vmem:[%s6566 + $0x78] sm:$0xff]
    %v6583 = vld [vmem:[%s6566 + $0x80] sm:$0xff]
    %v6584 = vld [vmem:[%s6566 + $0x88] sm:$0xff]
    %v6585 = vld [vmem:[%s6566 + $0x90] sm:$0xff]
    %v6586 = vld [vmem:[%s6566 + $0x98] sm:$0xff]
    %v6587 = vld [vmem:[%s6566 + $0xa0] sm:$0xff]
    %v6588 = vld [vmem:[%s6566 + $0xa8] sm:$0xff]
    %v6589 = vld [vmem:[%s6566 + $0xb0] sm:$0xff]
    %v6590 = vld [vmem:[%s6566 + $0xb8] sm:$0xff]
    %v6591 = vld [vmem:[%s6566 + $0xc0] sm:$0xff]
    %v6592 = vld [vmem:[%s6566 + $0xc8] sm:$0xff]
    %v6593 = vld [vmem:[%s6566 + $0xd0] sm:$0xff]
    %v6594 = vld [vmem:[%s6566 + $0xd8] sm:$0xff]
    %v6595 = vld [vmem:[%s6566 + $0xe0] sm:$0xff]
    %v6596 = vld [vmem:[%s6566 + $0xe8] sm:$0xff]
    %v6597 = vld [vmem:[%s6566 + $0xf0] sm:$0xff]
    %v6598 = vld [vmem:[%s6566 + $0xf8] sm:$0xff]
    %v6599 = vld [vmem:[%s6566 + $0x100] sm:$0xff]
    %v6600 = vld [vmem:[%s6566 + $0x108] sm:$0xff]
    %v6601 = vld [vmem:[%s6566 + $0x110] sm:$0xff]
    %v6602 = vld [vmem:[%s6566 + $0x118] sm:$0xff]
    %v6603 = vld [vmem:[%s6566 + $0x120] sm:$0xff]
    %v6604 = vld [vmem:[%s6566 + $0x128] sm:$0xff]
    %v6605 = vld [vmem:[%s6566 + $0x130] sm:$0xff]
    %v6606 = vld [vmem:[%s6566 + $0x138] sm:$0xff]
    %v6607 = vld [vmem:[%s6566 + $0x140] sm:$0xff]
    %v6608 = vld [vmem:[%s6566 + $0x148] sm:$0xff]
    %v6609 = vld [vmem:[%s6566 + $0x150] sm:$0xff]
    %v6610 = vld [vmem:[%s6566 + $0x158] sm:$0xff]
    %v6611 = vld [vmem:[%s6566 + $0x160] sm:$0xff]
    %v6612 = vld [vmem:[%s6566 + $0x168] sm:$0xff]
    %v6613 = vld [vmem:[%s6566 + $0x170] sm:$0xff]
    %v6614 = vld [vmem:[%s6566 + $0x178] sm:$0xff]
    %v6615 = vld [vmem:[%s6566 + $0x180] sm:$0xff]
    %v6616 = vld [vmem:[%s6566 + $0x188] sm:$0xff]
    %v6617 = vld [vmem:[%s6566 + $0x190] sm:$0xff]
    %v6618 = vld [vmem:[%s6566 + $0x198] sm:$0xff]
    %v6619 = vld [vmem:[%s6566 + $0x1a0] sm:$0xff]
    %v6620 = vld [vmem:[%s6566 + $0x1a8] sm:$0xff]
    %v6621 = vld [vmem:[%s6566 + $0x1b0] sm:$0xff]
    %v6622 = vld [vmem:[%s6566 + $0x1b8] sm:$0xff]
    %v6623 = vld [vmem:[%s6566 + $0x1c0] sm:$0xff]
    %v6624 = vld [vmem:[%s6566 + $0x1c8] sm:$0xff]
    %v6625 = vld [vmem:[%s6566 + $0x1d0] sm:$0xff]
    %v6626 = vld [vmem:[%s6566 + $0x1d8] sm:$0xff]
    %v6627 = vld [vmem:[%s6566 + $0x1e0] sm:$0xff]
    %v6628 = vld [vmem:[%s6566 + $0x1e8] sm:$0xff]
    %v6629 = vld [vmem:[%s6566 + $0x1f0] sm:$0xff]
    %v6630 = vld [vmem:[%s6566 + $0x1f8] sm:$0xff]
    %v6635 = vunpack.c.l.b16 %v6562
    %v6636 = vunpack.c.l.b16 %v6563
    %v6637 = vunpack.c.l.b16 %v6564
    %v6638 = vunpack.c.l.b16 %v6565
    %v6639 = vrot.slane %v6635, 1
    %v6640 = vsel %vm2841, %v6637, %v6639
    %v6641 = vrot.slane %v6636, 1
    %v6642 = vsel %vm2841, %v6638, %v6641
    %v6643 = vpack.c.b16 %v6640, %v6640
    %v6644 = vpack.c.b16 %v6642, %v6642
    %6647 = vmatprep.subr.bf16.mxu0 %v6568
    %6648 = vmatpush1.bf16.msra.mxu0 %v6567
    %6649 = vmatprep.subr.bf16.mxu0 %v6572
    %6650 = vmatpush1.bf16.msra.mxu0 %v6571
    %6651 = vmatprep.subr.bf16.mxu0 %v6576
    %6652 = vmatpush1.bf16.msra.mxu0 %v6575
    %6653 = vmatprep.subr.bf16.mxu0 %v6580
    %6654 = vmatpush1.bf16.msra.mxu0 %v6579
    %6655 = vmatprep.subr.bf16.mxu0 %v6584
    %6656 = vmatpush1.bf16.msra.mxu0 %v6583
    %6657 = vmatprep.subr.bf16.mxu0 %v6588
    %6658 = vmatpush1.bf16.msra.mxu0 %v6587
    %6659 = vmatprep.subr.bf16.mxu0 %v6592
    %6660 = vmatpush1.bf16.msra.mxu0 %v6591
    %6661 = vmatprep.subr.bf16.mxu0 %v6596
    %6662 = vmatpush1.bf16.msra.mxu0 %v6595
    %6663 = vmatprep.subr.bf16.mxu0 %v6600
    %6664 = vmatpush1.bf16.msra.mxu0 %v6599
    %6665 = vmatprep.subr.bf16.mxu0 %v6604
    %6666 = vmatpush1.bf16.msra.mxu0 %v6603
    %6667 = vmatprep.subr.bf16.mxu0 %v6608
    %6668 = vmatpush1.bf16.msra.mxu0 %v6607
    %6669 = vmatprep.subr.bf16.mxu0 %v6612
    %6670 = vmatpush1.bf16.msra.mxu0 %v6611
    %6671 = vmatprep.subr.bf16.mxu0 %v6616
    %6672 = vmatpush1.bf16.msra.mxu0 %v6615
    %6673 = vmatprep.subr.bf16.mxu0 %v6620
    %6674 = vmatpush1.bf16.msra.mxu0 %v6619
    %6675 = vmatprep.subr.bf16.mxu0 %v6624
    %6676 = vmatpush1.bf16.msra.mxu0 %v6623
    %6677 = vmatprep.subr.bf16.mxu0 %v6628
    %6678 = vmatpush1.bf16.msra.mxu0 %v6627
    %6679 = vmatprep.mubr.bf16.mxu0 %v6644
    %6680 = vmatmul.mubr.bf16.gmra.mrb[0].mxu0 %v6643
    %v6681 = vpop.f32.mrb[0].mxu0
    %v6682 = vadd.f32 0.0, %v6681
    %v6683 = vpop.f32.mrb[0].mxu0
    %v6684 = vadd.f32 0.0, %v6683
    %v6685 = vpop.f32.mrb[0].mxu0
    %v6686 = vpop.f32.mrb[0].mxu0
    %6687 = vdwg.mxu0
    %6688 = vmatprep.subr.bf16.mxu0 %v6570
    %6689 = vmatpush1.bf16.msra.mxu0 %v6569
    %6690 = vmatprep.subr.bf16.mxu0 %v6574
    %6691 = vmatpush1.bf16.msra.mxu0 %v6573
    %6692 = vmatprep.subr.bf16.mxu0 %v6578
    %6693 = vmatpush1.bf16.msra.mxu0 %v6577
    %6694 = vmatprep.subr.bf16.mxu0 %v6582
    %6695 = vmatpush1.bf16.msra.mxu0 %v6581
    %6696 = vmatprep.subr.bf16.mxu0 %v6586
    %6697 = vmatpush1.bf16.msra.mxu0 %v6585
    %6698 = vmatprep.subr.bf16.mxu0 %v6590
    %6699 = vmatpush1.bf16.msra.mxu0 %v6589
    %6700 = vmatprep.subr.bf16.mxu0 %v6594
    %6701 = vmatpush1.bf16.msra.mxu0 %v6593
    %6702 = vmatprep.subr.bf16.mxu0 %v6598
    %6703 = vmatpush1.bf16.msra.mxu0 %v6597
    %6704 = vmatprep.subr.bf16.mxu0 %v6602
    %6705 = vmatpush1.bf16.msra.mxu0 %v6601
    %6706 = vmatprep.subr.bf16.mxu0 %v6606
    %6707 = vmatpush1.bf16.msra.mxu0 %v6605
    %6708 = vmatprep.subr.bf16.mxu0 %v6610
    %6709 = vmatpush1.bf16.msra.mxu0 %v6609
    %6710 = vmatprep.subr.bf16.mxu0 %v6614
    %6711 = vmatpush1.bf16.msra.mxu0 %v6613
    %6712 = vmatprep.subr.bf16.mxu0 %v6618
    %6713 = vmatpush1.bf16.msra.mxu0 %v6617
    %6714 = vmatprep.subr.bf16.mxu0 %v6622
    %6715 = vmatpush1.bf16.msra.mxu0 %v6621
    %6716 = vmatprep.subr.bf16.mxu0 %v6626
    %6717 = vmatpush1.bf16.msra.mxu0 %v6625
    %6718 = vmatprep.subr.bf16.mxu0 %v6630
    %6719 = vmatpush1.bf16.msra.mxu0 %v6629
    %6720 = vmatprep.mubr.bf16.mxu0 %v6644
    %6721 = vmatmul.mubr.bf16.gmra.mrb[0].mxu0 %v6643
    %v6722 = vpop.f32.mrb[0].mxu0
    %v6723 = vadd.f32 0.0, %v6722
    %v6724 = vpop.f32.mrb[0].mxu0
    %v6725 = vadd.f32 0.0, %v6724
    %v6726 = vpop.f32.mrb[0].mxu0
    %v6727 = vpop.f32.mrb[0].mxu0
    %6728 = vdwg.mxu0
    %v6733 = vunpack.c.l.b16 %v6474
    %v6734 = vunpack.c.l.b16 %v6475
    %v6735 = vunpack.c.l.b16 %v6476
    %v6736 = vunpack.c.l.b16 %v6477
    %v6737 = vrot.slane %v6735, 7
    %v6738 = vsel %vm2841, %v6737, %v6733
    %v6739 = vrot.slane %v6736, 7
    %v6740 = vsel %vm2841, %v6739, %v6734
    %v6741 = vpack.c.b16 %v6738, %v6738
    %v6742 = vpack.c.b16 %v6740, %v6740
    %6745 = vmatprep.subr.bf16.mxu0 %v6479
    %6746 = vmatpush1.bf16.msra.mxu0 %v6478
    %6747 = vmatprep.subr.bf16.mxu0 %v6483
    %6748 = vmatpush1.bf16.msra.mxu0 %v6482
    %6749 = vmatprep.subr.bf16.mxu0 %v6487
    %6750 = vmatpush1.bf16.msra.mxu0 %v6486
    %6751 = vmatprep.subr.bf16.mxu0 %v6491
    %6752 = vmatpush1.bf16.msra.mxu0 %v6490
    %6753 = vmatprep.subr.bf16.mxu0 %v6495
    %6754 = vmatpush1.bf16.msra.mxu0 %v6494
    %6755 = vmatprep.subr.bf16.mxu0 %v6499
    %6756 = vmatpush1.bf16.msra.mxu0 %v6498
    %6757 = vmatprep.subr.bf16.mxu0 %v6503
    %6758 = vmatpush1.bf16.msra.mxu0 %v6502
    %6759 = vmatprep.subr.bf16.mxu0 %v6507
    %6760 = vmatpush1.bf16.msra.mxu0 %v6506
    %6761 = vmatprep.subr.bf16.mxu0 %v6511
    %6762 = vmatpush1.bf16.msra.mxu0 %v6510
    %6763 = vmatprep.subr.bf16.mxu0 %v6515
    %6764 = vmatpush1.bf16.msra.mxu0 %v6514
    %6765 = vmatprep.subr.bf16.mxu0 %v6519
    %6766 = vmatpush1.bf16.msra.mxu0 %v6518
    %6767 = vmatprep.subr.bf16.mxu0 %v6523
    %6768 = vmatpush1.bf16.msra.mxu0 %v6522
    %6769 = vmatprep.subr.bf16.mxu0 %v6527
    %6770 = vmatpush1.bf16.msra.mxu0 %v6526
    %6771 = vmatprep.subr.bf16.mxu0 %v6531
    %6772 = vmatpush1.bf16.msra.mxu0 %v6530
    %6773 = vmatprep.subr.bf16.mxu0 %v6535
    %6774 = vmatpush1.bf16.msra.mxu0 %v6534
    %6775 = vmatprep.subr.bf16.mxu0 %v6539
    %6776 = vmatpush1.bf16.msra.mxu0 %v6538
    %6777 = vmatprep.mubr.bf16.mxu0 %v6742
    %6778 = vmatmul.mubr.bf16.gmra.mrb[0].mxu0 %v6741
    %v6779 = vpop.f32.mrb[0].mxu0
    %v6780 = vadd.f32 %v6682, %v6779
    %v6781 = vpop.f32.mrb[0].mxu0
    %v6782 = vadd.f32 %v6684, %v6781
    %v6783 = vpop.f32.mrb[0].mxu0
    %v6784 = vpop.f32.mrb[0].mxu0
    %6785 = vdwg.mxu0
    %6786 = vmatprep.subr.bf16.mxu0 %v6481
    %6787 = vmatpush1.bf16.msra.mxu0 %v6480
    %6788 = vmatprep.subr.bf16.mxu0 %v6485
    %6789 = vmatpush1.bf16.msra.mxu0 %v6484
    %6790 = vmatprep.subr.bf16.mxu0 %v6489
    %6791 = vmatpush1.bf16.msra.mxu0 %v6488
    %6792 = vmatprep.subr.bf16.mxu0 %v6493
    %6793 = vmatpush1.bf16.msra.mxu0 %v6492
    %6794 = vmatprep.subr.bf16.mxu0 %v6497
    %6795 = vmatpush1.bf16.msra.mxu0 %v6496
    %6796 = vmatprep.subr.bf16.mxu0 %v6501
    %6797 = vmatpush1.bf16.msra.mxu0 %v6500
    %6798 = vmatprep.subr.bf16.mxu0 %v6505
    %6799 = vmatpush1.bf16.msra.mxu0 %v6504
    %6800 = vmatprep.subr.bf16.mxu0 %v6509
    %6801 = vmatpush1.bf16.msra.mxu0 %v6508
    %6802 = vmatprep.subr.bf16.mxu0 %v6513
    %6803 = vmatpush1.bf16.msra.mxu0 %v6512
    %6804 = vmatprep.subr.bf16.mxu0 %v6517
    %6805 = vmatpush1.bf16.msra.mxu0 %v6516
    %6806 = vmatprep.subr.bf16.mxu0 %v6521
    %6807 = vmatpush1.bf16.msra.mxu0 %v6520
    %6808 = vmatprep.subr.bf16.mxu0 %v6525
    %6809 = vmatpush1.bf16.msra.mxu0 %v6524
    %6810 = vmatprep.subr.bf16.mxu0 %v6529
    %6811 = vmatpush1.bf16.msra.mxu0 %v6528
    %6812 = vmatprep.subr.bf16.mxu0 %v6533
    %6813 = vmatpush1.bf16.msra.mxu0 %v6532
    %6814 = vmatprep.subr.bf16.mxu0 %v6537
    %6815 = vmatpush1.bf16.msra.mxu0 %v6536
    %6816 = vmatprep.subr.bf16.mxu0 %v6541
    %6817 = vmatpush1.bf16.msra.mxu0 %v6540
    %6818 = vmatprep.mubr.bf16.mxu0 %v6742
    %6819 = vmatmul.mubr.bf16.gmra.mrb[0].mxu0 %v6741
    %v6820 = vpop.f32.mrb[0].mxu0
    %v6821 = vadd.f32 %v6723, %v6820
    %v6822 = vpop.f32.mrb[0].mxu0
    %v6823 = vadd.f32 %v6725, %v6822
    %v6824 = vpop.f32.mrb[0].mxu0
    %v6825 = vpop.f32.mrb[0].mxu0
    %6826 = vdwg.mxu0
    %v6827 = vlaneseq
    %v6828 = vshrl.u32 %v6827, 7
    %v6829 = vsub.s32 2, %v6828
    %v6830 = vrot.slane %v6445, %v6829
    %v6831 = vlaneseq
    %v6832 = vshrl.u32 %v6831, 7
    %v6833 = vsub.s32 6, %v6832
    %v6834 = vrot.slane %v6445, %v6833
    %v6835 = vlaneseq
    %v6836 = vshrl.u32 %v6835, 7
    %v6837 = vsub.s32 2, %v6836
    %v6838 = vrot.slane %v6446, %v6837
    %v6839 = vlaneseq
    %v6840 = vshrl.u32 %v6839, 7
    %v6841 = vsub.s32 6, %v6840
    %v6842 = vrot.slane %v6446, %v6841
    %v6847 = vpack.c.bf16 %v6830, %v6830
    %v6848 = vpack.c.bf16 %v6834, %v6834
    %v6849 = vpack.c.bf16 %v6838, %v6838
    %v6850 = vpack.c.bf16 %v6842, %v6842
    %s6851 = scalar_lea.vmem [#allocation4], 1024
    %v6852 = vld [vmem:[%s6851] sm:$0xff]
    %v6853 = vld [vmem:[%s6851 + $0x8] sm:$0xff]
    %v6854 = vld [vmem:[%s6851 + $0x10] sm:$0xff]
    %v6855 = vld [vmem:[%s6851 + $0x18] sm:$0xff]
    %v6856 = vld [vmem:[%s6851 + $0x20] sm:$0xff]
    %v6857 = vld [vmem:[%s6851 + $0x28] sm:$0xff]
    %v6858 = vld [vmem:[%s6851 + $0x30] sm:$0xff]
    %v6859 = vld [vmem:[%s6851 + $0x38] sm:$0xff]
    %v6860 = vld [vmem:[%s6851 + $0x40] sm:$0xff]
    %v6861 = vld [vmem:[%s6851 + $0x48] sm:$0xff]
    %v6862 = vld [vmem:[%s6851 + $0x50] sm:$0xff]
    %v6863 = vld [vmem:[%s6851 + $0x58] sm:$0xff]
    %v6864 = vld [vmem:[%s6851 + $0x60] sm:$0xff]
    %v6865 = vld [vmem:[%s6851 + $0x68] sm:$0xff]
    %v6866 = vld [vmem:[%s6851 + $0x70] sm:$0xff]
    %v6867 = vld [vmem:[%s6851 + $0x78] sm:$0xff]
    %v6868 = vld [vmem:[%s6851 + $0x80] sm:$0xff]
    %v6869 = vld [vmem:[%s6851 + $0x88] sm:$0xff]
    %v6870 = vld [vmem:[%s6851 + $0x90] sm:$0xff]
    %v6871 = vld [vmem:[%s6851 + $0x98] sm:$0xff]
    %v6872 = vld [vmem:[%s6851 + $0xa0] sm:$0xff]
    %v6873 = vld [vmem:[%s6851 + $0xa8] sm:$0xff]
    %v6874 = vld [vmem:[%s6851 + $0xb0] sm:$0xff]
    %v6875 = vld [vmem:[%s6851 + $0xb8] sm:$0xff]
    %v6876 = vld [vmem:[%s6851 + $0xc0] sm:$0xff]
    %v6877 = vld [vmem:[%s6851 + $0xc8] sm:$0xff]
    %v6878 = vld [vmem:[%s6851 + $0xd0] sm:$0xff]
    %v6879 = vld [vmem:[%s6851 + $0xd8] sm:$0xff]
    %v6880 = vld [vmem:[%s6851 + $0xe0] sm:$0xff]
    %v6881 = vld [vmem:[%s6851 + $0xe8] sm:$0xff]
    %v6882 = vld [vmem:[%s6851 + $0xf0] sm:$0xff]
    %v6883 = vld [vmem:[%s6851 + $0xf8] sm:$0xff]
    %v6884 = vld [vmem:[%s6851 + $0x100] sm:$0xff]
    %v6885 = vld [vmem:[%s6851 + $0x108] sm:$0xff]
    %v6886 = vld [vmem:[%s6851 + $0x110] sm:$0xff]
    %v6887 = vld [vmem:[%s6851 + $0x118] sm:$0xff]
    %v6888 = vld [vmem:[%s6851 + $0x120] sm:$0xff]
    %v6889 = vld [vmem:[%s6851 + $0x128] sm:$0xff]
    %v6890 = vld [vmem:[%s6851 + $0x130] sm:$0xff]
    %v6891 = vld [vmem:[%s6851 + $0x138] sm:$0xff]
    %v6892 = vld [vmem:[%s6851 + $0x140] sm:$0xff]
    %v6893 = vld [vmem:[%s6851 + $0x148] sm:$0xff]
    %v6894 = vld [vmem:[%s6851 + $0x150] sm:$0xff]
    %v6895 = vld [vmem:[%s6851 + $0x158] sm:$0xff]
    %v6896 = vld [vmem:[%s6851 + $0x160] sm:$0xff]
    %v6897 = vld [vmem:[%s6851 + $0x168] sm:$0xff]
    %v6898 = vld [vmem:[%s6851 + $0x170] sm:$0xff]
    %v6899 = vld [vmem:[%s6851 + $0x178] sm:$0xff]
    %v6900 = vld [vmem:[%s6851 + $0x180] sm:$0xff]
    %v6901 = vld [vmem:[%s6851 + $0x188] sm:$0xff]
    %v6902 = vld [vmem:[%s6851 + $0x190] sm:$0xff]
    %v6903 = vld [vmem:[%s6851 + $0x198] sm:$0xff]
    %v6904 = vld [vmem:[%s6851 + $0x1a0] sm:$0xff]
    %v6905 = vld [vmem:[%s6851 + $0x1a8] sm:$0xff]
    %v6906 = vld [vmem:[%s6851 + $0x1b0] sm:$0xff]
    %v6907 = vld [vmem:[%s6851 + $0x1b8] sm:$0xff]
    %v6908 = vld [vmem:[%s6851 + $0x1c0] sm:$0xff]
    %v6909 = vld [vmem:[%s6851 + $0x1c8] sm:$0xff]
    %v6910 = vld [vmem:[%s6851 + $0x1d0] sm:$0xff]
    %v6911 = vld [vmem:[%s6851 + $0x1d8] sm:$0xff]
    %v6912 = vld [vmem:[%s6851 + $0x1e0] sm:$0xff]
    %v6913 = vld [vmem:[%s6851 + $0x1e8] sm:$0xff]
    %v6914 = vld [vmem:[%s6851 + $0x1f0] sm:$0xff]
    %v6915 = vld [vmem:[%s6851 + $0x1f8] sm:$0xff]
    %v6920 = vunpack.c.l.b16 %v6847
    %v6921 = vunpack.c.l.b16 %v6848
    %v6922 = vunpack.c.l.b16 %v6849
    %v6923 = vunpack.c.l.b16 %v6850
    %v6924 = vrot.slane %v6920, 2
    %v6925 = vrot.slane %v6922, 1
    %v6926 = vsel %vm2841, %v6925, %v6924
    %v6927 = vrot.slane %v6921, 2
    %v6928 = vrot.slane %v6923, 1
    %v6929 = vsel %vm2841, %v6928, %v6927
    %v6930 = vpack.c.b16 %v6926, %v6926
    %v6931 = vpack.c.b16 %v6929, %v6929
    %6934 = vmatprep.subr.bf16.mxu0 %v6853
    %6935 = vmatpush1.bf16.msra.mxu0 %v6852
    %6936 = vmatprep.subr.bf16.mxu0 %v6857
    %6937 = vmatpush1.bf16.msra.mxu0 %v6856
    %6938 = vmatprep.subr.bf16.mxu0 %v6861
    %6939 = vmatpush1.bf16.msra.mxu0 %v6860
    %6940 = vmatprep.subr.bf16.mxu0 %v6865
    %6941 = vmatpush1.bf16.msra.mxu0 %v6864
    %6942 = vmatprep.subr.bf16.mxu0 %v6869
    %6943 = vmatpush1.bf16.msra.mxu0 %v6868
    %6944 = vmatprep.subr.bf16.mxu0 %v6873
    %6945 = vmatpush1.bf16.msra.mxu0 %v6872
    %6946 = vmatprep.subr.bf16.mxu0 %v6877
    %6947 = vmatpush1.bf16.msra.mxu0 %v6876
    %6948 = vmatprep.subr.bf16.mxu0 %v6881
    %6949 = vmatpush1.bf16.msra.mxu0 %v6880
    %6950 = vmatprep.subr.bf16.mxu0 %v6885
    %6951 = vmatpush1.bf16.msra.mxu0 %v6884
    %6952 = vmatprep.subr.bf16.mxu0 %v6889
    %6953 = vmatpush1.bf16.msra.mxu0 %v6888
    %6954 = vmatprep.subr.bf16.mxu0 %v6893
    %6955 = vmatpush1.bf16.msra.mxu0 %v6892
    %6956 = vmatprep.subr.bf16.mxu0 %v6897
    %6957 = vmatpush1.bf16.msra.mxu0 %v6896
    %6958 = vmatprep.subr.bf16.mxu0 %v6901
    %6959 = vmatpush1.bf16.msra.mxu0 %v6900
    %6960 = vmatprep.subr.bf16.mxu0 %v6905
    %6961 = vmatpush1.bf16.msra.mxu0 %v6904
    %6962 = vmatprep.subr.bf16.mxu0 %v6909
    %6963 = vmatpush1.bf16.msra.mxu0 %v6908
    %6964 = vmatprep.subr.bf16.mxu0 %v6913
    %6965 = vmatpush1.bf16.msra.mxu0 %v6912
    %6966 = vmatprep.mubr.bf16.mxu0 %v6931
    %6967 = vmatmul.mubr.bf16.gmra.mrb[0].mxu0 %v6930
    %v6968 = vpop.f32.mrb[0].mxu0
    %v6969 = vadd.f32 0.0, %v6968
    %v6970 = vpop.f32.mrb[0].mxu0
    %v6971 = vadd.f32 0.0, %v6970
    %v6972 = vpop.f32.mrb[0].mxu0
    %v6973 = vpop.f32.mrb[0].mxu0
    %6974 = vdwg.mxu0
    %6975 = vmatprep.subr.bf16.mxu0 %v6855
    %6976 = vmatpush1.bf16.msra.mxu0 %v6854
    %6977 = vmatprep.subr.bf16.mxu0 %v6859
    %6978 = vmatpush1.bf16.msra.mxu0 %v6858
    %6979 = vmatprep.subr.bf16.mxu0 %v6863
    %6980 = vmatpush1.bf16.msra.mxu0 %v6862
    %6981 = vmatprep.subr.bf16.mxu0 %v6867
    %6982 = vmatpush1.bf16.msra.mxu0 %v6866
    %6983 = vmatprep.subr.bf16.mxu0 %v6871
    %6984 = vmatpush1.bf16.msra.mxu0 %v6870
    %6985 = vmatprep.subr.bf16.mxu0 %v6875
    %6986 = vmatpush1.bf16.msra.mxu0 %v6874
    %6987 = vmatprep.subr.bf16.mxu0 %v6879
    %6988 = vmatpush1.bf16.msra.mxu0 %v6878
    %6989 = vmatprep.subr.bf16.mxu0 %v6883
    %6990 = vmatpush1.bf16.msra.mxu0 %v6882
    %6991 = vmatprep.subr.bf16.mxu0 %v6887
    %6992 = vmatpush1.bf16.msra.mxu0 %v6886
    %6993 = vmatprep.subr.bf16.mxu0 %v6891
    %6994 = vmatpush1.bf16.msra.mxu0 %v6890
    %6995 = vmatprep.subr.bf16.mxu0 %v6895
    %6996 = vmatpush1.bf16.msra.mxu0 %v6894
    %6997 = vmatprep.subr.bf16.mxu0 %v6899
    %6998 = vmatpush1.bf16.msra.mxu0 %v6898
    %6999 = vmatprep.subr.bf16.mxu0 %v6903
    %7000 = vmatpush1.bf16.msra.mxu0 %v6902
    %7001 = vmatprep.subr.bf16.mxu0 %v6907
    %7002 = vmatpush1.bf16.msra.mxu0 %v6906
    %7003 = vmatprep.subr.bf16.mxu0 %v6911
    %7004 = vmatpush1.bf16.msra.mxu0 %v6910
    %7005 = vmatprep.subr.bf16.mxu0 %v6915
    %7006 = vmatpush1.bf16.msra.mxu0 %v6914
    %7007 = vmatprep.mubr.bf16.mxu0 %v6931
    %7008 = vmatmul.mubr.bf16.gmra.mrb[0].mxu0 %v6930
    %v7009 = vpop.f32.mrb[0].mxu0
    %v7010 = vadd.f32 0.0, %v7009
    %v7011 = vpop.f32.mrb[0].mxu0
    %v7012 = vadd.f32 0.0, %v7011
    %v7013 = vpop.f32.mrb[0].mxu0
    %v7014 = vpop.f32.mrb[0].mxu0
    %7015 = vdwg.mxu0
    %v7016 = vadd.f32 %v6780, %v6969
    %v7017 = vadd.f32 %v6782, %v6971
    %v7018 = vadd.f32 %v6821, %v7010
    %v7019 = vadd.f32 %v6823, %v7012
    %v7020 = vlaneseq
    %v7021 = vshrl.u32 %v7020, 7
    %v7022 = vsub.s32 3, %v7021
    %v7023 = vrot.slane %v6445, %v7022
    %v7024 = vlaneseq
    %v7025 = vshrl.u32 %v7024, 7
    %v7026 = vsub.s32 7, %v7025
    %v7027 = vrot.slane %v6445, %v7026
    %v7028 = vlaneseq
    %v7029 = vshrl.u32 %v7028, 7
    %v7030 = vsub.s32 3, %v7029
    %v7031 = vrot.slane %v6446, %v7030
    %v7032 = vlaneseq
    %v7033 = vshrl.u32 %v7032, 7
    %v7034 = vsub.s32 7, %v7033
    %v7035 = vrot.slane %v6446, %v7034
    %v7040 = vpack.c.bf16 %v7023, %v7023
    %v7041 = vpack.c.bf16 %v7027, %v7027
    %v7042 = vpack.c.bf16 %v7031, %v7031
    %v7043 = vpack.c.bf16 %v7035, %v7035
    %s7044 = scalar_lea.vmem [#allocation4], 1536
    %v7045 = vld [vmem:[%s7044] sm:$0xff]
    %v7046 = vld [vmem:[%s7044 + $0x8] sm:$0xff]
    %v7047 = vld [vmem:[%s7044 + $0x10] sm:$0xff]
    %v7048 = vld [vmem:[%s7044 + $0x18] sm:$0xff]
    %v7049 = vld [vmem:[%s7044 + $0x20] sm:$0xff]
    %v7050 = vld [vmem:[%s7044 + $0x28] sm:$0xff]
    %v7051 = vld [vmem:[%s7044 + $0x30] sm:$0xff]
    %v7052 = vld [vmem:[%s7044 + $0x38] sm:$0xff]
    %v7053 = vld [vmem:[%s7044 + $0x40] sm:$0xff]
    %v7054 = vld [vmem:[%s7044 + $0x48] sm:$0xff]
    %v7055 = vld [vmem:[%s7044 + $0x50] sm:$0xff]
    %v7056 = vld [vmem:[%s7044 + $0x58] sm:$0xff]
    %v7057 = vld [vmem:[%s7044 + $0x60] sm:$0xff]
    %v7058 = vld [vmem:[%s7044 + $0x68] sm:$0xff]
    %v7059 = vld [vmem:[%s7044 + $0x70] sm:$0xff]
    %v7060 = vld [vmem:[%s7044 + $0x78] sm:$0xff]
    %v7061 = vld [vmem:[%s7044 + $0x80] sm:$0xff]
    %v7062 = vld [vmem:[%s7044 + $0x88] sm:$0xff]
    %v7063 = vld [vmem:[%s7044 + $0x90] sm:$0xff]
    %v7064 = vld [vmem:[%s7044 + $0x98] sm:$0xff]
    %v7065 = vld [vmem:[%s7044 + $0xa0] sm:$0xff]
    %v7066 = vld [vmem:[%s7044 + $0xa8] sm:$0xff]
    %v7067 = vld [vmem:[%s7044 + $0xb0] sm:$0xff]
    %v7068 = vld [vmem:[%s7044 + $0xb8] sm:$0xff]
    %v7069 = vld [vmem:[%s7044 + $0xc0] sm:$0xff]
    %v7070 = vld [vmem:[%s7044 + $0xc8] sm:$0xff]
    %v7071 = vld [vmem:[%s7044 + $0xd0] sm:$0xff]
    %v7072 = vld [vmem:[%s7044 + $0xd8] sm:$0xff]
    %v7073 = vld [vmem:[%s7044 + $0xe0] sm:$0xff]
    %v7074 = vld [vmem:[%s7044 + $0xe8] sm:$0xff]
    %v7075 = vld [vmem:[%s7044 + $0xf0] sm:$0xff]
    %v7076 = vld [vmem:[%s7044 + $0xf8] sm:$0xff]
    %v7077 = vld [vmem:[%s7044 + $0x100] sm:$0xff]
    %v7078 = vld [vmem:[%s7044 + $0x108] sm:$0xff]
    %v7079 = vld [vmem:[%s7044 + $0x110] sm:$0xff]
    %v7080 = vld [vmem:[%s7044 + $0x118] sm:$0xff]
    %v7081 = vld [vmem:[%s7044 + $0x120] sm:$0xff]
    %v7082 = vld [vmem:[%s7044 + $0x128] sm:$0xff]
    %v7083 = vld [vmem:[%s7044 + $0x130] sm:$0xff]
    %v7084 = vld [vmem:[%s7044 + $0x138] sm:$0xff]
    %v7085 = vld [vmem:[%s7044 + $0x140] sm:$0xff]
    %v7086 = vld [vmem:[%s7044 + $0x148] sm:$0xff]
    %v7087 = vld [vmem:[%s7044 + $0x150] sm:$0xff]
    %v7088 = vld [vmem:[%s7044 + $0x158] sm:$0xff]
    %v7089 = vld [vmem:[%s7044 + $0x160] sm:$0xff]
    %v7090 = vld [vmem:[%s7044 + $0x168] sm:$0xff]
    %v7091 = vld [vmem:[%s7044 + $0x170] sm:$0xff]
    %v7092 = vld [vmem:[%s7044 + $0x178] sm:$0xff]
    %v7093 = vld [vmem:[%s7044 + $0x180] sm:$0xff]
    %v7094 = vld [vmem:[%s7044 + $0x188] sm:$0xff]
    %v7095 = vld [vmem:[%s7044 + $0x190] sm:$0xff]
    %v7096 = vld [vmem:[%s7044 + $0x198] sm:$0xff]
    %v7097 = vld [vmem:[%s7044 + $0x1a0] sm:$0xff]
    %v7098 = vld [vmem:[%s7044 + $0x1a8] sm:$0xff]
    %v7099 = vld [vmem:[%s7044 + $0x1b0] sm:$0xff]
    %v7100 = vld [vmem:[%s7044 + $0x1b8] sm:$0xff]
    %v7101 = vld [vmem:[%s7044 + $0x1c0] sm:$0xff]
    %v7102 = vld [vmem:[%s7044 + $0x1c8] sm:$0xff]
    %v7103 = vld [vmem:[%s7044 + $0x1d0] sm:$0xff]
    %v7104 = vld [vmem:[%s7044 + $0x1d8] sm:$0xff]
    %v7105 = vld [vmem:[%s7044 + $0x1e0] sm:$0xff]
    %v7106 = vld [vmem:[%s7044 + $0x1e8] sm:$0xff]
    %v7107 = vld [vmem:[%s7044 + $0x1f0] sm:$0xff]
    %v7108 = vld [vmem:[%s7044 + $0x1f8] sm:$0xff]
    %v7113 = vunpack.c.l.b16 %v7040
    %v7114 = vunpack.c.l.b16 %v7041
    %v7115 = vunpack.c.l.b16 %v7042
    %v7116 = vunpack.c.l.b16 %v7043
    %v7117 = vrot.slane %v7113, 3
    %v7118 = vrot.slane %v7115, 2
    %v7119 = vsel %vm2841, %v7118, %v7117
    %v7120 = vrot.slane %v7114, 3
    %v7121 = vrot.slane %v7116, 2
    %v7122 = vsel %vm2841, %v7121, %v7120
    %v7123 = vpack.c.b16 %v7119, %v7119
    %v7124 = vpack.c.b16 %v7122, %v7122
    %7127 = vmatprep.subr.bf16.mxu0 %v7046
    %7128 = vmatpush1.bf16.msra.mxu0 %v7045
    %7129 = vmatprep.subr.bf16.mxu0 %v7050
    %7130 = vmatpush1.bf16.msra.mxu0 %v7049
    %7131 = vmatprep.subr.bf16.mxu0 %v7054
    %7132 = vmatpush1.bf16.msra.mxu0 %v7053
    %7133 = vmatprep.subr.bf16.mxu0 %v7058
    %7134 = vmatpush1.bf16.msra.mxu0 %v7057
    %7135 = vmatprep.subr.bf16.mxu0 %v7062
    %7136 = vmatpush1.bf16.msra.mxu0 %v7061
    %7137 = vmatprep.subr.bf16.mxu0 %v7066
    %7138 = vmatpush1.bf16.msra.mxu0 %v7065
    %7139 = vmatprep.subr.bf16.mxu0 %v7070
    %7140 = vmatpush1.bf16.msra.mxu0 %v7069
    %7141 = vmatprep.subr.bf16.mxu0 %v7074
    %7142 = vmatpush1.bf16.msra.mxu0 %v7073
    %7143 = vmatprep.subr.bf16.mxu0 %v7078
    %7144 = vmatpush1.bf16.msra.mxu0 %v7077
    %7145 = vmatprep.subr.bf16.mxu0 %v7082
    %7146 = vmatpush1.bf16.msra.mxu0 %v7081
    %7147 = vmatprep.subr.bf16.mxu0 %v7086
    %7148 = vmatpush1.bf16.msra.mxu0 %v7085
    %7149 = vmatprep.subr.bf16.mxu0 %v7090
    %7150 = vmatpush1.bf16.msra.mxu0 %v7089
    %7151 = vmatprep.subr.bf16.mxu0 %v7094
    %7152 = vmatpush1.bf16.msra.mxu0 %v7093
    %7153 = vmatprep.subr.bf16.mxu0 %v7098
    %7154 = vmatpush1.bf16.msra.mxu0 %v7097
    %7155 = vmatprep.subr.bf16.mxu0 %v7102
    %7156 = vmatpush1.bf16.msra.mxu0 %v7101
    %7157 = vmatprep.subr.bf16.mxu0 %v7106
    %7158 = vmatpush1.bf16.msra.mxu0 %v7105
    %7159 = vmatprep.mubr.bf16.mxu0 %v7124
    %7160 = vmatmul.mubr.bf16.gmra.mrb[0].mxu0 %v7123
    %v7161 = vpop.f32.mrb[0].mxu0
    %v7162 = vadd.f32 0.0, %v7161
    %v7163 = vpop.f32.mrb[0].mxu0
    %v7164 = vadd.f32 0.0, %v7163
    %v7165 = vpop.f32.mrb[0].mxu0
    %v7166 = vpop.f32.mrb[0].mxu0
    %7167 = vdwg.mxu0
    %7168 = vmatprep.subr.bf16.mxu0 %v7048
    %7169 = vmatpush1.bf16.msra.mxu0 %v7047
    %7170 = vmatprep.subr.bf16.mxu0 %v7052
    %7171 = vmatpush1.bf16.msra.mxu0 %v7051
    %7172 = vmatprep.subr.bf16.mxu0 %v7056
    %7173 = vmatpush1.bf16.msra.mxu0 %v7055
    %7174 = vmatprep.subr.bf16.mxu0 %v7060
    %7175 = vmatpush1.bf16.msra.mxu0 %v7059
    %7176 = vmatprep.subr.bf16.mxu0 %v7064
    %7177 = vmatpush1.bf16.msra.mxu0 %v7063
    %7178 = vmatprep.subr.bf16.mxu0 %v7068
    %7179 = vmatpush1.bf16.msra.mxu0 %v7067
    %7180 = vmatprep.subr.bf16.mxu0 %v7072
    %7181 = vmatpush1.bf16.msra.mxu0 %v7071
    %7182 = vmatprep.subr.bf16.mxu0 %v7076
    %7183 = vmatpush1.bf16.msra.mxu0 %v7075
    %7184 = vmatprep.subr.bf16.mxu0 %v7080
    %7185 = vmatpush1.bf16.msra.mxu0 %v7079
    %7186 = vmatprep.subr.bf16.mxu0 %v7084
    %7187 = vmatpush1.bf16.msra.mxu0 %v7083
    %7188 = vmatprep.subr.bf16.mxu0 %v7088
    %7189 = vmatpush1.bf16.msra.mxu0 %v7087
    %7190 = vmatprep.subr.bf16.mxu0 %v7092
    %7191 = vmatpush1.bf16.msra.mxu0 %v7091
    %7192 = vmatprep.subr.bf16.mxu0 %v7096
    %7193 = vmatpush1.bf16.msra.mxu0 %v7095
    %7194 = vmatprep.subr.bf16.mxu0 %v7100
    %7195 = vmatpush1.bf16.msra.mxu0 %v7099
    %7196 = vmatprep.subr.bf16.mxu0 %v7104
    %7197 = vmatpush1.bf16.msra.mxu0 %v7103
    %7198 = vmatprep.subr.bf16.mxu0 %v7108
    %7199 = vmatpush1.bf16.msra.mxu0 %v7107
    %7200 = vmatprep.mubr.bf16.mxu0 %v7124
    %7201 = vmatmul.mubr.bf16.gmra.mrb[0].mxu0 %v7123
    %v7202 = vpop.f32.mrb[0].mxu0
    %v7203 = vadd.f32 0.0, %v7202
    %v7204 = vpop.f32.mrb[0].mxu0
    %v7205 = vadd.f32 0.0, %v7204
    %v7206 = vpop.f32.mrb[0].mxu0
    %v7207 = vpop.f32.mrb[0].mxu0
    %7208 = vdwg.mxu0
    %v7209 = vadd.f32 %v7016, %v7162
    %v7210 = vadd.f32 %v7017, %v7164
    %v7211 = vadd.f32 %v7018, %v7203
    %v7212 = vadd.f32 %v7019, %v7205
    %v7213 = vld [vmem:[%s17] sm:$0xf]
    %v7215 = vlaneseq
    %v7216 = vshrl.u32 %v7215, 7
    %v7217 = vsub.s32 0, %v7216
    %v7218 = vrot.slane %v7213, %v7217
    %v7219 = vlaneseq
    %v7220 = vshrl.u32 %v7219, 7
    %v7221 = vsub.s32 1, %v7220
    %v7222 = vrot.slane %v7213, %v7221
    %v7223 = vlaneseq
    %v7224 = vshrl.u32 %v7223, 7
    %v7225 = vsub.s32 2, %v7224
    %v7226 = vrot.slane %v7213, %v7225
    %v7227 = vlaneseq
    %v7228 = vshrl.u32 %v7227, 7
    %v7229 = vsub.s32 3, %v7228
    %v7230 = vrot.slane %v7213, %v7229
    %v7235 = vadd.f32 %v7209, %v7218
    %v7236 = vadd.f32 %v7210, %v7222
    %v7237 = vadd.f32 %v7211, %v7226
    %v7238 = vadd.f32 %v7212, %v7230
    %v7239 = vmax.f32 %v7235, 0.0
    %v7240 = vmax.f32 %v7236, 0.0
    %v7241 = vmax.f32 %v7237, 0.0
    %v7242 = vmax.f32 %v7238, 0.0
    %s7243 = smul.u32 %s3749, 2
    %s7244 = sshll.u32 %s7243, 4
    %7245 = dma.done %s301, %s7244
    %v7246 = vpack.c.bf16 %v7239, %v7239
    %v7247 = vpack.c.bf16 %v7240, %v7240
    %v7248 = vpack.c.bf16 %v7241, %v7241
    %v7249 = vpack.c.bf16 %v7242, %v7242
    %v7250 = vld [vmem:[#allocation5] sm:$0xff]
    %v7251 = vld [vmem:[#allocation5 + $0x8] sm:$0xff]
    %v7252 = vld [vmem:[#allocation5 + $0x10] sm:$0xff]
    %v7253 = vld [vmem:[#allocation5 + $0x18] sm:$0xff]
    %v7254 = vld [vmem:[#allocation5 + $0x20] sm:$0xff]
    %v7255 = vld [vmem:[#allocation5 + $0x28] sm:$0xff]
    %v7256 = vld [vmem:[#allocation5 + $0x30] sm:$0xff]
    %v7257 = vld [vmem:[#allocation5 + $0x38] sm:$0xff]
    %v7258 = vld [vmem:[#allocation5 + $0x40] sm:$0xff]
    %v7259 = vld [vmem:[#allocation5 + $0x48] sm:$0xff]
    %v7260 = vld [vmem:[#allocation5 + $0x50] sm:$0xff]
    %v7261 = vld [vmem:[#allocation5 + $0x58] sm:$0xff]
    %v7262 = vld [vmem:[#allocation5 + $0x60] sm:$0xff]
    %v7263 = vld [vmem:[#allocation5 + $0x68] sm:$0xff]
    %v7264 = vld [vmem:[#allocation5 + $0x70] sm:$0xff]
    %v7265 = vld [vmem:[#allocation5 + $0x78] sm:$0xff]
    %v7266 = vld [vmem:[#allocation5 + $0x80] sm:$0xff]
    %v7267 = vld [vmem:[#allocation5 + $0x88] sm:$0xff]
    %v7268 = vld [vmem:[#allocation5 + $0x90] sm:$0xff]
    %v7269 = vld [vmem:[#allocation5 + $0x98] sm:$0xff]
    %v7270 = vld [vmem:[#allocation5 + $0xa0] sm:$0xff]
    %v7271 = vld [vmem:[#allocation5 + $0xa8] sm:$0xff]
    %v7272 = vld [vmem:[#allocation5 + $0xb0] sm:$0xff]
    %v7273 = vld [vmem:[#allocation5 + $0xb8] sm:$0xff]
    %v7274 = vld [vmem:[#allocation5 + $0xc0] sm:$0xff]
    %v7275 = vld [vmem:[#allocation5 + $0xc8] sm:$0xff]
    %v7276 = vld [vmem:[#allocation5 + $0xd0] sm:$0xff]
    %v7277 = vld [vmem:[#allocation5 + $0xd8] sm:$0xff]
    %v7278 = vld [vmem:[#allocation5 + $0xe0] sm:$0xff]
    %v7279 = vld [vmem:[#allocation5 + $0xe8] sm:$0xff]
    %v7280 = vld [vmem:[#allocation5 + $0xf0] sm:$0xff]
    %v7281 = vld [vmem:[#allocation5 + $0xf8] sm:$0xff]
    %v7282 = vld [vmem:[#allocation5 + $0x100] sm:$0xff]
    %v7283 = vld [vmem:[#allocation5 + $0x108] sm:$0xff]
    %v7284 = vld [vmem:[#allocation5 + $0x110] sm:$0xff]
    %v7285 = vld [vmem:[#allocation5 + $0x118] sm:$0xff]
    %v7286 = vld [vmem:[#allocation5 + $0x120] sm:$0xff]
    %v7287 = vld [vmem:[#allocation5 + $0x128] sm:$0xff]
    %v7288 = vld [vmem:[#allocation5 + $0x130] sm:$0xff]
    %v7289 = vld [vmem:[#allocation5 + $0x138] sm:$0xff]
    %v7290 = vld [vmem:[#allocation5 + $0x140] sm:$0xff]
    %v7291 = vld [vmem:[#allocation5 + $0x148] sm:$0xff]
    %v7292 = vld [vmem:[#allocation5 + $0x150] sm:$0xff]
    %v7293 = vld [vmem:[#allocation5 + $0x158] sm:$0xff]
    %v7294 = vld [vmem:[#allocation5 + $0x160] sm:$0xff]
    %v7295 = vld [vmem:[#allocation5 + $0x168] sm:$0xff]
    %v7296 = vld [vmem:[#allocation5 + $0x170] sm:$0xff]
    %v7297 = vld [vmem:[#allocation5 + $0x178] sm:$0xff]
    %v7298 = vld [vmem:[#allocation5 + $0x180] sm:$0xff]
    %v7299 = vld [vmem:[#allocation5 + $0x188] sm:$0xff]
    %v7300 = vld [vmem:[#allocation5 + $0x190] sm:$0xff]
    %v7301 = vld [vmem:[#allocation5 + $0x198] sm:$0xff]
    %v7302 = vld [vmem:[#allocation5 + $0x1a0] sm:$0xff]
    %v7303 = vld [vmem:[#allocation5 + $0x1a8] sm:$0xff]
    %v7304 = vld [vmem:[#allocation5 + $0x1b0] sm:$0xff]
    %v7305 = vld [vmem:[#allocation5 + $0x1b8] sm:$0xff]
    %v7306 = vld [vmem:[#allocation5 + $0x1c0] sm:$0xff]
    %v7307 = vld [vmem:[#allocation5 + $0x1c8] sm:$0xff]
    %v7308 = vld [vmem:[#allocation5 + $0x1d0] sm:$0xff]
    %v7309 = vld [vmem:[#allocation5 + $0x1d8] sm:$0xff]
    %v7310 = vld [vmem:[#allocation5 + $0x1e0] sm:$0xff]
    %v7311 = vld [vmem:[#allocation5 + $0x1e8] sm:$0xff]
    %v7312 = vld [vmem:[#allocation5 + $0x1f0] sm:$0xff]
    %v7313 = vld [vmem:[#allocation5 + $0x1f8] sm:$0xff]
    %v7314 = vld [vmem:[#allocation22] sm:$0x3]
    %v7316 = vlaneseq
    %v7317 = vshrl.u32 %v7316, 7
    %v7318 = vsub.s32 0, %v7317
    %v7319 = vrot.slane %v7314, %v7318
    %v7320 = vlaneseq
    %v7321 = vshrl.u32 %v7320, 7
    %v7322 = vsub.s32 1, %v7321
    %v7323 = vrot.slane %v7314, %v7322
    %7326 = vmatprep.subr.bf16.mxu0 %v7251
    %7327 = vmatpush1.bf16.msra.mxu0 %v7250
    %7328 = vmatprep.subr.bf16.mxu0 %v7253
    %7329 = vmatpush1.bf16.msra.mxu0 %v7252
    %7330 = vmatprep.subr.bf16.mxu0 %v7255
    %7331 = vmatpush1.bf16.msra.mxu0 %v7254
    %7332 = vmatprep.subr.bf16.mxu0 %v7257
    %7333 = vmatpush1.bf16.msra.mxu0 %v7256
    %7334 = vmatprep.subr.bf16.mxu0 %v7259
    %7335 = vmatpush1.bf16.msra.mxu0 %v7258
    %7336 = vmatprep.subr.bf16.mxu0 %v7261
    %7337 = vmatpush1.bf16.msra.mxu0 %v7260
    %7338 = vmatprep.subr.bf16.mxu0 %v7263
    %7339 = vmatpush1.bf16.msra.mxu0 %v7262
    %7340 = vmatprep.subr.bf16.mxu0 %v7265
    %7341 = vmatpush1.bf16.msra.mxu0 %v7264
    %7342 = vmatprep.subr.bf16.mxu0 %v7267
    %7343 = vmatpush1.bf16.msra.mxu0 %v7266
    %7344 = vmatprep.subr.bf16.mxu0 %v7269
    %7345 = vmatpush1.bf16.msra.mxu0 %v7268
    %7346 = vmatprep.subr.bf16.mxu0 %v7271
    %7347 = vmatpush1.bf16.msra.mxu0 %v7270
    %7348 = vmatprep.subr.bf16.mxu0 %v7273
    %7349 = vmatpush1.bf16.msra.mxu0 %v7272
    %7350 = vmatprep.subr.bf16.mxu0 %v7275
    %7351 = vmatpush1.bf16.msra.mxu0 %v7274
    %7352 = vmatprep.subr.bf16.mxu0 %v7277
    %7353 = vmatpush1.bf16.msra.mxu0 %v7276
    %7354 = vmatprep.subr.bf16.mxu0 %v7279
    %7355 = vmatpush1.bf16.msra.mxu0 %v7278
    %7356 = vmatprep.subr.bf16.mxu0 %v7281
    %7357 = vmatpush1.bf16.msra.mxu0 %v7280
    %7358 = vmatprep.mubr.bf16.mxu0 %v7247
    %7359 = vmatmul.mubr.bf16.gmra.mrb[0].mxu0 %v7246
    %v7360 = vpop.f32.mrb[0].mxu0
    %v7361 = vadd.f32 %v7319, %v7360
    %v7362 = vpop.f32.mrb[0].mxu0
    %v7363 = vadd.f32 %v7323, %v7362
    %v7364 = vpop.f32.mrb[0].mxu0
    %v7365 = vpop.f32.mrb[0].mxu0
    %7366 = vdwg.mxu0
    %7367 = vmatprep.subr.bf16.mxu0 %v7283
    %7368 = vmatpush1.bf16.msra.mxu0 %v7282
    %7369 = vmatprep.subr.bf16.mxu0 %v7285
    %7370 = vmatpush1.bf16.msra.mxu0 %v7284
    %7371 = vmatprep.subr.bf16.mxu0 %v7287
    %7372 = vmatpush1.bf16.msra.mxu0 %v7286
    %7373 = vmatprep.subr.bf16.mxu0 %v7289
    %7374 = vmatpush1.bf16.msra.mxu0 %v7288
    %7375 = vmatprep.subr.bf16.mxu0 %v7291
    %7376 = vmatpush1.bf16.msra.mxu0 %v7290
    %7377 = vmatprep.subr.bf16.mxu0 %v7293
    %7378 = vmatpush1.bf16.msra.mxu0 %v7292
    %7379 = vmatprep.subr.bf16.mxu0 %v7295
    %7380 = vmatpush1.bf16.msra.mxu0 %v7294
    %7381 = vmatprep.subr.bf16.mxu0 %v7297
    %7382 = vmatpush1.bf16.msra.mxu0 %v7296
    %7383 = vmatprep.subr.bf16.mxu0 %v7299
    %7384 = vmatpush1.bf16.msra.mxu0 %v7298
    %7385 = vmatprep.subr.bf16.mxu0 %v7301
    %7386 = vmatpush1.bf16.msra.mxu0 %v7300
    %7387 = vmatprep.subr.bf16.mxu0 %v7303
    %7388 = vmatpush1.bf16.msra.mxu0 %v7302
    %7389 = vmatprep.subr.bf16.mxu0 %v7305
    %7390 = vmatpush1.bf16.msra.mxu0 %v7304
    %7391 = vmatprep.subr.bf16.mxu0 %v7307
    %7392 = vmatpush1.bf16.msra.mxu0 %v7306
    %7393 = vmatprep.subr.bf16.mxu0 %v7309
    %7394 = vmatpush1.bf16.msra.mxu0 %v7308
    %7395 = vmatprep.subr.bf16.mxu0 %v7311
    %7396 = vmatpush1.bf16.msra.mxu0 %v7310
    %7397 = vmatprep.subr.bf16.mxu0 %v7313
    %7398 = vmatpush1.bf16.msra.mxu0 %v7312
    %7399 = vmatprep.mubr.bf16.mxu0 %v7249
    %7400 = vmatmul.mubr.bf16.gmra.mrb[0].mxu0 %v7248
    %v7401 = vpop.f32.mrb[0].mxu0
    %v7402 = vadd.f32 %v7361, %v7401
    %v7403 = vpop.f32.mrb[0].mxu0
    %v7404 = vadd.f32 %v7363, %v7403
    %v7405 = vpop.f32.mrb[0].mxu0
    %v7406 = vpop.f32.mrb[0].mxu0
    %7407 = vdwg.mxu0
    %v7408 = vmax.f32 %v7402, 0.0
    %v7409 = vmax.f32 %v7404, 0.0
    %v7410 = vld [vmem:[%s20] sm:$0xff]
    %v7411 = vld [vmem:[%s20 + $0x8] sm:$0xff]
    %v7412 = vld [vmem:[%s20 + $0x10] sm:$0xff]
    %v7413 = vld [vmem:[%s20 + $0x18] sm:$0xff]
    %v7414 = vld [vmem:[%s20 + $0x20] sm:$0xff]
    %v7415 = vld [vmem:[%s20 + $0x28] sm:$0xff]
    %v7416 = vld [vmem:[%s20 + $0x30] sm:$0xff]
    %v7417 = vld [vmem:[%s20 + $0x38] sm:$0xff]
    %v7418 = vld [vmem:[%s20 + $0x40] sm:$0xff]
    %v7419 = vld [vmem:[%s20 + $0x48] sm:$0xff]
    %v7420 = vld [vmem:[%s20 + $0x50] sm:$0xff]
    %v7421 = vld [vmem:[%s20 + $0x58] sm:$0xff]
    %v7422 = vld [vmem:[%s20 + $0x60] sm:$0xff]
    %v7423 = vld [vmem:[%s20 + $0x68] sm:$0xff]
    %v7424 = vld [vmem:[%s20 + $0x70] sm:$0xff]
    %v7425 = vld [vmem:[%s20 + $0x78] sm:$0xff]
    %v7426 = vld [vmem:[%s20 + $0x80] sm:$0xff]
    %v7427 = vld [vmem:[%s20 + $0x88] sm:$0xff]
    %v7428 = vld [vmem:[%s20 + $0x90] sm:$0xff]
    %v7429 = vld [vmem:[%s20 + $0x98] sm:$0xff]
    %v7430 = vld [vmem:[%s20 + $0xa0] sm:$0xff]
    %v7431 = vld [vmem:[%s20 + $0xa8] sm:$0xff]
    %v7432 = vld [vmem:[%s20 + $0xb0] sm:$0xff]
    %v7433 = vld [vmem:[%s20 + $0xb8] sm:$0xff]
    %v7434 = vld [vmem:[%s20 + $0xc0] sm:$0xff]
    %v7435 = vld [vmem:[%s20 + $0xc8] sm:$0xff]
    %v7436 = vld [vmem:[%s20 + $0xd0] sm:$0xff]
    %v7437 = vld [vmem:[%s20 + $0xd8] sm:$0xff]
    %v7438 = vld [vmem:[%s20 + $0xe0] sm:$0xff]
    %v7439 = vld [vmem:[%s20 + $0xe8] sm:$0xff]
    %v7440 = vld [vmem:[%s20 + $0xf0] sm:$0xff]
    %v7441 = vld [vmem:[%s20 + $0xf8] sm:$0xff]
    %v7442 = vld [vmem:[#allocation23] sm:$0x1]
    %v7444 = vlaneseq
    %v7445 = vshrl.u32 %v7444, 7
    %v7446 = vsub.s32 0, %v7445
    %v7447 = vrot.slane %v7442, %v7446
    %7449 = vmatprep.subr.mxu0 0.0
    %7450 = vmatpush1.msra.mxu0 %v7410
    %7451 = vmatprep.subr.mxu0 0.0
    %7452 = vmatpush1.msra.mxu0 %v7411
    %7453 = vmatprep.subr.mxu0 0.0
    %7454 = vmatpush1.msra.mxu0 %v7412
    %7455 = vmatprep.subr.mxu0 0.0
    %7456 = vmatpush1.msra.mxu0 %v7413
    %7457 = vmatprep.subr.mxu0 0.0
    %7458 = vmatpush1.msra.mxu0 %v7414
    %7459 = vmatprep.subr.mxu0 0.0
    %7460 = vmatpush1.msra.mxu0 %v7415
    %7461 = vmatprep.subr.mxu0 0.0
    %7462 = vmatpush1.msra.mxu0 %v7416
    %7463 = vmatprep.subr.mxu0 0.0
    %7464 = vmatpush1.msra.mxu0 %v7417
    %7465 = vmatprep.subr.mxu0 0.0
    %7466 = vmatpush1.msra.mxu0 %v7418
    %7467 = vmatprep.subr.mxu0 0.0
    %7468 = vmatpush1.msra.mxu0 %v7419
    %7469 = vmatprep.subr.mxu0 0.0
    %7470 = vmatpush1.msra.mxu0 %v7420
    %7471 = vmatprep.subr.mxu0 0.0
    %7472 = vmatpush1.msra.mxu0 %v7421
    %7473 = vmatprep.subr.mxu0 0.0
    %7474 = vmatpush1.msra.mxu0 %v7422
    %7475 = vmatprep.subr.mxu0 0.0
    %7476 = vmatpush1.msra.mxu0 %v7423
    %7477 = vmatprep.subr.mxu0 0.0
    %7478 = vmatpush1.msra.mxu0 %v7424
    %7479 = vmatprep.subr.mxu0 0.0
    %7480 = vmatpush1.msra.mxu0 %v7425
    %7481 = vmatprep.subr.mxu0 0.0
    %7482 = vmatpush1.msra.mxu0 %v7426
    %7483 = vmatprep.subr.mxu0 0.0
    %7484 = vmatpush1.msra.mxu0 %v7427
    %7485 = vmatprep.subr.mxu0 0.0
    %7486 = vmatpush1.msra.mxu0 %v7428
    %7487 = vmatprep.subr.mxu0 0.0
    %7488 = vmatpush1.msra.mxu0 %v7429
    %7489 = vmatprep.subr.mxu0 0.0
    %7490 = vmatpush1.msra.mxu0 %v7430
    %7491 = vmatprep.subr.mxu0 0.0
    %7492 = vmatpush1.msra.mxu0 %v7431
    %7493 = vmatprep.subr.mxu0 0.0
    %7494 = vmatpush1.msra.mxu0 %v7432
    %7495 = vmatprep.subr.mxu0 0.0
    %7496 = vmatpush1.msra.mxu0 %v7433
    %7497 = vmatprep.subr.mxu0 0.0
    %7498 = vmatpush1.msra.mxu0 %v7434
    %7499 = vmatprep.subr.mxu0 0.0
    %7500 = vmatpush1.msra.mxu0 %v7435
    %7501 = vmatprep.subr.mxu0 0.0
    %7502 = vmatpush1.msra.mxu0 %v7436
    %7503 = vmatprep.subr.mxu0 0.0
    %7504 = vmatpush1.msra.mxu0 %v7437
    %7505 = vmatprep.subr.mxu0 0.0
    %7506 = vmatpush1.msra.mxu0 %v7438
    %7507 = vmatprep.subr.mxu0 0.0
    %7508 = vmatpush1.msra.mxu0 %v7439
    %7509 = vmatprep.subr.mxu0 0.0
    %7510 = vmatpush1.msra.mxu0 %v7440
    %7511 = vmatprep.subr.mxu0 0.0
    %7512 = vmatpush1.msra.mxu0 %v7441
    %7513 = vmatprep.mubr.f32.mxu0 %v7409
    %7514 = vmatmul.mubr.f32.gmra.mrb[0].mxu0 %v7408
    %v7515 = vpop.f32.mrb[0].mxu0
    %v7516 = vadd.f32 %v7447, %v7515
    %v7517 = vpop.f32.mrb[0].mxu0
    %7518 = vdwg.mxu0
    %v7519 = vmax.f32 %v7516, 0.0
    %v7520 = vld [vmem:[%s22] sm:$0xff]
    %v7521 = vld [vmem:[%s22 + $0x8] sm:$0xff]
    %v7522 = vld [vmem:[%s22 + $0x10] sm:$0xff]
    %v7523 = vld [vmem:[%s22 + $0x18] sm:$0xff]
    %v7524 = vld [vmem:[%s22 + $0x20] sm:$0xff]
    %v7525 = vld [vmem:[%s22 + $0x28] sm:$0xff]
    %v7526 = vld [vmem:[%s22 + $0x30] sm:$0xff]
    %v7527 = vld [vmem:[%s22 + $0x38] sm:$0xff]
    %v7528 = vld [vmem:[%s22 + $0x40] sm:$0xff]
    %v7529 = vld [vmem:[%s22 + $0x48] sm:$0xff]
    %v7530 = vld [vmem:[%s22 + $0x50] sm:$0xff]
    %v7531 = vld [vmem:[%s22 + $0x58] sm:$0xff]
    %v7532 = vld [vmem:[%s22 + $0x60] sm:$0xff]
    %v7533 = vld [vmem:[%s22 + $0x68] sm:$0xff]
    %v7534 = vld [vmem:[%s22 + $0x70] sm:$0xff]
    %v7535 = vld [vmem:[%s22 + $0x78] sm:$0xff]
    %v7536 = vld [vmem:[#allocation25] sm:$0x1]
    %v7538 = vlaneseq
    %v7539 = vshrl.u32 %v7538, 7
    %v7540 = vsub.s32 0, %v7539
    %v7541 = vrot.slane %v7536, %v7540
    %7543 = vmatprep.subr.mxu0 0.0
    %7544 = vmatpush1.msra.mxu0 %v7520
    %7545 = vmatprep.subr.mxu0 0.0
    %7546 = vmatpush1.msra.mxu0 %v7521
    %7547 = vmatprep.subr.mxu0 0.0
    %7548 = vmatpush1.msra.mxu0 %v7522
    %7549 = vmatprep.subr.mxu0 0.0
    %7550 = vmatpush1.msra.mxu0 %v7523
    %7551 = vmatprep.subr.mxu0 0.0
    %7552 = vmatpush1.msra.mxu0 %v7524
    %7553 = vmatprep.subr.mxu0 0.0
    %7554 = vmatpush1.msra.mxu0 %v7525
    %7555 = vmatprep.subr.mxu0 0.0
    %7556 = vmatpush1.msra.mxu0 %v7526
    %7557 = vmatprep.subr.mxu0 0.0
    %7558 = vmatpush1.msra.mxu0 %v7527
    %7559 = vmatprep.subr.mxu0 0.0
    %7560 = vmatpush1.msra.mxu0 %v7528
    %7561 = vmatprep.subr.mxu0 0.0
    %7562 = vmatpush1.msra.mxu0 %v7529
    %7563 = vmatprep.subr.mxu0 0.0
    %7564 = vmatpush1.msra.mxu0 %v7530
    %7565 = vmatprep.subr.mxu0 0.0
    %7566 = vmatpush1.msra.mxu0 %v7531
    %7567 = vmatprep.subr.mxu0 0.0
    %7568 = vmatpush1.msra.mxu0 %v7532
    %7569 = vmatprep.subr.mxu0 0.0
    %7570 = vmatpush1.msra.mxu0 %v7533
    %7571 = vmatprep.subr.mxu0 0.0
    %7572 = vmatpush1.msra.mxu0 %v7534
    %7573 = vmatprep.subr.mxu0 0.0
    %7574 = vmatpush1.msra.mxu0 %v7535
    %7575 = vmatprep.subr.mxu0 0.0
    %7576 = vmatpush1.msra.mxu0 0.0
    %7577 = vmatprep.subr.mxu0 0.0
    %7578 = vmatpush1.msra.mxu0 0.0
    %7579 = vmatprep.subr.mxu0 0.0
    %7580 = vmatpush1.msra.mxu0 0.0
    %7581 = vmatprep.subr.mxu0 0.0
    %7582 = vmatpush1.msra.mxu0 0.0
    %7583 = vmatprep.subr.mxu0 0.0
    %7584 = vmatpush1.msra.mxu0 0.0
    %7585 = vmatprep.subr.mxu0 0.0
    %7586 = vmatpush1.msra.mxu0 0.0
    %7587 = vmatprep.subr.mxu0 0.0
    %7588 = vmatpush1.msra.mxu0 0.0
    %7589 = vmatprep.subr.mxu0 0.0
    %7590 = vmatpush1.msra.mxu0 0.0
    %7591 = vmatprep.subr.mxu0 0.0
    %7592 = vmatpush1.msra.mxu0 0.0
    %7593 = vmatprep.subr.mxu0 0.0
    %7594 = vmatpush1.msra.mxu0 0.0
    %7595 = vmatprep.subr.mxu0 0.0
    %7596 = vmatpush1.msra.mxu0 0.0
    %7597 = vmatprep.subr.mxu0 0.0
    %7598 = vmatpush1.msra.mxu0 0.0
    %7599 = vmatprep.subr.mxu0 0.0
    %7600 = vmatpush1.msra.mxu0 0.0
    %7601 = vmatprep.subr.mxu0 0.0
    %7602 = vmatpush1.msra.mxu0 0.0
    %7603 = vmatprep.subr.mxu0 0.0
    %7604 = vmatpush1.msra.mxu0 0.0
    %7605 = vmatprep.subr.mxu0 0.0
    %7606 = vmatpush1.msra.mxu0 0.0
    %7607 = vmatprep.mubr.f32.mxu0 0.0
    %7608 = vmatmul.mubr.f32.gmra.mrb[0].mxu0 %v7519
    %v7609 = vpop.f32.mrb[0].mxu0
    %v7610 = vadd.f32 %v7541, %v7609
    %v7611 = vpop.f32.mrb[0].mxu0
    %7612 = vdwg.mxu0
    %vm7613 = vcmask 9216
    %7614 = vst.msk [vmem:[#allocation26] sm:$0x3] %vm7613, %v7610
    // Predicated region
    $region122: #{stage1_forward.1} parent=1 // pred_check
      _
    $region123: #{stage1_forward.1} parent=1 // pred_check_branch
      %7616 = sbr.rel (0) target = $region125
    $region124: #{stage1_forward.1} parent=1 // pred_region
      %s7618 = ssub.s32 32, 32
      %7619 = vsyncadd [#allocation11], %s7618
      %s7621 = sshll.u32 [#allocation26], 4
      %s7622 = int_to_ptr.vmem [resolvable:$true] %s7621
      %7624 = dma.vmem_to_hbm [thread:$0]  %s7622, 32, %s24, [#allocation11]
    $region125: #{stage1_forward.1} parent=1 // pred_fallthru
      _
    // Predicated region
    $region126: #{stage1_forward.1} parent=1 // pred_check
      _
    $region127: #{stage1_forward.1} parent=1 // pred_check_branch
      %7626 = sbr.rel (0) target = $region129
    $region128: #{stage1_forward.1} parent=1 // pred_region
      %7627 = dma.done [#allocation11], 32
    $region129: #{stage1_forward.1} parent=1 // pred_fallthru
      _
    %7628 = vsyncpa [#allocation10], 1
    %7629 = vsyncpa [#allocation14], 1
    %7630 = vsyncpa [#allocation17], 1
    %7631 = vsyncpa [#allocation20], 1
    %7632 = vsyncpa [#allocation24], 1
    %7633 = vsyncpa [#allocation11], 1
    %7634 = vsyncpa [#allocation12], 1
  %7635 = vsyncmov [#allocation6]
  %s7636 = vpop.sfrf %7635
  %p7637 = scmp.eq.s32.totalorder %s7636, 0
  %p7638 = pneg %p7637
  %7640 = shalt.err (%p7638)
  %s7641 = scalar_lea.sflag [#allocation6], 1
  %7642 = vsyncmov %s7641
  %s7643 = vpop.sfrf %7642
  %p7644 = scmp.eq.s32.totalorder %s7643, 0
  %p7645 = pneg %p7644
  %7647 = shalt.err (%p7645)
  %s7648 = scalar_lea.sflag [#allocation6], 2
  %7649 = vsyncmov %s7648
  %s7650 = vpop.sfrf %7649
  %p7651 = scmp.eq.s32.totalorder %s7650, 0
  %p7652 = pneg %p7651
  %7654 = shalt.err (%p7652)
  %s7655 = scalar_lea.sflag [#allocation6], 3
  %7656 = vsyncmov %s7655
  %s7657 = vpop.sfrf %7656
  %p7658 = scmp.eq.s32.totalorder %s7657, 0
  %p7659 = pneg %p7658
  %7661 = shalt.err (%p7659)

</llo_original>
